<compile_context>
chip_gen: v7x
topology: tpu7x:2x2x1
jax: 0.10.0
libtpu: 0.0.40
codegen_flags: <defaults>
</compile_context>

<pallas_src>
import functools

import jax
import jax.numpy as jnp
from jax.experimental import pallas as pl

# ---------------- config (small, consistent with the module) ----------------
B = 2            # batch
S = 8            # sequence length
H = 32           # hidden_size
NUM_HEADS = 4    # num_attention_heads
HEAD_DIM = H // NUM_HEADS
INTER = 64       # intermediate_size
NUM_LAYERS = 2   # num_layers
EPS = 1e-5       # LayerNorm eps
SCALING = HEAD_DIM ** (-0.5)
G = B * NUM_HEADS           # batched-head dim; ordering g = h * B + b
VEC_ROWS = 8                # packed per-layer vector table rows (padded)


def _layernorm_2d(x, gamma, beta, eps):
    """Module's custom LayerNorm on a [rows, H] slab:
       y = (x - mean) / std + eps ; out = y * gamma + beta
       (torch.std default = unbiased, N-1).  rsqrt -> EUP slot."""
    n = x.shape[-1]
    mean = jnp.mean(x, axis=-1, keepdims=True)
    diff = x - mean
    var = jnp.sum(diff * diff, axis=-1, keepdims=True) * (1.0 / (n - 1))
    y = diff * jax.lax.rsqrt(var) + eps
    return y * gamma + beta


def encoder_stack_kernel(x_ref, wq_ref, wk_ref, wv_ref, bq_ref, bk_ref, bv_ref,
                         wo_ref, w1_ref, b1_ref, w2_ref, vec_ref, out_ref,
                         *, num_layers, batch, seq, hidden, num_heads, eps):
    bs = batch * seq
    x = x_ref[...]                                   # [B*S, H] carried activation

    for l in range(num_layers):                      # static unrolled layer loop
        # Replicate the activation once per head: [B*S,H] -> [B,S,H] -> [G,S,H]
        # (leading-axis concat only; g = h*B + b, matching the offline weight repack).
        x3 = x.reshape(batch, seq, hidden)
        x_g = jnp.concatenate([x3] * num_heads, axis=0)          # [G, S, H]

        # Per-head Q/K/V projections as single batched matmuls.
        # Attention scaling is folded into wq/bq offline.
        q = jnp.einsum('gsn,gnd->gsd', x_g, wq_ref[l],
                       preferred_element_type=jnp.float32) + bq_ref[l]   # [G,S,d]
        k = jnp.einsum('gsn,gnd->gsd', x_g, wk_ref[l],
                       preferred_element_type=jnp.float32) + bk_ref[l]
        v = jnp.einsum('gsn,gnd->gsd', x_g, wv_ref[l],
                       preferred_element_type=jnp.float32) + bv_ref[l]

        # One scores einsum and ONE softmax over all (batch, head) pairs.
        # TODO(synk): key_padding_mask / attn_mask support (only mask=None path).
        s = jnp.einsum('gqd,gkd->gqk', q, k,
                       preferred_element_type=jnp.float32)               # [G,S,S]
        s = s - jnp.max(s, axis=-1, keepdims=True)
        p = jnp.exp(s)
        # exact reciprocal (approx=True risks the 1e-4 reference tolerance)
        p = p * pl.reciprocal(jnp.sum(p, axis=-1, keepdims=True), approx=False)
        o = jnp.einsum('gqk,gkd->gqd', p, v,
                       preferred_element_type=jnp.float32)               # [G,S,d]

        # Per-head output projection then head-sum == concat(heads) @ Wo,
        # without any transpose or lane concatenate.
        proj = jnp.einsum('gsd,gdm->gsm', o, wo_ref[l],
                          preferred_element_type=jnp.float32)            # [G,S,H]
        attn3 = proj[0:batch]
        for h in range(1, num_heads):
            attn3 = attn3 + proj[h * batch:(h + 1) * batch]              # [B,S,H]
        attn = attn3.reshape(bs, hidden)                                 # [B*S,H]

        # Per-layer vector table, loaded once per layer.
        vec = vec_ref[l]                                                 # [8, H]
        bo, b2 = vec[0:1, :], vec[1:2, :]
        g1, be1 = vec[2:3, :], vec[3:4, :]
        g2, be2 = vec[4:5, :], vec[5:6, :]

        # ---- residual + norm1 ----
        x1 = _layernorm_2d(x + attn + bo, g1, be1, eps)

        # ---- feed-forward ----
        hdn = jnp.dot(x1, w1_ref[l],
                      preferred_element_type=jnp.float32) + b1_ref[l]    # [B*S, INTER]
        hdn = jnp.maximum(hdn, 0.0)                                      # ReLU
        ffn = jnp.dot(hdn, w2_ref[l],
                      preferred_element_type=jnp.float32) + b2

        # ---- residual + norm2 ----
        x2 = _layernorm_2d(x1 + ffn, g2, be2, eps)

        out_ref[l] = x2.astype(out_ref.dtype)        # this layer's hidden state
        x = x2                                       # carry to next layer


def _encoder_stack(x2d, stacked):
    """Single pallas_call, single grid step; returns [L, B*S, H]."""
    num_layers = stacked[0].shape[0]
    bs = x2d.shape[0]
    kernel = functools.partial(
        encoder_stack_kernel, num_layers=num_layers, batch=B, seq=S,
        hidden=H, num_heads=NUM_HEADS, eps=EPS)
    # No grid / no BlockSpecs: every operand is a full-array VMEM block and the
    # whole stack runs in one kernel invocation (all weights ~tens of KiB f32).
    return pl.pallas_call(
        kernel,
        out_shape=jax.ShapeDtypeStruct((num_layers, bs, H), x2d.dtype),
    )(x2d, *stacked)


def transformer_encoder(x, stacked_params):
    """Matches TransformerEncoder.forward: returns a tuple of every layer's output."""
    b, s, h = x.shape
    out = _encoder_stack(x.reshape(b * s, h), stacked_params)     # [L, B*S, H]
    out = out.reshape(out.shape[0], b, s, h)
    return tuple(out[l] for l in range(out.shape[0]))


# ---------------------------- parameter init --------------------------------
def init_layer_params(key):
    ks = jax.random.split(key, 12)
    f32 = jnp.float32

    def w(k, shape):
        return (0.02 * jax.random.normal(k, shape)).astype(f32)

    wq, bq = w(ks[0], (H, H)), w(ks[1], (1, H))
    wk, bk = w(ks[2], (H, H)), w(ks[3], (1, H))
    wv, bv = w(ks[4], (H, H)), w(ks[5], (1, H))
    wo, bo = w(ks[6], (H, H)), w(ks[7], (1, H))
    g1, be1 = jnp.ones((1, H), f32), jnp.zeros((1, H), f32)
    w1, b1 = w(ks[8], (H, INTER)), w(ks[9], (1, INTER))
    w2, b2 = w(ks[10], (INTER, H)), w(ks[11], (1, H))
    g2, be2 = jnp.ones((1, H), f32), jnp.zeros((1, H), f32)
    return (wq, bq, wk, bk, wv, bv, wo, bo, g1, be1, w1, b1, w2, b2, g2, be2)


def stack_layer_params(layer_params):
    """Repack per-layer params into head-batched kernel operands (g = h*B + b)."""
    def per_layer(p):
        (wq, bq, wk, bk, wv, bv, wo, bo, g1, be1, w1, b1, w2, b2, g2, be2) = p

        def heads_w(wm):       # [H, H] -> [NH, H, d] -> [G, H, d]
            wh = wm.reshape(H, NUM_HEADS, HEAD_DIM).transpose(1, 0, 2)
            return jnp.repeat(wh, B, axis=0)

        def heads_b(bvec):     # [1, H] -> [NH, 1, d] -> [G, 1, d]
            bh = bvec.reshape(NUM_HEADS, HEAD_DIM)[:, None, :]
            return jnp.repeat(bh, B, axis=0)

        wq_g = heads_w(wq * SCALING)                     # fold attention scaling
        bq_g = heads_b(bq * SCALING)
        wk_g, bk_g = heads_w(wk), heads_b(bk)
        wv_g, bv_g = heads_w(wv), heads_b(bv)
        wo_g = jnp.repeat(wo.reshape(NUM_HEADS, HEAD_DIM, H), B, axis=0)  # [G, d, H]

        pad = jnp.zeros((1, H), jnp.float32)
        vec = jnp.concatenate([bo, b2, g1, be1, g2, be2, pad, pad], axis=0)  # [8, H]
        return (wq_g, wk_g, wv_g, bq_g, bk_g, bv_g, wo_g, w1, b1, w2, vec)

    cols = list(zip(*[per_layer(p) for p in layer_params]))
    return tuple(jnp.stack(list(c)) for c in cols)


# ---------------------------- pure-JAX reference -----------------------------
def reference_layer(x, params):
    (wq, bq, wk, bk, wv, bv, wo, bo, g1, be1, w1, b1, w2, b2, g2, be2) = params

    def ln(z, g, b):
        mean = jnp.mean(z, axis=-1, keepdims=True)
        var = jnp.sum((z - mean) ** 2, axis=-1, keepdims=True) / (z.shape[-1] - 1)
        return ((z - mean) / jnp.sqrt(var) + EPS) * g + b

    q = x @ wq + bq
    k = x @ wk + bk
    v = x @ wv + bv

    def split(t):  # [B,S,H] -> [B,nh,S,d]
        return t.reshape(B, S, NUM_HEADS, HEAD_DIM).transpose(0, 2, 1, 3)

    qh, kh, vh = split(q), split(k), split(v)
    scores = jnp.einsum('bhqd,bhkd->bhqk', qh, kh) * SCALING
    p = jax.nn.softmax(scores, axis=-1)
    attn = jnp.einsum('bhqk,bhkd->bhqd', p, vh)
    attn = attn.transpose(0, 2, 1, 3).reshape(B, S, H)
    attn = attn @ wo + bo

    x1 = ln(x + attn, g1, be1)
    f = jnp.maximum(x1 @ w1 + b1, 0.0) @ w2 + b2
    return ln(x1 + f, g2, be2)


if __name__ == "__main__":
    root = jax.random.PRNGKey(0)
    kx, *layer_keys = jax.random.split(root, NUM_LAYERS + 1)

    x = jax.random.normal(kx, (B, S, H), dtype=jnp.float32)
    layer_params = [init_layer_params(k) for k in layer_keys]
    stacked = stack_layer_params(layer_params)

    outs = transformer_encoder(x, stacked)
    outs = jax.block_until_ready(outs)

    # correctness check against pure-JAX reference of the module's semantics
    ref = x
    for i, params in enumerate(layer_params):
        ref = reference_layer(ref, params)
        assert jnp.allclose(outs[i], ref, rtol=1e-4, atol=1e-4), f"mismatch at layer {i}"

    print("KERNEL_OK")
</pallas_src>

<mosaic_0001>
module attributes {stable_mosaic.version = 11 : i64} {
  func.func @encoder_stack_kernel(%arg0: memref<16x32xf32, #tpu.memory_space<vmem>>, %arg1: memref<2x8x32x8xf32, #tpu.memory_space<vmem>>, %arg2: memref<2x8x32x8xf32, #tpu.memory_space<vmem>>, %arg3: memref<2x8x32x8xf32, #tpu.memory_space<vmem>>, %arg4: memref<2x8x1x8xf32, #tpu.memory_space<vmem>>, %arg5: memref<2x8x1x8xf32, #tpu.memory_space<vmem>>, %arg6: memref<2x8x1x8xf32, #tpu.memory_space<vmem>>, %arg7: memref<2x8x8x32xf32, #tpu.memory_space<vmem>>, %arg8: memref<2x32x64xf32, #tpu.memory_space<vmem>>, %arg9: memref<2x1x64xf32, #tpu.memory_space<vmem>>, %arg10: memref<2x64x32xf32, #tpu.memory_space<vmem>>, %arg11: memref<2x8x32xf32, #tpu.memory_space<vmem>>, %arg12: memref<2x16x32xf32, #tpu.memory_space<vmem>>) attributes {dimension_semantics = [], scalar_prefetch = 0 : i64, scratch_operands = 0 : i64, tpu.core_type = #tpu.core_type<tc>} {
    %c0 = arith.constant 0 : index
    %c0_0 = arith.constant 0 : index
    %0 = vector.load %arg0[%c0, %c0_0] : memref<16x32xf32, #tpu.memory_space<vmem>>, vector<16x32xf32>
    %1 = vector.shape_cast %0 : vector<16x32xf32> to vector<2x8x32xf32>
    %2 = tpu.concatenate %1, %1, %1, %1 in 0 : vector<2x8x32xf32>, vector<2x8x32xf32>, vector<2x8x32xf32>, vector<2x8x32xf32> -> vector<8x8x32xf32>
    %c0_1 = arith.constant 0 : index
    %c0_2 = arith.constant 0 : index
    %c0_3 = arith.constant 0 : index
    %c0_4 = arith.constant 0 : index
    %3 = vector.load %arg1[%c0_1, %c0_2, %c0_3, %c0_4] : memref<2x8x32x8xf32, #tpu.memory_space<vmem>>, vector<1x8x32x8xf32>
    %4 = vector.shape_cast %3 : vector<1x8x32x8xf32> to vector<8x32x8xf32>
    "tpu.trace_start"() <{level = 10 : i32, message = "gsn,gnd->gsd"}> : () -> ()
    %cst = arith.constant dense<0.000000e+00> : vector<8x8x8xf32>
    %5 = tpu.matmul %2, %4, %cst {dimension_numbers = #tpu.dot_dimension_numbers<[2], [1], [1], [2], [0, 0, 0, 1, 1, 2], [0], [0]>} : vector<8x8x32xf32>, vector<8x32x8xf32>, vector<8x8x8xf32> -> vector<8x8x8xf32>
    "tpu.trace_stop"() : () -> ()
    %c0_5 = arith.constant 0 : index
    %c0_6 = arith.constant 0 : index
    %c0_7 = arith.constant 0 : index
    %c0_8 = arith.constant 0 : index
    %6 = vector.load %arg4[%c0_5, %c0_6, %c0_7, %c0_8] : memref<2x8x1x8xf32, #tpu.memory_space<vmem>>, vector<1x8x1x8xf32>
    %7 = vector.shape_cast %6 : vector<1x8x1x8xf32> to vector<8x1x8xf32>
    %8 = vector.broadcast %7 : vector<8x1x8xf32> to vector<8x8x8xf32>
    %9 = arith.addf %5, %8 : vector<8x8x8xf32>
    %c0_9 = arith.constant 0 : index
    %c0_10 = arith.constant 0 : index
    %c0_11 = arith.constant 0 : index
    %c0_12 = arith.constant 0 : index
    %10 = vector.load %arg2[%c0_9, %c0_10, %c0_11, %c0_12] : memref<2x8x32x8xf32, #tpu.memory_space<vmem>>, vector<1x8x32x8xf32>
    %11 = vector.shape_cast %10 : vector<1x8x32x8xf32> to vector<8x32x8xf32>
    "tpu.trace_start"() <{level = 10 : i32, message = "gsn,gnd->gsd"}> : () -> ()
    %cst_13 = arith.constant dense<0.000000e+00> : vector<8x8x8xf32>
    %12 = tpu.matmul %2, %11, %cst_13 {dimension_numbers = #tpu.dot_dimension_numbers<[2], [1], [1], [2], [0, 0, 0, 1, 1, 2], [0], [0]>} : vector<8x8x32xf32>, vector<8x32x8xf32>, vector<8x8x8xf32> -> vector<8x8x8xf32>
    "tpu.trace_stop"() : () -> ()
    %c0_14 = arith.constant 0 : index
    %c0_15 = arith.constant 0 : index
    %c0_16 = arith.constant 0 : index
    %c0_17 = arith.constant 0 : index
    %13 = vector.load %arg5[%c0_14, %c0_15, %c0_16, %c0_17] : memref<2x8x1x8xf32, #tpu.memory_space<vmem>>, vector<1x8x1x8xf32>
    %14 = vector.shape_cast %13 : vector<1x8x1x8xf32> to vector<8x1x8xf32>
    %15 = vector.broadcast %14 : vector<8x1x8xf32> to vector<8x8x8xf32>
    %16 = arith.addf %12, %15 : vector<8x8x8xf32>
    %c0_18 = arith.constant 0 : index
    %c0_19 = arith.constant 0 : index
    %c0_20 = arith.constant 0 : index
    %c0_21 = arith.constant 0 : index
    %17 = vector.load %arg3[%c0_18, %c0_19, %c0_20, %c0_21] : memref<2x8x32x8xf32, #tpu.memory_space<vmem>>, vector<1x8x32x8xf32>
    %18 = vector.shape_cast %17 : vector<1x8x32x8xf32> to vector<8x32x8xf32>
    "tpu.trace_start"() <{level = 10 : i32, message = "gsn,gnd->gsd"}> : () -> ()
    %cst_22 = arith.constant dense<0.000000e+00> : vector<8x8x8xf32>
    %19 = tpu.matmul %2, %18, %cst_22 {dimension_numbers = #tpu.dot_dimension_numbers<[2], [1], [1], [2], [0, 0, 0, 1, 1, 2], [0], [0]>} : vector<8x8x32xf32>, vector<8x32x8xf32>, vector<8x8x8xf32> -> vector<8x8x8xf32>
    "tpu.trace_stop"() : () -> ()
    %c0_23 = arith.constant 0 : index
    %c0_24 = arith.constant 0 : index
    %c0_25 = arith.constant 0 : index
    %c0_26 = arith.constant 0 : index
    %20 = vector.load %arg6[%c0_23, %c0_24, %c0_25, %c0_26] : memref<2x8x1x8xf32, #tpu.memory_space<vmem>>, vector<1x8x1x8xf32>
    %21 = vector.shape_cast %20 : vector<1x8x1x8xf32> to vector<8x1x8xf32>
    %22 = vector.broadcast %21 : vector<8x1x8xf32> to vector<8x8x8xf32>
    %23 = arith.addf %19, %22 : vector<8x8x8xf32>
    "tpu.trace_start"() <{level = 10 : i32, message = "gqd,gkd->gqk"}> : () -> ()
    %cst_27 = arith.constant dense<0.000000e+00> : vector<8x8x8xf32>
    %24 = tpu.matmul %9, %16, %cst_27 {dimension_numbers = #tpu.dot_dimension_numbers<[2], [2], [1], [1], [0, 0, 0, 1, 1, 1], [0], [0]>} : vector<8x8x8xf32>, vector<8x8x8xf32>, vector<8x8x8xf32> -> vector<8x8x8xf32>
    "tpu.trace_stop"() : () -> ()
    %cst_28 = arith.constant dense<0xFF800000> : vector<8x8xf32>
    %25 = vector.multi_reduction <maximumf>, %24, %cst_28 [2] : vector<8x8x8xf32> to vector<8x8xf32>
    %26 = vector.shape_cast %25 : vector<8x8xf32> to vector<8x8x1xf32>
    %27 = vector.broadcast %26 : vector<8x8x1xf32> to vector<8x8x8xf32>
    %28 = arith.subf %24, %27 : vector<8x8x8xf32>
    %29 = math.exp %28 : vector<8x8x8xf32>
    %cst_29 = arith.constant dense<0.000000e+00> : vector<8x8xf32>
    %30 = vector.multi_reduction <add>, %29, %cst_29 [2] : vector<8x8x8xf32> to vector<8x8xf32>
    %31 = vector.shape_cast %30 : vector<8x8xf32> to vector<8x8x1xf32>
    %32 = tpu.reciprocal %31 : vector<8x8x1xf32> -> vector<8x8x1xf32>
    %33 = vector.broadcast %32 : vector<8x8x1xf32> to vector<8x8x8xf32>
    %34 = arith.mulf %29, %33 : vector<8x8x8xf32>
    "tpu.trace_start"() <{level = 10 : i32, message = "gqk,gkd->gqd"}> : () -> ()
    %cst_30 = arith.constant dense<0.000000e+00> : vector<8x8x8xf32>
    %35 = tpu.matmul %34, %23, %cst_30 {dimension_numbers = #tpu.dot_dimension_numbers<[2], [1], [1], [2], [0, 0, 0, 1, 1, 2], [0], [0]>} : vector<8x8x8xf32>, vector<8x8x8xf32>, vector<8x8x8xf32> -> vector<8x8x8xf32>
    "tpu.trace_stop"() : () -> ()
    %c0_31 = arith.constant 0 : index
    %c0_32 = arith.constant 0 : index
    %c0_33 = arith.constant 0 : index
    %c0_34 = arith.constant 0 : index
    %36 = vector.load %arg7[%c0_31, %c0_32, %c0_33, %c0_34] : memref<2x8x8x32xf32, #tpu.memory_space<vmem>>, vector<1x8x8x32xf32>
    %37 = vector.shape_cast %36 : vector<1x8x8x32xf32> to vector<8x8x32xf32>
    "tpu.trace_start"() <{level = 10 : i32, message = "gsd,gdm->gsm"}> : () -> ()
    %cst_35 = arith.constant dense<0.000000e+00> : vector<8x8x32xf32>
    %38 = tpu.matmul %35, %37, %cst_35 {dimension_numbers = #tpu.dot_dimension_numbers<[2], [1], [1], [2], [0, 0, 0, 1, 1, 2], [0], [0]>} : vector<8x8x8xf32>, vector<8x8x32xf32>, vector<8x8x32xf32> -> vector<8x8x32xf32>
    "tpu.trace_stop"() : () -> ()
    %39 = vector.extract_strided_slice %38 {offsets = [0, 0, 0], sizes = [2, 8, 32], strides = [1, 1, 1]} : vector<8x8x32xf32> to vector<2x8x32xf32>
    %40 = vector.extract_strided_slice %38 {offsets = [2, 0, 0], sizes = [2, 8, 32], strides = [1, 1, 1]} : vector<8x8x32xf32> to vector<2x8x32xf32>
    %41 = arith.addf %39, %40 : vector<2x8x32xf32>
    %42 = vector.extract_strided_slice %38 {offsets = [4, 0, 0], sizes = [2, 8, 32], strides = [1, 1, 1]} : vector<8x8x32xf32> to vector<2x8x32xf32>
    %43 = arith.addf %41, %42 : vector<2x8x32xf32>
    %44 = vector.extract_strided_slice %38 {offsets = [6, 0, 0], sizes = [2, 8, 32], strides = [1, 1, 1]} : vector<8x8x32xf32> to vector<2x8x32xf32>
    %45 = arith.addf %43, %44 : vector<2x8x32xf32>
    %46 = vector.shape_cast %45 : vector<2x8x32xf32> to vector<16x32xf32>
    %c0_36 = arith.constant 0 : index
    %c0_37 = arith.constant 0 : index
    %c0_38 = arith.constant 0 : index
    %47 = vector.load %arg11[%c0_36, %c0_37, %c0_38] : memref<2x8x32xf32, #tpu.memory_space<vmem>>, vector<1x8x32xf32>
    %48 = vector.shape_cast %47 : vector<1x8x32xf32> to vector<8x32xf32>
    %49 = vector.extract_strided_slice %48 {offsets = [0, 0], sizes = [1, 32], strides = [1, 1]} : vector<8x32xf32> to vector<1x32xf32>
    %50 = vector.extract_strided_slice %48 {offsets = [1, 0], sizes = [1, 32], strides = [1, 1]} : vector<8x32xf32> to vector<1x32xf32>
    %51 = vector.extract_strided_slice %48 {offsets = [2, 0], sizes = [1, 32], strides = [1, 1]} : vector<8x32xf32> to vector<1x32xf32>
    %52 = vector.extract_strided_slice %48 {offsets = [3, 0], sizes = [1, 32], strides = [1, 1]} : vector<8x32xf32> to vector<1x32xf32>
    %53 = vector.extract_strided_slice %48 {offsets = [4, 0], sizes = [1, 32], strides = [1, 1]} : vector<8x32xf32> to vector<1x32xf32>
    %54 = vector.extract_strided_slice %48 {offsets = [5, 0], sizes = [1, 32], strides = [1, 1]} : vector<8x32xf32> to vector<1x32xf32>
    %55 = arith.addf %0, %46 : vector<16x32xf32>
    %56 = vector.broadcast %49 : vector<1x32xf32> to vector<16x32xf32>
    %57 = arith.addf %55, %56 : vector<16x32xf32>
    %cst_39 = arith.constant dense<0.000000e+00> : vector<16xf32>
    %58 = vector.multi_reduction <add>, %57, %cst_39 [1] : vector<16x32xf32> to vector<16xf32>
    %59 = vector.shape_cast %58 : vector<16xf32> to vector<16x1xf32>
    %cst_40 = arith.constant 3.200000e+01 : f32
    %60 = vector.broadcast %cst_40 : f32 to vector<16x1xf32>
    %61 = arith.divf %59, %60 : vector<16x1xf32>
    %62 = vector.broadcast %61 : vector<16x1xf32> to vector<16x32xf32>
    %63 = arith.subf %57, %62 : vector<16x32xf32>
    %64 = arith.mulf %63, %63 : vector<16x32xf32>
    %cst_41 = arith.constant dense<0.000000e+00> : vector<16xf32>
    %65 = vector.multi_reduction <add>, %64, %cst_41 [1] : vector<16x32xf32> to vector<16xf32>
    %66 = vector.shape_cast %65 : vector<16xf32> to vector<16x1xf32>
    %cst_42 = arith.constant 0.0322580636 : f32
    %67 = vector.broadcast %cst_42 : f32 to vector<16x1xf32>
    %68 = arith.mulf %66, %67 : vector<16x1xf32>
    %69 = math.rsqrt %68 : vector<16x1xf32>
    %70 = vector.broadcast %69 : vector<16x1xf32> to vector<16x32xf32>
    %71 = arith.mulf %63, %70 : vector<16x32xf32>
    %cst_43 = arith.constant 9.99999974E-6 : f32
    %72 = vector.broadcast %cst_43 : f32 to vector<16x32xf32>
    %73 = arith.addf %71, %72 : vector<16x32xf32>
    %74 = vector.broadcast %51 : vector<1x32xf32> to vector<16x32xf32>
    %75 = arith.mulf %73, %74 : vector<16x32xf32>
    %76 = vector.broadcast %52 : vector<1x32xf32> to vector<16x32xf32>
    %77 = arith.addf %75, %76 : vector<16x32xf32>
    %c0_44 = arith.constant 0 : index
    %c0_45 = arith.constant 0 : index
    %c0_46 = arith.constant 0 : index
    %78 = vector.load %arg8[%c0_44, %c0_45, %c0_46] : memref<2x32x64xf32, #tpu.memory_space<vmem>>, vector<1x32x64xf32>
    %79 = vector.shape_cast %78 : vector<1x32x64xf32> to vector<32x64xf32>
    %cst_47 = arith.constant dense<0.000000e+00> : vector<16x64xf32>
    %80 = tpu.matmul %77, %79, %cst_47 {dimension_numbers = #tpu.dot_dimension_numbers<[1], [0], [0], [1], [0, 0, 1, 1], [], []>} : vector<16x32xf32>, vector<32x64xf32>, vector<16x64xf32> -> vector<16x64xf32>
    %c0_48 = arith.constant 0 : index
    %c0_49 = arith.constant 0 : index
    %c0_50 = arith.constant 0 : index
    %81 = vector.load %arg9[%c0_48, %c0_49, %c0_50] : memref<2x1x64xf32, #tpu.memory_space<vmem>>, vector<1x1x64xf32>
    %82 = vector.shape_cast %81 : vector<1x1x64xf32> to vector<1x64xf32>
    %83 = vector.broadcast %82 : vector<1x64xf32> to vector<16x64xf32>
    %84 = arith.addf %80, %83 : vector<16x64xf32>
    %cst_51 = arith.constant 0.000000e+00 : f32
    %85 = vector.broadcast %cst_51 : f32 to vector<16x64xf32>
    %86 = arith.maximumf %84, %85 : vector<16x64xf32>
    %c0_52 = arith.constant 0 : index
    %c0_53 = arith.constant 0 : index
    %c0_54 = arith.constant 0 : index
    %87 = vector.load %arg10[%c0_52, %c0_53, %c0_54] : memref<2x64x32xf32, #tpu.memory_space<vmem>>, vector<1x64x32xf32>
    %88 = vector.shape_cast %87 : vector<1x64x32xf32> to vector<64x32xf32>
    %cst_55 = arith.constant dense<0.000000e+00> : vector<16x32xf32>
    %89 = tpu.matmul %86, %88, %cst_55 {dimension_numbers = #tpu.dot_dimension_numbers<[1], [0], [0], [1], [0, 0, 1, 1], [], []>} : vector<16x64xf32>, vector<64x32xf32>, vector<16x32xf32> -> vector<16x32xf32>
    %90 = vector.broadcast %50 : vector<1x32xf32> to vector<16x32xf32>
    %91 = arith.addf %89, %90 : vector<16x32xf32>
    %92 = arith.addf %77, %91 : vector<16x32xf32>
    %cst_56 = arith.constant dense<0.000000e+00> : vector<16xf32>
    %93 = vector.multi_reduction <add>, %92, %cst_56 [1] : vector<16x32xf32> to vector<16xf32>
    %94 = vector.shape_cast %93 : vector<16xf32> to vector<16x1xf32>
    %cst_57 = arith.constant 3.200000e+01 : f32
    %95 = vector.broadcast %cst_57 : f32 to vector<16x1xf32>
    %96 = arith.divf %94, %95 : vector<16x1xf32>
    %97 = vector.broadcast %96 : vector<16x1xf32> to vector<16x32xf32>
    %98 = arith.subf %92, %97 : vector<16x32xf32>
    %99 = arith.mulf %98, %98 : vector<16x32xf32>
    %cst_58 = arith.constant dense<0.000000e+00> : vector<16xf32>
    %100 = vector.multi_reduction <add>, %99, %cst_58 [1] : vector<16x32xf32> to vector<16xf32>
    %101 = vector.shape_cast %100 : vector<16xf32> to vector<16x1xf32>
    %cst_59 = arith.constant 0.0322580636 : f32
    %102 = vector.broadcast %cst_59 : f32 to vector<16x1xf32>
    %103 = arith.mulf %101, %102 : vector<16x1xf32>
    %104 = math.rsqrt %103 : vector<16x1xf32>
    %105 = vector.broadcast %104 : vector<16x1xf32> to vector<16x32xf32>
    %106 = arith.mulf %98, %105 : vector<16x32xf32>
    %cst_60 = arith.constant 9.99999974E-6 : f32
    %107 = vector.broadcast %cst_60 : f32 to vector<16x32xf32>
    %108 = arith.addf %106, %107 : vector<16x32xf32>
    %109 = vector.broadcast %53 : vector<1x32xf32> to vector<16x32xf32>
    %110 = arith.mulf %108, %109 : vector<16x32xf32>
    %111 = vector.broadcast %54 : vector<1x32xf32> to vector<16x32xf32>
    %112 = arith.addf %110, %111 : vector<16x32xf32>
    %c0_61 = arith.constant 0 : index
    %c0_62 = arith.constant 0 : index
    %c0_63 = arith.constant 0 : index
    %113 = vector.load %arg12[%c0_61, %c0_62, %c0_63] : memref<2x16x32xf32, #tpu.memory_space<vmem>>, vector<1x16x32xf32>
    %114 = vector.shape_cast %113 : vector<1x16x32xf32> to vector<16x32xf32>
    %115 = vector.shape_cast %112 : vector<16x32xf32> to vector<1x16x32xf32>
    tpu.vector_store %arg12[%c0_61, %c0_62, %c0_63], %115 {strides = array<i32>} : memref<2x16x32xf32, #tpu.memory_space<vmem>>, vector<1x16x32xf32>,
    %116 = vector.shape_cast %112 : vector<16x32xf32> to vector<2x8x32xf32>
    %117 = tpu.concatenate %116, %116, %116, %116 in 0 : vector<2x8x32xf32>, vector<2x8x32xf32>, vector<2x8x32xf32>, vector<2x8x32xf32> -> vector<8x8x32xf32>
    %c1 = arith.constant 1 : index
    %c0_64 = arith.constant 0 : index
    %c0_65 = arith.constant 0 : index
    %c0_66 = arith.constant 0 : index
    %118 = vector.load %arg1[%c1, %c0_64, %c0_65, %c0_66] : memref<2x8x32x8xf32, #tpu.memory_space<vmem>>, vector<1x8x32x8xf32>
    %119 = vector.shape_cast %118 : vector<1x8x32x8xf32> to vector<8x32x8xf32>
    "tpu.trace_start"() <{level = 10 : i32, message = "gsn,gnd->gsd"}> : () -> ()
    %cst_67 = arith.constant dense<0.000000e+00> : vector<8x8x8xf32>
    %120 = tpu.matmul %117, %119, %cst_67 {dimension_numbers = #tpu.dot_dimension_numbers<[2], [1], [1], [2], [0, 0, 0, 1, 1, 2], [0], [0]>} : vector<8x8x32xf32>, vector<8x32x8xf32>, vector<8x8x8xf32> -> vector<8x8x8xf32>
    "tpu.trace_stop"() : () -> ()
    %c1_68 = arith.constant 1 : index
    %c0_69 = arith.constant 0 : index
    %c0_70 = arith.constant 0 : index
    %c0_71 = arith.constant 0 : index
    %121 = vector.load %arg4[%c1_68, %c0_69, %c0_70, %c0_71] : memref<2x8x1x8xf32, #tpu.memory_space<vmem>>, vector<1x8x1x8xf32>
    %122 = vector.shape_cast %121 : vector<1x8x1x8xf32> to vector<8x1x8xf32>
    %123 = vector.broadcast %122 : vector<8x1x8xf32> to vector<8x8x8xf32>
    %124 = arith.addf %120, %123 : vector<8x8x8xf32>
    %c1_72 = arith.constant 1 : index
    %c0_73 = arith.constant 0 : index
    %c0_74 = arith.constant 0 : index
    %c0_75 = arith.constant 0 : index
    %125 = vector.load %arg2[%c1_72, %c0_73, %c0_74, %c0_75] : memref<2x8x32x8xf32, #tpu.memory_space<vmem>>, vector<1x8x32x8xf32>
    %126 = vector.shape_cast %125 : vector<1x8x32x8xf32> to vector<8x32x8xf32>
    "tpu.trace_start"() <{level = 10 : i32, message = "gsn,gnd->gsd"}> : () -> ()
    %cst_76 = arith.constant dense<0.000000e+00> : vector<8x8x8xf32>
    %127 = tpu.matmul %117, %126, %cst_76 {dimension_numbers = #tpu.dot_dimension_numbers<[2], [1], [1], [2], [0, 0, 0, 1, 1, 2], [0], [0]>} : vector<8x8x32xf32>, vector<8x32x8xf32>, vector<8x8x8xf32> -> vector<8x8x8xf32>
    "tpu.trace_stop"() : () -> ()
    %c1_77 = arith.constant 1 : index
    %c0_78 = arith.constant 0 : index
    %c0_79 = arith.constant 0 : index
    %c0_80 = arith.constant 0 : index
    %128 = vector.load %arg5[%c1_77, %c0_78, %c0_79, %c0_80] : memref<2x8x1x8xf32, #tpu.memory_space<vmem>>, vector<1x8x1x8xf32>
    %129 = vector.shape_cast %128 : vector<1x8x1x8xf32> to vector<8x1x8xf32>
    %130 = vector.broadcast %129 : vector<8x1x8xf32> to vector<8x8x8xf32>
    %131 = arith.addf %127, %130 : vector<8x8x8xf32>
    %c1_81 = arith.constant 1 : index
    %c0_82 = arith.constant 0 : index
    %c0_83 = arith.constant 0 : index
    %c0_84 = arith.constant 0 : index
    %132 = vector.load %arg3[%c1_81, %c0_82, %c0_83, %c0_84] : memref<2x8x32x8xf32, #tpu.memory_space<vmem>>, vector<1x8x32x8xf32>
    %133 = vector.shape_cast %132 : vector<1x8x32x8xf32> to vector<8x32x8xf32>
    "tpu.trace_start"() <{level = 10 : i32, message = "gsn,gnd->gsd"}> : () -> ()
    %cst_85 = arith.constant dense<0.000000e+00> : vector<8x8x8xf32>
    %134 = tpu.matmul %117, %133, %cst_85 {dimension_numbers = #tpu.dot_dimension_numbers<[2], [1], [1], [2], [0, 0, 0, 1, 1, 2], [0], [0]>} : vector<8x8x32xf32>, vector<8x32x8xf32>, vector<8x8x8xf32> -> vector<8x8x8xf32>
    "tpu.trace_stop"() : () -> ()
    %c1_86 = arith.constant 1 : index
    %c0_87 = arith.constant 0 : index
    %c0_88 = arith.constant 0 : index
    %c0_89 = arith.constant 0 : index
    %135 = vector.load %arg6[%c1_86, %c0_87, %c0_88, %c0_89] : memref<2x8x1x8xf32, #tpu.memory_space<vmem>>, vector<1x8x1x8xf32>
    %136 = vector.shape_cast %135 : vector<1x8x1x8xf32> to vector<8x1x8xf32>
    %137 = vector.broadcast %136 : vector<8x1x8xf32> to vector<8x8x8xf32>
    %138 = arith.addf %134, %137 : vector<8x8x8xf32>
    "tpu.trace_start"() <{level = 10 : i32, message = "gqd,gkd->gqk"}> : () -> ()
    %cst_90 = arith.constant dense<0.000000e+00> : vector<8x8x8xf32>
    %139 = tpu.matmul %124, %131, %cst_90 {dimension_numbers = #tpu.dot_dimension_numbers<[2], [2], [1], [1], [0, 0, 0, 1, 1, 1], [0], [0]>} : vector<8x8x8xf32>, vector<8x8x8xf32>, vector<8x8x8xf32> -> vector<8x8x8xf32>
    "tpu.trace_stop"() : () -> ()
    %cst_91 = arith.constant dense<0xFF800000> : vector<8x8xf32>
    %140 = vector.multi_reduction <maximumf>, %139, %cst_91 [2] : vector<8x8x8xf32> to vector<8x8xf32>
    %141 = vector.shape_cast %140 : vector<8x8xf32> to vector<8x8x1xf32>
    %142 = vector.broadcast %141 : vector<8x8x1xf32> to vector<8x8x8xf32>
    %143 = arith.subf %139, %142 : vector<8x8x8xf32>
    %144 = math.exp %143 : vector<8x8x8xf32>
    %cst_92 = arith.constant dense<0.000000e+00> : vector<8x8xf32>
    %145 = vector.multi_reduction <add>, %144, %cst_92 [2] : vector<8x8x8xf32> to vector<8x8xf32>
    %146 = vector.shape_cast %145 : vector<8x8xf32> to vector<8x8x1xf32>
    %147 = tpu.reciprocal %146 : vector<8x8x1xf32> -> vector<8x8x1xf32>
    %148 = vector.broadcast %147 : vector<8x8x1xf32> to vector<8x8x8xf32>
    %149 = arith.mulf %144, %148 : vector<8x8x8xf32>
    "tpu.trace_start"() <{level = 10 : i32, message = "gqk,gkd->gqd"}> : () -> ()
    %cst_93 = arith.constant dense<0.000000e+00> : vector<8x8x8xf32>
    %150 = tpu.matmul %149, %138, %cst_93 {dimension_numbers = #tpu.dot_dimension_numbers<[2], [1], [1], [2], [0, 0, 0, 1, 1, 2], [0], [0]>} : vector<8x8x8xf32>, vector<8x8x8xf32>, vector<8x8x8xf32> -> vector<8x8x8xf32>
    "tpu.trace_stop"() : () -> ()
    %c1_94 = arith.constant 1 : index
    %c0_95 = arith.constant 0 : index
    %c0_96 = arith.constant 0 : index
    %c0_97 = arith.constant 0 : index
    %151 = vector.load %arg7[%c1_94, %c0_95, %c0_96, %c0_97] : memref<2x8x8x32xf32, #tpu.memory_space<vmem>>, vector<1x8x8x32xf32>
    %152 = vector.shape_cast %151 : vector<1x8x8x32xf32> to vector<8x8x32xf32>
    "tpu.trace_start"() <{level = 10 : i32, message = "gsd,gdm->gsm"}> : () -> ()
    %cst_98 = arith.constant dense<0.000000e+00> : vector<8x8x32xf32>
    %153 = tpu.matmul %150, %152, %cst_98 {dimension_numbers = #tpu.dot_dimension_numbers<[2], [1], [1], [2], [0, 0, 0, 1, 1, 2], [0], [0]>} : vector<8x8x8xf32>, vector<8x8x32xf32>, vector<8x8x32xf32> -> vector<8x8x32xf32>
    "tpu.trace_stop"() : () -> ()
    %154 = vector.extract_strided_slice %153 {offsets = [0, 0, 0], sizes = [2, 8, 32], strides = [1, 1, 1]} : vector<8x8x32xf32> to vector<2x8x32xf32>
    %155 = vector.extract_strided_slice %153 {offsets = [2, 0, 0], sizes = [2, 8, 32], strides = [1, 1, 1]} : vector<8x8x32xf32> to vector<2x8x32xf32>
    %156 = arith.addf %154, %155 : vector<2x8x32xf32>
    %157 = vector.extract_strided_slice %153 {offsets = [4, 0, 0], sizes = [2, 8, 32], strides = [1, 1, 1]} : vector<8x8x32xf32> to vector<2x8x32xf32>
    %158 = arith.addf %156, %157 : vector<2x8x32xf32>
    %159 = vector.extract_strided_slice %153 {offsets = [6, 0, 0], sizes = [2, 8, 32], strides = [1, 1, 1]} : vector<8x8x32xf32> to vector<2x8x32xf32>
    %160 = arith.addf %158, %159 : vector<2x8x32xf32>
    %161 = vector.shape_cast %160 : vector<2x8x32xf32> to vector<16x32xf32>
    %c1_99 = arith.constant 1 : index
    %c0_100 = arith.constant 0 : index
    %c0_101 = arith.constant 0 : index
    %162 = vector.load %arg11[%c1_99, %c0_100, %c0_101] : memref<2x8x32xf32, #tpu.memory_space<vmem>>, vector<1x8x32xf32>
    %163 = vector.shape_cast %162 : vector<1x8x32xf32> to vector<8x32xf32>
    %164 = vector.extract_strided_slice %163 {offsets = [0, 0], sizes = [1, 32], strides = [1, 1]} : vector<8x32xf32> to vector<1x32xf32>
    %165 = vector.extract_strided_slice %163 {offsets = [1, 0], sizes = [1, 32], strides = [1, 1]} : vector<8x32xf32> to vector<1x32xf32>
    %166 = vector.extract_strided_slice %163 {offsets = [2, 0], sizes = [1, 32], strides = [1, 1]} : vector<8x32xf32> to vector<1x32xf32>
    %167 = vector.extract_strided_slice %163 {offsets = [3, 0], sizes = [1, 32], strides = [1, 1]} : vector<8x32xf32> to vector<1x32xf32>
    %168 = vector.extract_strided_slice %163 {offsets = [4, 0], sizes = [1, 32], strides = [1, 1]} : vector<8x32xf32> to vector<1x32xf32>
    %169 = vector.extract_strided_slice %163 {offsets = [5, 0], sizes = [1, 32], strides = [1, 1]} : vector<8x32xf32> to vector<1x32xf32>
    %170 = arith.addf %112, %161 : vector<16x32xf32>
    %171 = vector.broadcast %164 : vector<1x32xf32> to vector<16x32xf32>
    %172 = arith.addf %170, %171 : vector<16x32xf32>
    %cst_102 = arith.constant dense<0.000000e+00> : vector<16xf32>
    %173 = vector.multi_reduction <add>, %172, %cst_102 [1] : vector<16x32xf32> to vector<16xf32>
    %174 = vector.shape_cast %173 : vector<16xf32> to vector<16x1xf32>
    %cst_103 = arith.constant 3.200000e+01 : f32
    %175 = vector.broadcast %cst_103 : f32 to vector<16x1xf32>
    %176 = arith.divf %174, %175 : vector<16x1xf32>
    %177 = vector.broadcast %176 : vector<16x1xf32> to vector<16x32xf32>
    %178 = arith.subf %172, %177 : vector<16x32xf32>
    %179 = arith.mulf %178, %178 : vector<16x32xf32>
    %cst_104 = arith.constant dense<0.000000e+00> : vector<16xf32>
    %180 = vector.multi_reduction <add>, %179, %cst_104 [1] : vector<16x32xf32> to vector<16xf32>
    %181 = vector.shape_cast %180 : vector<16xf32> to vector<16x1xf32>
    %cst_105 = arith.constant 0.0322580636 : f32
    %182 = vector.broadcast %cst_105 : f32 to vector<16x1xf32>
    %183 = arith.mulf %181, %182 : vector<16x1xf32>
    %184 = math.rsqrt %183 : vector<16x1xf32>
    %185 = vector.broadcast %184 : vector<16x1xf32> to vector<16x32xf32>
    %186 = arith.mulf %178, %185 : vector<16x32xf32>
    %cst_106 = arith.constant 9.99999974E-6 : f32
    %187 = vector.broadcast %cst_106 : f32 to vector<16x32xf32>
    %188 = arith.addf %186, %187 : vector<16x32xf32>
    %189 = vector.broadcast %166 : vector<1x32xf32> to vector<16x32xf32>
    %190 = arith.mulf %188, %189 : vector<16x32xf32>
    %191 = vector.broadcast %167 : vector<1x32xf32> to vector<16x32xf32>
    %192 = arith.addf %190, %191 : vector<16x32xf32>
    %c1_107 = arith.constant 1 : index
    %c0_108 = arith.constant 0 : index
    %c0_109 = arith.constant 0 : index
    %193 = vector.load %arg8[%c1_107, %c0_108, %c0_109] : memref<2x32x64xf32, #tpu.memory_space<vmem>>, vector<1x32x64xf32>
    %194 = vector.shape_cast %193 : vector<1x32x64xf32> to vector<32x64xf32>
    %cst_110 = arith.constant dense<0.000000e+00> : vector<16x64xf32>
    %195 = tpu.matmul %192, %194, %cst_110 {dimension_numbers = #tpu.dot_dimension_numbers<[1], [0], [0], [1], [0, 0, 1, 1], [], []>} : vector<16x32xf32>, vector<32x64xf32>, vector<16x64xf32> -> vector<16x64xf32>
    %c1_111 = arith.constant 1 : index
    %c0_112 = arith.constant 0 : index
    %c0_113 = arith.constant 0 : index
    %196 = vector.load %arg9[%c1_111, %c0_112, %c0_113] : memref<2x1x64xf32, #tpu.memory_space<vmem>>, vector<1x1x64xf32>
    %197 = vector.shape_cast %196 : vector<1x1x64xf32> to vector<1x64xf32>
    %198 = vector.broadcast %197 : vector<1x64xf32> to vector<16x64xf32>
    %199 = arith.addf %195, %198 : vector<16x64xf32>
    %cst_114 = arith.constant 0.000000e+00 : f32
    %200 = vector.broadcast %cst_114 : f32 to vector<16x64xf32>
    %201 = arith.maximumf %199, %200 : vector<16x64xf32>
    %c1_115 = arith.constant 1 : index
    %c0_116 = arith.constant 0 : index
    %c0_117 = arith.constant 0 : index
    %202 = vector.load %arg10[%c1_115, %c0_116, %c0_117] : memref<2x64x32xf32, #tpu.memory_space<vmem>>, vector<1x64x32xf32>
    %203 = vector.shape_cast %202 : vector<1x64x32xf32> to vector<64x32xf32>
    %cst_118 = arith.constant dense<0.000000e+00> : vector<16x32xf32>
    %204 = tpu.matmul %201, %203, %cst_118 {dimension_numbers = #tpu.dot_dimension_numbers<[1], [0], [0], [1], [0, 0, 1, 1], [], []>} : vector<16x64xf32>, vector<64x32xf32>, vector<16x32xf32> -> vector<16x32xf32>
    %205 = vector.broadcast %165 : vector<1x32xf32> to vector<16x32xf32>
    %206 = arith.addf %204, %205 : vector<16x32xf32>
    %207 = arith.addf %192, %206 : vector<16x32xf32>
    %cst_119 = arith.constant dense<0.000000e+00> : vector<16xf32>
    %208 = vector.multi_reduction <add>, %207, %cst_119 [1] : vector<16x32xf32> to vector<16xf32>
    %209 = vector.shape_cast %208 : vector<16xf32> to vector<16x1xf32>
    %cst_120 = arith.constant 3.200000e+01 : f32
    %210 = vector.broadcast %cst_120 : f32 to vector<16x1xf32>
    %211 = arith.divf %209, %210 : vector<16x1xf32>
    %212 = vector.broadcast %211 : vector<16x1xf32> to vector<16x32xf32>
    %213 = arith.subf %207, %212 : vector<16x32xf32>
    %214 = arith.mulf %213, %213 : vector<16x32xf32>
    %cst_121 = arith.constant dense<0.000000e+00> : vector<16xf32>
    %215 = vector.multi_reduction <add>, %214, %cst_121 [1] : vector<16x32xf32> to vector<16xf32>
    %216 = vector.shape_cast %215 : vector<16xf32> to vector<16x1xf32>
    %cst_122 = arith.constant 0.0322580636 : f32
    %217 = vector.broadcast %cst_122 : f32 to vector<16x1xf32>
    %218 = arith.mulf %216, %217 : vector<16x1xf32>
    %219 = math.rsqrt %218 : vector<16x1xf32>
    %220 = vector.broadcast %219 : vector<16x1xf32> to vector<16x32xf32>
    %221 = arith.mulf %213, %220 : vector<16x32xf32>
    %cst_123 = arith.constant 9.99999974E-6 : f32
    %222 = vector.broadcast %cst_123 : f32 to vector<16x32xf32>
    %223 = arith.addf %221, %222 : vector<16x32xf32>
    %224 = vector.broadcast %168 : vector<1x32xf32> to vector<16x32xf32>
    %225 = arith.mulf %223, %224 : vector<16x32xf32>
    %226 = vector.broadcast %169 : vector<1x32xf32> to vector<16x32xf32>
    %227 = arith.addf %225, %226 : vector<16x32xf32>
    %c1_124 = arith.constant 1 : index
    %c0_125 = arith.constant 0 : index
    %c0_126 = arith.constant 0 : index
    %228 = vector.load %arg12[%c1_124, %c0_125, %c0_126] : memref<2x16x32xf32, #tpu.memory_space<vmem>>, vector<1x16x32xf32>
    %229 = vector.shape_cast %228 : vector<1x16x32xf32> to vector<16x32xf32>
    %230 = vector.shape_cast %227 : vector<16x32xf32> to vector<1x16x32xf32>
    tpu.vector_store %arg12[%c1_124, %c0_125, %c0_126], %230 {strides = array<i32>} : memref<2x16x32xf32, #tpu.memory_space<vmem>>, vector<1x16x32xf32>,
    return
  }
}

</mosaic_0001>

<llo_original>
// kernel: tpu_custom_call.1
$region0: #{tpu_custom_call.1}
  #allocation0 [shape = 'u32[]', space=smem, size = 0x4, offset = 0x4, fixed_abs, tag = 'smem constant byte address 0x4 - core index']
  #allocation1 [shape = 'u32[144,128]{1,0:T(1,128)}', space=vmem, size = 0x12000, scoped, tag = 'internal scratch']
  %s0 = inlined_call_operand.vmem [shape: f32[16,32], index: 0, kind: input, shape index: {}]
  %s1 = inlined_call_operand.vmem [shape: f32[2,8,32,8], index: 1, kind: input, shape index: {}]
  %s2 = inlined_call_operand.vmem [shape: f32[2,8,32,8], index: 2, kind: input, shape index: {}]
  %s3 = inlined_call_operand.vmem [shape: f32[2,8,32,8], index: 3, kind: input, shape index: {}]
  %s4 = inlined_call_operand.vmem [shape: f32[2,8,1,8], index: 4, kind: input, shape index: {}]
  %s5 = inlined_call_operand.vmem [shape: f32[2,8,1,8], index: 5, kind: input, shape index: {}]
  %s6 = inlined_call_operand.vmem [shape: f32[2,8,1,8], index: 6, kind: input, shape index: {}]
  %s7 = inlined_call_operand.vmem [shape: f32[2,8,8,32], index: 7, kind: input, shape index: {}]
  %s8 = inlined_call_operand.vmem [shape: f32[2,32,64], index: 8, kind: input, shape index: {}]
  %s9 = inlined_call_operand.vmem [shape: f32[2,1,64], index: 9, kind: input, shape index: {}]
  %s10 = inlined_call_operand.vmem [shape: f32[2,64,32], index: 10, kind: input, shape index: {}]
  %s11 = inlined_call_operand.vmem [shape: f32[2,8,32], index: 11, kind: input, shape index: {}]
  %s12 = inlined_call_operand.hbm [shape: f32[2,16,32], index: 12, kind: output, shape index: {}]
  %s13 = sld [smem:[#allocation0]]
  $region58: #{tpu_custom_call.1} parent=0
    _
  %s15 = ssub.s32 1, %s13
  %s16 = scalar_select 0, %s15, %s13
  $region1: #{tpu_custom_call.1} parent=0
    #allocation2 [shape = 'u8[16384]{0}', space=vmem, size = 0x4000, scoped, tag = 'output window, operand 0, single buffered']
    #allocation3 [shape = 's32[1]{0}', space=sflag, size = 0x4, scoped, tag = 'scoped memory for tpu_custom_call.1']
    %17 = vsyncpa [#allocation3], 0
    // Predicated region
    $region2: #{tpu_custom_call.1} parent=1 // pred_check
      _
    $region3: #{tpu_custom_call.1} parent=1 // pred_check_branch
      %19 = sbr.rel (0) target = $region5
    $region4: #{tpu_custom_call.1} parent=1 // pred_region
      _
    $region5: #{tpu_custom_call.1} parent=1 // pred_fallthru
      _
    // Predicated region
    $region6: #{tpu_custom_call.1} parent=1 // pred_check
      _
    $region7: #{tpu_custom_call.1} parent=1 // pred_check_branch
      %21 = sbr.rel (0) target = $region9
    $region8: #{tpu_custom_call.1} parent=1 // pred_region
      _
    $region9: #{tpu_custom_call.1} parent=1 // pred_fallthru
      _
    // Predicated region
    $region10: #{tpu_custom_call.1} parent=1 // pred_check
      _
    $region11: #{tpu_custom_call.1} parent=1 // pred_check_branch
      %23 = sbr.rel (0) target = $region13
    $region12: #{tpu_custom_call.1} parent=1 // pred_region
      _
    $region13: #{tpu_custom_call.1} parent=1 // pred_fallthru
      _
    // Predicated region
    $region14: #{tpu_custom_call.1} parent=1 // pred_check
      _
    $region15: #{tpu_custom_call.1} parent=1 // pred_check_branch
      %25 = sbr.rel (0) target = $region17
    $region16: #{tpu_custom_call.1} parent=1 // pred_region
      _
    $region17: #{tpu_custom_call.1} parent=1 // pred_fallthru
      _
    // Predicated region
    $region18: #{tpu_custom_call.1} parent=1 // pred_check
      _
    $region19: #{tpu_custom_call.1} parent=1 // pred_check_branch
      %27 = sbr.rel (0) target = $region21
    $region20: #{tpu_custom_call.1} parent=1 // pred_region
      _
    $region21: #{tpu_custom_call.1} parent=1 // pred_fallthru
      _
    // Predicated region
    $region22: #{tpu_custom_call.1} parent=1 // pred_check
      _
    $region23: #{tpu_custom_call.1} parent=1 // pred_check_branch
      %29 = sbr.rel (0) target = $region25
    $region24: #{tpu_custom_call.1} parent=1 // pred_region
      _
    $region25: #{tpu_custom_call.1} parent=1 // pred_fallthru
      _
    // Predicated region
    $region26: #{tpu_custom_call.1} parent=1 // pred_check
      _
    $region27: #{tpu_custom_call.1} parent=1 // pred_check_branch
      %31 = sbr.rel (0) target = $region29
    $region28: #{tpu_custom_call.1} parent=1 // pred_region
      _
    $region29: #{tpu_custom_call.1} parent=1 // pred_fallthru
      _
    // Predicated region
    $region30: #{tpu_custom_call.1} parent=1 // pred_check
      _
    $region31: #{tpu_custom_call.1} parent=1 // pred_check_branch
      %33 = sbr.rel (0) target = $region33
    $region32: #{tpu_custom_call.1} parent=1 // pred_region
      _
    $region33: #{tpu_custom_call.1} parent=1 // pred_fallthru
      _
    // Predicated region
    $region34: #{tpu_custom_call.1} parent=1 // pred_check
      _
    $region35: #{tpu_custom_call.1} parent=1 // pred_check_branch
      %35 = sbr.rel (0) target = $region37
    $region36: #{tpu_custom_call.1} parent=1 // pred_region
      _
    $region37: #{tpu_custom_call.1} parent=1 // pred_fallthru
      _
    // Predicated region
    $region38: #{tpu_custom_call.1} parent=1 // pred_check
      _
    $region39: #{tpu_custom_call.1} parent=1 // pred_check_branch
      %37 = sbr.rel (0) target = $region41
    $region40: #{tpu_custom_call.1} parent=1 // pred_region
      _
    $region41: #{tpu_custom_call.1} parent=1 // pred_fallthru
      _
    // Predicated region
    $region42: #{tpu_custom_call.1} parent=1 // pred_check
      _
    $region43: #{tpu_custom_call.1} parent=1 // pred_check_branch
      %39 = sbr.rel (0) target = $region45
    $region44: #{tpu_custom_call.1} parent=1 // pred_region
      _
    $region45: #{tpu_custom_call.1} parent=1 // pred_fallthru
      _
    // Predicated region
    $region46: #{tpu_custom_call.1} parent=1 // pred_check
      _
    $region47: #{tpu_custom_call.1} parent=1 // pred_check_branch
      %41 = sbr.rel (0) target = $region49
    $region48: #{tpu_custom_call.1} parent=1 // pred_region
      _
    $region49: #{tpu_custom_call.1} parent=1 // pred_fallthru
      _
    %v42 = vld [vmem:[%s0] sm:$0xff]
    %v43 = vld [vmem:[%s0 + $0x8] sm:$0xff]
    %v44 = vld [vmem:[%s1] sm:$0xff]
    %v45 = vld [vmem:[%s1 + $0x8] sm:$0xff]
    %v46 = vld [vmem:[%s1 + $0x10] sm:$0xff]
    %v47 = vld [vmem:[%s1 + $0x18] sm:$0xff]
    %v48 = vld [vmem:[%s1 + $0x20] sm:$0xff]
    %v49 = vld [vmem:[%s1 + $0x28] sm:$0xff]
    %v50 = vld [vmem:[%s1 + $0x30] sm:$0xff]
    %v51 = vld [vmem:[%s1 + $0x38] sm:$0xff]
    %v52 = vld [vmem:[%s1 + $0x40] sm:$0xff]
    %v53 = vld [vmem:[%s1 + $0x48] sm:$0xff]
    %v54 = vld [vmem:[%s1 + $0x50] sm:$0xff]
    %v55 = vld [vmem:[%s1 + $0x58] sm:$0xff]
    %v56 = vld [vmem:[%s1 + $0x60] sm:$0xff]
    %v57 = vld [vmem:[%s1 + $0x68] sm:$0xff]
    %v58 = vld [vmem:[%s1 + $0x70] sm:$0xff]
    %v59 = vld [vmem:[%s1 + $0x78] sm:$0xff]
    %v60 = vld [vmem:[%s1 + $0x80] sm:$0xff]
    %v61 = vld [vmem:[%s1 + $0x88] sm:$0xff]
    %v62 = vld [vmem:[%s1 + $0x90] sm:$0xff]
    %v63 = vld [vmem:[%s1 + $0x98] sm:$0xff]
    %v64 = vld [vmem:[%s1 + $0xa0] sm:$0xff]
    %v65 = vld [vmem:[%s1 + $0xa8] sm:$0xff]
    %v66 = vld [vmem:[%s1 + $0xb0] sm:$0xff]
    %v67 = vld [vmem:[%s1 + $0xb8] sm:$0xff]
    %v68 = vld [vmem:[%s1 + $0xc0] sm:$0xff]
    %v69 = vld [vmem:[%s1 + $0xc8] sm:$0xff]
    %v70 = vld [vmem:[%s1 + $0xd0] sm:$0xff]
    %v71 = vld [vmem:[%s1 + $0xd8] sm:$0xff]
    %v72 = vld [vmem:[%s1 + $0xe0] sm:$0xff]
    %v73 = vld [vmem:[%s1 + $0xe8] sm:$0xff]
    %v74 = vld [vmem:[%s1 + $0xf0] sm:$0xff]
    %v75 = vld [vmem:[%s1 + $0xf8] sm:$0xff]
    %v76 = vld [vmem:[%s4] sm:$0x1]
    %v77 = vld [vmem:[%s4 + $0x1] sm:$0x1]
    %v78 = vld [vmem:[%s4 + $0x2] sm:$0x1]
    %v79 = vld [vmem:[%s4 + $0x3] sm:$0x1]
    %v80 = vld [vmem:[%s4 + $0x4] sm:$0x1]
    %v81 = vld [vmem:[%s4 + $0x5] sm:$0x1]
    %v82 = vld [vmem:[%s4 + $0x6] sm:$0x1]
    %v83 = vld [vmem:[%s4 + $0x7] sm:$0x1]
    %v92 = vlaneseq
    %v93 = vshrl.u32 %v92, 7
    %v94 = vsub.s32 0, %v93
    %v95 = vrot.slane %v76, %v94
    %v96 = vlaneseq
    %v97 = vshrl.u32 %v96, 7
    %v98 = vsub.s32 0, %v97
    %v99 = vrot.slane %v77, %v98
    %v100 = vlaneseq
    %v101 = vshrl.u32 %v100, 7
    %v102 = vsub.s32 0, %v101
    %v103 = vrot.slane %v78, %v102
    %v104 = vlaneseq
    %v105 = vshrl.u32 %v104, 7
    %v106 = vsub.s32 0, %v105
    %v107 = vrot.slane %v79, %v106
    %v108 = vlaneseq
    %v109 = vshrl.u32 %v108, 7
    %v110 = vsub.s32 0, %v109
    %v111 = vrot.slane %v80, %v110
    %v112 = vlaneseq
    %v113 = vshrl.u32 %v112, 7
    %v114 = vsub.s32 0, %v113
    %v115 = vrot.slane %v81, %v114
    %v116 = vlaneseq
    %v117 = vshrl.u32 %v116, 7
    %v118 = vsub.s32 0, %v117
    %v119 = vrot.slane %v82, %v118
    %v120 = vlaneseq
    %v121 = vshrl.u32 %v120, 7
    %v122 = vsub.s32 0, %v121
    %v123 = vrot.slane %v83, %v122
    %vm132 = vcmask 261120
    %v134 = vsel %vm132, %v42, 0
    %136 = vmatprep.subr.mxu0 0.0
    %137 = vmatpush1.msra.mxu0 %v44
    %138 = vmatprep.subr.mxu0 0.0
    %139 = vmatpush1.msra.mxu0 %v45
    %140 = vmatprep.subr.mxu0 0.0
    %141 = vmatpush1.msra.mxu0 %v46
    %142 = vmatprep.subr.mxu0 0.0
    %143 = vmatpush1.msra.mxu0 %v47
    %144 = vmatprep.subr.mxu0 0.0
    %145 = vmatpush1.msra.mxu0 0.0
    %146 = vmatprep.subr.mxu0 0.0
    %147 = vmatpush1.msra.mxu0 0.0
    %148 = vmatprep.subr.mxu0 0.0
    %149 = vmatpush1.msra.mxu0 0.0
    %150 = vmatprep.subr.mxu0 0.0
    %151 = vmatpush1.msra.mxu0 0.0
    %152 = vmatprep.subr.mxu0 0.0
    %153 = vmatpush1.msra.mxu0 0.0
    %154 = vmatprep.subr.mxu0 0.0
    %155 = vmatpush1.msra.mxu0 0.0
    %156 = vmatprep.subr.mxu0 0.0
    %157 = vmatpush1.msra.mxu0 0.0
    %158 = vmatprep.subr.mxu0 0.0
    %159 = vmatpush1.msra.mxu0 0.0
    %160 = vmatprep.subr.mxu0 0.0
    %161 = vmatpush1.msra.mxu0 0.0
    %162 = vmatprep.subr.mxu0 0.0
    %163 = vmatpush1.msra.mxu0 0.0
    %164 = vmatprep.subr.mxu0 0.0
    %165 = vmatpush1.msra.mxu0 0.0
    %166 = vmatprep.subr.mxu0 0.0
    %167 = vmatpush1.msra.mxu0 0.0
    %168 = vmatprep.subr.mxu0 0.0
    %169 = vmatpush1.msra.mxu0 0.0
    %170 = vmatprep.subr.mxu0 0.0
    %171 = vmatpush1.msra.mxu0 0.0
    %172 = vmatprep.subr.mxu0 0.0
    %173 = vmatpush1.msra.mxu0 0.0
    %174 = vmatprep.subr.mxu0 0.0
    %175 = vmatpush1.msra.mxu0 0.0
    %176 = vmatprep.subr.mxu0 0.0
    %177 = vmatpush1.msra.mxu0 0.0
    %178 = vmatprep.subr.mxu0 0.0
    %179 = vmatpush1.msra.mxu0 0.0
    %180 = vmatprep.subr.mxu0 0.0
    %181 = vmatpush1.msra.mxu0 0.0
    %182 = vmatprep.subr.mxu0 0.0
    %183 = vmatpush1.msra.mxu0 0.0
    %184 = vmatprep.subr.mxu0 0.0
    %185 = vmatpush1.msra.mxu0 0.0
    %186 = vmatprep.subr.mxu0 0.0
    %187 = vmatpush1.msra.mxu0 0.0
    %188 = vmatprep.subr.mxu0 0.0
    %189 = vmatpush1.msra.mxu0 0.0
    %190 = vmatprep.subr.mxu0 0.0
    %191 = vmatpush1.msra.mxu0 0.0
    %192 = vmatprep.subr.mxu0 0.0
    %193 = vmatpush1.msra.mxu0 0.0
    %194 = vmatprep.subr.mxu0 0.0
    %195 = vmatpush1.msra.mxu0 0.0
    %196 = vmatprep.subr.mxu0 0.0
    %197 = vmatpush1.msra.mxu0 0.0
    %198 = vmatprep.subr.mxu0 0.0
    %199 = vmatpush1.msra.mxu0 0.0
    %200 = vmatprep.mubr.f32.mxu0 0.0
    %201 = vmatmul.mubr.f32.gmra.mrb[0].mxu0 %v134
    %v202 = vpop.f32.mrb[0].mxu0
    %v203 = vadd.f32 %v95, %v202
    %v204 = vpop.f32.mrb[0].mxu0
    %205 = vdwg.mxu0
    %v207 = vsel %vm132, %v43, 0
    %209 = vmatprep.subr.mxu0 0.0
    %210 = vmatpush1.msra.mxu0 %v48
    %211 = vmatprep.subr.mxu0 0.0
    %212 = vmatpush1.msra.mxu0 %v49
    %213 = vmatprep.subr.mxu0 0.0
    %214 = vmatpush1.msra.mxu0 %v50
    %215 = vmatprep.subr.mxu0 0.0
    %216 = vmatpush1.msra.mxu0 %v51
    %217 = vmatprep.subr.mxu0 0.0
    %218 = vmatpush1.msra.mxu0 0.0
    %219 = vmatprep.subr.mxu0 0.0
    %220 = vmatpush1.msra.mxu0 0.0
    %221 = vmatprep.subr.mxu0 0.0
    %222 = vmatpush1.msra.mxu0 0.0
    %223 = vmatprep.subr.mxu0 0.0
    %224 = vmatpush1.msra.mxu0 0.0
    %225 = vmatprep.subr.mxu0 0.0
    %226 = vmatpush1.msra.mxu0 0.0
    %227 = vmatprep.subr.mxu0 0.0
    %228 = vmatpush1.msra.mxu0 0.0
    %229 = vmatprep.subr.mxu0 0.0
    %230 = vmatpush1.msra.mxu0 0.0
    %231 = vmatprep.subr.mxu0 0.0
    %232 = vmatpush1.msra.mxu0 0.0
    %233 = vmatprep.subr.mxu0 0.0
    %234 = vmatpush1.msra.mxu0 0.0
    %235 = vmatprep.subr.mxu0 0.0
    %236 = vmatpush1.msra.mxu0 0.0
    %237 = vmatprep.subr.mxu0 0.0
    %238 = vmatpush1.msra.mxu0 0.0
    %239 = vmatprep.subr.mxu0 0.0
    %240 = vmatpush1.msra.mxu0 0.0
    %241 = vmatprep.subr.mxu0 0.0
    %242 = vmatpush1.msra.mxu0 0.0
    %243 = vmatprep.subr.mxu0 0.0
    %244 = vmatpush1.msra.mxu0 0.0
    %245 = vmatprep.subr.mxu0 0.0
    %246 = vmatpush1.msra.mxu0 0.0
    %247 = vmatprep.subr.mxu0 0.0
    %248 = vmatpush1.msra.mxu0 0.0
    %249 = vmatprep.subr.mxu0 0.0
    %250 = vmatpush1.msra.mxu0 0.0
    %251 = vmatprep.subr.mxu0 0.0
    %252 = vmatpush1.msra.mxu0 0.0
    %253 = vmatprep.subr.mxu0 0.0
    %254 = vmatpush1.msra.mxu0 0.0
    %255 = vmatprep.subr.mxu0 0.0
    %256 = vmatpush1.msra.mxu0 0.0
    %257 = vmatprep.subr.mxu0 0.0
    %258 = vmatpush1.msra.mxu0 0.0
    %259 = vmatprep.subr.mxu0 0.0
    %260 = vmatpush1.msra.mxu0 0.0
    %261 = vmatprep.subr.mxu0 0.0
    %262 = vmatpush1.msra.mxu0 0.0
    %263 = vmatprep.subr.mxu0 0.0
    %264 = vmatpush1.msra.mxu0 0.0
    %265 = vmatprep.subr.mxu0 0.0
    %266 = vmatpush1.msra.mxu0 0.0
    %267 = vmatprep.subr.mxu0 0.0
    %268 = vmatpush1.msra.mxu0 0.0
    %269 = vmatprep.subr.mxu0 0.0
    %270 = vmatpush1.msra.mxu0 0.0
    %271 = vmatprep.subr.mxu0 0.0
    %272 = vmatpush1.msra.mxu0 0.0
    %273 = vmatprep.mubr.f32.mxu0 0.0
    %274 = vmatmul.mubr.f32.gmra.mrb[0].mxu0 %v207
    %v275 = vpop.f32.mrb[0].mxu0
    %v276 = vadd.f32 %v99, %v275
    %v277 = vpop.f32.mrb[0].mxu0
    %278 = vdwg.mxu0
    %279 = vmatprep.subr.mxu0 0.0
    %280 = vmatpush1.msra.mxu0 %v52
    %281 = vmatprep.subr.mxu0 0.0
    %282 = vmatpush1.msra.mxu0 %v53
    %283 = vmatprep.subr.mxu0 0.0
    %284 = vmatpush1.msra.mxu0 %v54
    %285 = vmatprep.subr.mxu0 0.0
    %286 = vmatpush1.msra.mxu0 %v55
    %287 = vmatprep.subr.mxu0 0.0
    %288 = vmatpush1.msra.mxu0 0.0
    %289 = vmatprep.subr.mxu0 0.0
    %290 = vmatpush1.msra.mxu0 0.0
    %291 = vmatprep.subr.mxu0 0.0
    %292 = vmatpush1.msra.mxu0 0.0
    %293 = vmatprep.subr.mxu0 0.0
    %294 = vmatpush1.msra.mxu0 0.0
    %295 = vmatprep.subr.mxu0 0.0
    %296 = vmatpush1.msra.mxu0 0.0
    %297 = vmatprep.subr.mxu0 0.0
    %298 = vmatpush1.msra.mxu0 0.0
    %299 = vmatprep.subr.mxu0 0.0
    %300 = vmatpush1.msra.mxu0 0.0
    %301 = vmatprep.subr.mxu0 0.0
    %302 = vmatpush1.msra.mxu0 0.0
    %303 = vmatprep.subr.mxu0 0.0
    %304 = vmatpush1.msra.mxu0 0.0
    %305 = vmatprep.subr.mxu0 0.0
    %306 = vmatpush1.msra.mxu0 0.0
    %307 = vmatprep.subr.mxu0 0.0
    %308 = vmatpush1.msra.mxu0 0.0
    %309 = vmatprep.subr.mxu0 0.0
    %310 = vmatpush1.msra.mxu0 0.0
    %311 = vmatprep.subr.mxu0 0.0
    %312 = vmatpush1.msra.mxu0 0.0
    %313 = vmatprep.subr.mxu0 0.0
    %314 = vmatpush1.msra.mxu0 0.0
    %315 = vmatprep.subr.mxu0 0.0
    %316 = vmatpush1.msra.mxu0 0.0
    %317 = vmatprep.subr.mxu0 0.0
    %318 = vmatpush1.msra.mxu0 0.0
    %319 = vmatprep.subr.mxu0 0.0
    %320 = vmatpush1.msra.mxu0 0.0
    %321 = vmatprep.subr.mxu0 0.0
    %322 = vmatpush1.msra.mxu0 0.0
    %323 = vmatprep.subr.mxu0 0.0
    %324 = vmatpush1.msra.mxu0 0.0
    %325 = vmatprep.subr.mxu0 0.0
    %326 = vmatpush1.msra.mxu0 0.0
    %327 = vmatprep.subr.mxu0 0.0
    %328 = vmatpush1.msra.mxu0 0.0
    %329 = vmatprep.subr.mxu0 0.0
    %330 = vmatpush1.msra.mxu0 0.0
    %331 = vmatprep.subr.mxu0 0.0
    %332 = vmatpush1.msra.mxu0 0.0
    %333 = vmatprep.subr.mxu0 0.0
    %334 = vmatpush1.msra.mxu0 0.0
    %335 = vmatprep.subr.mxu0 0.0
    %336 = vmatpush1.msra.mxu0 0.0
    %337 = vmatprep.subr.mxu0 0.0
    %338 = vmatpush1.msra.mxu0 0.0
    %339 = vmatprep.subr.mxu0 0.0
    %340 = vmatpush1.msra.mxu0 0.0
    %341 = vmatprep.subr.mxu0 0.0
    %342 = vmatpush1.msra.mxu0 0.0
    %343 = vmatprep.mubr.f32.mxu0 0.0
    %344 = vmatmul.mubr.f32.gmra.mrb[0].mxu0 %v134
    %v345 = vpop.f32.mrb[0].mxu0
    %v346 = vadd.f32 %v103, %v345
    %v347 = vpop.f32.mrb[0].mxu0
    %348 = vdwg.mxu0
    %349 = vmatprep.subr.mxu0 0.0
    %350 = vmatpush1.msra.mxu0 %v56
    %351 = vmatprep.subr.mxu0 0.0
    %352 = vmatpush1.msra.mxu0 %v57
    %353 = vmatprep.subr.mxu0 0.0
    %354 = vmatpush1.msra.mxu0 %v58
    %355 = vmatprep.subr.mxu0 0.0
    %356 = vmatpush1.msra.mxu0 %v59
    %357 = vmatprep.subr.mxu0 0.0
    %358 = vmatpush1.msra.mxu0 0.0
    %359 = vmatprep.subr.mxu0 0.0
    %360 = vmatpush1.msra.mxu0 0.0
    %361 = vmatprep.subr.mxu0 0.0
    %362 = vmatpush1.msra.mxu0 0.0
    %363 = vmatprep.subr.mxu0 0.0
    %364 = vmatpush1.msra.mxu0 0.0
    %365 = vmatprep.subr.mxu0 0.0
    %366 = vmatpush1.msra.mxu0 0.0
    %367 = vmatprep.subr.mxu0 0.0
    %368 = vmatpush1.msra.mxu0 0.0
    %369 = vmatprep.subr.mxu0 0.0
    %370 = vmatpush1.msra.mxu0 0.0
    %371 = vmatprep.subr.mxu0 0.0
    %372 = vmatpush1.msra.mxu0 0.0
    %373 = vmatprep.subr.mxu0 0.0
    %374 = vmatpush1.msra.mxu0 0.0
    %375 = vmatprep.subr.mxu0 0.0
    %376 = vmatpush1.msra.mxu0 0.0
    %377 = vmatprep.subr.mxu0 0.0
    %378 = vmatpush1.msra.mxu0 0.0
    %379 = vmatprep.subr.mxu0 0.0
    %380 = vmatpush1.msra.mxu0 0.0
    %381 = vmatprep.subr.mxu0 0.0
    %382 = vmatpush1.msra.mxu0 0.0
    %383 = vmatprep.subr.mxu0 0.0
    %384 = vmatpush1.msra.mxu0 0.0
    %385 = vmatprep.subr.mxu0 0.0
    %386 = vmatpush1.msra.mxu0 0.0
    %387 = vmatprep.subr.mxu0 0.0
    %388 = vmatpush1.msra.mxu0 0.0
    %389 = vmatprep.subr.mxu0 0.0
    %390 = vmatpush1.msra.mxu0 0.0
    %391 = vmatprep.subr.mxu0 0.0
    %392 = vmatpush1.msra.mxu0 0.0
    %393 = vmatprep.subr.mxu0 0.0
    %394 = vmatpush1.msra.mxu0 0.0
    %395 = vmatprep.subr.mxu0 0.0
    %396 = vmatpush1.msra.mxu0 0.0
    %397 = vmatprep.subr.mxu0 0.0
    %398 = vmatpush1.msra.mxu0 0.0
    %399 = vmatprep.subr.mxu0 0.0
    %400 = vmatpush1.msra.mxu0 0.0
    %401 = vmatprep.subr.mxu0 0.0
    %402 = vmatpush1.msra.mxu0 0.0
    %403 = vmatprep.subr.mxu0 0.0
    %404 = vmatpush1.msra.mxu0 0.0
    %405 = vmatprep.subr.mxu0 0.0
    %406 = vmatpush1.msra.mxu0 0.0
    %407 = vmatprep.subr.mxu0 0.0
    %408 = vmatpush1.msra.mxu0 0.0
    %409 = vmatprep.subr.mxu0 0.0
    %410 = vmatpush1.msra.mxu0 0.0
    %411 = vmatprep.subr.mxu0 0.0
    %412 = vmatpush1.msra.mxu0 0.0
    %413 = vmatprep.mubr.f32.mxu0 0.0
    %414 = vmatmul.mubr.f32.gmra.mrb[0].mxu0 %v207
    %v415 = vpop.f32.mrb[0].mxu0
    %v416 = vadd.f32 %v107, %v415
    %v417 = vpop.f32.mrb[0].mxu0
    %418 = vdwg.mxu0
    %419 = vmatprep.subr.mxu0 0.0
    %420 = vmatpush1.msra.mxu0 %v60
    %421 = vmatprep.subr.mxu0 0.0
    %422 = vmatpush1.msra.mxu0 %v61
    %423 = vmatprep.subr.mxu0 0.0
    %424 = vmatpush1.msra.mxu0 %v62
    %425 = vmatprep.subr.mxu0 0.0
    %426 = vmatpush1.msra.mxu0 %v63
    %427 = vmatprep.subr.mxu0 0.0
    %428 = vmatpush1.msra.mxu0 0.0
    %429 = vmatprep.subr.mxu0 0.0
    %430 = vmatpush1.msra.mxu0 0.0
    %431 = vmatprep.subr.mxu0 0.0
    %432 = vmatpush1.msra.mxu0 0.0
    %433 = vmatprep.subr.mxu0 0.0
    %434 = vmatpush1.msra.mxu0 0.0
    %435 = vmatprep.subr.mxu0 0.0
    %436 = vmatpush1.msra.mxu0 0.0
    %437 = vmatprep.subr.mxu0 0.0
    %438 = vmatpush1.msra.mxu0 0.0
    %439 = vmatprep.subr.mxu0 0.0
    %440 = vmatpush1.msra.mxu0 0.0
    %441 = vmatprep.subr.mxu0 0.0
    %442 = vmatpush1.msra.mxu0 0.0
    %443 = vmatprep.subr.mxu0 0.0
    %444 = vmatpush1.msra.mxu0 0.0
    %445 = vmatprep.subr.mxu0 0.0
    %446 = vmatpush1.msra.mxu0 0.0
    %447 = vmatprep.subr.mxu0 0.0
    %448 = vmatpush1.msra.mxu0 0.0
    %449 = vmatprep.subr.mxu0 0.0
    %450 = vmatpush1.msra.mxu0 0.0
    %451 = vmatprep.subr.mxu0 0.0
    %452 = vmatpush1.msra.mxu0 0.0
    %453 = vmatprep.subr.mxu0 0.0
    %454 = vmatpush1.msra.mxu0 0.0
    %455 = vmatprep.subr.mxu0 0.0
    %456 = vmatpush1.msra.mxu0 0.0
    %457 = vmatprep.subr.mxu0 0.0
    %458 = vmatpush1.msra.mxu0 0.0
    %459 = vmatprep.subr.mxu0 0.0
    %460 = vmatpush1.msra.mxu0 0.0
    %461 = vmatprep.subr.mxu0 0.0
    %462 = vmatpush1.msra.mxu0 0.0
    %463 = vmatprep.subr.mxu0 0.0
    %464 = vmatpush1.msra.mxu0 0.0
    %465 = vmatprep.subr.mxu0 0.0
    %466 = vmatpush1.msra.mxu0 0.0
    %467 = vmatprep.subr.mxu0 0.0
    %468 = vmatpush1.msra.mxu0 0.0
    %469 = vmatprep.subr.mxu0 0.0
    %470 = vmatpush1.msra.mxu0 0.0
    %471 = vmatprep.subr.mxu0 0.0
    %472 = vmatpush1.msra.mxu0 0.0
    %473 = vmatprep.subr.mxu0 0.0
    %474 = vmatpush1.msra.mxu0 0.0
    %475 = vmatprep.subr.mxu0 0.0
    %476 = vmatpush1.msra.mxu0 0.0
    %477 = vmatprep.subr.mxu0 0.0
    %478 = vmatpush1.msra.mxu0 0.0
    %479 = vmatprep.subr.mxu0 0.0
    %480 = vmatpush1.msra.mxu0 0.0
    %481 = vmatprep.subr.mxu0 0.0
    %482 = vmatpush1.msra.mxu0 0.0
    %483 = vmatprep.mubr.f32.mxu0 0.0
    %484 = vmatmul.mubr.f32.gmra.mrb[0].mxu0 %v134
    %v485 = vpop.f32.mrb[0].mxu0
    %v486 = vadd.f32 %v111, %v485
    %v487 = vpop.f32.mrb[0].mxu0
    %488 = vdwg.mxu0
    %489 = vmatprep.subr.mxu0 0.0
    %490 = vmatpush1.msra.mxu0 %v64
    %491 = vmatprep.subr.mxu0 0.0
    %492 = vmatpush1.msra.mxu0 %v65
    %493 = vmatprep.subr.mxu0 0.0
    %494 = vmatpush1.msra.mxu0 %v66
    %495 = vmatprep.subr.mxu0 0.0
    %496 = vmatpush1.msra.mxu0 %v67
    %497 = vmatprep.subr.mxu0 0.0
    %498 = vmatpush1.msra.mxu0 0.0
    %499 = vmatprep.subr.mxu0 0.0
    %500 = vmatpush1.msra.mxu0 0.0
    %501 = vmatprep.subr.mxu0 0.0
    %502 = vmatpush1.msra.mxu0 0.0
    %503 = vmatprep.subr.mxu0 0.0
    %504 = vmatpush1.msra.mxu0 0.0
    %505 = vmatprep.subr.mxu0 0.0
    %506 = vmatpush1.msra.mxu0 0.0
    %507 = vmatprep.subr.mxu0 0.0
    %508 = vmatpush1.msra.mxu0 0.0
    %509 = vmatprep.subr.mxu0 0.0
    %510 = vmatpush1.msra.mxu0 0.0
    %511 = vmatprep.subr.mxu0 0.0
    %512 = vmatpush1.msra.mxu0 0.0
    %513 = vmatprep.subr.mxu0 0.0
    %514 = vmatpush1.msra.mxu0 0.0
    %515 = vmatprep.subr.mxu0 0.0
    %516 = vmatpush1.msra.mxu0 0.0
    %517 = vmatprep.subr.mxu0 0.0
    %518 = vmatpush1.msra.mxu0 0.0
    %519 = vmatprep.subr.mxu0 0.0
    %520 = vmatpush1.msra.mxu0 0.0
    %521 = vmatprep.subr.mxu0 0.0
    %522 = vmatpush1.msra.mxu0 0.0
    %523 = vmatprep.subr.mxu0 0.0
    %524 = vmatpush1.msra.mxu0 0.0
    %525 = vmatprep.subr.mxu0 0.0
    %526 = vmatpush1.msra.mxu0 0.0
    %527 = vmatprep.subr.mxu0 0.0
    %528 = vmatpush1.msra.mxu0 0.0
    %529 = vmatprep.subr.mxu0 0.0
    %530 = vmatpush1.msra.mxu0 0.0
    %531 = vmatprep.subr.mxu0 0.0
    %532 = vmatpush1.msra.mxu0 0.0
    %533 = vmatprep.subr.mxu0 0.0
    %534 = vmatpush1.msra.mxu0 0.0
    %535 = vmatprep.subr.mxu0 0.0
    %536 = vmatpush1.msra.mxu0 0.0
    %537 = vmatprep.subr.mxu0 0.0
    %538 = vmatpush1.msra.mxu0 0.0
    %539 = vmatprep.subr.mxu0 0.0
    %540 = vmatpush1.msra.mxu0 0.0
    %541 = vmatprep.subr.mxu0 0.0
    %542 = vmatpush1.msra.mxu0 0.0
    %543 = vmatprep.subr.mxu0 0.0
    %544 = vmatpush1.msra.mxu0 0.0
    %545 = vmatprep.subr.mxu0 0.0
    %546 = vmatpush1.msra.mxu0 0.0
    %547 = vmatprep.subr.mxu0 0.0
    %548 = vmatpush1.msra.mxu0 0.0
    %549 = vmatprep.subr.mxu0 0.0
    %550 = vmatpush1.msra.mxu0 0.0
    %551 = vmatprep.subr.mxu0 0.0
    %552 = vmatpush1.msra.mxu0 0.0
    %553 = vmatprep.mubr.f32.mxu0 0.0
    %554 = vmatmul.mubr.f32.gmra.mrb[0].mxu0 %v207
    %v555 = vpop.f32.mrb[0].mxu0
    %v556 = vadd.f32 %v115, %v555
    %v557 = vpop.f32.mrb[0].mxu0
    %558 = vdwg.mxu0
    %559 = vmatprep.subr.mxu0 0.0
    %560 = vmatpush1.msra.mxu0 %v68
    %561 = vmatprep.subr.mxu0 0.0
    %562 = vmatpush1.msra.mxu0 %v69
    %563 = vmatprep.subr.mxu0 0.0
    %564 = vmatpush1.msra.mxu0 %v70
    %565 = vmatprep.subr.mxu0 0.0
    %566 = vmatpush1.msra.mxu0 %v71
    %567 = vmatprep.subr.mxu0 0.0
    %568 = vmatpush1.msra.mxu0 0.0
    %569 = vmatprep.subr.mxu0 0.0
    %570 = vmatpush1.msra.mxu0 0.0
    %571 = vmatprep.subr.mxu0 0.0
    %572 = vmatpush1.msra.mxu0 0.0
    %573 = vmatprep.subr.mxu0 0.0
    %574 = vmatpush1.msra.mxu0 0.0
    %575 = vmatprep.subr.mxu0 0.0
    %576 = vmatpush1.msra.mxu0 0.0
    %577 = vmatprep.subr.mxu0 0.0
    %578 = vmatpush1.msra.mxu0 0.0
    %579 = vmatprep.subr.mxu0 0.0
    %580 = vmatpush1.msra.mxu0 0.0
    %581 = vmatprep.subr.mxu0 0.0
    %582 = vmatpush1.msra.mxu0 0.0
    %583 = vmatprep.subr.mxu0 0.0
    %584 = vmatpush1.msra.mxu0 0.0
    %585 = vmatprep.subr.mxu0 0.0
    %586 = vmatpush1.msra.mxu0 0.0
    %587 = vmatprep.subr.mxu0 0.0
    %588 = vmatpush1.msra.mxu0 0.0
    %589 = vmatprep.subr.mxu0 0.0
    %590 = vmatpush1.msra.mxu0 0.0
    %591 = vmatprep.subr.mxu0 0.0
    %592 = vmatpush1.msra.mxu0 0.0
    %593 = vmatprep.subr.mxu0 0.0
    %594 = vmatpush1.msra.mxu0 0.0
    %595 = vmatprep.subr.mxu0 0.0
    %596 = vmatpush1.msra.mxu0 0.0
    %597 = vmatprep.subr.mxu0 0.0
    %598 = vmatpush1.msra.mxu0 0.0
    %599 = vmatprep.subr.mxu0 0.0
    %600 = vmatpush1.msra.mxu0 0.0
    %601 = vmatprep.subr.mxu0 0.0
    %602 = vmatpush1.msra.mxu0 0.0
    %603 = vmatprep.subr.mxu0 0.0
    %604 = vmatpush1.msra.mxu0 0.0
    %605 = vmatprep.subr.mxu0 0.0
    %606 = vmatpush1.msra.mxu0 0.0
    %607 = vmatprep.subr.mxu0 0.0
    %608 = vmatpush1.msra.mxu0 0.0
    %609 = vmatprep.subr.mxu0 0.0
    %610 = vmatpush1.msra.mxu0 0.0
    %611 = vmatprep.subr.mxu0 0.0
    %612 = vmatpush1.msra.mxu0 0.0
    %613 = vmatprep.subr.mxu0 0.0
    %614 = vmatpush1.msra.mxu0 0.0
    %615 = vmatprep.subr.mxu0 0.0
    %616 = vmatpush1.msra.mxu0 0.0
    %617 = vmatprep.subr.mxu0 0.0
    %618 = vmatpush1.msra.mxu0 0.0
    %619 = vmatprep.subr.mxu0 0.0
    %620 = vmatpush1.msra.mxu0 0.0
    %621 = vmatprep.subr.mxu0 0.0
    %622 = vmatpush1.msra.mxu0 0.0
    %623 = vmatprep.mubr.f32.mxu0 0.0
    %624 = vmatmul.mubr.f32.gmra.mrb[0].mxu0 %v134
    %v625 = vpop.f32.mrb[0].mxu0
    %v626 = vadd.f32 %v119, %v625
    %v627 = vpop.f32.mrb[0].mxu0
    %628 = vdwg.mxu0
    %629 = vmatprep.subr.mxu0 0.0
    %630 = vmatpush1.msra.mxu0 %v72
    %631 = vmatprep.subr.mxu0 0.0
    %632 = vmatpush1.msra.mxu0 %v73
    %633 = vmatprep.subr.mxu0 0.0
    %634 = vmatpush1.msra.mxu0 %v74
    %635 = vmatprep.subr.mxu0 0.0
    %636 = vmatpush1.msra.mxu0 %v75
    %637 = vmatprep.subr.mxu0 0.0
    %638 = vmatpush1.msra.mxu0 0.0
    %639 = vmatprep.subr.mxu0 0.0
    %640 = vmatpush1.msra.mxu0 0.0
    %641 = vmatprep.subr.mxu0 0.0
    %642 = vmatpush1.msra.mxu0 0.0
    %643 = vmatprep.subr.mxu0 0.0
    %644 = vmatpush1.msra.mxu0 0.0
    %645 = vmatprep.subr.mxu0 0.0
    %646 = vmatpush1.msra.mxu0 0.0
    %647 = vmatprep.subr.mxu0 0.0
    %648 = vmatpush1.msra.mxu0 0.0
    %649 = vmatprep.subr.mxu0 0.0
    %650 = vmatpush1.msra.mxu0 0.0
    %651 = vmatprep.subr.mxu0 0.0
    %652 = vmatpush1.msra.mxu0 0.0
    %653 = vmatprep.subr.mxu0 0.0
    %654 = vmatpush1.msra.mxu0 0.0
    %655 = vmatprep.subr.mxu0 0.0
    %656 = vmatpush1.msra.mxu0 0.0
    %657 = vmatprep.subr.mxu0 0.0
    %658 = vmatpush1.msra.mxu0 0.0
    %659 = vmatprep.subr.mxu0 0.0
    %660 = vmatpush1.msra.mxu0 0.0
    %661 = vmatprep.subr.mxu0 0.0
    %662 = vmatpush1.msra.mxu0 0.0
    %663 = vmatprep.subr.mxu0 0.0
    %664 = vmatpush1.msra.mxu0 0.0
    %665 = vmatprep.subr.mxu0 0.0
    %666 = vmatpush1.msra.mxu0 0.0
    %667 = vmatprep.subr.mxu0 0.0
    %668 = vmatpush1.msra.mxu0 0.0
    %669 = vmatprep.subr.mxu0 0.0
    %670 = vmatpush1.msra.mxu0 0.0
    %671 = vmatprep.subr.mxu0 0.0
    %672 = vmatpush1.msra.mxu0 0.0
    %673 = vmatprep.subr.mxu0 0.0
    %674 = vmatpush1.msra.mxu0 0.0
    %675 = vmatprep.subr.mxu0 0.0
    %676 = vmatpush1.msra.mxu0 0.0
    %677 = vmatprep.subr.mxu0 0.0
    %678 = vmatpush1.msra.mxu0 0.0
    %679 = vmatprep.subr.mxu0 0.0
    %680 = vmatpush1.msra.mxu0 0.0
    %681 = vmatprep.subr.mxu0 0.0
    %682 = vmatpush1.msra.mxu0 0.0
    %683 = vmatprep.subr.mxu0 0.0
    %684 = vmatpush1.msra.mxu0 0.0
    %685 = vmatprep.subr.mxu0 0.0
    %686 = vmatpush1.msra.mxu0 0.0
    %687 = vmatprep.subr.mxu0 0.0
    %688 = vmatpush1.msra.mxu0 0.0
    %689 = vmatprep.subr.mxu0 0.0
    %690 = vmatpush1.msra.mxu0 0.0
    %691 = vmatprep.subr.mxu0 0.0
    %692 = vmatpush1.msra.mxu0 0.0
    %693 = vmatprep.mubr.f32.mxu0 0.0
    %694 = vmatmul.mubr.f32.gmra.mrb[0].mxu0 %v207
    %v695 = vpop.f32.mrb[0].mxu0
    %v696 = vadd.f32 %v123, %v695
    %v697 = vpop.f32.mrb[0].mxu0
    %698 = vdwg.mxu0
    %v699 = vld [vmem:[%s2] sm:$0xff]
    %v700 = vld [vmem:[%s2 + $0x8] sm:$0xff]
    %v701 = vld [vmem:[%s2 + $0x10] sm:$0xff]
    %v702 = vld [vmem:[%s2 + $0x18] sm:$0xff]
    %v703 = vld [vmem:[%s2 + $0x20] sm:$0xff]
    %v704 = vld [vmem:[%s2 + $0x28] sm:$0xff]
    %v705 = vld [vmem:[%s2 + $0x30] sm:$0xff]
    %v706 = vld [vmem:[%s2 + $0x38] sm:$0xff]
    %v707 = vld [vmem:[%s2 + $0x40] sm:$0xff]
    %v708 = vld [vmem:[%s2 + $0x48] sm:$0xff]
    %v709 = vld [vmem:[%s2 + $0x50] sm:$0xff]
    %v710 = vld [vmem:[%s2 + $0x58] sm:$0xff]
    %v711 = vld [vmem:[%s2 + $0x60] sm:$0xff]
    %v712 = vld [vmem:[%s2 + $0x68] sm:$0xff]
    %v713 = vld [vmem:[%s2 + $0x70] sm:$0xff]
    %v714 = vld [vmem:[%s2 + $0x78] sm:$0xff]
    %v715 = vld [vmem:[%s2 + $0x80] sm:$0xff]
    %v716 = vld [vmem:[%s2 + $0x88] sm:$0xff]
    %v717 = vld [vmem:[%s2 + $0x90] sm:$0xff]
    %v718 = vld [vmem:[%s2 + $0x98] sm:$0xff]
    %v719 = vld [vmem:[%s2 + $0xa0] sm:$0xff]
    %v720 = vld [vmem:[%s2 + $0xa8] sm:$0xff]
    %v721 = vld [vmem:[%s2 + $0xb0] sm:$0xff]
    %v722 = vld [vmem:[%s2 + $0xb8] sm:$0xff]
    %v723 = vld [vmem:[%s2 + $0xc0] sm:$0xff]
    %v724 = vld [vmem:[%s2 + $0xc8] sm:$0xff]
    %v725 = vld [vmem:[%s2 + $0xd0] sm:$0xff]
    %v726 = vld [vmem:[%s2 + $0xd8] sm:$0xff]
    %v727 = vld [vmem:[%s2 + $0xe0] sm:$0xff]
    %v728 = vld [vmem:[%s2 + $0xe8] sm:$0xff]
    %v729 = vld [vmem:[%s2 + $0xf0] sm:$0xff]
    %v730 = vld [vmem:[%s2 + $0xf8] sm:$0xff]
    %v731 = vld [vmem:[%s5] sm:$0x1]
    %v732 = vld [vmem:[%s5 + $0x1] sm:$0x1]
    %v733 = vld [vmem:[%s5 + $0x2] sm:$0x1]
    %v734 = vld [vmem:[%s5 + $0x3] sm:$0x1]
    %v735 = vld [vmem:[%s5 + $0x4] sm:$0x1]
    %v736 = vld [vmem:[%s5 + $0x5] sm:$0x1]
    %v737 = vld [vmem:[%s5 + $0x6] sm:$0x1]
    %v738 = vld [vmem:[%s5 + $0x7] sm:$0x1]
    %v747 = vlaneseq
    %v748 = vshrl.u32 %v747, 7
    %v749 = vsub.s32 0, %v748
    %v750 = vrot.slane %v731, %v749
    %v751 = vlaneseq
    %v752 = vshrl.u32 %v751, 7
    %v753 = vsub.s32 0, %v752
    %v754 = vrot.slane %v732, %v753
    %v755 = vlaneseq
    %v756 = vshrl.u32 %v755, 7
    %v757 = vsub.s32 0, %v756
    %v758 = vrot.slane %v733, %v757
    %v759 = vlaneseq
    %v760 = vshrl.u32 %v759, 7
    %v761 = vsub.s32 0, %v760
    %v762 = vrot.slane %v734, %v761
    %v763 = vlaneseq
    %v764 = vshrl.u32 %v763, 7
    %v765 = vsub.s32 0, %v764
    %v766 = vrot.slane %v735, %v765
    %v767 = vlaneseq
    %v768 = vshrl.u32 %v767, 7
    %v769 = vsub.s32 0, %v768
    %v770 = vrot.slane %v736, %v769
    %v771 = vlaneseq
    %v772 = vshrl.u32 %v771, 7
    %v773 = vsub.s32 0, %v772
    %v774 = vrot.slane %v737, %v773
    %v775 = vlaneseq
    %v776 = vshrl.u32 %v775, 7
    %v777 = vsub.s32 0, %v776
    %v778 = vrot.slane %v738, %v777
    %787 = vmatprep.subr.mxu0 0.0
    %788 = vmatpush1.msra.mxu0 %v699
    %789 = vmatprep.subr.mxu0 0.0
    %790 = vmatpush1.msra.mxu0 %v700
    %791 = vmatprep.subr.mxu0 0.0
    %792 = vmatpush1.msra.mxu0 %v701
    %793 = vmatprep.subr.mxu0 0.0
    %794 = vmatpush1.msra.mxu0 %v702
    %795 = vmatprep.subr.mxu0 0.0
    %796 = vmatpush1.msra.mxu0 0.0
    %797 = vmatprep.subr.mxu0 0.0
    %798 = vmatpush1.msra.mxu0 0.0
    %799 = vmatprep.subr.mxu0 0.0
    %800 = vmatpush1.msra.mxu0 0.0
    %801 = vmatprep.subr.mxu0 0.0
    %802 = vmatpush1.msra.mxu0 0.0
    %803 = vmatprep.subr.mxu0 0.0
    %804 = vmatpush1.msra.mxu0 0.0
    %805 = vmatprep.subr.mxu0 0.0
    %806 = vmatpush1.msra.mxu0 0.0
    %807 = vmatprep.subr.mxu0 0.0
    %808 = vmatpush1.msra.mxu0 0.0
    %809 = vmatprep.subr.mxu0 0.0
    %810 = vmatpush1.msra.mxu0 0.0
    %811 = vmatprep.subr.mxu0 0.0
    %812 = vmatpush1.msra.mxu0 0.0
    %813 = vmatprep.subr.mxu0 0.0
    %814 = vmatpush1.msra.mxu0 0.0
    %815 = vmatprep.subr.mxu0 0.0
    %816 = vmatpush1.msra.mxu0 0.0
    %817 = vmatprep.subr.mxu0 0.0
    %818 = vmatpush1.msra.mxu0 0.0
    %819 = vmatprep.subr.mxu0 0.0
    %820 = vmatpush1.msra.mxu0 0.0
    %821 = vmatprep.subr.mxu0 0.0
    %822 = vmatpush1.msra.mxu0 0.0
    %823 = vmatprep.subr.mxu0 0.0
    %824 = vmatpush1.msra.mxu0 0.0
    %825 = vmatprep.subr.mxu0 0.0
    %826 = vmatpush1.msra.mxu0 0.0
    %827 = vmatprep.subr.mxu0 0.0
    %828 = vmatpush1.msra.mxu0 0.0
    %829 = vmatprep.subr.mxu0 0.0
    %830 = vmatpush1.msra.mxu0 0.0
    %831 = vmatprep.subr.mxu0 0.0
    %832 = vmatpush1.msra.mxu0 0.0
    %833 = vmatprep.subr.mxu0 0.0
    %834 = vmatpush1.msra.mxu0 0.0
    %835 = vmatprep.subr.mxu0 0.0
    %836 = vmatpush1.msra.mxu0 0.0
    %837 = vmatprep.subr.mxu0 0.0
    %838 = vmatpush1.msra.mxu0 0.0
    %839 = vmatprep.subr.mxu0 0.0
    %840 = vmatpush1.msra.mxu0 0.0
    %841 = vmatprep.subr.mxu0 0.0
    %842 = vmatpush1.msra.mxu0 0.0
    %843 = vmatprep.subr.mxu0 0.0
    %844 = vmatpush1.msra.mxu0 0.0
    %845 = vmatprep.subr.mxu0 0.0
    %846 = vmatpush1.msra.mxu0 0.0
    %847 = vmatprep.subr.mxu0 0.0
    %848 = vmatpush1.msra.mxu0 0.0
    %849 = vmatprep.subr.mxu0 0.0
    %850 = vmatpush1.msra.mxu0 0.0
    %851 = vmatprep.mubr.f32.mxu0 0.0
    %852 = vmatmul.mubr.f32.gmra.mrb[0].mxu0 %v134
    %v853 = vpop.f32.mrb[0].mxu0
    %v854 = vadd.f32 %v750, %v853
    %v855 = vpop.f32.mrb[0].mxu0
    %856 = vdwg.mxu0
    %857 = vmatprep.subr.mxu0 0.0
    %858 = vmatpush1.msra.mxu0 %v703
    %859 = vmatprep.subr.mxu0 0.0
    %860 = vmatpush1.msra.mxu0 %v704
    %861 = vmatprep.subr.mxu0 0.0
    %862 = vmatpush1.msra.mxu0 %v705
    %863 = vmatprep.subr.mxu0 0.0
    %864 = vmatpush1.msra.mxu0 %v706
    %865 = vmatprep.subr.mxu0 0.0
    %866 = vmatpush1.msra.mxu0 0.0
    %867 = vmatprep.subr.mxu0 0.0
    %868 = vmatpush1.msra.mxu0 0.0
    %869 = vmatprep.subr.mxu0 0.0
    %870 = vmatpush1.msra.mxu0 0.0
    %871 = vmatprep.subr.mxu0 0.0
    %872 = vmatpush1.msra.mxu0 0.0
    %873 = vmatprep.subr.mxu0 0.0
    %874 = vmatpush1.msra.mxu0 0.0
    %875 = vmatprep.subr.mxu0 0.0
    %876 = vmatpush1.msra.mxu0 0.0
    %877 = vmatprep.subr.mxu0 0.0
    %878 = vmatpush1.msra.mxu0 0.0
    %879 = vmatprep.subr.mxu0 0.0
    %880 = vmatpush1.msra.mxu0 0.0
    %881 = vmatprep.subr.mxu0 0.0
    %882 = vmatpush1.msra.mxu0 0.0
    %883 = vmatprep.subr.mxu0 0.0
    %884 = vmatpush1.msra.mxu0 0.0
    %885 = vmatprep.subr.mxu0 0.0
    %886 = vmatpush1.msra.mxu0 0.0
    %887 = vmatprep.subr.mxu0 0.0
    %888 = vmatpush1.msra.mxu0 0.0
    %889 = vmatprep.subr.mxu0 0.0
    %890 = vmatpush1.msra.mxu0 0.0
    %891 = vmatprep.subr.mxu0 0.0
    %892 = vmatpush1.msra.mxu0 0.0
    %893 = vmatprep.subr.mxu0 0.0
    %894 = vmatpush1.msra.mxu0 0.0
    %895 = vmatprep.subr.mxu0 0.0
    %896 = vmatpush1.msra.mxu0 0.0
    %897 = vmatprep.subr.mxu0 0.0
    %898 = vmatpush1.msra.mxu0 0.0
    %899 = vmatprep.subr.mxu0 0.0
    %900 = vmatpush1.msra.mxu0 0.0
    %901 = vmatprep.subr.mxu0 0.0
    %902 = vmatpush1.msra.mxu0 0.0
    %903 = vmatprep.subr.mxu0 0.0
    %904 = vmatpush1.msra.mxu0 0.0
    %905 = vmatprep.subr.mxu0 0.0
    %906 = vmatpush1.msra.mxu0 0.0
    %907 = vmatprep.subr.mxu0 0.0
    %908 = vmatpush1.msra.mxu0 0.0
    %909 = vmatprep.subr.mxu0 0.0
    %910 = vmatpush1.msra.mxu0 0.0
    %911 = vmatprep.subr.mxu0 0.0
    %912 = vmatpush1.msra.mxu0 0.0
    %913 = vmatprep.subr.mxu0 0.0
    %914 = vmatpush1.msra.mxu0 0.0
    %915 = vmatprep.subr.mxu0 0.0
    %916 = vmatpush1.msra.mxu0 0.0
    %917 = vmatprep.subr.mxu0 0.0
    %918 = vmatpush1.msra.mxu0 0.0
    %919 = vmatprep.subr.mxu0 0.0
    %920 = vmatpush1.msra.mxu0 0.0
    %921 = vmatprep.mubr.f32.mxu0 0.0
    %922 = vmatmul.mubr.f32.gmra.mrb[0].mxu0 %v207
    %v923 = vpop.f32.mrb[0].mxu0
    %v924 = vadd.f32 %v754, %v923
    %v925 = vpop.f32.mrb[0].mxu0
    %926 = vdwg.mxu0
    %927 = vmatprep.subr.mxu0 0.0
    %928 = vmatpush1.msra.mxu0 %v707
    %929 = vmatprep.subr.mxu0 0.0
    %930 = vmatpush1.msra.mxu0 %v708
    %931 = vmatprep.subr.mxu0 0.0
    %932 = vmatpush1.msra.mxu0 %v709
    %933 = vmatprep.subr.mxu0 0.0
    %934 = vmatpush1.msra.mxu0 %v710
    %935 = vmatprep.subr.mxu0 0.0
    %936 = vmatpush1.msra.mxu0 0.0
    %937 = vmatprep.subr.mxu0 0.0
    %938 = vmatpush1.msra.mxu0 0.0
    %939 = vmatprep.subr.mxu0 0.0
    %940 = vmatpush1.msra.mxu0 0.0
    %941 = vmatprep.subr.mxu0 0.0
    %942 = vmatpush1.msra.mxu0 0.0
    %943 = vmatprep.subr.mxu0 0.0
    %944 = vmatpush1.msra.mxu0 0.0
    %945 = vmatprep.subr.mxu0 0.0
    %946 = vmatpush1.msra.mxu0 0.0
    %947 = vmatprep.subr.mxu0 0.0
    %948 = vmatpush1.msra.mxu0 0.0
    %949 = vmatprep.subr.mxu0 0.0
    %950 = vmatpush1.msra.mxu0 0.0
    %951 = vmatprep.subr.mxu0 0.0
    %952 = vmatpush1.msra.mxu0 0.0
    %953 = vmatprep.subr.mxu0 0.0
    %954 = vmatpush1.msra.mxu0 0.0
    %955 = vmatprep.subr.mxu0 0.0
    %956 = vmatpush1.msra.mxu0 0.0
    %957 = vmatprep.subr.mxu0 0.0
    %958 = vmatpush1.msra.mxu0 0.0
    %959 = vmatprep.subr.mxu0 0.0
    %960 = vmatpush1.msra.mxu0 0.0
    %961 = vmatprep.subr.mxu0 0.0
    %962 = vmatpush1.msra.mxu0 0.0
    %963 = vmatprep.subr.mxu0 0.0
    %964 = vmatpush1.msra.mxu0 0.0
    %965 = vmatprep.subr.mxu0 0.0
    %966 = vmatpush1.msra.mxu0 0.0
    %967 = vmatprep.subr.mxu0 0.0
    %968 = vmatpush1.msra.mxu0 0.0
    %969 = vmatprep.subr.mxu0 0.0
    %970 = vmatpush1.msra.mxu0 0.0
    %971 = vmatprep.subr.mxu0 0.0
    %972 = vmatpush1.msra.mxu0 0.0
    %973 = vmatprep.subr.mxu0 0.0
    %974 = vmatpush1.msra.mxu0 0.0
    %975 = vmatprep.subr.mxu0 0.0
    %976 = vmatpush1.msra.mxu0 0.0
    %977 = vmatprep.subr.mxu0 0.0
    %978 = vmatpush1.msra.mxu0 0.0
    %979 = vmatprep.subr.mxu0 0.0
    %980 = vmatpush1.msra.mxu0 0.0
    %981 = vmatprep.subr.mxu0 0.0
    %982 = vmatpush1.msra.mxu0 0.0
    %983 = vmatprep.subr.mxu0 0.0
    %984 = vmatpush1.msra.mxu0 0.0
    %985 = vmatprep.subr.mxu0 0.0
    %986 = vmatpush1.msra.mxu0 0.0
    %987 = vmatprep.subr.mxu0 0.0
    %988 = vmatpush1.msra.mxu0 0.0
    %989 = vmatprep.subr.mxu0 0.0
    %990 = vmatpush1.msra.mxu0 0.0
    %991 = vmatprep.mubr.f32.mxu0 0.0
    %992 = vmatmul.mubr.f32.gmra.mrb[0].mxu0 %v134
    %v993 = vpop.f32.mrb[0].mxu0
    %v994 = vadd.f32 %v758, %v993
    %v995 = vpop.f32.mrb[0].mxu0
    %996 = vdwg.mxu0
    %997 = vmatprep.subr.mxu0 0.0
    %998 = vmatpush1.msra.mxu0 %v711
    %999 = vmatprep.subr.mxu0 0.0
    %1000 = vmatpush1.msra.mxu0 %v712
    %1001 = vmatprep.subr.mxu0 0.0
    %1002 = vmatpush1.msra.mxu0 %v713
    %1003 = vmatprep.subr.mxu0 0.0
    %1004 = vmatpush1.msra.mxu0 %v714
    %1005 = vmatprep.subr.mxu0 0.0
    %1006 = vmatpush1.msra.mxu0 0.0
    %1007 = vmatprep.subr.mxu0 0.0
    %1008 = vmatpush1.msra.mxu0 0.0
    %1009 = vmatprep.subr.mxu0 0.0
    %1010 = vmatpush1.msra.mxu0 0.0
    %1011 = vmatprep.subr.mxu0 0.0
    %1012 = vmatpush1.msra.mxu0 0.0
    %1013 = vmatprep.subr.mxu0 0.0
    %1014 = vmatpush1.msra.mxu0 0.0
    %1015 = vmatprep.subr.mxu0 0.0
    %1016 = vmatpush1.msra.mxu0 0.0
    %1017 = vmatprep.subr.mxu0 0.0
    %1018 = vmatpush1.msra.mxu0 0.0
    %1019 = vmatprep.subr.mxu0 0.0
    %1020 = vmatpush1.msra.mxu0 0.0
    %1021 = vmatprep.subr.mxu0 0.0
    %1022 = vmatpush1.msra.mxu0 0.0
    %1023 = vmatprep.subr.mxu0 0.0
    %1024 = vmatpush1.msra.mxu0 0.0
    %1025 = vmatprep.subr.mxu0 0.0
    %1026 = vmatpush1.msra.mxu0 0.0
    %1027 = vmatprep.subr.mxu0 0.0
    %1028 = vmatpush1.msra.mxu0 0.0
    %1029 = vmatprep.subr.mxu0 0.0
    %1030 = vmatpush1.msra.mxu0 0.0
    %1031 = vmatprep.subr.mxu0 0.0
    %1032 = vmatpush1.msra.mxu0 0.0
    %1033 = vmatprep.subr.mxu0 0.0
    %1034 = vmatpush1.msra.mxu0 0.0
    %1035 = vmatprep.subr.mxu0 0.0
    %1036 = vmatpush1.msra.mxu0 0.0
    %1037 = vmatprep.subr.mxu0 0.0
    %1038 = vmatpush1.msra.mxu0 0.0
    %1039 = vmatprep.subr.mxu0 0.0
    %1040 = vmatpush1.msra.mxu0 0.0
    %1041 = vmatprep.subr.mxu0 0.0
    %1042 = vmatpush1.msra.mxu0 0.0
    %1043 = vmatprep.subr.mxu0 0.0
    %1044 = vmatpush1.msra.mxu0 0.0
    %1045 = vmatprep.subr.mxu0 0.0
    %1046 = vmatpush1.msra.mxu0 0.0
    %1047 = vmatprep.subr.mxu0 0.0
    %1048 = vmatpush1.msra.mxu0 0.0
    %1049 = vmatprep.subr.mxu0 0.0
    %1050 = vmatpush1.msra.mxu0 0.0
    %1051 = vmatprep.subr.mxu0 0.0
    %1052 = vmatpush1.msra.mxu0 0.0
    %1053 = vmatprep.subr.mxu0 0.0
    %1054 = vmatpush1.msra.mxu0 0.0
    %1055 = vmatprep.subr.mxu0 0.0
    %1056 = vmatpush1.msra.mxu0 0.0
    %1057 = vmatprep.subr.mxu0 0.0
    %1058 = vmatpush1.msra.mxu0 0.0
    %1059 = vmatprep.subr.mxu0 0.0
    %1060 = vmatpush1.msra.mxu0 0.0
    %1061 = vmatprep.mubr.f32.mxu0 0.0
    %1062 = vmatmul.mubr.f32.gmra.mrb[0].mxu0 %v207
    %v1063 = vpop.f32.mrb[0].mxu0
    %v1064 = vadd.f32 %v762, %v1063
    %v1065 = vpop.f32.mrb[0].mxu0
    %1066 = vdwg.mxu0
    %1067 = vmatprep.subr.mxu0 0.0
    %1068 = vmatpush1.msra.mxu0 %v715
    %1069 = vmatprep.subr.mxu0 0.0
    %1070 = vmatpush1.msra.mxu0 %v716
    %1071 = vmatprep.subr.mxu0 0.0
    %1072 = vmatpush1.msra.mxu0 %v717
    %1073 = vmatprep.subr.mxu0 0.0
    %1074 = vmatpush1.msra.mxu0 %v718
    %1075 = vmatprep.subr.mxu0 0.0
    %1076 = vmatpush1.msra.mxu0 0.0
    %1077 = vmatprep.subr.mxu0 0.0
    %1078 = vmatpush1.msra.mxu0 0.0
    %1079 = vmatprep.subr.mxu0 0.0
    %1080 = vmatpush1.msra.mxu0 0.0
    %1081 = vmatprep.subr.mxu0 0.0
    %1082 = vmatpush1.msra.mxu0 0.0
    %1083 = vmatprep.subr.mxu0 0.0
    %1084 = vmatpush1.msra.mxu0 0.0
    %1085 = vmatprep.subr.mxu0 0.0
    %1086 = vmatpush1.msra.mxu0 0.0
    %1087 = vmatprep.subr.mxu0 0.0
    %1088 = vmatpush1.msra.mxu0 0.0
    %1089 = vmatprep.subr.mxu0 0.0
    %1090 = vmatpush1.msra.mxu0 0.0
    %1091 = vmatprep.subr.mxu0 0.0
    %1092 = vmatpush1.msra.mxu0 0.0
    %1093 = vmatprep.subr.mxu0 0.0
    %1094 = vmatpush1.msra.mxu0 0.0
    %1095 = vmatprep.subr.mxu0 0.0
    %1096 = vmatpush1.msra.mxu0 0.0
    %1097 = vmatprep.subr.mxu0 0.0
    %1098 = vmatpush1.msra.mxu0 0.0
    %1099 = vmatprep.subr.mxu0 0.0
    %1100 = vmatpush1.msra.mxu0 0.0
    %1101 = vmatprep.subr.mxu0 0.0
    %1102 = vmatpush1.msra.mxu0 0.0
    %1103 = vmatprep.subr.mxu0 0.0
    %1104 = vmatpush1.msra.mxu0 0.0
    %1105 = vmatprep.subr.mxu0 0.0
    %1106 = vmatpush1.msra.mxu0 0.0
    %1107 = vmatprep.subr.mxu0 0.0
    %1108 = vmatpush1.msra.mxu0 0.0
    %1109 = vmatprep.subr.mxu0 0.0
    %1110 = vmatpush1.msra.mxu0 0.0
    %1111 = vmatprep.subr.mxu0 0.0
    %1112 = vmatpush1.msra.mxu0 0.0
    %1113 = vmatprep.subr.mxu0 0.0
    %1114 = vmatpush1.msra.mxu0 0.0
    %1115 = vmatprep.subr.mxu0 0.0
    %1116 = vmatpush1.msra.mxu0 0.0
    %1117 = vmatprep.subr.mxu0 0.0
    %1118 = vmatpush1.msra.mxu0 0.0
    %1119 = vmatprep.subr.mxu0 0.0
    %1120 = vmatpush1.msra.mxu0 0.0
    %1121 = vmatprep.subr.mxu0 0.0
    %1122 = vmatpush1.msra.mxu0 0.0
    %1123 = vmatprep.subr.mxu0 0.0
    %1124 = vmatpush1.msra.mxu0 0.0
    %1125 = vmatprep.subr.mxu0 0.0
    %1126 = vmatpush1.msra.mxu0 0.0
    %1127 = vmatprep.subr.mxu0 0.0
    %1128 = vmatpush1.msra.mxu0 0.0
    %1129 = vmatprep.subr.mxu0 0.0
    %1130 = vmatpush1.msra.mxu0 0.0
    %1131 = vmatprep.mubr.f32.mxu0 0.0
    %1132 = vmatmul.mubr.f32.gmra.mrb[0].mxu0 %v134
    %v1133 = vpop.f32.mrb[0].mxu0
    %v1134 = vadd.f32 %v766, %v1133
    %v1135 = vpop.f32.mrb[0].mxu0
    %1136 = vdwg.mxu0
    %1137 = vmatprep.subr.mxu0 0.0
    %1138 = vmatpush1.msra.mxu0 %v719
    %1139 = vmatprep.subr.mxu0 0.0
    %1140 = vmatpush1.msra.mxu0 %v720
    %1141 = vmatprep.subr.mxu0 0.0
    %1142 = vmatpush1.msra.mxu0 %v721
    %1143 = vmatprep.subr.mxu0 0.0
    %1144 = vmatpush1.msra.mxu0 %v722
    %1145 = vmatprep.subr.mxu0 0.0
    %1146 = vmatpush1.msra.mxu0 0.0
    %1147 = vmatprep.subr.mxu0 0.0
    %1148 = vmatpush1.msra.mxu0 0.0
    %1149 = vmatprep.subr.mxu0 0.0
    %1150 = vmatpush1.msra.mxu0 0.0
    %1151 = vmatprep.subr.mxu0 0.0
    %1152 = vmatpush1.msra.mxu0 0.0
    %1153 = vmatprep.subr.mxu0 0.0
    %1154 = vmatpush1.msra.mxu0 0.0
    %1155 = vmatprep.subr.mxu0 0.0
    %1156 = vmatpush1.msra.mxu0 0.0
    %1157 = vmatprep.subr.mxu0 0.0
    %1158 = vmatpush1.msra.mxu0 0.0
    %1159 = vmatprep.subr.mxu0 0.0
    %1160 = vmatpush1.msra.mxu0 0.0
    %1161 = vmatprep.subr.mxu0 0.0
    %1162 = vmatpush1.msra.mxu0 0.0
    %1163 = vmatprep.subr.mxu0 0.0
    %1164 = vmatpush1.msra.mxu0 0.0
    %1165 = vmatprep.subr.mxu0 0.0
    %1166 = vmatpush1.msra.mxu0 0.0
    %1167 = vmatprep.subr.mxu0 0.0
    %1168 = vmatpush1.msra.mxu0 0.0
    %1169 = vmatprep.subr.mxu0 0.0
    %1170 = vmatpush1.msra.mxu0 0.0
    %1171 = vmatprep.subr.mxu0 0.0
    %1172 = vmatpush1.msra.mxu0 0.0
    %1173 = vmatprep.subr.mxu0 0.0
    %1174 = vmatpush1.msra.mxu0 0.0
    %1175 = vmatprep.subr.mxu0 0.0
    %1176 = vmatpush1.msra.mxu0 0.0
    %1177 = vmatprep.subr.mxu0 0.0
    %1178 = vmatpush1.msra.mxu0 0.0
    %1179 = vmatprep.subr.mxu0 0.0
    %1180 = vmatpush1.msra.mxu0 0.0
    %1181 = vmatprep.subr.mxu0 0.0
    %1182 = vmatpush1.msra.mxu0 0.0
    %1183 = vmatprep.subr.mxu0 0.0
    %1184 = vmatpush1.msra.mxu0 0.0
    %1185 = vmatprep.subr.mxu0 0.0
    %1186 = vmatpush1.msra.mxu0 0.0
    %1187 = vmatprep.subr.mxu0 0.0
    %1188 = vmatpush1.msra.mxu0 0.0
    %1189 = vmatprep.subr.mxu0 0.0
    %1190 = vmatpush1.msra.mxu0 0.0
    %1191 = vmatprep.subr.mxu0 0.0
    %1192 = vmatpush1.msra.mxu0 0.0
    %1193 = vmatprep.subr.mxu0 0.0
    %1194 = vmatpush1.msra.mxu0 0.0
    %1195 = vmatprep.subr.mxu0 0.0
    %1196 = vmatpush1.msra.mxu0 0.0
    %1197 = vmatprep.subr.mxu0 0.0
    %1198 = vmatpush1.msra.mxu0 0.0
    %1199 = vmatprep.subr.mxu0 0.0
    %1200 = vmatpush1.msra.mxu0 0.0
    %1201 = vmatprep.mubr.f32.mxu0 0.0
    %1202 = vmatmul.mubr.f32.gmra.mrb[0].mxu0 %v207
    %v1203 = vpop.f32.mrb[0].mxu0
    %v1204 = vadd.f32 %v770, %v1203
    %v1205 = vpop.f32.mrb[0].mxu0
    %1206 = vdwg.mxu0
    %1207 = vmatprep.subr.mxu0 0.0
    %1208 = vmatpush1.msra.mxu0 %v723
    %1209 = vmatprep.subr.mxu0 0.0
    %1210 = vmatpush1.msra.mxu0 %v724
    %1211 = vmatprep.subr.mxu0 0.0
    %1212 = vmatpush1.msra.mxu0 %v725
    %1213 = vmatprep.subr.mxu0 0.0
    %1214 = vmatpush1.msra.mxu0 %v726
    %1215 = vmatprep.subr.mxu0 0.0
    %1216 = vmatpush1.msra.mxu0 0.0
    %1217 = vmatprep.subr.mxu0 0.0
    %1218 = vmatpush1.msra.mxu0 0.0
    %1219 = vmatprep.subr.mxu0 0.0
    %1220 = vmatpush1.msra.mxu0 0.0
    %1221 = vmatprep.subr.mxu0 0.0
    %1222 = vmatpush1.msra.mxu0 0.0
    %1223 = vmatprep.subr.mxu0 0.0
    %1224 = vmatpush1.msra.mxu0 0.0
    %1225 = vmatprep.subr.mxu0 0.0
    %1226 = vmatpush1.msra.mxu0 0.0
    %1227 = vmatprep.subr.mxu0 0.0
    %1228 = vmatpush1.msra.mxu0 0.0
    %1229 = vmatprep.subr.mxu0 0.0
    %1230 = vmatpush1.msra.mxu0 0.0
    %1231 = vmatprep.subr.mxu0 0.0
    %1232 = vmatpush1.msra.mxu0 0.0
    %1233 = vmatprep.subr.mxu0 0.0
    %1234 = vmatpush1.msra.mxu0 0.0
    %1235 = vmatprep.subr.mxu0 0.0
    %1236 = vmatpush1.msra.mxu0 0.0
    %1237 = vmatprep.subr.mxu0 0.0
    %1238 = vmatpush1.msra.mxu0 0.0
    %1239 = vmatprep.subr.mxu0 0.0
    %1240 = vmatpush1.msra.mxu0 0.0
    %1241 = vmatprep.subr.mxu0 0.0
    %1242 = vmatpush1.msra.mxu0 0.0
    %1243 = vmatprep.subr.mxu0 0.0
    %1244 = vmatpush1.msra.mxu0 0.0
    %1245 = vmatprep.subr.mxu0 0.0
    %1246 = vmatpush1.msra.mxu0 0.0
    %1247 = vmatprep.subr.mxu0 0.0
    %1248 = vmatpush1.msra.mxu0 0.0
    %1249 = vmatprep.subr.mxu0 0.0
    %1250 = vmatpush1.msra.mxu0 0.0
    %1251 = vmatprep.subr.mxu0 0.0
    %1252 = vmatpush1.msra.mxu0 0.0
    %1253 = vmatprep.subr.mxu0 0.0
    %1254 = vmatpush1.msra.mxu0 0.0
    %1255 = vmatprep.subr.mxu0 0.0
    %1256 = vmatpush1.msra.mxu0 0.0
    %1257 = vmatprep.subr.mxu0 0.0
    %1258 = vmatpush1.msra.mxu0 0.0
    %1259 = vmatprep.subr.mxu0 0.0
    %1260 = vmatpush1.msra.mxu0 0.0
    %1261 = vmatprep.subr.mxu0 0.0
    %1262 = vmatpush1.msra.mxu0 0.0
    %1263 = vmatprep.subr.mxu0 0.0
    %1264 = vmatpush1.msra.mxu0 0.0
    %1265 = vmatprep.subr.mxu0 0.0
    %1266 = vmatpush1.msra.mxu0 0.0
    %1267 = vmatprep.subr.mxu0 0.0
    %1268 = vmatpush1.msra.mxu0 0.0
    %1269 = vmatprep.subr.mxu0 0.0
    %1270 = vmatpush1.msra.mxu0 0.0
    %1271 = vmatprep.mubr.f32.mxu0 0.0
    %1272 = vmatmul.mubr.f32.gmra.mrb[0].mxu0 %v134
    %v1273 = vpop.f32.mrb[0].mxu0
    %v1274 = vadd.f32 %v774, %v1273
    %v1275 = vpop.f32.mrb[0].mxu0
    %1276 = vdwg.mxu0
    %1277 = vmatprep.subr.mxu0 0.0
    %1278 = vmatpush1.msra.mxu0 %v727
    %1279 = vmatprep.subr.mxu0 0.0
    %1280 = vmatpush1.msra.mxu0 %v728
    %1281 = vmatprep.subr.mxu0 0.0
    %1282 = vmatpush1.msra.mxu0 %v729
    %1283 = vmatprep.subr.mxu0 0.0
    %1284 = vmatpush1.msra.mxu0 %v730
    %1285 = vmatprep.subr.mxu0 0.0
    %1286 = vmatpush1.msra.mxu0 0.0
    %1287 = vmatprep.subr.mxu0 0.0
    %1288 = vmatpush1.msra.mxu0 0.0
    %1289 = vmatprep.subr.mxu0 0.0
    %1290 = vmatpush1.msra.mxu0 0.0
    %1291 = vmatprep.subr.mxu0 0.0
    %1292 = vmatpush1.msra.mxu0 0.0
    %1293 = vmatprep.subr.mxu0 0.0
    %1294 = vmatpush1.msra.mxu0 0.0
    %1295 = vmatprep.subr.mxu0 0.0
    %1296 = vmatpush1.msra.mxu0 0.0
    %1297 = vmatprep.subr.mxu0 0.0
    %1298 = vmatpush1.msra.mxu0 0.0
    %1299 = vmatprep.subr.mxu0 0.0
    %1300 = vmatpush1.msra.mxu0 0.0
    %1301 = vmatprep.subr.mxu0 0.0
    %1302 = vmatpush1.msra.mxu0 0.0
    %1303 = vmatprep.subr.mxu0 0.0
    %1304 = vmatpush1.msra.mxu0 0.0
    %1305 = vmatprep.subr.mxu0 0.0
    %1306 = vmatpush1.msra.mxu0 0.0
    %1307 = vmatprep.subr.mxu0 0.0
    %1308 = vmatpush1.msra.mxu0 0.0
    %1309 = vmatprep.subr.mxu0 0.0
    %1310 = vmatpush1.msra.mxu0 0.0
    %1311 = vmatprep.subr.mxu0 0.0
    %1312 = vmatpush1.msra.mxu0 0.0
    %1313 = vmatprep.subr.mxu0 0.0
    %1314 = vmatpush1.msra.mxu0 0.0
    %1315 = vmatprep.subr.mxu0 0.0
    %1316 = vmatpush1.msra.mxu0 0.0
    %1317 = vmatprep.subr.mxu0 0.0
    %1318 = vmatpush1.msra.mxu0 0.0
    %1319 = vmatprep.subr.mxu0 0.0
    %1320 = vmatpush1.msra.mxu0 0.0
    %1321 = vmatprep.subr.mxu0 0.0
    %1322 = vmatpush1.msra.mxu0 0.0
    %1323 = vmatprep.subr.mxu0 0.0
    %1324 = vmatpush1.msra.mxu0 0.0
    %1325 = vmatprep.subr.mxu0 0.0
    %1326 = vmatpush1.msra.mxu0 0.0
    %1327 = vmatprep.subr.mxu0 0.0
    %1328 = vmatpush1.msra.mxu0 0.0
    %1329 = vmatprep.subr.mxu0 0.0
    %1330 = vmatpush1.msra.mxu0 0.0
    %1331 = vmatprep.subr.mxu0 0.0
    %1332 = vmatpush1.msra.mxu0 0.0
    %1333 = vmatprep.subr.mxu0 0.0
    %1334 = vmatpush1.msra.mxu0 0.0
    %1335 = vmatprep.subr.mxu0 0.0
    %1336 = vmatpush1.msra.mxu0 0.0
    %1337 = vmatprep.subr.mxu0 0.0
    %1338 = vmatpush1.msra.mxu0 0.0
    %1339 = vmatprep.subr.mxu0 0.0
    %1340 = vmatpush1.msra.mxu0 0.0
    %1341 = vmatprep.mubr.f32.mxu0 0.0
    %1342 = vmatmul.mubr.f32.gmra.mrb[0].mxu0 %v207
    %v1343 = vpop.f32.mrb[0].mxu0
    %v1344 = vadd.f32 %v778, %v1343
    %v1345 = vpop.f32.mrb[0].mxu0
    %1346 = vdwg.mxu0
    %v1347 = vld [vmem:[%s3] sm:$0xff]
    %v1348 = vld [vmem:[%s3 + $0x8] sm:$0xff]
    %v1349 = vld [vmem:[%s3 + $0x10] sm:$0xff]
    %v1350 = vld [vmem:[%s3 + $0x18] sm:$0xff]
    %v1351 = vld [vmem:[%s3 + $0x20] sm:$0xff]
    %v1352 = vld [vmem:[%s3 + $0x28] sm:$0xff]
    %v1353 = vld [vmem:[%s3 + $0x30] sm:$0xff]
    %v1354 = vld [vmem:[%s3 + $0x38] sm:$0xff]
    %v1355 = vld [vmem:[%s3 + $0x40] sm:$0xff]
    %v1356 = vld [vmem:[%s3 + $0x48] sm:$0xff]
    %v1357 = vld [vmem:[%s3 + $0x50] sm:$0xff]
    %v1358 = vld [vmem:[%s3 + $0x58] sm:$0xff]
    %v1359 = vld [vmem:[%s3 + $0x60] sm:$0xff]
    %v1360 = vld [vmem:[%s3 + $0x68] sm:$0xff]
    %v1361 = vld [vmem:[%s3 + $0x70] sm:$0xff]
    %v1362 = vld [vmem:[%s3 + $0x78] sm:$0xff]
    %v1363 = vld [vmem:[%s3 + $0x80] sm:$0xff]
    %v1364 = vld [vmem:[%s3 + $0x88] sm:$0xff]
    %v1365 = vld [vmem:[%s3 + $0x90] sm:$0xff]
    %v1366 = vld [vmem:[%s3 + $0x98] sm:$0xff]
    %v1367 = vld [vmem:[%s3 + $0xa0] sm:$0xff]
    %v1368 = vld [vmem:[%s3 + $0xa8] sm:$0xff]
    %v1369 = vld [vmem:[%s3 + $0xb0] sm:$0xff]
    %v1370 = vld [vmem:[%s3 + $0xb8] sm:$0xff]
    %v1371 = vld [vmem:[%s3 + $0xc0] sm:$0xff]
    %v1372 = vld [vmem:[%s3 + $0xc8] sm:$0xff]
    %v1373 = vld [vmem:[%s3 + $0xd0] sm:$0xff]
    %v1374 = vld [vmem:[%s3 + $0xd8] sm:$0xff]
    %v1375 = vld [vmem:[%s3 + $0xe0] sm:$0xff]
    %v1376 = vld [vmem:[%s3 + $0xe8] sm:$0xff]
    %v1377 = vld [vmem:[%s3 + $0xf0] sm:$0xff]
    %v1378 = vld [vmem:[%s3 + $0xf8] sm:$0xff]
    %v1379 = vld [vmem:[%s6] sm:$0x1]
    %v1380 = vld [vmem:[%s6 + $0x1] sm:$0x1]
    %v1381 = vld [vmem:[%s6 + $0x2] sm:$0x1]
    %v1382 = vld [vmem:[%s6 + $0x3] sm:$0x1]
    %v1383 = vld [vmem:[%s6 + $0x4] sm:$0x1]
    %v1384 = vld [vmem:[%s6 + $0x5] sm:$0x1]
    %v1385 = vld [vmem:[%s6 + $0x6] sm:$0x1]
    %v1386 = vld [vmem:[%s6 + $0x7] sm:$0x1]
    %v1395 = vlaneseq
    %v1396 = vshrl.u32 %v1395, 7
    %v1397 = vsub.s32 0, %v1396
    %v1398 = vrot.slane %v1379, %v1397
    %v1399 = vlaneseq
    %v1400 = vshrl.u32 %v1399, 7
    %v1401 = vsub.s32 0, %v1400
    %v1402 = vrot.slane %v1380, %v1401
    %v1403 = vlaneseq
    %v1404 = vshrl.u32 %v1403, 7
    %v1405 = vsub.s32 0, %v1404
    %v1406 = vrot.slane %v1381, %v1405
    %v1407 = vlaneseq
    %v1408 = vshrl.u32 %v1407, 7
    %v1409 = vsub.s32 0, %v1408
    %v1410 = vrot.slane %v1382, %v1409
    %v1411 = vlaneseq
    %v1412 = vshrl.u32 %v1411, 7
    %v1413 = vsub.s32 0, %v1412
    %v1414 = vrot.slane %v1383, %v1413
    %v1415 = vlaneseq
    %v1416 = vshrl.u32 %v1415, 7
    %v1417 = vsub.s32 0, %v1416
    %v1418 = vrot.slane %v1384, %v1417
    %v1419 = vlaneseq
    %v1420 = vshrl.u32 %v1419, 7
    %v1421 = vsub.s32 0, %v1420
    %v1422 = vrot.slane %v1385, %v1421
    %v1423 = vlaneseq
    %v1424 = vshrl.u32 %v1423, 7
    %v1425 = vsub.s32 0, %v1424
    %v1426 = vrot.slane %v1386, %v1425
    %1435 = vmatprep.subr.mxu0 0.0
    %1436 = vmatpush1.msra.mxu0 %v1347
    %1437 = vmatprep.subr.mxu0 0.0
    %1438 = vmatpush1.msra.mxu0 %v1348
    %1439 = vmatprep.subr.mxu0 0.0
    %1440 = vmatpush1.msra.mxu0 %v1349
    %1441 = vmatprep.subr.mxu0 0.0
    %1442 = vmatpush1.msra.mxu0 %v1350
    %1443 = vmatprep.subr.mxu0 0.0
    %1444 = vmatpush1.msra.mxu0 0.0
    %1445 = vmatprep.subr.mxu0 0.0
    %1446 = vmatpush1.msra.mxu0 0.0
    %1447 = vmatprep.subr.mxu0 0.0
    %1448 = vmatpush1.msra.mxu0 0.0
    %1449 = vmatprep.subr.mxu0 0.0
    %1450 = vmatpush1.msra.mxu0 0.0
    %1451 = vmatprep.subr.mxu0 0.0
    %1452 = vmatpush1.msra.mxu0 0.0
    %1453 = vmatprep.subr.mxu0 0.0
    %1454 = vmatpush1.msra.mxu0 0.0
    %1455 = vmatprep.subr.mxu0 0.0
    %1456 = vmatpush1.msra.mxu0 0.0
    %1457 = vmatprep.subr.mxu0 0.0
    %1458 = vmatpush1.msra.mxu0 0.0
    %1459 = vmatprep.subr.mxu0 0.0
    %1460 = vmatpush1.msra.mxu0 0.0
    %1461 = vmatprep.subr.mxu0 0.0
    %1462 = vmatpush1.msra.mxu0 0.0
    %1463 = vmatprep.subr.mxu0 0.0
    %1464 = vmatpush1.msra.mxu0 0.0
    %1465 = vmatprep.subr.mxu0 0.0
    %1466 = vmatpush1.msra.mxu0 0.0
    %1467 = vmatprep.subr.mxu0 0.0
    %1468 = vmatpush1.msra.mxu0 0.0
    %1469 = vmatprep.subr.mxu0 0.0
    %1470 = vmatpush1.msra.mxu0 0.0
    %1471 = vmatprep.subr.mxu0 0.0
    %1472 = vmatpush1.msra.mxu0 0.0
    %1473 = vmatprep.subr.mxu0 0.0
    %1474 = vmatpush1.msra.mxu0 0.0
    %1475 = vmatprep.subr.mxu0 0.0
    %1476 = vmatpush1.msra.mxu0 0.0
    %1477 = vmatprep.subr.mxu0 0.0
    %1478 = vmatpush1.msra.mxu0 0.0
    %1479 = vmatprep.subr.mxu0 0.0
    %1480 = vmatpush1.msra.mxu0 0.0
    %1481 = vmatprep.subr.mxu0 0.0
    %1482 = vmatpush1.msra.mxu0 0.0
    %1483 = vmatprep.subr.mxu0 0.0
    %1484 = vmatpush1.msra.mxu0 0.0
    %1485 = vmatprep.subr.mxu0 0.0
    %1486 = vmatpush1.msra.mxu0 0.0
    %1487 = vmatprep.subr.mxu0 0.0
    %1488 = vmatpush1.msra.mxu0 0.0
    %1489 = vmatprep.subr.mxu0 0.0
    %1490 = vmatpush1.msra.mxu0 0.0
    %1491 = vmatprep.subr.mxu0 0.0
    %1492 = vmatpush1.msra.mxu0 0.0
    %1493 = vmatprep.subr.mxu0 0.0
    %1494 = vmatpush1.msra.mxu0 0.0
    %1495 = vmatprep.subr.mxu0 0.0
    %1496 = vmatpush1.msra.mxu0 0.0
    %1497 = vmatprep.subr.mxu0 0.0
    %1498 = vmatpush1.msra.mxu0 0.0
    %1499 = vmatprep.mubr.f32.mxu0 0.0
    %1500 = vmatmul.mubr.f32.gmra.mrb[0].mxu0 %v134
    %v1501 = vpop.f32.mrb[0].mxu0
    %v1502 = vadd.f32 %v1398, %v1501
    %v1503 = vpop.f32.mrb[0].mxu0
    %1504 = vdwg.mxu0
    %1505 = vmatprep.subr.mxu0 0.0
    %1506 = vmatpush1.msra.mxu0 %v1351
    %1507 = vmatprep.subr.mxu0 0.0
    %1508 = vmatpush1.msra.mxu0 %v1352
    %1509 = vmatprep.subr.mxu0 0.0
    %1510 = vmatpush1.msra.mxu0 %v1353
    %1511 = vmatprep.subr.mxu0 0.0
    %1512 = vmatpush1.msra.mxu0 %v1354
    %1513 = vmatprep.subr.mxu0 0.0
    %1514 = vmatpush1.msra.mxu0 0.0
    %1515 = vmatprep.subr.mxu0 0.0
    %1516 = vmatpush1.msra.mxu0 0.0
    %1517 = vmatprep.subr.mxu0 0.0
    %1518 = vmatpush1.msra.mxu0 0.0
    %1519 = vmatprep.subr.mxu0 0.0
    %1520 = vmatpush1.msra.mxu0 0.0
    %1521 = vmatprep.subr.mxu0 0.0
    %1522 = vmatpush1.msra.mxu0 0.0
    %1523 = vmatprep.subr.mxu0 0.0
    %1524 = vmatpush1.msra.mxu0 0.0
    %1525 = vmatprep.subr.mxu0 0.0
    %1526 = vmatpush1.msra.mxu0 0.0
    %1527 = vmatprep.subr.mxu0 0.0
    %1528 = vmatpush1.msra.mxu0 0.0
    %1529 = vmatprep.subr.mxu0 0.0
    %1530 = vmatpush1.msra.mxu0 0.0
    %1531 = vmatprep.subr.mxu0 0.0
    %1532 = vmatpush1.msra.mxu0 0.0
    %1533 = vmatprep.subr.mxu0 0.0
    %1534 = vmatpush1.msra.mxu0 0.0
    %1535 = vmatprep.subr.mxu0 0.0
    %1536 = vmatpush1.msra.mxu0 0.0
    %1537 = vmatprep.subr.mxu0 0.0
    %1538 = vmatpush1.msra.mxu0 0.0
    %1539 = vmatprep.subr.mxu0 0.0
    %1540 = vmatpush1.msra.mxu0 0.0
    %1541 = vmatprep.subr.mxu0 0.0
    %1542 = vmatpush1.msra.mxu0 0.0
    %1543 = vmatprep.subr.mxu0 0.0
    %1544 = vmatpush1.msra.mxu0 0.0
    %1545 = vmatprep.subr.mxu0 0.0
    %1546 = vmatpush1.msra.mxu0 0.0
    %1547 = vmatprep.subr.mxu0 0.0
    %1548 = vmatpush1.msra.mxu0 0.0
    %1549 = vmatprep.subr.mxu0 0.0
    %1550 = vmatpush1.msra.mxu0 0.0
    %1551 = vmatprep.subr.mxu0 0.0
    %1552 = vmatpush1.msra.mxu0 0.0
    %1553 = vmatprep.subr.mxu0 0.0
    %1554 = vmatpush1.msra.mxu0 0.0
    %1555 = vmatprep.subr.mxu0 0.0
    %1556 = vmatpush1.msra.mxu0 0.0
    %1557 = vmatprep.subr.mxu0 0.0
    %1558 = vmatpush1.msra.mxu0 0.0
    %1559 = vmatprep.subr.mxu0 0.0
    %1560 = vmatpush1.msra.mxu0 0.0
    %1561 = vmatprep.subr.mxu0 0.0
    %1562 = vmatpush1.msra.mxu0 0.0
    %1563 = vmatprep.subr.mxu0 0.0
    %1564 = vmatpush1.msra.mxu0 0.0
    %1565 = vmatprep.subr.mxu0 0.0
    %1566 = vmatpush1.msra.mxu0 0.0
    %1567 = vmatprep.subr.mxu0 0.0
    %1568 = vmatpush1.msra.mxu0 0.0
    %1569 = vmatprep.mubr.f32.mxu0 0.0
    %1570 = vmatmul.mubr.f32.gmra.mrb[0].mxu0 %v207
    %v1571 = vpop.f32.mrb[0].mxu0
    %v1572 = vadd.f32 %v1402, %v1571
    %v1573 = vpop.f32.mrb[0].mxu0
    %1574 = vdwg.mxu0
    %1575 = vmatprep.subr.mxu0 0.0
    %1576 = vmatpush1.msra.mxu0 %v1355
    %1577 = vmatprep.subr.mxu0 0.0
    %1578 = vmatpush1.msra.mxu0 %v1356
    %1579 = vmatprep.subr.mxu0 0.0
    %1580 = vmatpush1.msra.mxu0 %v1357
    %1581 = vmatprep.subr.mxu0 0.0
    %1582 = vmatpush1.msra.mxu0 %v1358
    %1583 = vmatprep.subr.mxu0 0.0
    %1584 = vmatpush1.msra.mxu0 0.0
    %1585 = vmatprep.subr.mxu0 0.0
    %1586 = vmatpush1.msra.mxu0 0.0
    %1587 = vmatprep.subr.mxu0 0.0
    %1588 = vmatpush1.msra.mxu0 0.0
    %1589 = vmatprep.subr.mxu0 0.0
    %1590 = vmatpush1.msra.mxu0 0.0
    %1591 = vmatprep.subr.mxu0 0.0
    %1592 = vmatpush1.msra.mxu0 0.0
    %1593 = vmatprep.subr.mxu0 0.0
    %1594 = vmatpush1.msra.mxu0 0.0
    %1595 = vmatprep.subr.mxu0 0.0
    %1596 = vmatpush1.msra.mxu0 0.0
    %1597 = vmatprep.subr.mxu0 0.0
    %1598 = vmatpush1.msra.mxu0 0.0
    %1599 = vmatprep.subr.mxu0 0.0
    %1600 = vmatpush1.msra.mxu0 0.0
    %1601 = vmatprep.subr.mxu0 0.0
    %1602 = vmatpush1.msra.mxu0 0.0
    %1603 = vmatprep.subr.mxu0 0.0
    %1604 = vmatpush1.msra.mxu0 0.0
    %1605 = vmatprep.subr.mxu0 0.0
    %1606 = vmatpush1.msra.mxu0 0.0
    %1607 = vmatprep.subr.mxu0 0.0
    %1608 = vmatpush1.msra.mxu0 0.0
    %1609 = vmatprep.subr.mxu0 0.0
    %1610 = vmatpush1.msra.mxu0 0.0
    %1611 = vmatprep.subr.mxu0 0.0
    %1612 = vmatpush1.msra.mxu0 0.0
    %1613 = vmatprep.subr.mxu0 0.0
    %1614 = vmatpush1.msra.mxu0 0.0
    %1615 = vmatprep.subr.mxu0 0.0
    %1616 = vmatpush1.msra.mxu0 0.0
    %1617 = vmatprep.subr.mxu0 0.0
    %1618 = vmatpush1.msra.mxu0 0.0
    %1619 = vmatprep.subr.mxu0 0.0
    %1620 = vmatpush1.msra.mxu0 0.0
    %1621 = vmatprep.subr.mxu0 0.0
    %1622 = vmatpush1.msra.mxu0 0.0
    %1623 = vmatprep.subr.mxu0 0.0
    %1624 = vmatpush1.msra.mxu0 0.0
    %1625 = vmatprep.subr.mxu0 0.0
    %1626 = vmatpush1.msra.mxu0 0.0
    %1627 = vmatprep.subr.mxu0 0.0
    %1628 = vmatpush1.msra.mxu0 0.0
    %1629 = vmatprep.subr.mxu0 0.0
    %1630 = vmatpush1.msra.mxu0 0.0
    %1631 = vmatprep.subr.mxu0 0.0
    %1632 = vmatpush1.msra.mxu0 0.0
    %1633 = vmatprep.subr.mxu0 0.0
    %1634 = vmatpush1.msra.mxu0 0.0
    %1635 = vmatprep.subr.mxu0 0.0
    %1636 = vmatpush1.msra.mxu0 0.0
    %1637 = vmatprep.subr.mxu0 0.0
    %1638 = vmatpush1.msra.mxu0 0.0
    %1639 = vmatprep.mubr.f32.mxu0 0.0
    %1640 = vmatmul.mubr.f32.gmra.mrb[0].mxu0 %v134
    %v1641 = vpop.f32.mrb[0].mxu0
    %v1642 = vadd.f32 %v1406, %v1641
    %v1643 = vpop.f32.mrb[0].mxu0
    %1644 = vdwg.mxu0
    %1645 = vmatprep.subr.mxu0 0.0
    %1646 = vmatpush1.msra.mxu0 %v1359
    %1647 = vmatprep.subr.mxu0 0.0
    %1648 = vmatpush1.msra.mxu0 %v1360
    %1649 = vmatprep.subr.mxu0 0.0
    %1650 = vmatpush1.msra.mxu0 %v1361
    %1651 = vmatprep.subr.mxu0 0.0
    %1652 = vmatpush1.msra.mxu0 %v1362
    %1653 = vmatprep.subr.mxu0 0.0
    %1654 = vmatpush1.msra.mxu0 0.0
    %1655 = vmatprep.subr.mxu0 0.0
    %1656 = vmatpush1.msra.mxu0 0.0
    %1657 = vmatprep.subr.mxu0 0.0
    %1658 = vmatpush1.msra.mxu0 0.0
    %1659 = vmatprep.subr.mxu0 0.0
    %1660 = vmatpush1.msra.mxu0 0.0
    %1661 = vmatprep.subr.mxu0 0.0
    %1662 = vmatpush1.msra.mxu0 0.0
    %1663 = vmatprep.subr.mxu0 0.0
    %1664 = vmatpush1.msra.mxu0 0.0
    %1665 = vmatprep.subr.mxu0 0.0
    %1666 = vmatpush1.msra.mxu0 0.0
    %1667 = vmatprep.subr.mxu0 0.0
    %1668 = vmatpush1.msra.mxu0 0.0
    %1669 = vmatprep.subr.mxu0 0.0
    %1670 = vmatpush1.msra.mxu0 0.0
    %1671 = vmatprep.subr.mxu0 0.0
    %1672 = vmatpush1.msra.mxu0 0.0
    %1673 = vmatprep.subr.mxu0 0.0
    %1674 = vmatpush1.msra.mxu0 0.0
    %1675 = vmatprep.subr.mxu0 0.0
    %1676 = vmatpush1.msra.mxu0 0.0
    %1677 = vmatprep.subr.mxu0 0.0
    %1678 = vmatpush1.msra.mxu0 0.0
    %1679 = vmatprep.subr.mxu0 0.0
    %1680 = vmatpush1.msra.mxu0 0.0
    %1681 = vmatprep.subr.mxu0 0.0
    %1682 = vmatpush1.msra.mxu0 0.0
    %1683 = vmatprep.subr.mxu0 0.0
    %1684 = vmatpush1.msra.mxu0 0.0
    %1685 = vmatprep.subr.mxu0 0.0
    %1686 = vmatpush1.msra.mxu0 0.0
    %1687 = vmatprep.subr.mxu0 0.0
    %1688 = vmatpush1.msra.mxu0 0.0
    %1689 = vmatprep.subr.mxu0 0.0
    %1690 = vmatpush1.msra.mxu0 0.0
    %1691 = vmatprep.subr.mxu0 0.0
    %1692 = vmatpush1.msra.mxu0 0.0
    %1693 = vmatprep.subr.mxu0 0.0
    %1694 = vmatpush1.msra.mxu0 0.0
    %1695 = vmatprep.subr.mxu0 0.0
    %1696 = vmatpush1.msra.mxu0 0.0
    %1697 = vmatprep.subr.mxu0 0.0
    %1698 = vmatpush1.msra.mxu0 0.0
    %1699 = vmatprep.subr.mxu0 0.0
    %1700 = vmatpush1.msra.mxu0 0.0
    %1701 = vmatprep.subr.mxu0 0.0
    %1702 = vmatpush1.msra.mxu0 0.0
    %1703 = vmatprep.subr.mxu0 0.0
    %1704 = vmatpush1.msra.mxu0 0.0
    %1705 = vmatprep.subr.mxu0 0.0
    %1706 = vmatpush1.msra.mxu0 0.0
    %1707 = vmatprep.subr.mxu0 0.0
    %1708 = vmatpush1.msra.mxu0 0.0
    %1709 = vmatprep.mubr.f32.mxu0 0.0
    %1710 = vmatmul.mubr.f32.gmra.mrb[0].mxu0 %v207
    %v1711 = vpop.f32.mrb[0].mxu0
    %v1712 = vadd.f32 %v1410, %v1711
    %v1713 = vpop.f32.mrb[0].mxu0
    %1714 = vdwg.mxu0
    %1715 = vmatprep.subr.mxu0 0.0
    %1716 = vmatpush1.msra.mxu0 %v1363
    %1717 = vmatprep.subr.mxu0 0.0
    %1718 = vmatpush1.msra.mxu0 %v1364
    %1719 = vmatprep.subr.mxu0 0.0
    %1720 = vmatpush1.msra.mxu0 %v1365
    %1721 = vmatprep.subr.mxu0 0.0
    %1722 = vmatpush1.msra.mxu0 %v1366
    %1723 = vmatprep.subr.mxu0 0.0
    %1724 = vmatpush1.msra.mxu0 0.0
    %1725 = vmatprep.subr.mxu0 0.0
    %1726 = vmatpush1.msra.mxu0 0.0
    %1727 = vmatprep.subr.mxu0 0.0
    %1728 = vmatpush1.msra.mxu0 0.0
    %1729 = vmatprep.subr.mxu0 0.0
    %1730 = vmatpush1.msra.mxu0 0.0
    %1731 = vmatprep.subr.mxu0 0.0
    %1732 = vmatpush1.msra.mxu0 0.0
    %1733 = vmatprep.subr.mxu0 0.0
    %1734 = vmatpush1.msra.mxu0 0.0
    %1735 = vmatprep.subr.mxu0 0.0
    %1736 = vmatpush1.msra.mxu0 0.0
    %1737 = vmatprep.subr.mxu0 0.0
    %1738 = vmatpush1.msra.mxu0 0.0
    %1739 = vmatprep.subr.mxu0 0.0
    %1740 = vmatpush1.msra.mxu0 0.0
    %1741 = vmatprep.subr.mxu0 0.0
    %1742 = vmatpush1.msra.mxu0 0.0
    %1743 = vmatprep.subr.mxu0 0.0
    %1744 = vmatpush1.msra.mxu0 0.0
    %1745 = vmatprep.subr.mxu0 0.0
    %1746 = vmatpush1.msra.mxu0 0.0
    %1747 = vmatprep.subr.mxu0 0.0
    %1748 = vmatpush1.msra.mxu0 0.0
    %1749 = vmatprep.subr.mxu0 0.0
    %1750 = vmatpush1.msra.mxu0 0.0
    %1751 = vmatprep.subr.mxu0 0.0
    %1752 = vmatpush1.msra.mxu0 0.0
    %1753 = vmatprep.subr.mxu0 0.0
    %1754 = vmatpush1.msra.mxu0 0.0
    %1755 = vmatprep.subr.mxu0 0.0
    %1756 = vmatpush1.msra.mxu0 0.0
    %1757 = vmatprep.subr.mxu0 0.0
    %1758 = vmatpush1.msra.mxu0 0.0
    %1759 = vmatprep.subr.mxu0 0.0
    %1760 = vmatpush1.msra.mxu0 0.0
    %1761 = vmatprep.subr.mxu0 0.0
    %1762 = vmatpush1.msra.mxu0 0.0
    %1763 = vmatprep.subr.mxu0 0.0
    %1764 = vmatpush1.msra.mxu0 0.0
    %1765 = vmatprep.subr.mxu0 0.0
    %1766 = vmatpush1.msra.mxu0 0.0
    %1767 = vmatprep.subr.mxu0 0.0
    %1768 = vmatpush1.msra.mxu0 0.0
    %1769 = vmatprep.subr.mxu0 0.0
    %1770 = vmatpush1.msra.mxu0 0.0
    %1771 = vmatprep.subr.mxu0 0.0
    %1772 = vmatpush1.msra.mxu0 0.0
    %1773 = vmatprep.subr.mxu0 0.0
    %1774 = vmatpush1.msra.mxu0 0.0
    %1775 = vmatprep.subr.mxu0 0.0
    %1776 = vmatpush1.msra.mxu0 0.0
    %1777 = vmatprep.subr.mxu0 0.0
    %1778 = vmatpush1.msra.mxu0 0.0
    %1779 = vmatprep.mubr.f32.mxu0 0.0
    %1780 = vmatmul.mubr.f32.gmra.mrb[0].mxu0 %v134
    %v1781 = vpop.f32.mrb[0].mxu0
    %v1782 = vadd.f32 %v1414, %v1781
    %v1783 = vpop.f32.mrb[0].mxu0
    %1784 = vdwg.mxu0
    %1785 = vmatprep.subr.mxu0 0.0
    %1786 = vmatpush1.msra.mxu0 %v1367
    %1787 = vmatprep.subr.mxu0 0.0
    %1788 = vmatpush1.msra.mxu0 %v1368
    %1789 = vmatprep.subr.mxu0 0.0
    %1790 = vmatpush1.msra.mxu0 %v1369
    %1791 = vmatprep.subr.mxu0 0.0
    %1792 = vmatpush1.msra.mxu0 %v1370
    %1793 = vmatprep.subr.mxu0 0.0
    %1794 = vmatpush1.msra.mxu0 0.0
    %1795 = vmatprep.subr.mxu0 0.0
    %1796 = vmatpush1.msra.mxu0 0.0
    %1797 = vmatprep.subr.mxu0 0.0
    %1798 = vmatpush1.msra.mxu0 0.0
    %1799 = vmatprep.subr.mxu0 0.0
    %1800 = vmatpush1.msra.mxu0 0.0
    %1801 = vmatprep.subr.mxu0 0.0
    %1802 = vmatpush1.msra.mxu0 0.0
    %1803 = vmatprep.subr.mxu0 0.0
    %1804 = vmatpush1.msra.mxu0 0.0
    %1805 = vmatprep.subr.mxu0 0.0
    %1806 = vmatpush1.msra.mxu0 0.0
    %1807 = vmatprep.subr.mxu0 0.0
    %1808 = vmatpush1.msra.mxu0 0.0
    %1809 = vmatprep.subr.mxu0 0.0
    %1810 = vmatpush1.msra.mxu0 0.0
    %1811 = vmatprep.subr.mxu0 0.0
    %1812 = vmatpush1.msra.mxu0 0.0
    %1813 = vmatprep.subr.mxu0 0.0
    %1814 = vmatpush1.msra.mxu0 0.0
    %1815 = vmatprep.subr.mxu0 0.0
    %1816 = vmatpush1.msra.mxu0 0.0
    %1817 = vmatprep.subr.mxu0 0.0
    %1818 = vmatpush1.msra.mxu0 0.0
    %1819 = vmatprep.subr.mxu0 0.0
    %1820 = vmatpush1.msra.mxu0 0.0
    %1821 = vmatprep.subr.mxu0 0.0
    %1822 = vmatpush1.msra.mxu0 0.0
    %1823 = vmatprep.subr.mxu0 0.0
    %1824 = vmatpush1.msra.mxu0 0.0
    %1825 = vmatprep.subr.mxu0 0.0
    %1826 = vmatpush1.msra.mxu0 0.0
    %1827 = vmatprep.subr.mxu0 0.0
    %1828 = vmatpush1.msra.mxu0 0.0
    %1829 = vmatprep.subr.mxu0 0.0
    %1830 = vmatpush1.msra.mxu0 0.0
    %1831 = vmatprep.subr.mxu0 0.0
    %1832 = vmatpush1.msra.mxu0 0.0
    %1833 = vmatprep.subr.mxu0 0.0
    %1834 = vmatpush1.msra.mxu0 0.0
    %1835 = vmatprep.subr.mxu0 0.0
    %1836 = vmatpush1.msra.mxu0 0.0
    %1837 = vmatprep.subr.mxu0 0.0
    %1838 = vmatpush1.msra.mxu0 0.0
    %1839 = vmatprep.subr.mxu0 0.0
    %1840 = vmatpush1.msra.mxu0 0.0
    %1841 = vmatprep.subr.mxu0 0.0
    %1842 = vmatpush1.msra.mxu0 0.0
    %1843 = vmatprep.subr.mxu0 0.0
    %1844 = vmatpush1.msra.mxu0 0.0
    %1845 = vmatprep.subr.mxu0 0.0
    %1846 = vmatpush1.msra.mxu0 0.0
    %1847 = vmatprep.subr.mxu0 0.0
    %1848 = vmatpush1.msra.mxu0 0.0
    %1849 = vmatprep.mubr.f32.mxu0 0.0
    %1850 = vmatmul.mubr.f32.gmra.mrb[0].mxu0 %v207
    %v1851 = vpop.f32.mrb[0].mxu0
    %v1852 = vadd.f32 %v1418, %v1851
    %v1853 = vpop.f32.mrb[0].mxu0
    %1854 = vdwg.mxu0
    %1855 = vmatprep.subr.mxu0 0.0
    %1856 = vmatpush1.msra.mxu0 %v1371
    %1857 = vmatprep.subr.mxu0 0.0
    %1858 = vmatpush1.msra.mxu0 %v1372
    %1859 = vmatprep.subr.mxu0 0.0
    %1860 = vmatpush1.msra.mxu0 %v1373
    %1861 = vmatprep.subr.mxu0 0.0
    %1862 = vmatpush1.msra.mxu0 %v1374
    %1863 = vmatprep.subr.mxu0 0.0
    %1864 = vmatpush1.msra.mxu0 0.0
    %1865 = vmatprep.subr.mxu0 0.0
    %1866 = vmatpush1.msra.mxu0 0.0
    %1867 = vmatprep.subr.mxu0 0.0
    %1868 = vmatpush1.msra.mxu0 0.0
    %1869 = vmatprep.subr.mxu0 0.0
    %1870 = vmatpush1.msra.mxu0 0.0
    %1871 = vmatprep.subr.mxu0 0.0
    %1872 = vmatpush1.msra.mxu0 0.0
    %1873 = vmatprep.subr.mxu0 0.0
    %1874 = vmatpush1.msra.mxu0 0.0
    %1875 = vmatprep.subr.mxu0 0.0
    %1876 = vmatpush1.msra.mxu0 0.0
    %1877 = vmatprep.subr.mxu0 0.0
    %1878 = vmatpush1.msra.mxu0 0.0
    %1879 = vmatprep.subr.mxu0 0.0
    %1880 = vmatpush1.msra.mxu0 0.0
    %1881 = vmatprep.subr.mxu0 0.0
    %1882 = vmatpush1.msra.mxu0 0.0
    %1883 = vmatprep.subr.mxu0 0.0
    %1884 = vmatpush1.msra.mxu0 0.0
    %1885 = vmatprep.subr.mxu0 0.0
    %1886 = vmatpush1.msra.mxu0 0.0
    %1887 = vmatprep.subr.mxu0 0.0
    %1888 = vmatpush1.msra.mxu0 0.0
    %1889 = vmatprep.subr.mxu0 0.0
    %1890 = vmatpush1.msra.mxu0 0.0
    %1891 = vmatprep.subr.mxu0 0.0
    %1892 = vmatpush1.msra.mxu0 0.0
    %1893 = vmatprep.subr.mxu0 0.0
    %1894 = vmatpush1.msra.mxu0 0.0
    %1895 = vmatprep.subr.mxu0 0.0
    %1896 = vmatpush1.msra.mxu0 0.0
    %1897 = vmatprep.subr.mxu0 0.0
    %1898 = vmatpush1.msra.mxu0 0.0
    %1899 = vmatprep.subr.mxu0 0.0
    %1900 = vmatpush1.msra.mxu0 0.0
    %1901 = vmatprep.subr.mxu0 0.0
    %1902 = vmatpush1.msra.mxu0 0.0
    %1903 = vmatprep.subr.mxu0 0.0
    %1904 = vmatpush1.msra.mxu0 0.0
    %1905 = vmatprep.subr.mxu0 0.0
    %1906 = vmatpush1.msra.mxu0 0.0
    %1907 = vmatprep.subr.mxu0 0.0
    %1908 = vmatpush1.msra.mxu0 0.0
    %1909 = vmatprep.subr.mxu0 0.0
    %1910 = vmatpush1.msra.mxu0 0.0
    %1911 = vmatprep.subr.mxu0 0.0
    %1912 = vmatpush1.msra.mxu0 0.0
    %1913 = vmatprep.subr.mxu0 0.0
    %1914 = vmatpush1.msra.mxu0 0.0
    %1915 = vmatprep.subr.mxu0 0.0
    %1916 = vmatpush1.msra.mxu0 0.0
    %1917 = vmatprep.subr.mxu0 0.0
    %1918 = vmatpush1.msra.mxu0 0.0
    %1919 = vmatprep.mubr.f32.mxu0 0.0
    %1920 = vmatmul.mubr.f32.gmra.mrb[0].mxu0 %v134
    %v1921 = vpop.f32.mrb[0].mxu0
    %v1922 = vadd.f32 %v1422, %v1921
    %v1923 = vpop.f32.mrb[0].mxu0
    %1924 = vdwg.mxu0
    %1925 = vmatprep.subr.mxu0 0.0
    %1926 = vmatpush1.msra.mxu0 %v1375
    %1927 = vmatprep.subr.mxu0 0.0
    %1928 = vmatpush1.msra.mxu0 %v1376
    %1929 = vmatprep.subr.mxu0 0.0
    %1930 = vmatpush1.msra.mxu0 %v1377
    %1931 = vmatprep.subr.mxu0 0.0
    %1932 = vmatpush1.msra.mxu0 %v1378
    %1933 = vmatprep.subr.mxu0 0.0
    %1934 = vmatpush1.msra.mxu0 0.0
    %1935 = vmatprep.subr.mxu0 0.0
    %1936 = vmatpush1.msra.mxu0 0.0
    %1937 = vmatprep.subr.mxu0 0.0
    %1938 = vmatpush1.msra.mxu0 0.0
    %1939 = vmatprep.subr.mxu0 0.0
    %1940 = vmatpush1.msra.mxu0 0.0
    %1941 = vmatprep.subr.mxu0 0.0
    %1942 = vmatpush1.msra.mxu0 0.0
    %1943 = vmatprep.subr.mxu0 0.0
    %1944 = vmatpush1.msra.mxu0 0.0
    %1945 = vmatprep.subr.mxu0 0.0
    %1946 = vmatpush1.msra.mxu0 0.0
    %1947 = vmatprep.subr.mxu0 0.0
    %1948 = vmatpush1.msra.mxu0 0.0
    %1949 = vmatprep.subr.mxu0 0.0
    %1950 = vmatpush1.msra.mxu0 0.0
    %1951 = vmatprep.subr.mxu0 0.0
    %1952 = vmatpush1.msra.mxu0 0.0
    %1953 = vmatprep.subr.mxu0 0.0
    %1954 = vmatpush1.msra.mxu0 0.0
    %1955 = vmatprep.subr.mxu0 0.0
    %1956 = vmatpush1.msra.mxu0 0.0
    %1957 = vmatprep.subr.mxu0 0.0
    %1958 = vmatpush1.msra.mxu0 0.0
    %1959 = vmatprep.subr.mxu0 0.0
    %1960 = vmatpush1.msra.mxu0 0.0
    %1961 = vmatprep.subr.mxu0 0.0
    %1962 = vmatpush1.msra.mxu0 0.0
    %1963 = vmatprep.subr.mxu0 0.0
    %1964 = vmatpush1.msra.mxu0 0.0
    %1965 = vmatprep.subr.mxu0 0.0
    %1966 = vmatpush1.msra.mxu0 0.0
    %1967 = vmatprep.subr.mxu0 0.0
    %1968 = vmatpush1.msra.mxu0 0.0
    %1969 = vmatprep.subr.mxu0 0.0
    %1970 = vmatpush1.msra.mxu0 0.0
    %1971 = vmatprep.subr.mxu0 0.0
    %1972 = vmatpush1.msra.mxu0 0.0
    %1973 = vmatprep.subr.mxu0 0.0
    %1974 = vmatpush1.msra.mxu0 0.0
    %1975 = vmatprep.subr.mxu0 0.0
    %1976 = vmatpush1.msra.mxu0 0.0
    %1977 = vmatprep.subr.mxu0 0.0
    %1978 = vmatpush1.msra.mxu0 0.0
    %1979 = vmatprep.subr.mxu0 0.0
    %1980 = vmatpush1.msra.mxu0 0.0
    %1981 = vmatprep.subr.mxu0 0.0
    %1982 = vmatpush1.msra.mxu0 0.0
    %1983 = vmatprep.subr.mxu0 0.0
    %1984 = vmatpush1.msra.mxu0 0.0
    %1985 = vmatprep.subr.mxu0 0.0
    %1986 = vmatpush1.msra.mxu0 0.0
    %1987 = vmatprep.subr.mxu0 0.0
    %1988 = vmatpush1.msra.mxu0 0.0
    %1989 = vmatprep.mubr.f32.mxu0 0.0
    %1990 = vmatmul.mubr.f32.gmra.mrb[0].mxu0 %v207
    %v1991 = vpop.f32.mrb[0].mxu0
    %v1992 = vadd.f32 %v1426, %v1991
    %v1993 = vpop.f32.mrb[0].mxu0
    %1994 = vdwg.mxu0
    %vm1995 = vcmask 64512
    %v1997 = vsel %vm1995, %v203, 0
    %v2000 = vsel %vm1995, %v854, 0
    %2002 = vmatprep.subr.mxu0 0.0
    %2003 = vmatpush1.xpose.msra.mxu0 %v2000
    %2004 = vmatprep.subr.mxu0 0.0
    %2005 = vmatpush1.xpose.msra.mxu0 0.0
    %2006 = vmatprep.subr.mxu0 0.0
    %2007 = vmatpush1.xpose.msra.mxu0 0.0
    %2008 = vmatprep.subr.mxu0 0.0
    %2009 = vmatpush1.xpose.msra.mxu0 0.0
    %2010 = vmatprep.subr.mxu0 0.0
    %2011 = vmatpush1.xpose.msra.mxu0 0.0
    %2012 = vmatprep.subr.mxu0 0.0
    %2013 = vmatpush1.xpose.msra.mxu0 0.0
    %2014 = vmatprep.subr.mxu0 0.0
    %2015 = vmatpush1.xpose.msra.mxu0 0.0
    %2016 = vmatprep.subr.mxu0 0.0
    %2017 = vmatpush1.xpose.msra.mxu0 0.0
    %2018 = vmatprep.subr.mxu0 0.0
    %2019 = vmatpush1.xpose.msra.mxu0 0.0
    %2020 = vmatprep.subr.mxu0 0.0
    %2021 = vmatpush1.xpose.msra.mxu0 0.0
    %2022 = vmatprep.subr.mxu0 0.0
    %2023 = vmatpush1.xpose.msra.mxu0 0.0
    %2024 = vmatprep.subr.mxu0 0.0
    %2025 = vmatpush1.xpose.msra.mxu0 0.0
    %2026 = vmatprep.subr.mxu0 0.0
    %2027 = vmatpush1.xpose.msra.mxu0 0.0
    %2028 = vmatprep.subr.mxu0 0.0
    %2029 = vmatpush1.xpose.msra.mxu0 0.0
    %2030 = vmatprep.subr.mxu0 0.0
    %2031 = vmatpush1.xpose.msra.mxu0 0.0
    %2032 = vmatprep.subr.mxu0 0.0
    %2033 = vmatpush1.xpose.msra.mxu0 0.0
    %2034 = vmatprep.subr.mxu0 0.0
    %2035 = vmatpush1.xpose.msra.mxu0 0.0
    %2036 = vmatprep.subr.mxu0 0.0
    %2037 = vmatpush1.xpose.msra.mxu0 0.0
    %2038 = vmatprep.subr.mxu0 0.0
    %2039 = vmatpush1.xpose.msra.mxu0 0.0
    %2040 = vmatprep.subr.mxu0 0.0
    %2041 = vmatpush1.xpose.msra.mxu0 0.0
    %2042 = vmatprep.subr.mxu0 0.0
    %2043 = vmatpush1.xpose.msra.mxu0 0.0
    %2044 = vmatprep.subr.mxu0 0.0
    %2045 = vmatpush1.xpose.msra.mxu0 0.0
    %2046 = vmatprep.subr.mxu0 0.0
    %2047 = vmatpush1.xpose.msra.mxu0 0.0
    %2048 = vmatprep.subr.mxu0 0.0
    %2049 = vmatpush1.xpose.msra.mxu0 0.0
    %2050 = vmatprep.subr.mxu0 0.0
    %2051 = vmatpush1.xpose.msra.mxu0 0.0
    %2052 = vmatprep.subr.mxu0 0.0
    %2053 = vmatpush1.xpose.msra.mxu0 0.0
    %2054 = vmatprep.subr.mxu0 0.0
    %2055 = vmatpush1.xpose.msra.mxu0 0.0
    %2056 = vmatprep.subr.mxu0 0.0
    %2057 = vmatpush1.xpose.msra.mxu0 0.0
    %2058 = vmatprep.subr.mxu0 0.0
    %2059 = vmatpush1.xpose.msra.mxu0 0.0
    %2060 = vmatprep.subr.mxu0 0.0
    %2061 = vmatpush1.xpose.msra.mxu0 0.0
    %2062 = vmatprep.subr.mxu0 0.0
    %2063 = vmatpush1.xpose.msra.mxu0 0.0
    %2064 = vmatprep.subr.mxu0 0.0
    %2065 = vmatpush1.xpose.msra.mxu0 0.0
    %2066 = vmatprep.mubr.f32.mxu0 0.0
    %2067 = vmatmul.mubr.f32.gmra.mrb[0].mxu0 %v1997
    %v2068 = vpop.f32.mrb[0].mxu0
    %v2069 = vadd.f32 0.0, %v2068
    %v2070 = vpop.f32.mrb[0].mxu0
    %2071 = vdwg.mxu0
    %v2073 = vsel %vm1995, %v276, 0
    %v2076 = vsel %vm1995, %v924, 0
    %2078 = vmatprep.subr.mxu0 0.0
    %2079 = vmatpush1.xpose.msra.mxu0 %v2076
    %2080 = vmatprep.subr.mxu0 0.0
    %2081 = vmatpush1.xpose.msra.mxu0 0.0
    %2082 = vmatprep.subr.mxu0 0.0
    %2083 = vmatpush1.xpose.msra.mxu0 0.0
    %2084 = vmatprep.subr.mxu0 0.0
    %2085 = vmatpush1.xpose.msra.mxu0 0.0
    %2086 = vmatprep.subr.mxu0 0.0
    %2087 = vmatpush1.xpose.msra.mxu0 0.0
    %2088 = vmatprep.subr.mxu0 0.0
    %2089 = vmatpush1.xpose.msra.mxu0 0.0
    %2090 = vmatprep.subr.mxu0 0.0
    %2091 = vmatpush1.xpose.msra.mxu0 0.0
    %2092 = vmatprep.subr.mxu0 0.0
    %2093 = vmatpush1.xpose.msra.mxu0 0.0
    %2094 = vmatprep.subr.mxu0 0.0
    %2095 = vmatpush1.xpose.msra.mxu0 0.0
    %2096 = vmatprep.subr.mxu0 0.0
    %2097 = vmatpush1.xpose.msra.mxu0 0.0
    %2098 = vmatprep.subr.mxu0 0.0
    %2099 = vmatpush1.xpose.msra.mxu0 0.0
    %2100 = vmatprep.subr.mxu0 0.0
    %2101 = vmatpush1.xpose.msra.mxu0 0.0
    %2102 = vmatprep.subr.mxu0 0.0
    %2103 = vmatpush1.xpose.msra.mxu0 0.0
    %2104 = vmatprep.subr.mxu0 0.0
    %2105 = vmatpush1.xpose.msra.mxu0 0.0
    %2106 = vmatprep.subr.mxu0 0.0
    %2107 = vmatpush1.xpose.msra.mxu0 0.0
    %2108 = vmatprep.subr.mxu0 0.0
    %2109 = vmatpush1.xpose.msra.mxu0 0.0
    %2110 = vmatprep.subr.mxu0 0.0
    %2111 = vmatpush1.xpose.msra.mxu0 0.0
    %2112 = vmatprep.subr.mxu0 0.0
    %2113 = vmatpush1.xpose.msra.mxu0 0.0
    %2114 = vmatprep.subr.mxu0 0.0
    %2115 = vmatpush1.xpose.msra.mxu0 0.0
    %2116 = vmatprep.subr.mxu0 0.0
    %2117 = vmatpush1.xpose.msra.mxu0 0.0
    %2118 = vmatprep.subr.mxu0 0.0
    %2119 = vmatpush1.xpose.msra.mxu0 0.0
    %2120 = vmatprep.subr.mxu0 0.0
    %2121 = vmatpush1.xpose.msra.mxu0 0.0
    %2122 = vmatprep.subr.mxu0 0.0
    %2123 = vmatpush1.xpose.msra.mxu0 0.0
    %2124 = vmatprep.subr.mxu0 0.0
    %2125 = vmatpush1.xpose.msra.mxu0 0.0
    %2126 = vmatprep.subr.mxu0 0.0
    %2127 = vmatpush1.xpose.msra.mxu0 0.0
    %2128 = vmatprep.subr.mxu0 0.0
    %2129 = vmatpush1.xpose.msra.mxu0 0.0
    %2130 = vmatprep.subr.mxu0 0.0
    %2131 = vmatpush1.xpose.msra.mxu0 0.0
    %2132 = vmatprep.subr.mxu0 0.0
    %2133 = vmatpush1.xpose.msra.mxu0 0.0
    %2134 = vmatprep.subr.mxu0 0.0
    %2135 = vmatpush1.xpose.msra.mxu0 0.0
    %2136 = vmatprep.subr.mxu0 0.0
    %2137 = vmatpush1.xpose.msra.mxu0 0.0
    %2138 = vmatprep.subr.mxu0 0.0
    %2139 = vmatpush1.xpose.msra.mxu0 0.0
    %2140 = vmatprep.subr.mxu0 0.0
    %2141 = vmatpush1.xpose.msra.mxu0 0.0
    %2142 = vmatprep.mubr.f32.mxu0 0.0
    %2143 = vmatmul.mubr.f32.gmra.mrb[0].mxu0 %v2073
    %v2144 = vpop.f32.mrb[0].mxu0
    %v2145 = vadd.f32 0.0, %v2144
    %v2146 = vpop.f32.mrb[0].mxu0
    %2147 = vdwg.mxu0
    %v2149 = vsel %vm1995, %v346, 0
    %v2152 = vsel %vm1995, %v994, 0
    %2154 = vmatprep.subr.mxu0 0.0
    %2155 = vmatpush1.xpose.msra.mxu0 %v2152
    %2156 = vmatprep.subr.mxu0 0.0
    %2157 = vmatpush1.xpose.msra.mxu0 0.0
    %2158 = vmatprep.subr.mxu0 0.0
    %2159 = vmatpush1.xpose.msra.mxu0 0.0
    %2160 = vmatprep.subr.mxu0 0.0
    %2161 = vmatpush1.xpose.msra.mxu0 0.0
    %2162 = vmatprep.subr.mxu0 0.0
    %2163 = vmatpush1.xpose.msra.mxu0 0.0
    %2164 = vmatprep.subr.mxu0 0.0
    %2165 = vmatpush1.xpose.msra.mxu0 0.0
    %2166 = vmatprep.subr.mxu0 0.0
    %2167 = vmatpush1.xpose.msra.mxu0 0.0
    %2168 = vmatprep.subr.mxu0 0.0
    %2169 = vmatpush1.xpose.msra.mxu0 0.0
    %2170 = vmatprep.subr.mxu0 0.0
    %2171 = vmatpush1.xpose.msra.mxu0 0.0
    %2172 = vmatprep.subr.mxu0 0.0
    %2173 = vmatpush1.xpose.msra.mxu0 0.0
    %2174 = vmatprep.subr.mxu0 0.0
    %2175 = vmatpush1.xpose.msra.mxu0 0.0
    %2176 = vmatprep.subr.mxu0 0.0
    %2177 = vmatpush1.xpose.msra.mxu0 0.0
    %2178 = vmatprep.subr.mxu0 0.0
    %2179 = vmatpush1.xpose.msra.mxu0 0.0
    %2180 = vmatprep.subr.mxu0 0.0
    %2181 = vmatpush1.xpose.msra.mxu0 0.0
    %2182 = vmatprep.subr.mxu0 0.0
    %2183 = vmatpush1.xpose.msra.mxu0 0.0
    %2184 = vmatprep.subr.mxu0 0.0
    %2185 = vmatpush1.xpose.msra.mxu0 0.0
    %2186 = vmatprep.subr.mxu0 0.0
    %2187 = vmatpush1.xpose.msra.mxu0 0.0
    %2188 = vmatprep.subr.mxu0 0.0
    %2189 = vmatpush1.xpose.msra.mxu0 0.0
    %2190 = vmatprep.subr.mxu0 0.0
    %2191 = vmatpush1.xpose.msra.mxu0 0.0
    %2192 = vmatprep.subr.mxu0 0.0
    %2193 = vmatpush1.xpose.msra.mxu0 0.0
    %2194 = vmatprep.subr.mxu0 0.0
    %2195 = vmatpush1.xpose.msra.mxu0 0.0
    %2196 = vmatprep.subr.mxu0 0.0
    %2197 = vmatpush1.xpose.msra.mxu0 0.0
    %2198 = vmatprep.subr.mxu0 0.0
    %2199 = vmatpush1.xpose.msra.mxu0 0.0
    %2200 = vmatprep.subr.mxu0 0.0
    %2201 = vmatpush1.xpose.msra.mxu0 0.0
    %2202 = vmatprep.subr.mxu0 0.0
    %2203 = vmatpush1.xpose.msra.mxu0 0.0
    %2204 = vmatprep.subr.mxu0 0.0
    %2205 = vmatpush1.xpose.msra.mxu0 0.0
    %2206 = vmatprep.subr.mxu0 0.0
    %2207 = vmatpush1.xpose.msra.mxu0 0.0
    %2208 = vmatprep.subr.mxu0 0.0
    %2209 = vmatpush1.xpose.msra.mxu0 0.0
    %2210 = vmatprep.subr.mxu0 0.0
    %2211 = vmatpush1.xpose.msra.mxu0 0.0
    %2212 = vmatprep.subr.mxu0 0.0
    %2213 = vmatpush1.xpose.msra.mxu0 0.0
    %2214 = vmatprep.subr.mxu0 0.0
    %2215 = vmatpush1.xpose.msra.mxu0 0.0
    %2216 = vmatprep.subr.mxu0 0.0
    %2217 = vmatpush1.xpose.msra.mxu0 0.0
    %2218 = vmatprep.mubr.f32.mxu0 0.0
    %2219 = vmatmul.mubr.f32.gmra.mrb[0].mxu0 %v2149
    %v2220 = vpop.f32.mrb[0].mxu0
    %v2221 = vadd.f32 0.0, %v2220
    %v2222 = vpop.f32.mrb[0].mxu0
    %2223 = vdwg.mxu0
    %v2225 = vsel %vm1995, %v416, 0
    %v2228 = vsel %vm1995, %v1064, 0
    %2230 = vmatprep.subr.mxu0 0.0
    %2231 = vmatpush1.xpose.msra.mxu0 %v2228
    %2232 = vmatprep.subr.mxu0 0.0
    %2233 = vmatpush1.xpose.msra.mxu0 0.0
    %2234 = vmatprep.subr.mxu0 0.0
    %2235 = vmatpush1.xpose.msra.mxu0 0.0
    %2236 = vmatprep.subr.mxu0 0.0
    %2237 = vmatpush1.xpose.msra.mxu0 0.0
    %2238 = vmatprep.subr.mxu0 0.0
    %2239 = vmatpush1.xpose.msra.mxu0 0.0
    %2240 = vmatprep.subr.mxu0 0.0
    %2241 = vmatpush1.xpose.msra.mxu0 0.0
    %2242 = vmatprep.subr.mxu0 0.0
    %2243 = vmatpush1.xpose.msra.mxu0 0.0
    %2244 = vmatprep.subr.mxu0 0.0
    %2245 = vmatpush1.xpose.msra.mxu0 0.0
    %2246 = vmatprep.subr.mxu0 0.0
    %2247 = vmatpush1.xpose.msra.mxu0 0.0
    %2248 = vmatprep.subr.mxu0 0.0
    %2249 = vmatpush1.xpose.msra.mxu0 0.0
    %2250 = vmatprep.subr.mxu0 0.0
    %2251 = vmatpush1.xpose.msra.mxu0 0.0
    %2252 = vmatprep.subr.mxu0 0.0
    %2253 = vmatpush1.xpose.msra.mxu0 0.0
    %2254 = vmatprep.subr.mxu0 0.0
    %2255 = vmatpush1.xpose.msra.mxu0 0.0
    %2256 = vmatprep.subr.mxu0 0.0
    %2257 = vmatpush1.xpose.msra.mxu0 0.0
    %2258 = vmatprep.subr.mxu0 0.0
    %2259 = vmatpush1.xpose.msra.mxu0 0.0
    %2260 = vmatprep.subr.mxu0 0.0
    %2261 = vmatpush1.xpose.msra.mxu0 0.0
    %2262 = vmatprep.subr.mxu0 0.0
    %2263 = vmatpush1.xpose.msra.mxu0 0.0
    %2264 = vmatprep.subr.mxu0 0.0
    %2265 = vmatpush1.xpose.msra.mxu0 0.0
    %2266 = vmatprep.subr.mxu0 0.0
    %2267 = vmatpush1.xpose.msra.mxu0 0.0
    %2268 = vmatprep.subr.mxu0 0.0
    %2269 = vmatpush1.xpose.msra.mxu0 0.0
    %2270 = vmatprep.subr.mxu0 0.0
    %2271 = vmatpush1.xpose.msra.mxu0 0.0
    %2272 = vmatprep.subr.mxu0 0.0
    %2273 = vmatpush1.xpose.msra.mxu0 0.0
    %2274 = vmatprep.subr.mxu0 0.0
    %2275 = vmatpush1.xpose.msra.mxu0 0.0
    %2276 = vmatprep.subr.mxu0 0.0
    %2277 = vmatpush1.xpose.msra.mxu0 0.0
    %2278 = vmatprep.subr.mxu0 0.0
    %2279 = vmatpush1.xpose.msra.mxu0 0.0
    %2280 = vmatprep.subr.mxu0 0.0
    %2281 = vmatpush1.xpose.msra.mxu0 0.0
    %2282 = vmatprep.subr.mxu0 0.0
    %2283 = vmatpush1.xpose.msra.mxu0 0.0
    %2284 = vmatprep.subr.mxu0 0.0
    %2285 = vmatpush1.xpose.msra.mxu0 0.0
    %2286 = vmatprep.subr.mxu0 0.0
    %2287 = vmatpush1.xpose.msra.mxu0 0.0
    %2288 = vmatprep.subr.mxu0 0.0
    %2289 = vmatpush1.xpose.msra.mxu0 0.0
    %2290 = vmatprep.subr.mxu0 0.0
    %2291 = vmatpush1.xpose.msra.mxu0 0.0
    %2292 = vmatprep.subr.mxu0 0.0
    %2293 = vmatpush1.xpose.msra.mxu0 0.0
    %2294 = vmatprep.mubr.f32.mxu0 0.0
    %2295 = vmatmul.mubr.f32.gmra.mrb[0].mxu0 %v2225
    %v2296 = vpop.f32.mrb[0].mxu0
    %v2297 = vadd.f32 0.0, %v2296
    %v2298 = vpop.f32.mrb[0].mxu0
    %2299 = vdwg.mxu0
    %v2301 = vsel %vm1995, %v486, 0
    %v2304 = vsel %vm1995, %v1134, 0
    %2306 = vmatprep.subr.mxu0 0.0
    %2307 = vmatpush1.xpose.msra.mxu0 %v2304
    %2308 = vmatprep.subr.mxu0 0.0
    %2309 = vmatpush1.xpose.msra.mxu0 0.0
    %2310 = vmatprep.subr.mxu0 0.0
    %2311 = vmatpush1.xpose.msra.mxu0 0.0
    %2312 = vmatprep.subr.mxu0 0.0
    %2313 = vmatpush1.xpose.msra.mxu0 0.0
    %2314 = vmatprep.subr.mxu0 0.0
    %2315 = vmatpush1.xpose.msra.mxu0 0.0
    %2316 = vmatprep.subr.mxu0 0.0
    %2317 = vmatpush1.xpose.msra.mxu0 0.0
    %2318 = vmatprep.subr.mxu0 0.0
    %2319 = vmatpush1.xpose.msra.mxu0 0.0
    %2320 = vmatprep.subr.mxu0 0.0
    %2321 = vmatpush1.xpose.msra.mxu0 0.0
    %2322 = vmatprep.subr.mxu0 0.0
    %2323 = vmatpush1.xpose.msra.mxu0 0.0
    %2324 = vmatprep.subr.mxu0 0.0
    %2325 = vmatpush1.xpose.msra.mxu0 0.0
    %2326 = vmatprep.subr.mxu0 0.0
    %2327 = vmatpush1.xpose.msra.mxu0 0.0
    %2328 = vmatprep.subr.mxu0 0.0
    %2329 = vmatpush1.xpose.msra.mxu0 0.0
    %2330 = vmatprep.subr.mxu0 0.0
    %2331 = vmatpush1.xpose.msra.mxu0 0.0
    %2332 = vmatprep.subr.mxu0 0.0
    %2333 = vmatpush1.xpose.msra.mxu0 0.0
    %2334 = vmatprep.subr.mxu0 0.0
    %2335 = vmatpush1.xpose.msra.mxu0 0.0
    %2336 = vmatprep.subr.mxu0 0.0
    %2337 = vmatpush1.xpose.msra.mxu0 0.0
    %2338 = vmatprep.subr.mxu0 0.0
    %2339 = vmatpush1.xpose.msra.mxu0 0.0
    %2340 = vmatprep.subr.mxu0 0.0
    %2341 = vmatpush1.xpose.msra.mxu0 0.0
    %2342 = vmatprep.subr.mxu0 0.0
    %2343 = vmatpush1.xpose.msra.mxu0 0.0
    %2344 = vmatprep.subr.mxu0 0.0
    %2345 = vmatpush1.xpose.msra.mxu0 0.0
    %2346 = vmatprep.subr.mxu0 0.0
    %2347 = vmatpush1.xpose.msra.mxu0 0.0
    %2348 = vmatprep.subr.mxu0 0.0
    %2349 = vmatpush1.xpose.msra.mxu0 0.0
    %2350 = vmatprep.subr.mxu0 0.0
    %2351 = vmatpush1.xpose.msra.mxu0 0.0
    %2352 = vmatprep.subr.mxu0 0.0
    %2353 = vmatpush1.xpose.msra.mxu0 0.0
    %2354 = vmatprep.subr.mxu0 0.0
    %2355 = vmatpush1.xpose.msra.mxu0 0.0
    %2356 = vmatprep.subr.mxu0 0.0
    %2357 = vmatpush1.xpose.msra.mxu0 0.0
    %2358 = vmatprep.subr.mxu0 0.0
    %2359 = vmatpush1.xpose.msra.mxu0 0.0
    %2360 = vmatprep.subr.mxu0 0.0
    %2361 = vmatpush1.xpose.msra.mxu0 0.0
    %2362 = vmatprep.subr.mxu0 0.0
    %2363 = vmatpush1.xpose.msra.mxu0 0.0
    %2364 = vmatprep.subr.mxu0 0.0
    %2365 = vmatpush1.xpose.msra.mxu0 0.0
    %2366 = vmatprep.subr.mxu0 0.0
    %2367 = vmatpush1.xpose.msra.mxu0 0.0
    %2368 = vmatprep.subr.mxu0 0.0
    %2369 = vmatpush1.xpose.msra.mxu0 0.0
    %2370 = vmatprep.mubr.f32.mxu0 0.0
    %2371 = vmatmul.mubr.f32.gmra.mrb[0].mxu0 %v2301
    %v2372 = vpop.f32.mrb[0].mxu0
    %v2373 = vadd.f32 0.0, %v2372
    %v2374 = vpop.f32.mrb[0].mxu0
    %2375 = vdwg.mxu0
    %v2377 = vsel %vm1995, %v556, 0
    %v2380 = vsel %vm1995, %v1204, 0
    %2382 = vmatprep.subr.mxu0 0.0
    %2383 = vmatpush1.xpose.msra.mxu0 %v2380
    %2384 = vmatprep.subr.mxu0 0.0
    %2385 = vmatpush1.xpose.msra.mxu0 0.0
    %2386 = vmatprep.subr.mxu0 0.0
    %2387 = vmatpush1.xpose.msra.mxu0 0.0
    %2388 = vmatprep.subr.mxu0 0.0
    %2389 = vmatpush1.xpose.msra.mxu0 0.0
    %2390 = vmatprep.subr.mxu0 0.0
    %2391 = vmatpush1.xpose.msra.mxu0 0.0
    %2392 = vmatprep.subr.mxu0 0.0
    %2393 = vmatpush1.xpose.msra.mxu0 0.0
    %2394 = vmatprep.subr.mxu0 0.0
    %2395 = vmatpush1.xpose.msra.mxu0 0.0
    %2396 = vmatprep.subr.mxu0 0.0
    %2397 = vmatpush1.xpose.msra.mxu0 0.0
    %2398 = vmatprep.subr.mxu0 0.0
    %2399 = vmatpush1.xpose.msra.mxu0 0.0
    %2400 = vmatprep.subr.mxu0 0.0
    %2401 = vmatpush1.xpose.msra.mxu0 0.0
    %2402 = vmatprep.subr.mxu0 0.0
    %2403 = vmatpush1.xpose.msra.mxu0 0.0
    %2404 = vmatprep.subr.mxu0 0.0
    %2405 = vmatpush1.xpose.msra.mxu0 0.0
    %2406 = vmatprep.subr.mxu0 0.0
    %2407 = vmatpush1.xpose.msra.mxu0 0.0
    %2408 = vmatprep.subr.mxu0 0.0
    %2409 = vmatpush1.xpose.msra.mxu0 0.0
    %2410 = vmatprep.subr.mxu0 0.0
    %2411 = vmatpush1.xpose.msra.mxu0 0.0
    %2412 = vmatprep.subr.mxu0 0.0
    %2413 = vmatpush1.xpose.msra.mxu0 0.0
    %2414 = vmatprep.subr.mxu0 0.0
    %2415 = vmatpush1.xpose.msra.mxu0 0.0
    %2416 = vmatprep.subr.mxu0 0.0
    %2417 = vmatpush1.xpose.msra.mxu0 0.0
    %2418 = vmatprep.subr.mxu0 0.0
    %2419 = vmatpush1.xpose.msra.mxu0 0.0
    %2420 = vmatprep.subr.mxu0 0.0
    %2421 = vmatpush1.xpose.msra.mxu0 0.0
    %2422 = vmatprep.subr.mxu0 0.0
    %2423 = vmatpush1.xpose.msra.mxu0 0.0
    %2424 = vmatprep.subr.mxu0 0.0
    %2425 = vmatpush1.xpose.msra.mxu0 0.0
    %2426 = vmatprep.subr.mxu0 0.0
    %2427 = vmatpush1.xpose.msra.mxu0 0.0
    %2428 = vmatprep.subr.mxu0 0.0
    %2429 = vmatpush1.xpose.msra.mxu0 0.0
    %2430 = vmatprep.subr.mxu0 0.0
    %2431 = vmatpush1.xpose.msra.mxu0 0.0
    %2432 = vmatprep.subr.mxu0 0.0
    %2433 = vmatpush1.xpose.msra.mxu0 0.0
    %2434 = vmatprep.subr.mxu0 0.0
    %2435 = vmatpush1.xpose.msra.mxu0 0.0
    %2436 = vmatprep.subr.mxu0 0.0
    %2437 = vmatpush1.xpose.msra.mxu0 0.0
    %2438 = vmatprep.subr.mxu0 0.0
    %2439 = vmatpush1.xpose.msra.mxu0 0.0
    %2440 = vmatprep.subr.mxu0 0.0
    %2441 = vmatpush1.xpose.msra.mxu0 0.0
    %2442 = vmatprep.subr.mxu0 0.0
    %2443 = vmatpush1.xpose.msra.mxu0 0.0
    %2444 = vmatprep.subr.mxu0 0.0
    %2445 = vmatpush1.xpose.msra.mxu0 0.0
    %2446 = vmatprep.mubr.f32.mxu0 0.0
    %2447 = vmatmul.mubr.f32.gmra.mrb[0].mxu0 %v2377
    %v2448 = vpop.f32.mrb[0].mxu0
    %v2449 = vadd.f32 0.0, %v2448
    %v2450 = vpop.f32.mrb[0].mxu0
    %2451 = vdwg.mxu0
    %v2453 = vsel %vm1995, %v626, 0
    %v2456 = vsel %vm1995, %v1274, 0
    %2458 = vmatprep.subr.mxu0 0.0
    %2459 = vmatpush1.xpose.msra.mxu0 %v2456
    %2460 = vmatprep.subr.mxu0 0.0
    %2461 = vmatpush1.xpose.msra.mxu0 0.0
    %2462 = vmatprep.subr.mxu0 0.0
    %2463 = vmatpush1.xpose.msra.mxu0 0.0
    %2464 = vmatprep.subr.mxu0 0.0
    %2465 = vmatpush1.xpose.msra.mxu0 0.0
    %2466 = vmatprep.subr.mxu0 0.0
    %2467 = vmatpush1.xpose.msra.mxu0 0.0
    %2468 = vmatprep.subr.mxu0 0.0
    %2469 = vmatpush1.xpose.msra.mxu0 0.0
    %2470 = vmatprep.subr.mxu0 0.0
    %2471 = vmatpush1.xpose.msra.mxu0 0.0
    %2472 = vmatprep.subr.mxu0 0.0
    %2473 = vmatpush1.xpose.msra.mxu0 0.0
    %2474 = vmatprep.subr.mxu0 0.0
    %2475 = vmatpush1.xpose.msra.mxu0 0.0
    %2476 = vmatprep.subr.mxu0 0.0
    %2477 = vmatpush1.xpose.msra.mxu0 0.0
    %2478 = vmatprep.subr.mxu0 0.0
    %2479 = vmatpush1.xpose.msra.mxu0 0.0
    %2480 = vmatprep.subr.mxu0 0.0
    %2481 = vmatpush1.xpose.msra.mxu0 0.0
    %2482 = vmatprep.subr.mxu0 0.0
    %2483 = vmatpush1.xpose.msra.mxu0 0.0
    %2484 = vmatprep.subr.mxu0 0.0
    %2485 = vmatpush1.xpose.msra.mxu0 0.0
    %2486 = vmatprep.subr.mxu0 0.0
    %2487 = vmatpush1.xpose.msra.mxu0 0.0
    %2488 = vmatprep.subr.mxu0 0.0
    %2489 = vmatpush1.xpose.msra.mxu0 0.0
    %2490 = vmatprep.subr.mxu0 0.0
    %2491 = vmatpush1.xpose.msra.mxu0 0.0
    %2492 = vmatprep.subr.mxu0 0.0
    %2493 = vmatpush1.xpose.msra.mxu0 0.0
    %2494 = vmatprep.subr.mxu0 0.0
    %2495 = vmatpush1.xpose.msra.mxu0 0.0
    %2496 = vmatprep.subr.mxu0 0.0
    %2497 = vmatpush1.xpose.msra.mxu0 0.0
    %2498 = vmatprep.subr.mxu0 0.0
    %2499 = vmatpush1.xpose.msra.mxu0 0.0
    %2500 = vmatprep.subr.mxu0 0.0
    %2501 = vmatpush1.xpose.msra.mxu0 0.0
    %2502 = vmatprep.subr.mxu0 0.0
    %2503 = vmatpush1.xpose.msra.mxu0 0.0
    %2504 = vmatprep.subr.mxu0 0.0
    %2505 = vmatpush1.xpose.msra.mxu0 0.0
    %2506 = vmatprep.subr.mxu0 0.0
    %2507 = vmatpush1.xpose.msra.mxu0 0.0
    %2508 = vmatprep.subr.mxu0 0.0
    %2509 = vmatpush1.xpose.msra.mxu0 0.0
    %2510 = vmatprep.subr.mxu0 0.0
    %2511 = vmatpush1.xpose.msra.mxu0 0.0
    %2512 = vmatprep.subr.mxu0 0.0
    %2513 = vmatpush1.xpose.msra.mxu0 0.0
    %2514 = vmatprep.subr.mxu0 0.0
    %2515 = vmatpush1.xpose.msra.mxu0 0.0
    %2516 = vmatprep.subr.mxu0 0.0
    %2517 = vmatpush1.xpose.msra.mxu0 0.0
    %2518 = vmatprep.subr.mxu0 0.0
    %2519 = vmatpush1.xpose.msra.mxu0 0.0
    %2520 = vmatprep.subr.mxu0 0.0
    %2521 = vmatpush1.xpose.msra.mxu0 0.0
    %2522 = vmatprep.mubr.f32.mxu0 0.0
    %2523 = vmatmul.mubr.f32.gmra.mrb[0].mxu0 %v2453
    %v2524 = vpop.f32.mrb[0].mxu0
    %v2525 = vadd.f32 0.0, %v2524
    %v2526 = vpop.f32.mrb[0].mxu0
    %2527 = vdwg.mxu0
    %v2529 = vsel %vm1995, %v696, 0
    %v2532 = vsel %vm1995, %v1344, 0
    %2534 = vmatprep.subr.mxu0 0.0
    %2535 = vmatpush1.xpose.msra.mxu0 %v2532
    %2536 = vmatprep.subr.mxu0 0.0
    %2537 = vmatpush1.xpose.msra.mxu0 0.0
    %2538 = vmatprep.subr.mxu0 0.0
    %2539 = vmatpush1.xpose.msra.mxu0 0.0
    %2540 = vmatprep.subr.mxu0 0.0
    %2541 = vmatpush1.xpose.msra.mxu0 0.0
    %2542 = vmatprep.subr.mxu0 0.0
    %2543 = vmatpush1.xpose.msra.mxu0 0.0
    %2544 = vmatprep.subr.mxu0 0.0
    %2545 = vmatpush1.xpose.msra.mxu0 0.0
    %2546 = vmatprep.subr.mxu0 0.0
    %2547 = vmatpush1.xpose.msra.mxu0 0.0
    %2548 = vmatprep.subr.mxu0 0.0
    %2549 = vmatpush1.xpose.msra.mxu0 0.0
    %2550 = vmatprep.subr.mxu0 0.0
    %2551 = vmatpush1.xpose.msra.mxu0 0.0
    %2552 = vmatprep.subr.mxu0 0.0
    %2553 = vmatpush1.xpose.msra.mxu0 0.0
    %2554 = vmatprep.subr.mxu0 0.0
    %2555 = vmatpush1.xpose.msra.mxu0 0.0
    %2556 = vmatprep.subr.mxu0 0.0
    %2557 = vmatpush1.xpose.msra.mxu0 0.0
    %2558 = vmatprep.subr.mxu0 0.0
    %2559 = vmatpush1.xpose.msra.mxu0 0.0
    %2560 = vmatprep.subr.mxu0 0.0
    %2561 = vmatpush1.xpose.msra.mxu0 0.0
    %2562 = vmatprep.subr.mxu0 0.0
    %2563 = vmatpush1.xpose.msra.mxu0 0.0
    %2564 = vmatprep.subr.mxu0 0.0
    %2565 = vmatpush1.xpose.msra.mxu0 0.0
    %2566 = vmatprep.subr.mxu0 0.0
    %2567 = vmatpush1.xpose.msra.mxu0 0.0
    %2568 = vmatprep.subr.mxu0 0.0
    %2569 = vmatpush1.xpose.msra.mxu0 0.0
    %2570 = vmatprep.subr.mxu0 0.0
    %2571 = vmatpush1.xpose.msra.mxu0 0.0
    %2572 = vmatprep.subr.mxu0 0.0
    %2573 = vmatpush1.xpose.msra.mxu0 0.0
    %2574 = vmatprep.subr.mxu0 0.0
    %2575 = vmatpush1.xpose.msra.mxu0 0.0
    %2576 = vmatprep.subr.mxu0 0.0
    %2577 = vmatpush1.xpose.msra.mxu0 0.0
    %2578 = vmatprep.subr.mxu0 0.0
    %2579 = vmatpush1.xpose.msra.mxu0 0.0
    %2580 = vmatprep.subr.mxu0 0.0
    %2581 = vmatpush1.xpose.msra.mxu0 0.0
    %2582 = vmatprep.subr.mxu0 0.0
    %2583 = vmatpush1.xpose.msra.mxu0 0.0
    %2584 = vmatprep.subr.mxu0 0.0
    %2585 = vmatpush1.xpose.msra.mxu0 0.0
    %2586 = vmatprep.subr.mxu0 0.0
    %2587 = vmatpush1.xpose.msra.mxu0 0.0
    %2588 = vmatprep.subr.mxu0 0.0
    %2589 = vmatpush1.xpose.msra.mxu0 0.0
    %2590 = vmatprep.subr.mxu0 0.0
    %2591 = vmatpush1.xpose.msra.mxu0 0.0
    %2592 = vmatprep.subr.mxu0 0.0
    %2593 = vmatpush1.xpose.msra.mxu0 0.0
    %2594 = vmatprep.subr.mxu0 0.0
    %2595 = vmatpush1.xpose.msra.mxu0 0.0
    %2596 = vmatprep.subr.mxu0 0.0
    %2597 = vmatpush1.xpose.msra.mxu0 0.0
    %2598 = vmatprep.mubr.f32.mxu0 0.0
    %2599 = vmatmul.mubr.f32.gmra.mrb[0].mxu0 %v2529
    %v2600 = vpop.f32.mrb[0].mxu0
    %v2601 = vadd.f32 0.0, %v2600
    %v2602 = vpop.f32.mrb[0].mxu0
    %2603 = vdwg.mxu0
    %v2604 = vsel %vm1995, %v2069, -inf
    %2605 = vmax.xlane.f32.xlu0 %v2604
    %v2606 = vpop.xlane.xlu0 %2605
    %v2607 = vsel %vm1995, %v2145, -inf
    %2608 = vmax.xlane.f32.xlu0 %v2607
    %v2609 = vpop.xlane.xlu0 %2608
    %v2610 = vsel %vm1995, %v2221, -inf
    %2611 = vmax.xlane.f32.xlu0 %v2610
    %v2612 = vpop.xlane.xlu0 %2611
    %v2613 = vsel %vm1995, %v2297, -inf
    %2614 = vmax.xlane.f32.xlu0 %v2613
    %v2615 = vpop.xlane.xlu0 %2614
    %v2616 = vsel %vm1995, %v2373, -inf
    %2617 = vmax.xlane.f32.xlu0 %v2616
    %v2618 = vpop.xlane.xlu0 %2617
    %v2619 = vsel %vm1995, %v2449, -inf
    %2620 = vmax.xlane.f32.xlu0 %v2619
    %v2621 = vpop.xlane.xlu0 %2620
    %v2622 = vsel %vm1995, %v2525, -inf
    %2623 = vmax.xlane.f32.xlu0 %v2622
    %v2624 = vpop.xlane.xlu0 %2623
    %v2625 = vsel %vm1995, %v2601, -inf
    %2626 = vmax.xlane.f32.xlu0 %v2625
    %v2627 = vpop.xlane.xlu0 %2626
    %v2628 = vsub.f32 %v2069, %v2606
    %v2629 = vsub.f32 %v2145, %v2609
    %v2630 = vsub.f32 %v2221, %v2612
    %v2631 = vsub.f32 %v2297, %v2615
    %v2632 = vsub.f32 %v2373, %v2618
    %v2633 = vsub.f32 %v2449, %v2621
    %v2634 = vsub.f32 %v2525, %v2624
    %v2635 = vsub.f32 %v2601, %v2627
    %v2636 = vmul.f32 %v2628, 1.442695
    %v2637 = vpow.pop %v2636
    %v2638 = vmul.f32 %v2629, 1.442695
    %v2639 = vpow.pop %v2638
    %v2640 = vmul.f32 %v2630, 1.442695
    %v2641 = vpow.pop %v2640
    %v2642 = vmul.f32 %v2631, 1.442695
    %v2643 = vpow.pop %v2642
    %v2644 = vmul.f32 %v2632, 1.442695
    %v2645 = vpow.pop %v2644
    %v2646 = vmul.f32 %v2633, 1.442695
    %v2647 = vpow.pop %v2646
    %v2648 = vmul.f32 %v2634, 1.442695
    %v2649 = vpow.pop %v2648
    %v2650 = vmul.f32 %v2635, 1.442695
    %v2651 = vpow.pop %v2650
    %v2652 = vsel %vm1995, %v2637, 0.0
    %2653 = vadd.xlane.f32.xlu0 %v2652
    %v2654 = vpop.xlane.xlu0 %2653
    %v2655 = vsel %vm1995, %v2639, 0.0
    %2656 = vadd.xlane.f32.xlu0 %v2655
    %v2657 = vpop.xlane.xlu0 %2656
    %v2658 = vsel %vm1995, %v2641, 0.0
    %2659 = vadd.xlane.f32.xlu0 %v2658
    %v2660 = vpop.xlane.xlu0 %2659
    %v2661 = vsel %vm1995, %v2643, 0.0
    %2662 = vadd.xlane.f32.xlu0 %v2661
    %v2663 = vpop.xlane.xlu0 %2662
    %v2664 = vsel %vm1995, %v2645, 0.0
    %2665 = vadd.xlane.f32.xlu0 %v2664
    %v2666 = vpop.xlane.xlu0 %2665
    %v2667 = vsel %vm1995, %v2647, 0.0
    %2668 = vadd.xlane.f32.xlu0 %v2667
    %v2669 = vpop.xlane.xlu0 %2668
    %v2670 = vsel %vm1995, %v2649, 0.0
    %2671 = vadd.xlane.f32.xlu0 %v2670
    %v2672 = vpop.xlane.xlu0 %2671
    %v2673 = vsel %vm1995, %v2651, 0.0
    %2674 = vadd.xlane.f32.xlu0 %v2673
    %v2675 = vpop.xlane.xlu0 %2674
    %v2676 = vrcp.pop %v2654
    %v2677 = vrcp.pop %v2657
    %v2678 = vrcp.pop %v2660
    %v2679 = vrcp.pop %v2663
    %v2680 = vrcp.pop %v2666
    %v2681 = vrcp.pop %v2669
    %v2682 = vrcp.pop %v2672
    %v2683 = vrcp.pop %v2675
    %v2684 = vmul.f32 %v2637, %v2676
    %v2685 = vmul.f32 %v2639, %v2677
    %v2686 = vmul.f32 %v2641, %v2678
    %v2687 = vmul.f32 %v2643, %v2679
    %v2688 = vmul.f32 %v2645, %v2680
    %v2689 = vmul.f32 %v2647, %v2681
    %v2690 = vmul.f32 %v2649, %v2682
    %v2691 = vmul.f32 %v2651, %v2683
    %v2693 = vsel %vm1995, %v2684, 0
    %2695 = vmatprep.subr.mxu0 0.0
    %2696 = vmatpush1.msra.mxu0 %v1502
    %2697 = vmatprep.subr.mxu0 0.0
    %2698 = vmatpush1.msra.mxu0 0.0
    %2699 = vmatprep.subr.mxu0 0.0
    %2700 = vmatpush1.msra.mxu0 0.0
    %2701 = vmatprep.subr.mxu0 0.0
    %2702 = vmatpush1.msra.mxu0 0.0
    %2703 = vmatprep.subr.mxu0 0.0
    %2704 = vmatpush1.msra.mxu0 0.0
    %2705 = vmatprep.subr.mxu0 0.0
    %2706 = vmatpush1.msra.mxu0 0.0
    %2707 = vmatprep.subr.mxu0 0.0
    %2708 = vmatpush1.msra.mxu0 0.0
    %2709 = vmatprep.subr.mxu0 0.0
    %2710 = vmatpush1.msra.mxu0 0.0
    %2711 = vmatprep.subr.mxu0 0.0
    %2712 = vmatpush1.msra.mxu0 0.0
    %2713 = vmatprep.subr.mxu0 0.0
    %2714 = vmatpush1.msra.mxu0 0.0
    %2715 = vmatprep.subr.mxu0 0.0
    %2716 = vmatpush1.msra.mxu0 0.0
    %2717 = vmatprep.subr.mxu0 0.0
    %2718 = vmatpush1.msra.mxu0 0.0
    %2719 = vmatprep.subr.mxu0 0.0
    %2720 = vmatpush1.msra.mxu0 0.0
    %2721 = vmatprep.subr.mxu0 0.0
    %2722 = vmatpush1.msra.mxu0 0.0
    %2723 = vmatprep.subr.mxu0 0.0
    %2724 = vmatpush1.msra.mxu0 0.0
    %2725 = vmatprep.subr.mxu0 0.0
    %2726 = vmatpush1.msra.mxu0 0.0
    %2727 = vmatprep.subr.mxu0 0.0
    %2728 = vmatpush1.msra.mxu0 0.0
    %2729 = vmatprep.subr.mxu0 0.0
    %2730 = vmatpush1.msra.mxu0 0.0
    %2731 = vmatprep.subr.mxu0 0.0
    %2732 = vmatpush1.msra.mxu0 0.0
    %2733 = vmatprep.subr.mxu0 0.0
    %2734 = vmatpush1.msra.mxu0 0.0
    %2735 = vmatprep.subr.mxu0 0.0
    %2736 = vmatpush1.msra.mxu0 0.0
    %2737 = vmatprep.subr.mxu0 0.0
    %2738 = vmatpush1.msra.mxu0 0.0
    %2739 = vmatprep.subr.mxu0 0.0
    %2740 = vmatpush1.msra.mxu0 0.0
    %2741 = vmatprep.subr.mxu0 0.0
    %2742 = vmatpush1.msra.mxu0 0.0
    %2743 = vmatprep.subr.mxu0 0.0
    %2744 = vmatpush1.msra.mxu0 0.0
    %2745 = vmatprep.subr.mxu0 0.0
    %2746 = vmatpush1.msra.mxu0 0.0
    %2747 = vmatprep.subr.mxu0 0.0
    %2748 = vmatpush1.msra.mxu0 0.0
    %2749 = vmatprep.subr.mxu0 0.0
    %2750 = vmatpush1.msra.mxu0 0.0
    %2751 = vmatprep.subr.mxu0 0.0
    %2752 = vmatpush1.msra.mxu0 0.0
    %2753 = vmatprep.subr.mxu0 0.0
    %2754 = vmatpush1.msra.mxu0 0.0
    %2755 = vmatprep.subr.mxu0 0.0
    %2756 = vmatpush1.msra.mxu0 0.0
    %2757 = vmatprep.subr.mxu0 0.0
    %2758 = vmatpush1.msra.mxu0 0.0
    %2759 = vmatprep.mubr.f32.mxu0 0.0
    %2760 = vmatmul.mubr.f32.gmra.mrb[0].mxu0 %v2693
    %v2761 = vpop.f32.mrb[0].mxu0
    %v2762 = vadd.f32 0.0, %v2761
    %v2763 = vpop.f32.mrb[0].mxu0
    %2764 = vdwg.mxu0
    %v2766 = vsel %vm1995, %v2685, 0
    %2768 = vmatprep.subr.mxu0 0.0
    %2769 = vmatpush1.msra.mxu0 %v1572
    %2770 = vmatprep.subr.mxu0 0.0
    %2771 = vmatpush1.msra.mxu0 0.0
    %2772 = vmatprep.subr.mxu0 0.0
    %2773 = vmatpush1.msra.mxu0 0.0
    %2774 = vmatprep.subr.mxu0 0.0
    %2775 = vmatpush1.msra.mxu0 0.0
    %2776 = vmatprep.subr.mxu0 0.0
    %2777 = vmatpush1.msra.mxu0 0.0
    %2778 = vmatprep.subr.mxu0 0.0
    %2779 = vmatpush1.msra.mxu0 0.0
    %2780 = vmatprep.subr.mxu0 0.0
    %2781 = vmatpush1.msra.mxu0 0.0
    %2782 = vmatprep.subr.mxu0 0.0
    %2783 = vmatpush1.msra.mxu0 0.0
    %2784 = vmatprep.subr.mxu0 0.0
    %2785 = vmatpush1.msra.mxu0 0.0
    %2786 = vmatprep.subr.mxu0 0.0
    %2787 = vmatpush1.msra.mxu0 0.0
    %2788 = vmatprep.subr.mxu0 0.0
    %2789 = vmatpush1.msra.mxu0 0.0
    %2790 = vmatprep.subr.mxu0 0.0
    %2791 = vmatpush1.msra.mxu0 0.0
    %2792 = vmatprep.subr.mxu0 0.0
    %2793 = vmatpush1.msra.mxu0 0.0
    %2794 = vmatprep.subr.mxu0 0.0
    %2795 = vmatpush1.msra.mxu0 0.0
    %2796 = vmatprep.subr.mxu0 0.0
    %2797 = vmatpush1.msra.mxu0 0.0
    %2798 = vmatprep.subr.mxu0 0.0
    %2799 = vmatpush1.msra.mxu0 0.0
    %2800 = vmatprep.subr.mxu0 0.0
    %2801 = vmatpush1.msra.mxu0 0.0
    %2802 = vmatprep.subr.mxu0 0.0
    %2803 = vmatpush1.msra.mxu0 0.0
    %2804 = vmatprep.subr.mxu0 0.0
    %2805 = vmatpush1.msra.mxu0 0.0
    %2806 = vmatprep.subr.mxu0 0.0
    %2807 = vmatpush1.msra.mxu0 0.0
    %2808 = vmatprep.subr.mxu0 0.0
    %2809 = vmatpush1.msra.mxu0 0.0
    %2810 = vmatprep.subr.mxu0 0.0
    %2811 = vmatpush1.msra.mxu0 0.0
    %2812 = vmatprep.subr.mxu0 0.0
    %2813 = vmatpush1.msra.mxu0 0.0
    %2814 = vmatprep.subr.mxu0 0.0
    %2815 = vmatpush1.msra.mxu0 0.0
    %2816 = vmatprep.subr.mxu0 0.0
    %2817 = vmatpush1.msra.mxu0 0.0
    %2818 = vmatprep.subr.mxu0 0.0
    %2819 = vmatpush1.msra.mxu0 0.0
    %2820 = vmatprep.subr.mxu0 0.0
    %2821 = vmatpush1.msra.mxu0 0.0
    %2822 = vmatprep.subr.mxu0 0.0
    %2823 = vmatpush1.msra.mxu0 0.0
    %2824 = vmatprep.subr.mxu0 0.0
    %2825 = vmatpush1.msra.mxu0 0.0
    %2826 = vmatprep.subr.mxu0 0.0
    %2827 = vmatpush1.msra.mxu0 0.0
    %2828 = vmatprep.subr.mxu0 0.0
    %2829 = vmatpush1.msra.mxu0 0.0
    %2830 = vmatprep.subr.mxu0 0.0
    %2831 = vmatpush1.msra.mxu0 0.0
    %2832 = vmatprep.mubr.f32.mxu0 0.0
    %2833 = vmatmul.mubr.f32.gmra.mrb[0].mxu0 %v2766
    %v2834 = vpop.f32.mrb[0].mxu0
    %v2835 = vadd.f32 0.0, %v2834
    %v2836 = vpop.f32.mrb[0].mxu0
    %2837 = vdwg.mxu0
    %v2839 = vsel %vm1995, %v2686, 0
    %2841 = vmatprep.subr.mxu0 0.0
    %2842 = vmatpush1.msra.mxu0 %v1642
    %2843 = vmatprep.subr.mxu0 0.0
    %2844 = vmatpush1.msra.mxu0 0.0
    %2845 = vmatprep.subr.mxu0 0.0
    %2846 = vmatpush1.msra.mxu0 0.0
    %2847 = vmatprep.subr.mxu0 0.0
    %2848 = vmatpush1.msra.mxu0 0.0
    %2849 = vmatprep.subr.mxu0 0.0
    %2850 = vmatpush1.msra.mxu0 0.0
    %2851 = vmatprep.subr.mxu0 0.0
    %2852 = vmatpush1.msra.mxu0 0.0
    %2853 = vmatprep.subr.mxu0 0.0
    %2854 = vmatpush1.msra.mxu0 0.0
    %2855 = vmatprep.subr.mxu0 0.0
    %2856 = vmatpush1.msra.mxu0 0.0
    %2857 = vmatprep.subr.mxu0 0.0
    %2858 = vmatpush1.msra.mxu0 0.0
    %2859 = vmatprep.subr.mxu0 0.0
    %2860 = vmatpush1.msra.mxu0 0.0
    %2861 = vmatprep.subr.mxu0 0.0
    %2862 = vmatpush1.msra.mxu0 0.0
    %2863 = vmatprep.subr.mxu0 0.0
    %2864 = vmatpush1.msra.mxu0 0.0
    %2865 = vmatprep.subr.mxu0 0.0
    %2866 = vmatpush1.msra.mxu0 0.0
    %2867 = vmatprep.subr.mxu0 0.0
    %2868 = vmatpush1.msra.mxu0 0.0
    %2869 = vmatprep.subr.mxu0 0.0
    %2870 = vmatpush1.msra.mxu0 0.0
    %2871 = vmatprep.subr.mxu0 0.0
    %2872 = vmatpush1.msra.mxu0 0.0
    %2873 = vmatprep.subr.mxu0 0.0
    %2874 = vmatpush1.msra.mxu0 0.0
    %2875 = vmatprep.subr.mxu0 0.0
    %2876 = vmatpush1.msra.mxu0 0.0
    %2877 = vmatprep.subr.mxu0 0.0
    %2878 = vmatpush1.msra.mxu0 0.0
    %2879 = vmatprep.subr.mxu0 0.0
    %2880 = vmatpush1.msra.mxu0 0.0
    %2881 = vmatprep.subr.mxu0 0.0
    %2882 = vmatpush1.msra.mxu0 0.0
    %2883 = vmatprep.subr.mxu0 0.0
    %2884 = vmatpush1.msra.mxu0 0.0
    %2885 = vmatprep.subr.mxu0 0.0
    %2886 = vmatpush1.msra.mxu0 0.0
    %2887 = vmatprep.subr.mxu0 0.0
    %2888 = vmatpush1.msra.mxu0 0.0
    %2889 = vmatprep.subr.mxu0 0.0
    %2890 = vmatpush1.msra.mxu0 0.0
    %2891 = vmatprep.subr.mxu0 0.0
    %2892 = vmatpush1.msra.mxu0 0.0
    %2893 = vmatprep.subr.mxu0 0.0
    %2894 = vmatpush1.msra.mxu0 0.0
    %2895 = vmatprep.subr.mxu0 0.0
    %2896 = vmatpush1.msra.mxu0 0.0
    %2897 = vmatprep.subr.mxu0 0.0
    %2898 = vmatpush1.msra.mxu0 0.0
    %2899 = vmatprep.subr.mxu0 0.0
    %2900 = vmatpush1.msra.mxu0 0.0
    %2901 = vmatprep.subr.mxu0 0.0
    %2902 = vmatpush1.msra.mxu0 0.0
    %2903 = vmatprep.subr.mxu0 0.0
    %2904 = vmatpush1.msra.mxu0 0.0
    %2905 = vmatprep.mubr.f32.mxu0 0.0
    %2906 = vmatmul.mubr.f32.gmra.mrb[0].mxu0 %v2839
    %v2907 = vpop.f32.mrb[0].mxu0
    %v2908 = vadd.f32 0.0, %v2907
    %v2909 = vpop.f32.mrb[0].mxu0
    %2910 = vdwg.mxu0
    %v2912 = vsel %vm1995, %v2687, 0
    %2914 = vmatprep.subr.mxu0 0.0
    %2915 = vmatpush1.msra.mxu0 %v1712
    %2916 = vmatprep.subr.mxu0 0.0
    %2917 = vmatpush1.msra.mxu0 0.0
    %2918 = vmatprep.subr.mxu0 0.0
    %2919 = vmatpush1.msra.mxu0 0.0
    %2920 = vmatprep.subr.mxu0 0.0
    %2921 = vmatpush1.msra.mxu0 0.0
    %2922 = vmatprep.subr.mxu0 0.0
    %2923 = vmatpush1.msra.mxu0 0.0
    %2924 = vmatprep.subr.mxu0 0.0
    %2925 = vmatpush1.msra.mxu0 0.0
    %2926 = vmatprep.subr.mxu0 0.0
    %2927 = vmatpush1.msra.mxu0 0.0
    %2928 = vmatprep.subr.mxu0 0.0
    %2929 = vmatpush1.msra.mxu0 0.0
    %2930 = vmatprep.subr.mxu0 0.0
    %2931 = vmatpush1.msra.mxu0 0.0
    %2932 = vmatprep.subr.mxu0 0.0
    %2933 = vmatpush1.msra.mxu0 0.0
    %2934 = vmatprep.subr.mxu0 0.0
    %2935 = vmatpush1.msra.mxu0 0.0
    %2936 = vmatprep.subr.mxu0 0.0
    %2937 = vmatpush1.msra.mxu0 0.0
    %2938 = vmatprep.subr.mxu0 0.0
    %2939 = vmatpush1.msra.mxu0 0.0
    %2940 = vmatprep.subr.mxu0 0.0
    %2941 = vmatpush1.msra.mxu0 0.0
    %2942 = vmatprep.subr.mxu0 0.0
    %2943 = vmatpush1.msra.mxu0 0.0
    %2944 = vmatprep.subr.mxu0 0.0
    %2945 = vmatpush1.msra.mxu0 0.0
    %2946 = vmatprep.subr.mxu0 0.0
    %2947 = vmatpush1.msra.mxu0 0.0
    %2948 = vmatprep.subr.mxu0 0.0
    %2949 = vmatpush1.msra.mxu0 0.0
    %2950 = vmatprep.subr.mxu0 0.0
    %2951 = vmatpush1.msra.mxu0 0.0
    %2952 = vmatprep.subr.mxu0 0.0
    %2953 = vmatpush1.msra.mxu0 0.0
    %2954 = vmatprep.subr.mxu0 0.0
    %2955 = vmatpush1.msra.mxu0 0.0
    %2956 = vmatprep.subr.mxu0 0.0
    %2957 = vmatpush1.msra.mxu0 0.0
    %2958 = vmatprep.subr.mxu0 0.0
    %2959 = vmatpush1.msra.mxu0 0.0
    %2960 = vmatprep.subr.mxu0 0.0
    %2961 = vmatpush1.msra.mxu0 0.0
    %2962 = vmatprep.subr.mxu0 0.0
    %2963 = vmatpush1.msra.mxu0 0.0
    %2964 = vmatprep.subr.mxu0 0.0
    %2965 = vmatpush1.msra.mxu0 0.0
    %2966 = vmatprep.subr.mxu0 0.0
    %2967 = vmatpush1.msra.mxu0 0.0
    %2968 = vmatprep.subr.mxu0 0.0
    %2969 = vmatpush1.msra.mxu0 0.0
    %2970 = vmatprep.subr.mxu0 0.0
    %2971 = vmatpush1.msra.mxu0 0.0
    %2972 = vmatprep.subr.mxu0 0.0
    %2973 = vmatpush1.msra.mxu0 0.0
    %2974 = vmatprep.subr.mxu0 0.0
    %2975 = vmatpush1.msra.mxu0 0.0
    %2976 = vmatprep.subr.mxu0 0.0
    %2977 = vmatpush1.msra.mxu0 0.0
    %2978 = vmatprep.mubr.f32.mxu0 0.0
    %2979 = vmatmul.mubr.f32.gmra.mrb[0].mxu0 %v2912
    %v2980 = vpop.f32.mrb[0].mxu0
    %v2981 = vadd.f32 0.0, %v2980
    %v2982 = vpop.f32.mrb[0].mxu0
    %2983 = vdwg.mxu0
    %v2985 = vsel %vm1995, %v2688, 0
    %2987 = vmatprep.subr.mxu0 0.0
    %2988 = vmatpush1.msra.mxu0 %v1782
    %2989 = vmatprep.subr.mxu0 0.0
    %2990 = vmatpush1.msra.mxu0 0.0
    %2991 = vmatprep.subr.mxu0 0.0
    %2992 = vmatpush1.msra.mxu0 0.0
    %2993 = vmatprep.subr.mxu0 0.0
    %2994 = vmatpush1.msra.mxu0 0.0
    %2995 = vmatprep.subr.mxu0 0.0
    %2996 = vmatpush1.msra.mxu0 0.0
    %2997 = vmatprep.subr.mxu0 0.0
    %2998 = vmatpush1.msra.mxu0 0.0
    %2999 = vmatprep.subr.mxu0 0.0
    %3000 = vmatpush1.msra.mxu0 0.0
    %3001 = vmatprep.subr.mxu0 0.0
    %3002 = vmatpush1.msra.mxu0 0.0
    %3003 = vmatprep.subr.mxu0 0.0
    %3004 = vmatpush1.msra.mxu0 0.0
    %3005 = vmatprep.subr.mxu0 0.0
    %3006 = vmatpush1.msra.mxu0 0.0
    %3007 = vmatprep.subr.mxu0 0.0
    %3008 = vmatpush1.msra.mxu0 0.0
    %3009 = vmatprep.subr.mxu0 0.0
    %3010 = vmatpush1.msra.mxu0 0.0
    %3011 = vmatprep.subr.mxu0 0.0
    %3012 = vmatpush1.msra.mxu0 0.0
    %3013 = vmatprep.subr.mxu0 0.0
    %3014 = vmatpush1.msra.mxu0 0.0
    %3015 = vmatprep.subr.mxu0 0.0
    %3016 = vmatpush1.msra.mxu0 0.0
    %3017 = vmatprep.subr.mxu0 0.0
    %3018 = vmatpush1.msra.mxu0 0.0
    %3019 = vmatprep.subr.mxu0 0.0
    %3020 = vmatpush1.msra.mxu0 0.0
    %3021 = vmatprep.subr.mxu0 0.0
    %3022 = vmatpush1.msra.mxu0 0.0
    %3023 = vmatprep.subr.mxu0 0.0
    %3024 = vmatpush1.msra.mxu0 0.0
    %3025 = vmatprep.subr.mxu0 0.0
    %3026 = vmatpush1.msra.mxu0 0.0
    %3027 = vmatprep.subr.mxu0 0.0
    %3028 = vmatpush1.msra.mxu0 0.0
    %3029 = vmatprep.subr.mxu0 0.0
    %3030 = vmatpush1.msra.mxu0 0.0
    %3031 = vmatprep.subr.mxu0 0.0
    %3032 = vmatpush1.msra.mxu0 0.0
    %3033 = vmatprep.subr.mxu0 0.0
    %3034 = vmatpush1.msra.mxu0 0.0
    %3035 = vmatprep.subr.mxu0 0.0
    %3036 = vmatpush1.msra.mxu0 0.0
    %3037 = vmatprep.subr.mxu0 0.0
    %3038 = vmatpush1.msra.mxu0 0.0
    %3039 = vmatprep.subr.mxu0 0.0
    %3040 = vmatpush1.msra.mxu0 0.0
    %3041 = vmatprep.subr.mxu0 0.0
    %3042 = vmatpush1.msra.mxu0 0.0
    %3043 = vmatprep.subr.mxu0 0.0
    %3044 = vmatpush1.msra.mxu0 0.0
    %3045 = vmatprep.subr.mxu0 0.0
    %3046 = vmatpush1.msra.mxu0 0.0
    %3047 = vmatprep.subr.mxu0 0.0
    %3048 = vmatpush1.msra.mxu0 0.0
    %3049 = vmatprep.subr.mxu0 0.0
    %3050 = vmatpush1.msra.mxu0 0.0
    %3051 = vmatprep.mubr.f32.mxu0 0.0
    %3052 = vmatmul.mubr.f32.gmra.mrb[0].mxu0 %v2985
    %v3053 = vpop.f32.mrb[0].mxu0
    %v3054 = vadd.f32 0.0, %v3053
    %v3055 = vpop.f32.mrb[0].mxu0
    %3056 = vdwg.mxu0
    %v3058 = vsel %vm1995, %v2689, 0
    %3060 = vmatprep.subr.mxu0 0.0
    %3061 = vmatpush1.msra.mxu0 %v1852
    %3062 = vmatprep.subr.mxu0 0.0
    %3063 = vmatpush1.msra.mxu0 0.0
    %3064 = vmatprep.subr.mxu0 0.0
    %3065 = vmatpush1.msra.mxu0 0.0
    %3066 = vmatprep.subr.mxu0 0.0
    %3067 = vmatpush1.msra.mxu0 0.0
    %3068 = vmatprep.subr.mxu0 0.0
    %3069 = vmatpush1.msra.mxu0 0.0
    %3070 = vmatprep.subr.mxu0 0.0
    %3071 = vmatpush1.msra.mxu0 0.0
    %3072 = vmatprep.subr.mxu0 0.0
    %3073 = vmatpush1.msra.mxu0 0.0
    %3074 = vmatprep.subr.mxu0 0.0
    %3075 = vmatpush1.msra.mxu0 0.0
    %3076 = vmatprep.subr.mxu0 0.0
    %3077 = vmatpush1.msra.mxu0 0.0
    %3078 = vmatprep.subr.mxu0 0.0
    %3079 = vmatpush1.msra.mxu0 0.0
    %3080 = vmatprep.subr.mxu0 0.0
    %3081 = vmatpush1.msra.mxu0 0.0
    %3082 = vmatprep.subr.mxu0 0.0
    %3083 = vmatpush1.msra.mxu0 0.0
    %3084 = vmatprep.subr.mxu0 0.0
    %3085 = vmatpush1.msra.mxu0 0.0
    %3086 = vmatprep.subr.mxu0 0.0
    %3087 = vmatpush1.msra.mxu0 0.0
    %3088 = vmatprep.subr.mxu0 0.0
    %3089 = vmatpush1.msra.mxu0 0.0
    %3090 = vmatprep.subr.mxu0 0.0
    %3091 = vmatpush1.msra.mxu0 0.0
    %3092 = vmatprep.subr.mxu0 0.0
    %3093 = vmatpush1.msra.mxu0 0.0
    %3094 = vmatprep.subr.mxu0 0.0
    %3095 = vmatpush1.msra.mxu0 0.0
    %3096 = vmatprep.subr.mxu0 0.0
    %3097 = vmatpush1.msra.mxu0 0.0
    %3098 = vmatprep.subr.mxu0 0.0
    %3099 = vmatpush1.msra.mxu0 0.0
    %3100 = vmatprep.subr.mxu0 0.0
    %3101 = vmatpush1.msra.mxu0 0.0
    %3102 = vmatprep.subr.mxu0 0.0
    %3103 = vmatpush1.msra.mxu0 0.0
    %3104 = vmatprep.subr.mxu0 0.0
    %3105 = vmatpush1.msra.mxu0 0.0
    %3106 = vmatprep.subr.mxu0 0.0
    %3107 = vmatpush1.msra.mxu0 0.0
    %3108 = vmatprep.subr.mxu0 0.0
    %3109 = vmatpush1.msra.mxu0 0.0
    %3110 = vmatprep.subr.mxu0 0.0
    %3111 = vmatpush1.msra.mxu0 0.0
    %3112 = vmatprep.subr.mxu0 0.0
    %3113 = vmatpush1.msra.mxu0 0.0
    %3114 = vmatprep.subr.mxu0 0.0
    %3115 = vmatpush1.msra.mxu0 0.0
    %3116 = vmatprep.subr.mxu0 0.0
    %3117 = vmatpush1.msra.mxu0 0.0
    %3118 = vmatprep.subr.mxu0 0.0
    %3119 = vmatpush1.msra.mxu0 0.0
    %3120 = vmatprep.subr.mxu0 0.0
    %3121 = vmatpush1.msra.mxu0 0.0
    %3122 = vmatprep.subr.mxu0 0.0
    %3123 = vmatpush1.msra.mxu0 0.0
    %3124 = vmatprep.mubr.f32.mxu0 0.0
    %3125 = vmatmul.mubr.f32.gmra.mrb[0].mxu0 %v3058
    %v3126 = vpop.f32.mrb[0].mxu0
    %v3127 = vadd.f32 0.0, %v3126
    %v3128 = vpop.f32.mrb[0].mxu0
    %3129 = vdwg.mxu0
    %v3131 = vsel %vm1995, %v2690, 0
    %3133 = vmatprep.subr.mxu0 0.0
    %3134 = vmatpush1.msra.mxu0 %v1922
    %3135 = vmatprep.subr.mxu0 0.0
    %3136 = vmatpush1.msra.mxu0 0.0
    %3137 = vmatprep.subr.mxu0 0.0
    %3138 = vmatpush1.msra.mxu0 0.0
    %3139 = vmatprep.subr.mxu0 0.0
    %3140 = vmatpush1.msra.mxu0 0.0
    %3141 = vmatprep.subr.mxu0 0.0
    %3142 = vmatpush1.msra.mxu0 0.0
    %3143 = vmatprep.subr.mxu0 0.0
    %3144 = vmatpush1.msra.mxu0 0.0
    %3145 = vmatprep.subr.mxu0 0.0
    %3146 = vmatpush1.msra.mxu0 0.0
    %3147 = vmatprep.subr.mxu0 0.0
    %3148 = vmatpush1.msra.mxu0 0.0
    %3149 = vmatprep.subr.mxu0 0.0
    %3150 = vmatpush1.msra.mxu0 0.0
    %3151 = vmatprep.subr.mxu0 0.0
    %3152 = vmatpush1.msra.mxu0 0.0
    %3153 = vmatprep.subr.mxu0 0.0
    %3154 = vmatpush1.msra.mxu0 0.0
    %3155 = vmatprep.subr.mxu0 0.0
    %3156 = vmatpush1.msra.mxu0 0.0
    %3157 = vmatprep.subr.mxu0 0.0
    %3158 = vmatpush1.msra.mxu0 0.0
    %3159 = vmatprep.subr.mxu0 0.0
    %3160 = vmatpush1.msra.mxu0 0.0
    %3161 = vmatprep.subr.mxu0 0.0
    %3162 = vmatpush1.msra.mxu0 0.0
    %3163 = vmatprep.subr.mxu0 0.0
    %3164 = vmatpush1.msra.mxu0 0.0
    %3165 = vmatprep.subr.mxu0 0.0
    %3166 = vmatpush1.msra.mxu0 0.0
    %3167 = vmatprep.subr.mxu0 0.0
    %3168 = vmatpush1.msra.mxu0 0.0
    %3169 = vmatprep.subr.mxu0 0.0
    %3170 = vmatpush1.msra.mxu0 0.0
    %3171 = vmatprep.subr.mxu0 0.0
    %3172 = vmatpush1.msra.mxu0 0.0
    %3173 = vmatprep.subr.mxu0 0.0
    %3174 = vmatpush1.msra.mxu0 0.0
    %3175 = vmatprep.subr.mxu0 0.0
    %3176 = vmatpush1.msra.mxu0 0.0
    %3177 = vmatprep.subr.mxu0 0.0
    %3178 = vmatpush1.msra.mxu0 0.0
    %3179 = vmatprep.subr.mxu0 0.0
    %3180 = vmatpush1.msra.mxu0 0.0
    %3181 = vmatprep.subr.mxu0 0.0
    %3182 = vmatpush1.msra.mxu0 0.0
    %3183 = vmatprep.subr.mxu0 0.0
    %3184 = vmatpush1.msra.mxu0 0.0
    %3185 = vmatprep.subr.mxu0 0.0
    %3186 = vmatpush1.msra.mxu0 0.0
    %3187 = vmatprep.subr.mxu0 0.0
    %3188 = vmatpush1.msra.mxu0 0.0
    %3189 = vmatprep.subr.mxu0 0.0
    %3190 = vmatpush1.msra.mxu0 0.0
    %3191 = vmatprep.subr.mxu0 0.0
    %3192 = vmatpush1.msra.mxu0 0.0
    %3193 = vmatprep.subr.mxu0 0.0
    %3194 = vmatpush1.msra.mxu0 0.0
    %3195 = vmatprep.subr.mxu0 0.0
    %3196 = vmatpush1.msra.mxu0 0.0
    %3197 = vmatprep.mubr.f32.mxu0 0.0
    %3198 = vmatmul.mubr.f32.gmra.mrb[0].mxu0 %v3131
    %v3199 = vpop.f32.mrb[0].mxu0
    %v3200 = vadd.f32 0.0, %v3199
    %v3201 = vpop.f32.mrb[0].mxu0
    %3202 = vdwg.mxu0
    %v3204 = vsel %vm1995, %v2691, 0
    %3206 = vmatprep.subr.mxu0 0.0
    %3207 = vmatpush1.msra.mxu0 %v1992
    %3208 = vmatprep.subr.mxu0 0.0
    %3209 = vmatpush1.msra.mxu0 0.0
    %3210 = vmatprep.subr.mxu0 0.0
    %3211 = vmatpush1.msra.mxu0 0.0
    %3212 = vmatprep.subr.mxu0 0.0
    %3213 = vmatpush1.msra.mxu0 0.0
    %3214 = vmatprep.subr.mxu0 0.0
    %3215 = vmatpush1.msra.mxu0 0.0
    %3216 = vmatprep.subr.mxu0 0.0
    %3217 = vmatpush1.msra.mxu0 0.0
    %3218 = vmatprep.subr.mxu0 0.0
    %3219 = vmatpush1.msra.mxu0 0.0
    %3220 = vmatprep.subr.mxu0 0.0
    %3221 = vmatpush1.msra.mxu0 0.0
    %3222 = vmatprep.subr.mxu0 0.0
    %3223 = vmatpush1.msra.mxu0 0.0
    %3224 = vmatprep.subr.mxu0 0.0
    %3225 = vmatpush1.msra.mxu0 0.0
    %3226 = vmatprep.subr.mxu0 0.0
    %3227 = vmatpush1.msra.mxu0 0.0
    %3228 = vmatprep.subr.mxu0 0.0
    %3229 = vmatpush1.msra.mxu0 0.0
    %3230 = vmatprep.subr.mxu0 0.0
    %3231 = vmatpush1.msra.mxu0 0.0
    %3232 = vmatprep.subr.mxu0 0.0
    %3233 = vmatpush1.msra.mxu0 0.0
    %3234 = vmatprep.subr.mxu0 0.0
    %3235 = vmatpush1.msra.mxu0 0.0
    %3236 = vmatprep.subr.mxu0 0.0
    %3237 = vmatpush1.msra.mxu0 0.0
    %3238 = vmatprep.subr.mxu0 0.0
    %3239 = vmatpush1.msra.mxu0 0.0
    %3240 = vmatprep.subr.mxu0 0.0
    %3241 = vmatpush1.msra.mxu0 0.0
    %3242 = vmatprep.subr.mxu0 0.0
    %3243 = vmatpush1.msra.mxu0 0.0
    %3244 = vmatprep.subr.mxu0 0.0
    %3245 = vmatpush1.msra.mxu0 0.0
    %3246 = vmatprep.subr.mxu0 0.0
    %3247 = vmatpush1.msra.mxu0 0.0
    %3248 = vmatprep.subr.mxu0 0.0
    %3249 = vmatpush1.msra.mxu0 0.0
    %3250 = vmatprep.subr.mxu0 0.0
    %3251 = vmatpush1.msra.mxu0 0.0
    %3252 = vmatprep.subr.mxu0 0.0
    %3253 = vmatpush1.msra.mxu0 0.0
    %3254 = vmatprep.subr.mxu0 0.0
    %3255 = vmatpush1.msra.mxu0 0.0
    %3256 = vmatprep.subr.mxu0 0.0
    %3257 = vmatpush1.msra.mxu0 0.0
    %3258 = vmatprep.subr.mxu0 0.0
    %3259 = vmatpush1.msra.mxu0 0.0
    %3260 = vmatprep.subr.mxu0 0.0
    %3261 = vmatpush1.msra.mxu0 0.0
    %3262 = vmatprep.subr.mxu0 0.0
    %3263 = vmatpush1.msra.mxu0 0.0
    %3264 = vmatprep.subr.mxu0 0.0
    %3265 = vmatpush1.msra.mxu0 0.0
    %3266 = vmatprep.subr.mxu0 0.0
    %3267 = vmatpush1.msra.mxu0 0.0
    %3268 = vmatprep.subr.mxu0 0.0
    %3269 = vmatpush1.msra.mxu0 0.0
    %3270 = vmatprep.mubr.f32.mxu0 0.0
    %3271 = vmatmul.mubr.f32.gmra.mrb[0].mxu0 %v3204
    %v3272 = vpop.f32.mrb[0].mxu0
    %v3273 = vadd.f32 0.0, %v3272
    %v3274 = vpop.f32.mrb[0].mxu0
    %3275 = vdwg.mxu0
    %v3276 = vld [vmem:[%s7] sm:$0xff]
    %v3277 = vld [vmem:[%s7 + $0x8] sm:$0xff]
    %v3278 = vld [vmem:[%s7 + $0x10] sm:$0xff]
    %v3279 = vld [vmem:[%s7 + $0x18] sm:$0xff]
    %v3280 = vld [vmem:[%s7 + $0x20] sm:$0xff]
    %v3281 = vld [vmem:[%s7 + $0x28] sm:$0xff]
    %v3282 = vld [vmem:[%s7 + $0x30] sm:$0xff]
    %v3283 = vld [vmem:[%s7 + $0x38] sm:$0xff]
    %v3285 = vsel %vm1995, %v2762, 0
    %3287 = vmatprep.subr.mxu0 0.0
    %3288 = vmatpush1.msra.mxu0 %v3276
    %3289 = vmatprep.subr.mxu0 0.0
    %3290 = vmatpush1.msra.mxu0 0.0
    %3291 = vmatprep.subr.mxu0 0.0
    %3292 = vmatpush1.msra.mxu0 0.0
    %3293 = vmatprep.subr.mxu0 0.0
    %3294 = vmatpush1.msra.mxu0 0.0
    %3295 = vmatprep.subr.mxu0 0.0
    %3296 = vmatpush1.msra.mxu0 0.0
    %3297 = vmatprep.subr.mxu0 0.0
    %3298 = vmatpush1.msra.mxu0 0.0
    %3299 = vmatprep.subr.mxu0 0.0
    %3300 = vmatpush1.msra.mxu0 0.0
    %3301 = vmatprep.subr.mxu0 0.0
    %3302 = vmatpush1.msra.mxu0 0.0
    %3303 = vmatprep.subr.mxu0 0.0
    %3304 = vmatpush1.msra.mxu0 0.0
    %3305 = vmatprep.subr.mxu0 0.0
    %3306 = vmatpush1.msra.mxu0 0.0
    %3307 = vmatprep.subr.mxu0 0.0
    %3308 = vmatpush1.msra.mxu0 0.0
    %3309 = vmatprep.subr.mxu0 0.0
    %3310 = vmatpush1.msra.mxu0 0.0
    %3311 = vmatprep.subr.mxu0 0.0
    %3312 = vmatpush1.msra.mxu0 0.0
    %3313 = vmatprep.subr.mxu0 0.0
    %3314 = vmatpush1.msra.mxu0 0.0
    %3315 = vmatprep.subr.mxu0 0.0
    %3316 = vmatpush1.msra.mxu0 0.0
    %3317 = vmatprep.subr.mxu0 0.0
    %3318 = vmatpush1.msra.mxu0 0.0
    %3319 = vmatprep.subr.mxu0 0.0
    %3320 = vmatpush1.msra.mxu0 0.0
    %3321 = vmatprep.subr.mxu0 0.0
    %3322 = vmatpush1.msra.mxu0 0.0
    %3323 = vmatprep.subr.mxu0 0.0
    %3324 = vmatpush1.msra.mxu0 0.0
    %3325 = vmatprep.subr.mxu0 0.0
    %3326 = vmatpush1.msra.mxu0 0.0
    %3327 = vmatprep.subr.mxu0 0.0
    %3328 = vmatpush1.msra.mxu0 0.0
    %3329 = vmatprep.subr.mxu0 0.0
    %3330 = vmatpush1.msra.mxu0 0.0
    %3331 = vmatprep.subr.mxu0 0.0
    %3332 = vmatpush1.msra.mxu0 0.0
    %3333 = vmatprep.subr.mxu0 0.0
    %3334 = vmatpush1.msra.mxu0 0.0
    %3335 = vmatprep.subr.mxu0 0.0
    %3336 = vmatpush1.msra.mxu0 0.0
    %3337 = vmatprep.subr.mxu0 0.0
    %3338 = vmatpush1.msra.mxu0 0.0
    %3339 = vmatprep.subr.mxu0 0.0
    %3340 = vmatpush1.msra.mxu0 0.0
    %3341 = vmatprep.subr.mxu0 0.0
    %3342 = vmatpush1.msra.mxu0 0.0
    %3343 = vmatprep.subr.mxu0 0.0
    %3344 = vmatpush1.msra.mxu0 0.0
    %3345 = vmatprep.subr.mxu0 0.0
    %3346 = vmatpush1.msra.mxu0 0.0
    %3347 = vmatprep.subr.mxu0 0.0
    %3348 = vmatpush1.msra.mxu0 0.0
    %3349 = vmatprep.subr.mxu0 0.0
    %3350 = vmatpush1.msra.mxu0 0.0
    %3351 = vmatprep.mubr.f32.mxu0 0.0
    %3352 = vmatmul.mubr.f32.gmra.mrb[0].mxu0 %v3285
    %v3353 = vpop.f32.mrb[0].mxu0
    %v3354 = vadd.f32 0.0, %v3353
    %v3355 = vpop.f32.mrb[0].mxu0
    %3356 = vdwg.mxu0
    %v3358 = vsel %vm1995, %v2835, 0
    %3360 = vmatprep.subr.mxu0 0.0
    %3361 = vmatpush1.msra.mxu0 %v3277
    %3362 = vmatprep.subr.mxu0 0.0
    %3363 = vmatpush1.msra.mxu0 0.0
    %3364 = vmatprep.subr.mxu0 0.0
    %3365 = vmatpush1.msra.mxu0 0.0
    %3366 = vmatprep.subr.mxu0 0.0
    %3367 = vmatpush1.msra.mxu0 0.0
    %3368 = vmatprep.subr.mxu0 0.0
    %3369 = vmatpush1.msra.mxu0 0.0
    %3370 = vmatprep.subr.mxu0 0.0
    %3371 = vmatpush1.msra.mxu0 0.0
    %3372 = vmatprep.subr.mxu0 0.0
    %3373 = vmatpush1.msra.mxu0 0.0
    %3374 = vmatprep.subr.mxu0 0.0
    %3375 = vmatpush1.msra.mxu0 0.0
    %3376 = vmatprep.subr.mxu0 0.0
    %3377 = vmatpush1.msra.mxu0 0.0
    %3378 = vmatprep.subr.mxu0 0.0
    %3379 = vmatpush1.msra.mxu0 0.0
    %3380 = vmatprep.subr.mxu0 0.0
    %3381 = vmatpush1.msra.mxu0 0.0
    %3382 = vmatprep.subr.mxu0 0.0
    %3383 = vmatpush1.msra.mxu0 0.0
    %3384 = vmatprep.subr.mxu0 0.0
    %3385 = vmatpush1.msra.mxu0 0.0
    %3386 = vmatprep.subr.mxu0 0.0
    %3387 = vmatpush1.msra.mxu0 0.0
    %3388 = vmatprep.subr.mxu0 0.0
    %3389 = vmatpush1.msra.mxu0 0.0
    %3390 = vmatprep.subr.mxu0 0.0
    %3391 = vmatpush1.msra.mxu0 0.0
    %3392 = vmatprep.subr.mxu0 0.0
    %3393 = vmatpush1.msra.mxu0 0.0
    %3394 = vmatprep.subr.mxu0 0.0
    %3395 = vmatpush1.msra.mxu0 0.0
    %3396 = vmatprep.subr.mxu0 0.0
    %3397 = vmatpush1.msra.mxu0 0.0
    %3398 = vmatprep.subr.mxu0 0.0
    %3399 = vmatpush1.msra.mxu0 0.0
    %3400 = vmatprep.subr.mxu0 0.0
    %3401 = vmatpush1.msra.mxu0 0.0
    %3402 = vmatprep.subr.mxu0 0.0
    %3403 = vmatpush1.msra.mxu0 0.0
    %3404 = vmatprep.subr.mxu0 0.0
    %3405 = vmatpush1.msra.mxu0 0.0
    %3406 = vmatprep.subr.mxu0 0.0
    %3407 = vmatpush1.msra.mxu0 0.0
    %3408 = vmatprep.subr.mxu0 0.0
    %3409 = vmatpush1.msra.mxu0 0.0
    %3410 = vmatprep.subr.mxu0 0.0
    %3411 = vmatpush1.msra.mxu0 0.0
    %3412 = vmatprep.subr.mxu0 0.0
    %3413 = vmatpush1.msra.mxu0 0.0
    %3414 = vmatprep.subr.mxu0 0.0
    %3415 = vmatpush1.msra.mxu0 0.0
    %3416 = vmatprep.subr.mxu0 0.0
    %3417 = vmatpush1.msra.mxu0 0.0
    %3418 = vmatprep.subr.mxu0 0.0
    %3419 = vmatpush1.msra.mxu0 0.0
    %3420 = vmatprep.subr.mxu0 0.0
    %3421 = vmatpush1.msra.mxu0 0.0
    %3422 = vmatprep.subr.mxu0 0.0
    %3423 = vmatpush1.msra.mxu0 0.0
    %3424 = vmatprep.mubr.f32.mxu0 0.0
    %3425 = vmatmul.mubr.f32.gmra.mrb[0].mxu0 %v3358
    %v3426 = vpop.f32.mrb[0].mxu0
    %v3427 = vadd.f32 0.0, %v3426
    %v3428 = vpop.f32.mrb[0].mxu0
    %3429 = vdwg.mxu0
    %v3431 = vsel %vm1995, %v2908, 0
    %3433 = vmatprep.subr.mxu0 0.0
    %3434 = vmatpush1.msra.mxu0 %v3278
    %3435 = vmatprep.subr.mxu0 0.0
    %3436 = vmatpush1.msra.mxu0 0.0
    %3437 = vmatprep.subr.mxu0 0.0
    %3438 = vmatpush1.msra.mxu0 0.0
    %3439 = vmatprep.subr.mxu0 0.0
    %3440 = vmatpush1.msra.mxu0 0.0
    %3441 = vmatprep.subr.mxu0 0.0
    %3442 = vmatpush1.msra.mxu0 0.0
    %3443 = vmatprep.subr.mxu0 0.0
    %3444 = vmatpush1.msra.mxu0 0.0
    %3445 = vmatprep.subr.mxu0 0.0
    %3446 = vmatpush1.msra.mxu0 0.0
    %3447 = vmatprep.subr.mxu0 0.0
    %3448 = vmatpush1.msra.mxu0 0.0
    %3449 = vmatprep.subr.mxu0 0.0
    %3450 = vmatpush1.msra.mxu0 0.0
    %3451 = vmatprep.subr.mxu0 0.0
    %3452 = vmatpush1.msra.mxu0 0.0
    %3453 = vmatprep.subr.mxu0 0.0
    %3454 = vmatpush1.msra.mxu0 0.0
    %3455 = vmatprep.subr.mxu0 0.0
    %3456 = vmatpush1.msra.mxu0 0.0
    %3457 = vmatprep.subr.mxu0 0.0
    %3458 = vmatpush1.msra.mxu0 0.0
    %3459 = vmatprep.subr.mxu0 0.0
    %3460 = vmatpush1.msra.mxu0 0.0
    %3461 = vmatprep.subr.mxu0 0.0
    %3462 = vmatpush1.msra.mxu0 0.0
    %3463 = vmatprep.subr.mxu0 0.0
    %3464 = vmatpush1.msra.mxu0 0.0
    %3465 = vmatprep.subr.mxu0 0.0
    %3466 = vmatpush1.msra.mxu0 0.0
    %3467 = vmatprep.subr.mxu0 0.0
    %3468 = vmatpush1.msra.mxu0 0.0
    %3469 = vmatprep.subr.mxu0 0.0
    %3470 = vmatpush1.msra.mxu0 0.0
    %3471 = vmatprep.subr.mxu0 0.0
    %3472 = vmatpush1.msra.mxu0 0.0
    %3473 = vmatprep.subr.mxu0 0.0
    %3474 = vmatpush1.msra.mxu0 0.0
    %3475 = vmatprep.subr.mxu0 0.0
    %3476 = vmatpush1.msra.mxu0 0.0
    %3477 = vmatprep.subr.mxu0 0.0
    %3478 = vmatpush1.msra.mxu0 0.0
    %3479 = vmatprep.subr.mxu0 0.0
    %3480 = vmatpush1.msra.mxu0 0.0
    %3481 = vmatprep.subr.mxu0 0.0
    %3482 = vmatpush1.msra.mxu0 0.0
    %3483 = vmatprep.subr.mxu0 0.0
    %3484 = vmatpush1.msra.mxu0 0.0
    %3485 = vmatprep.subr.mxu0 0.0
    %3486 = vmatpush1.msra.mxu0 0.0
    %3487 = vmatprep.subr.mxu0 0.0
    %3488 = vmatpush1.msra.mxu0 0.0
    %3489 = vmatprep.subr.mxu0 0.0
    %3490 = vmatpush1.msra.mxu0 0.0
    %3491 = vmatprep.subr.mxu0 0.0
    %3492 = vmatpush1.msra.mxu0 0.0
    %3493 = vmatprep.subr.mxu0 0.0
    %3494 = vmatpush1.msra.mxu0 0.0
    %3495 = vmatprep.subr.mxu0 0.0
    %3496 = vmatpush1.msra.mxu0 0.0
    %3497 = vmatprep.mubr.f32.mxu0 0.0
    %3498 = vmatmul.mubr.f32.gmra.mrb[0].mxu0 %v3431
    %v3499 = vpop.f32.mrb[0].mxu0
    %v3500 = vadd.f32 0.0, %v3499
    %v3501 = vpop.f32.mrb[0].mxu0
    %3502 = vdwg.mxu0
    %v3504 = vsel %vm1995, %v2981, 0
    %3506 = vmatprep.subr.mxu0 0.0
    %3507 = vmatpush1.msra.mxu0 %v3279
    %3508 = vmatprep.subr.mxu0 0.0
    %3509 = vmatpush1.msra.mxu0 0.0
    %3510 = vmatprep.subr.mxu0 0.0
    %3511 = vmatpush1.msra.mxu0 0.0
    %3512 = vmatprep.subr.mxu0 0.0
    %3513 = vmatpush1.msra.mxu0 0.0
    %3514 = vmatprep.subr.mxu0 0.0
    %3515 = vmatpush1.msra.mxu0 0.0
    %3516 = vmatprep.subr.mxu0 0.0
    %3517 = vmatpush1.msra.mxu0 0.0
    %3518 = vmatprep.subr.mxu0 0.0
    %3519 = vmatpush1.msra.mxu0 0.0
    %3520 = vmatprep.subr.mxu0 0.0
    %3521 = vmatpush1.msra.mxu0 0.0
    %3522 = vmatprep.subr.mxu0 0.0
    %3523 = vmatpush1.msra.mxu0 0.0
    %3524 = vmatprep.subr.mxu0 0.0
    %3525 = vmatpush1.msra.mxu0 0.0
    %3526 = vmatprep.subr.mxu0 0.0
    %3527 = vmatpush1.msra.mxu0 0.0
    %3528 = vmatprep.subr.mxu0 0.0
    %3529 = vmatpush1.msra.mxu0 0.0
    %3530 = vmatprep.subr.mxu0 0.0
    %3531 = vmatpush1.msra.mxu0 0.0
    %3532 = vmatprep.subr.mxu0 0.0
    %3533 = vmatpush1.msra.mxu0 0.0
    %3534 = vmatprep.subr.mxu0 0.0
    %3535 = vmatpush1.msra.mxu0 0.0
    %3536 = vmatprep.subr.mxu0 0.0
    %3537 = vmatpush1.msra.mxu0 0.0
    %3538 = vmatprep.subr.mxu0 0.0
    %3539 = vmatpush1.msra.mxu0 0.0
    %3540 = vmatprep.subr.mxu0 0.0
    %3541 = vmatpush1.msra.mxu0 0.0
    %3542 = vmatprep.subr.mxu0 0.0
    %3543 = vmatpush1.msra.mxu0 0.0
    %3544 = vmatprep.subr.mxu0 0.0
    %3545 = vmatpush1.msra.mxu0 0.0
    %3546 = vmatprep.subr.mxu0 0.0
    %3547 = vmatpush1.msra.mxu0 0.0
    %3548 = vmatprep.subr.mxu0 0.0
    %3549 = vmatpush1.msra.mxu0 0.0
    %3550 = vmatprep.subr.mxu0 0.0
    %3551 = vmatpush1.msra.mxu0 0.0
    %3552 = vmatprep.subr.mxu0 0.0
    %3553 = vmatpush1.msra.mxu0 0.0
    %3554 = vmatprep.subr.mxu0 0.0
    %3555 = vmatpush1.msra.mxu0 0.0
    %3556 = vmatprep.subr.mxu0 0.0
    %3557 = vmatpush1.msra.mxu0 0.0
    %3558 = vmatprep.subr.mxu0 0.0
    %3559 = vmatpush1.msra.mxu0 0.0
    %3560 = vmatprep.subr.mxu0 0.0
    %3561 = vmatpush1.msra.mxu0 0.0
    %3562 = vmatprep.subr.mxu0 0.0
    %3563 = vmatpush1.msra.mxu0 0.0
    %3564 = vmatprep.subr.mxu0 0.0
    %3565 = vmatpush1.msra.mxu0 0.0
    %3566 = vmatprep.subr.mxu0 0.0
    %3567 = vmatpush1.msra.mxu0 0.0
    %3568 = vmatprep.subr.mxu0 0.0
    %3569 = vmatpush1.msra.mxu0 0.0
    %3570 = vmatprep.mubr.f32.mxu0 0.0
    %3571 = vmatmul.mubr.f32.gmra.mrb[0].mxu0 %v3504
    %v3572 = vpop.f32.mrb[0].mxu0
    %v3573 = vadd.f32 0.0, %v3572
    %v3574 = vpop.f32.mrb[0].mxu0
    %3575 = vdwg.mxu0
    %v3577 = vsel %vm1995, %v3054, 0
    %3579 = vmatprep.subr.mxu0 0.0
    %3580 = vmatpush1.msra.mxu0 %v3280
    %3581 = vmatprep.subr.mxu0 0.0
    %3582 = vmatpush1.msra.mxu0 0.0
    %3583 = vmatprep.subr.mxu0 0.0
    %3584 = vmatpush1.msra.mxu0 0.0
    %3585 = vmatprep.subr.mxu0 0.0
    %3586 = vmatpush1.msra.mxu0 0.0
    %3587 = vmatprep.subr.mxu0 0.0
    %3588 = vmatpush1.msra.mxu0 0.0
    %3589 = vmatprep.subr.mxu0 0.0
    %3590 = vmatpush1.msra.mxu0 0.0
    %3591 = vmatprep.subr.mxu0 0.0
    %3592 = vmatpush1.msra.mxu0 0.0
    %3593 = vmatprep.subr.mxu0 0.0
    %3594 = vmatpush1.msra.mxu0 0.0
    %3595 = vmatprep.subr.mxu0 0.0
    %3596 = vmatpush1.msra.mxu0 0.0
    %3597 = vmatprep.subr.mxu0 0.0
    %3598 = vmatpush1.msra.mxu0 0.0
    %3599 = vmatprep.subr.mxu0 0.0
    %3600 = vmatpush1.msra.mxu0 0.0
    %3601 = vmatprep.subr.mxu0 0.0
    %3602 = vmatpush1.msra.mxu0 0.0
    %3603 = vmatprep.subr.mxu0 0.0
    %3604 = vmatpush1.msra.mxu0 0.0
    %3605 = vmatprep.subr.mxu0 0.0
    %3606 = vmatpush1.msra.mxu0 0.0
    %3607 = vmatprep.subr.mxu0 0.0
    %3608 = vmatpush1.msra.mxu0 0.0
    %3609 = vmatprep.subr.mxu0 0.0
    %3610 = vmatpush1.msra.mxu0 0.0
    %3611 = vmatprep.subr.mxu0 0.0
    %3612 = vmatpush1.msra.mxu0 0.0
    %3613 = vmatprep.subr.mxu0 0.0
    %3614 = vmatpush1.msra.mxu0 0.0
    %3615 = vmatprep.subr.mxu0 0.0
    %3616 = vmatpush1.msra.mxu0 0.0
    %3617 = vmatprep.subr.mxu0 0.0
    %3618 = vmatpush1.msra.mxu0 0.0
    %3619 = vmatprep.subr.mxu0 0.0
    %3620 = vmatpush1.msra.mxu0 0.0
    %3621 = vmatprep.subr.mxu0 0.0
    %3622 = vmatpush1.msra.mxu0 0.0
    %3623 = vmatprep.subr.mxu0 0.0
    %3624 = vmatpush1.msra.mxu0 0.0
    %3625 = vmatprep.subr.mxu0 0.0
    %3626 = vmatpush1.msra.mxu0 0.0
    %3627 = vmatprep.subr.mxu0 0.0
    %3628 = vmatpush1.msra.mxu0 0.0
    %3629 = vmatprep.subr.mxu0 0.0
    %3630 = vmatpush1.msra.mxu0 0.0
    %3631 = vmatprep.subr.mxu0 0.0
    %3632 = vmatpush1.msra.mxu0 0.0
    %3633 = vmatprep.subr.mxu0 0.0
    %3634 = vmatpush1.msra.mxu0 0.0
    %3635 = vmatprep.subr.mxu0 0.0
    %3636 = vmatpush1.msra.mxu0 0.0
    %3637 = vmatprep.subr.mxu0 0.0
    %3638 = vmatpush1.msra.mxu0 0.0
    %3639 = vmatprep.subr.mxu0 0.0
    %3640 = vmatpush1.msra.mxu0 0.0
    %3641 = vmatprep.subr.mxu0 0.0
    %3642 = vmatpush1.msra.mxu0 0.0
    %3643 = vmatprep.mubr.f32.mxu0 0.0
    %3644 = vmatmul.mubr.f32.gmra.mrb[0].mxu0 %v3577
    %v3645 = vpop.f32.mrb[0].mxu0
    %v3646 = vadd.f32 0.0, %v3645
    %v3647 = vpop.f32.mrb[0].mxu0
    %3648 = vdwg.mxu0
    %v3650 = vsel %vm1995, %v3127, 0
    %3652 = vmatprep.subr.mxu0 0.0
    %3653 = vmatpush1.msra.mxu0 %v3281
    %3654 = vmatprep.subr.mxu0 0.0
    %3655 = vmatpush1.msra.mxu0 0.0
    %3656 = vmatprep.subr.mxu0 0.0
    %3657 = vmatpush1.msra.mxu0 0.0
    %3658 = vmatprep.subr.mxu0 0.0
    %3659 = vmatpush1.msra.mxu0 0.0
    %3660 = vmatprep.subr.mxu0 0.0
    %3661 = vmatpush1.msra.mxu0 0.0
    %3662 = vmatprep.subr.mxu0 0.0
    %3663 = vmatpush1.msra.mxu0 0.0
    %3664 = vmatprep.subr.mxu0 0.0
    %3665 = vmatpush1.msra.mxu0 0.0
    %3666 = vmatprep.subr.mxu0 0.0
    %3667 = vmatpush1.msra.mxu0 0.0
    %3668 = vmatprep.subr.mxu0 0.0
    %3669 = vmatpush1.msra.mxu0 0.0
    %3670 = vmatprep.subr.mxu0 0.0
    %3671 = vmatpush1.msra.mxu0 0.0
    %3672 = vmatprep.subr.mxu0 0.0
    %3673 = vmatpush1.msra.mxu0 0.0
    %3674 = vmatprep.subr.mxu0 0.0
    %3675 = vmatpush1.msra.mxu0 0.0
    %3676 = vmatprep.subr.mxu0 0.0
    %3677 = vmatpush1.msra.mxu0 0.0
    %3678 = vmatprep.subr.mxu0 0.0
    %3679 = vmatpush1.msra.mxu0 0.0
    %3680 = vmatprep.subr.mxu0 0.0
    %3681 = vmatpush1.msra.mxu0 0.0
    %3682 = vmatprep.subr.mxu0 0.0
    %3683 = vmatpush1.msra.mxu0 0.0
    %3684 = vmatprep.subr.mxu0 0.0
    %3685 = vmatpush1.msra.mxu0 0.0
    %3686 = vmatprep.subr.mxu0 0.0
    %3687 = vmatpush1.msra.mxu0 0.0
    %3688 = vmatprep.subr.mxu0 0.0
    %3689 = vmatpush1.msra.mxu0 0.0
    %3690 = vmatprep.subr.mxu0 0.0
    %3691 = vmatpush1.msra.mxu0 0.0
    %3692 = vmatprep.subr.mxu0 0.0
    %3693 = vmatpush1.msra.mxu0 0.0
    %3694 = vmatprep.subr.mxu0 0.0
    %3695 = vmatpush1.msra.mxu0 0.0
    %3696 = vmatprep.subr.mxu0 0.0
    %3697 = vmatpush1.msra.mxu0 0.0
    %3698 = vmatprep.subr.mxu0 0.0
    %3699 = vmatpush1.msra.mxu0 0.0
    %3700 = vmatprep.subr.mxu0 0.0
    %3701 = vmatpush1.msra.mxu0 0.0
    %3702 = vmatprep.subr.mxu0 0.0
    %3703 = vmatpush1.msra.mxu0 0.0
    %3704 = vmatprep.subr.mxu0 0.0
    %3705 = vmatpush1.msra.mxu0 0.0
    %3706 = vmatprep.subr.mxu0 0.0
    %3707 = vmatpush1.msra.mxu0 0.0
    %3708 = vmatprep.subr.mxu0 0.0
    %3709 = vmatpush1.msra.mxu0 0.0
    %3710 = vmatprep.subr.mxu0 0.0
    %3711 = vmatpush1.msra.mxu0 0.0
    %3712 = vmatprep.subr.mxu0 0.0
    %3713 = vmatpush1.msra.mxu0 0.0
    %3714 = vmatprep.subr.mxu0 0.0
    %3715 = vmatpush1.msra.mxu0 0.0
    %3716 = vmatprep.mubr.f32.mxu0 0.0
    %3717 = vmatmul.mubr.f32.gmra.mrb[0].mxu0 %v3650
    %v3718 = vpop.f32.mrb[0].mxu0
    %v3719 = vadd.f32 0.0, %v3718
    %v3720 = vpop.f32.mrb[0].mxu0
    %3721 = vdwg.mxu0
    %v3723 = vsel %vm1995, %v3200, 0
    %3725 = vmatprep.subr.mxu0 0.0
    %3726 = vmatpush1.msra.mxu0 %v3282
    %3727 = vmatprep.subr.mxu0 0.0
    %3728 = vmatpush1.msra.mxu0 0.0
    %3729 = vmatprep.subr.mxu0 0.0
    %3730 = vmatpush1.msra.mxu0 0.0
    %3731 = vmatprep.subr.mxu0 0.0
    %3732 = vmatpush1.msra.mxu0 0.0
    %3733 = vmatprep.subr.mxu0 0.0
    %3734 = vmatpush1.msra.mxu0 0.0
    %3735 = vmatprep.subr.mxu0 0.0
    %3736 = vmatpush1.msra.mxu0 0.0
    %3737 = vmatprep.subr.mxu0 0.0
    %3738 = vmatpush1.msra.mxu0 0.0
    %3739 = vmatprep.subr.mxu0 0.0
    %3740 = vmatpush1.msra.mxu0 0.0
    %3741 = vmatprep.subr.mxu0 0.0
    %3742 = vmatpush1.msra.mxu0 0.0
    %3743 = vmatprep.subr.mxu0 0.0
    %3744 = vmatpush1.msra.mxu0 0.0
    %3745 = vmatprep.subr.mxu0 0.0
    %3746 = vmatpush1.msra.mxu0 0.0
    %3747 = vmatprep.subr.mxu0 0.0
    %3748 = vmatpush1.msra.mxu0 0.0
    %3749 = vmatprep.subr.mxu0 0.0
    %3750 = vmatpush1.msra.mxu0 0.0
    %3751 = vmatprep.subr.mxu0 0.0
    %3752 = vmatpush1.msra.mxu0 0.0
    %3753 = vmatprep.subr.mxu0 0.0
    %3754 = vmatpush1.msra.mxu0 0.0
    %3755 = vmatprep.subr.mxu0 0.0
    %3756 = vmatpush1.msra.mxu0 0.0
    %3757 = vmatprep.subr.mxu0 0.0
    %3758 = vmatpush1.msra.mxu0 0.0
    %3759 = vmatprep.subr.mxu0 0.0
    %3760 = vmatpush1.msra.mxu0 0.0
    %3761 = vmatprep.subr.mxu0 0.0
    %3762 = vmatpush1.msra.mxu0 0.0
    %3763 = vmatprep.subr.mxu0 0.0
    %3764 = vmatpush1.msra.mxu0 0.0
    %3765 = vmatprep.subr.mxu0 0.0
    %3766 = vmatpush1.msra.mxu0 0.0
    %3767 = vmatprep.subr.mxu0 0.0
    %3768 = vmatpush1.msra.mxu0 0.0
    %3769 = vmatprep.subr.mxu0 0.0
    %3770 = vmatpush1.msra.mxu0 0.0
    %3771 = vmatprep.subr.mxu0 0.0
    %3772 = vmatpush1.msra.mxu0 0.0
    %3773 = vmatprep.subr.mxu0 0.0
    %3774 = vmatpush1.msra.mxu0 0.0
    %3775 = vmatprep.subr.mxu0 0.0
    %3776 = vmatpush1.msra.mxu0 0.0
    %3777 = vmatprep.subr.mxu0 0.0
    %3778 = vmatpush1.msra.mxu0 0.0
    %3779 = vmatprep.subr.mxu0 0.0
    %3780 = vmatpush1.msra.mxu0 0.0
    %3781 = vmatprep.subr.mxu0 0.0
    %3782 = vmatpush1.msra.mxu0 0.0
    %3783 = vmatprep.subr.mxu0 0.0
    %3784 = vmatpush1.msra.mxu0 0.0
    %3785 = vmatprep.subr.mxu0 0.0
    %3786 = vmatpush1.msra.mxu0 0.0
    %3787 = vmatprep.subr.mxu0 0.0
    %3788 = vmatpush1.msra.mxu0 0.0
    %3789 = vmatprep.mubr.f32.mxu0 0.0
    %3790 = vmatmul.mubr.f32.gmra.mrb[0].mxu0 %v3723
    %v3791 = vpop.f32.mrb[0].mxu0
    %v3792 = vadd.f32 0.0, %v3791
    %v3793 = vpop.f32.mrb[0].mxu0
    %3794 = vdwg.mxu0
    %v3796 = vsel %vm1995, %v3273, 0
    %3798 = vmatprep.subr.mxu0 0.0
    %3799 = vmatpush1.msra.mxu0 %v3283
    %3800 = vmatprep.subr.mxu0 0.0
    %3801 = vmatpush1.msra.mxu0 0.0
    %3802 = vmatprep.subr.mxu0 0.0
    %3803 = vmatpush1.msra.mxu0 0.0
    %3804 = vmatprep.subr.mxu0 0.0
    %3805 = vmatpush1.msra.mxu0 0.0
    %3806 = vmatprep.subr.mxu0 0.0
    %3807 = vmatpush1.msra.mxu0 0.0
    %3808 = vmatprep.subr.mxu0 0.0
    %3809 = vmatpush1.msra.mxu0 0.0
    %3810 = vmatprep.subr.mxu0 0.0
    %3811 = vmatpush1.msra.mxu0 0.0
    %3812 = vmatprep.subr.mxu0 0.0
    %3813 = vmatpush1.msra.mxu0 0.0
    %3814 = vmatprep.subr.mxu0 0.0
    %3815 = vmatpush1.msra.mxu0 0.0
    %3816 = vmatprep.subr.mxu0 0.0
    %3817 = vmatpush1.msra.mxu0 0.0
    %3818 = vmatprep.subr.mxu0 0.0
    %3819 = vmatpush1.msra.mxu0 0.0
    %3820 = vmatprep.subr.mxu0 0.0
    %3821 = vmatpush1.msra.mxu0 0.0
    %3822 = vmatprep.subr.mxu0 0.0
    %3823 = vmatpush1.msra.mxu0 0.0
    %3824 = vmatprep.subr.mxu0 0.0
    %3825 = vmatpush1.msra.mxu0 0.0
    %3826 = vmatprep.subr.mxu0 0.0
    %3827 = vmatpush1.msra.mxu0 0.0
    %3828 = vmatprep.subr.mxu0 0.0
    %3829 = vmatpush1.msra.mxu0 0.0
    %3830 = vmatprep.subr.mxu0 0.0
    %3831 = vmatpush1.msra.mxu0 0.0
    %3832 = vmatprep.subr.mxu0 0.0
    %3833 = vmatpush1.msra.mxu0 0.0
    %3834 = vmatprep.subr.mxu0 0.0
    %3835 = vmatpush1.msra.mxu0 0.0
    %3836 = vmatprep.subr.mxu0 0.0
    %3837 = vmatpush1.msra.mxu0 0.0
    %3838 = vmatprep.subr.mxu0 0.0
    %3839 = vmatpush1.msra.mxu0 0.0
    %3840 = vmatprep.subr.mxu0 0.0
    %3841 = vmatpush1.msra.mxu0 0.0
    %3842 = vmatprep.subr.mxu0 0.0
    %3843 = vmatpush1.msra.mxu0 0.0
    %3844 = vmatprep.subr.mxu0 0.0
    %3845 = vmatpush1.msra.mxu0 0.0
    %3846 = vmatprep.subr.mxu0 0.0
    %3847 = vmatpush1.msra.mxu0 0.0
    %3848 = vmatprep.subr.mxu0 0.0
    %3849 = vmatpush1.msra.mxu0 0.0
    %3850 = vmatprep.subr.mxu0 0.0
    %3851 = vmatpush1.msra.mxu0 0.0
    %3852 = vmatprep.subr.mxu0 0.0
    %3853 = vmatpush1.msra.mxu0 0.0
    %3854 = vmatprep.subr.mxu0 0.0
    %3855 = vmatpush1.msra.mxu0 0.0
    %3856 = vmatprep.subr.mxu0 0.0
    %3857 = vmatpush1.msra.mxu0 0.0
    %3858 = vmatprep.subr.mxu0 0.0
    %3859 = vmatpush1.msra.mxu0 0.0
    %3860 = vmatprep.subr.mxu0 0.0
    %3861 = vmatpush1.msra.mxu0 0.0
    %3862 = vmatprep.mubr.f32.mxu0 0.0
    %3863 = vmatmul.mubr.f32.gmra.mrb[0].mxu0 %v3796
    %v3864 = vpop.f32.mrb[0].mxu0
    %v3865 = vadd.f32 0.0, %v3864
    %v3866 = vpop.f32.mrb[0].mxu0
    %3867 = vdwg.mxu0
    %v3868 = vadd.f32 %v3354, %v3500
    %v3869 = vadd.f32 %v3427, %v3573
    %v3870 = vadd.f32 %v3868, %v3646
    %v3871 = vadd.f32 %v3869, %v3719
    %v3872 = vadd.f32 %v3870, %v3792
    %v3873 = vadd.f32 %v3871, %v3865
    %v3874 = vld [vmem:[%s11] sm:$0xff]
    %v3875 = vadd.f32 %v42, %v3872
    %v3876 = vadd.f32 %v43, %v3873
    %v3877 = vlaneseq
    %v3878 = vshrl.u32 %v3877, 7
    %v3879 = vsub.s32 0, %v3878
    %v3880 = vrot.slane %v3874, %v3879
    %v3881 = vadd.f32 %v3875, %v3880
    %v3882 = vadd.f32 %v3876, %v3880
    %v3883 = vsel %vm132, %v3881, 0.0
    %3884 = vadd.xlane.f32.xlu0 %v3883
    %v3885 = vpop.xlane.xlu0 %3884
    %v3886 = vsel %vm132, %v3882, 0.0
    %3887 = vadd.xlane.f32.xlu0 %v3886
    %v3888 = vpop.xlane.xlu0 %3887
    %v3889 = vrcp.pop 32.0
    %v3890 = vmul.f32 %v3885, %v3889
    %v3891 = vmul.f32 %v3888, %v3889
    %v3892 = vsub.f32 %v3881, %v3890
    %v3893 = vsub.f32 %v3882, %v3891
    %v3894 = vmul.f32 %v3892, %v3892
    %v3895 = vmul.f32 %v3893, %v3893
    %v3896 = vsel %vm132, %v3894, 0.0
    %3897 = vadd.xlane.f32.xlu0 %v3896
    %v3898 = vpop.xlane.xlu0 %3897
    %v3899 = vsel %vm132, %v3895, 0.0
    %3900 = vadd.xlane.f32.xlu0 %v3899
    %v3901 = vpop.xlane.xlu0 %3900
    %v3902 = vmul.f32 %v3898, 0.032258064
    %v3903 = vmul.f32 %v3901, 0.032258064
    %v3904 = vrsqrt.pop %v3902
    %v3905 = vrsqrt.pop %v3903
    %v3906 = vmul.f32 %v3892, %v3904
    %v3907 = vmul.f32 %v3893, %v3905
    %v3908 = vadd.f32 %v3906, 1e-05
    %v3909 = vadd.f32 %v3907, 1e-05
    %v3910 = vlaneseq
    %v3911 = vshrl.u32 %v3910, 7
    %v3912 = vsub.s32 2, %v3911
    %v3913 = vrot.slane %v3874, %v3912
    %v3914 = vmul.f32 %v3908, %v3913
    %v3915 = vmul.f32 %v3909, %v3913
    %v3916 = vlaneseq
    %v3917 = vshrl.u32 %v3916, 7
    %v3918 = vsub.s32 3, %v3917
    %v3919 = vrot.slane %v3874, %v3918
    %v3920 = vadd.f32 %v3914, %v3919
    %v3921 = vadd.f32 %v3915, %v3919
    %v3922 = vld [vmem:[%s8] sm:$0xff]
    %v3923 = vld [vmem:[%s8 + $0x8] sm:$0xff]
    %v3924 = vld [vmem:[%s8 + $0x10] sm:$0xff]
    %v3925 = vld [vmem:[%s8 + $0x18] sm:$0xff]
    %v3926 = vld [vmem:[%s9] sm:$0x1]
    %v3928 = vlaneseq
    %v3929 = vshrl.u32 %v3928, 7
    %v3930 = vsub.s32 0, %v3929
    %v3931 = vrot.slane %v3926, %v3930
    %v3934 = vsel %vm132, %v3920, 0
    %v3937 = vsel %vm132, %v3921, 0
    %3939 = vmatprep.subr.mxu0 0.0
    %3940 = vmatpush1.msra.mxu0 %v3922
    %3941 = vmatprep.subr.mxu0 0.0
    %3942 = vmatpush1.msra.mxu0 %v3923
    %3943 = vmatprep.subr.mxu0 0.0
    %3944 = vmatpush1.msra.mxu0 %v3924
    %3945 = vmatprep.subr.mxu0 0.0
    %3946 = vmatpush1.msra.mxu0 %v3925
    %3947 = vmatprep.subr.mxu0 0.0
    %3948 = vmatpush1.msra.mxu0 0.0
    %3949 = vmatprep.subr.mxu0 0.0
    %3950 = vmatpush1.msra.mxu0 0.0
    %3951 = vmatprep.subr.mxu0 0.0
    %3952 = vmatpush1.msra.mxu0 0.0
    %3953 = vmatprep.subr.mxu0 0.0
    %3954 = vmatpush1.msra.mxu0 0.0
    %3955 = vmatprep.subr.mxu0 0.0
    %3956 = vmatpush1.msra.mxu0 0.0
    %3957 = vmatprep.subr.mxu0 0.0
    %3958 = vmatpush1.msra.mxu0 0.0
    %3959 = vmatprep.subr.mxu0 0.0
    %3960 = vmatpush1.msra.mxu0 0.0
    %3961 = vmatprep.subr.mxu0 0.0
    %3962 = vmatpush1.msra.mxu0 0.0
    %3963 = vmatprep.subr.mxu0 0.0
    %3964 = vmatpush1.msra.mxu0 0.0
    %3965 = vmatprep.subr.mxu0 0.0
    %3966 = vmatpush1.msra.mxu0 0.0
    %3967 = vmatprep.subr.mxu0 0.0
    %3968 = vmatpush1.msra.mxu0 0.0
    %3969 = vmatprep.subr.mxu0 0.0
    %3970 = vmatpush1.msra.mxu0 0.0
    %3971 = vmatprep.subr.mxu0 0.0
    %3972 = vmatpush1.msra.mxu0 0.0
    %3973 = vmatprep.subr.mxu0 0.0
    %3974 = vmatpush1.msra.mxu0 0.0
    %3975 = vmatprep.subr.mxu0 0.0
    %3976 = vmatpush1.msra.mxu0 0.0
    %3977 = vmatprep.subr.mxu0 0.0
    %3978 = vmatpush1.msra.mxu0 0.0
    %3979 = vmatprep.subr.mxu0 0.0
    %3980 = vmatpush1.msra.mxu0 0.0
    %3981 = vmatprep.subr.mxu0 0.0
    %3982 = vmatpush1.msra.mxu0 0.0
    %3983 = vmatprep.subr.mxu0 0.0
    %3984 = vmatpush1.msra.mxu0 0.0
    %3985 = vmatprep.subr.mxu0 0.0
    %3986 = vmatpush1.msra.mxu0 0.0
    %3987 = vmatprep.subr.mxu0 0.0
    %3988 = vmatpush1.msra.mxu0 0.0
    %3989 = vmatprep.subr.mxu0 0.0
    %3990 = vmatpush1.msra.mxu0 0.0
    %3991 = vmatprep.subr.mxu0 0.0
    %3992 = vmatpush1.msra.mxu0 0.0
    %3993 = vmatprep.subr.mxu0 0.0
    %3994 = vmatpush1.msra.mxu0 0.0
    %3995 = vmatprep.subr.mxu0 0.0
    %3996 = vmatpush1.msra.mxu0 0.0
    %3997 = vmatprep.subr.mxu0 0.0
    %3998 = vmatpush1.msra.mxu0 0.0
    %3999 = vmatprep.subr.mxu0 0.0
    %4000 = vmatpush1.msra.mxu0 0.0
    %4001 = vmatprep.subr.mxu0 0.0
    %4002 = vmatpush1.msra.mxu0 0.0
    %4003 = vmatprep.mubr.f32.mxu0 0.0
    %4004 = vmatmul.mubr.f32.gmra.mrb[0].mxu0 %v3934
    %v4005 = vpop.f32.mrb[0].mxu0
    %v4006 = vadd.f32 %v3931, %v4005
    %v4007 = vpop.f32.mrb[0].mxu0
    %4008 = vmatprep.mubr.f32.mxu0 0.0
    %4009 = vmatmul.mubr.f32.gmra.mrb[0].mxu0 %v3937
    %v4010 = vpop.f32.mrb[0].mxu0
    %v4011 = vadd.f32 %v3931, %v4010
    %v4012 = vpop.f32.mrb[0].mxu0
    %4013 = vdwg.mxu0
    %v4014 = vmax.f32 %v4006, 0.0
    %v4015 = vmax.f32 %v4011, 0.0
    %v4016 = vld [vmem:[%s10] sm:$0xff]
    %v4017 = vld [vmem:[%s10 + $0x8] sm:$0xff]
    %v4018 = vld [vmem:[%s10 + $0x10] sm:$0xff]
    %v4019 = vld [vmem:[%s10 + $0x18] sm:$0xff]
    %v4020 = vld [vmem:[%s10 + $0x20] sm:$0xff]
    %v4021 = vld [vmem:[%s10 + $0x28] sm:$0xff]
    %v4022 = vld [vmem:[%s10 + $0x30] sm:$0xff]
    %v4023 = vld [vmem:[%s10 + $0x38] sm:$0xff]
    %v4024 = vlaneseq
    %v4025 = vshrl.u32 %v4024, 7
    %v4026 = vsub.s32 1, %v4025
    %v4027 = vrot.slane %v3874, %v4026
    %vm4028 = vcmask 523264
    %v4030 = vsel %vm4028, %v4014, 0
    %v4033 = vsel %vm4028, %v4015, 0
    %4035 = vmatprep.subr.mxu0 0.0
    %4036 = vmatpush1.msra.mxu0 %v4016
    %4037 = vmatprep.subr.mxu0 0.0
    %4038 = vmatpush1.msra.mxu0 %v4017
    %4039 = vmatprep.subr.mxu0 0.0
    %4040 = vmatpush1.msra.mxu0 %v4018
    %4041 = vmatprep.subr.mxu0 0.0
    %4042 = vmatpush1.msra.mxu0 %v4019
    %4043 = vmatprep.subr.mxu0 0.0
    %4044 = vmatpush1.msra.mxu0 %v4020
    %4045 = vmatprep.subr.mxu0 0.0
    %4046 = vmatpush1.msra.mxu0 %v4021
    %4047 = vmatprep.subr.mxu0 0.0
    %4048 = vmatpush1.msra.mxu0 %v4022
    %4049 = vmatprep.subr.mxu0 0.0
    %4050 = vmatpush1.msra.mxu0 %v4023
    %4051 = vmatprep.subr.mxu0 0.0
    %4052 = vmatpush1.msra.mxu0 0.0
    %4053 = vmatprep.subr.mxu0 0.0
    %4054 = vmatpush1.msra.mxu0 0.0
    %4055 = vmatprep.subr.mxu0 0.0
    %4056 = vmatpush1.msra.mxu0 0.0
    %4057 = vmatprep.subr.mxu0 0.0
    %4058 = vmatpush1.msra.mxu0 0.0
    %4059 = vmatprep.subr.mxu0 0.0
    %4060 = vmatpush1.msra.mxu0 0.0
    %4061 = vmatprep.subr.mxu0 0.0
    %4062 = vmatpush1.msra.mxu0 0.0
    %4063 = vmatprep.subr.mxu0 0.0
    %4064 = vmatpush1.msra.mxu0 0.0
    %4065 = vmatprep.subr.mxu0 0.0
    %4066 = vmatpush1.msra.mxu0 0.0
    %4067 = vmatprep.subr.mxu0 0.0
    %4068 = vmatpush1.msra.mxu0 0.0
    %4069 = vmatprep.subr.mxu0 0.0
    %4070 = vmatpush1.msra.mxu0 0.0
    %4071 = vmatprep.subr.mxu0 0.0
    %4072 = vmatpush1.msra.mxu0 0.0
    %4073 = vmatprep.subr.mxu0 0.0
    %4074 = vmatpush1.msra.mxu0 0.0
    %4075 = vmatprep.subr.mxu0 0.0
    %4076 = vmatpush1.msra.mxu0 0.0
    %4077 = vmatprep.subr.mxu0 0.0
    %4078 = vmatpush1.msra.mxu0 0.0
    %4079 = vmatprep.subr.mxu0 0.0
    %4080 = vmatpush1.msra.mxu0 0.0
    %4081 = vmatprep.subr.mxu0 0.0
    %4082 = vmatpush1.msra.mxu0 0.0
    %4083 = vmatprep.subr.mxu0 0.0
    %4084 = vmatpush1.msra.mxu0 0.0
    %4085 = vmatprep.subr.mxu0 0.0
    %4086 = vmatpush1.msra.mxu0 0.0
    %4087 = vmatprep.subr.mxu0 0.0
    %4088 = vmatpush1.msra.mxu0 0.0
    %4089 = vmatprep.subr.mxu0 0.0
    %4090 = vmatpush1.msra.mxu0 0.0
    %4091 = vmatprep.subr.mxu0 0.0
    %4092 = vmatpush1.msra.mxu0 0.0
    %4093 = vmatprep.subr.mxu0 0.0
    %4094 = vmatpush1.msra.mxu0 0.0
    %4095 = vmatprep.subr.mxu0 0.0
    %4096 = vmatpush1.msra.mxu0 0.0
    %4097 = vmatprep.subr.mxu0 0.0
    %4098 = vmatpush1.msra.mxu0 0.0
    %4099 = vmatprep.mubr.f32.mxu0 0.0
    %4100 = vmatmul.mubr.f32.gmra.mrb[0].mxu0 %v4030
    %v4101 = vpop.f32.mrb[0].mxu0
    %v4102 = vadd.f32 %v4027, %v4101
    %v4103 = vpop.f32.mrb[0].mxu0
    %4104 = vmatprep.mubr.f32.mxu0 0.0
    %4105 = vmatmul.mubr.f32.gmra.mrb[0].mxu0 %v4033
    %v4106 = vpop.f32.mrb[0].mxu0
    %v4107 = vadd.f32 %v4027, %v4106
    %v4108 = vpop.f32.mrb[0].mxu0
    %4109 = vdwg.mxu0
    %v4110 = vadd.f32 %v3920, %v4102
    %v4111 = vadd.f32 %v3921, %v4107
    %v4112 = vsel %vm132, %v4110, 0.0
    %4113 = vadd.xlane.f32.xlu0 %v4112
    %v4114 = vpop.xlane.xlu0 %4113
    %v4115 = vsel %vm132, %v4111, 0.0
    %4116 = vadd.xlane.f32.xlu0 %v4115
    %v4117 = vpop.xlane.xlu0 %4116
    %v4118 = vmul.f32 %v4114, %v3889
    %v4119 = vmul.f32 %v4117, %v3889
    %v4120 = vsub.f32 %v4110, %v4118
    %v4121 = vsub.f32 %v4111, %v4119
    %v4122 = vmul.f32 %v4120, %v4120
    %v4123 = vmul.f32 %v4121, %v4121
    %v4124 = vsel %vm132, %v4122, 0.0
    %4125 = vadd.xlane.f32.xlu0 %v4124
    %v4126 = vpop.xlane.xlu0 %4125
    %v4127 = vsel %vm132, %v4123, 0.0
    %4128 = vadd.xlane.f32.xlu0 %v4127
    %v4129 = vpop.xlane.xlu0 %4128
    %v4130 = vmul.f32 %v4126, 0.032258064
    %v4131 = vmul.f32 %v4129, 0.032258064
    %v4132 = vrsqrt.pop %v4130
    %v4133 = vrsqrt.pop %v4131
    %v4134 = vmul.f32 %v4120, %v4132
    %v4135 = vmul.f32 %v4121, %v4133
    %v4136 = vadd.f32 %v4134, 1e-05
    %v4137 = vadd.f32 %v4135, 1e-05
    %v4138 = vlaneseq
    %v4139 = vshrl.u32 %v4138, 7
    %v4140 = vsub.s32 4, %v4139
    %v4141 = vrot.slane %v3874, %v4140
    %v4142 = vmul.f32 %v4136, %v4141
    %v4143 = vmul.f32 %v4137, %v4141
    %v4144 = vlaneseq
    %v4145 = vshrl.u32 %v4144, 7
    %v4146 = vsub.s32 5, %v4145
    %v4147 = vrot.slane %v3874, %v4146
    %v4148 = vadd.f32 %v4142, %v4147
    %v4149 = vadd.f32 %v4143, %v4147
    %4150 = vst.msk [vmem:[#allocation2] sm:$0xff] %vm132, %v4148
    %4151 = vst.msk [vmem:[#allocation2 + $0x8] sm:$0xff] %vm132, %v4149
    %s4152 = scalar_lea.vmem %s1, 256
    %v4153 = vld [vmem:[%s4152] sm:$0xff]
    %v4154 = vld [vmem:[%s4152 + $0x8] sm:$0xff]
    %v4155 = vld [vmem:[%s4152 + $0x10] sm:$0xff]
    %v4156 = vld [vmem:[%s4152 + $0x18] sm:$0xff]
    %v4157 = vld [vmem:[%s4152 + $0x20] sm:$0xff]
    %v4158 = vld [vmem:[%s4152 + $0x28] sm:$0xff]
    %v4159 = vld [vmem:[%s4152 + $0x30] sm:$0xff]
    %v4160 = vld [vmem:[%s4152 + $0x38] sm:$0xff]
    %v4161 = vld [vmem:[%s4152 + $0x40] sm:$0xff]
    %v4162 = vld [vmem:[%s4152 + $0x48] sm:$0xff]
    %v4163 = vld [vmem:[%s4152 + $0x50] sm:$0xff]
    %v4164 = vld [vmem:[%s4152 + $0x58] sm:$0xff]
    %v4165 = vld [vmem:[%s4152 + $0x60] sm:$0xff]
    %v4166 = vld [vmem:[%s4152 + $0x68] sm:$0xff]
    %v4167 = vld [vmem:[%s4152 + $0x70] sm:$0xff]
    %v4168 = vld [vmem:[%s4152 + $0x78] sm:$0xff]
    %v4169 = vld [vmem:[%s4152 + $0x80] sm:$0xff]
    %v4170 = vld [vmem:[%s4152 + $0x88] sm:$0xff]
    %v4171 = vld [vmem:[%s4152 + $0x90] sm:$0xff]
    %v4172 = vld [vmem:[%s4152 + $0x98] sm:$0xff]
    %v4173 = vld [vmem:[%s4152 + $0xa0] sm:$0xff]
    %v4174 = vld [vmem:[%s4152 + $0xa8] sm:$0xff]
    %v4175 = vld [vmem:[%s4152 + $0xb0] sm:$0xff]
    %v4176 = vld [vmem:[%s4152 + $0xb8] sm:$0xff]
    %v4177 = vld [vmem:[%s4152 + $0xc0] sm:$0xff]
    %v4178 = vld [vmem:[%s4152 + $0xc8] sm:$0xff]
    %v4179 = vld [vmem:[%s4152 + $0xd0] sm:$0xff]
    %v4180 = vld [vmem:[%s4152 + $0xd8] sm:$0xff]
    %v4181 = vld [vmem:[%s4152 + $0xe0] sm:$0xff]
    %v4182 = vld [vmem:[%s4152 + $0xe8] sm:$0xff]
    %v4183 = vld [vmem:[%s4152 + $0xf0] sm:$0xff]
    %v4184 = vld [vmem:[%s4152 + $0xf8] sm:$0xff]
    %s4185 = scalar_lea.vmem %s4, 8
    %v4186 = vld [vmem:[%s4185] sm:$0x1]
    %v4187 = vld [vmem:[%s4185 + $0x1] sm:$0x1]
    %v4188 = vld [vmem:[%s4185 + $0x2] sm:$0x1]
    %v4189 = vld [vmem:[%s4185 + $0x3] sm:$0x1]
    %v4190 = vld [vmem:[%s4185 + $0x4] sm:$0x1]
    %v4191 = vld [vmem:[%s4185 + $0x5] sm:$0x1]
    %v4192 = vld [vmem:[%s4185 + $0x6] sm:$0x1]
    %v4193 = vld [vmem:[%s4185 + $0x7] sm:$0x1]
    %v4202 = vlaneseq
    %v4203 = vshrl.u32 %v4202, 7
    %v4204 = vsub.s32 0, %v4203
    %v4205 = vrot.slane %v4186, %v4204
    %v4206 = vlaneseq
    %v4207 = vshrl.u32 %v4206, 7
    %v4208 = vsub.s32 0, %v4207
    %v4209 = vrot.slane %v4187, %v4208
    %v4210 = vlaneseq
    %v4211 = vshrl.u32 %v4210, 7
    %v4212 = vsub.s32 0, %v4211
    %v4213 = vrot.slane %v4188, %v4212
    %v4214 = vlaneseq
    %v4215 = vshrl.u32 %v4214, 7
    %v4216 = vsub.s32 0, %v4215
    %v4217 = vrot.slane %v4189, %v4216
    %v4218 = vlaneseq
    %v4219 = vshrl.u32 %v4218, 7
    %v4220 = vsub.s32 0, %v4219
    %v4221 = vrot.slane %v4190, %v4220
    %v4222 = vlaneseq
    %v4223 = vshrl.u32 %v4222, 7
    %v4224 = vsub.s32 0, %v4223
    %v4225 = vrot.slane %v4191, %v4224
    %v4226 = vlaneseq
    %v4227 = vshrl.u32 %v4226, 7
    %v4228 = vsub.s32 0, %v4227
    %v4229 = vrot.slane %v4192, %v4228
    %v4230 = vlaneseq
    %v4231 = vshrl.u32 %v4230, 7
    %v4232 = vsub.s32 0, %v4231
    %v4233 = vrot.slane %v4193, %v4232
    %v4243 = vsel %vm132, %v4148, 0
    %4245 = vmatprep.subr.mxu0 0.0
    %4246 = vmatpush1.msra.mxu0 %v4153
    %4247 = vmatprep.subr.mxu0 0.0
    %4248 = vmatpush1.msra.mxu0 %v4154
    %4249 = vmatprep.subr.mxu0 0.0
    %4250 = vmatpush1.msra.mxu0 %v4155
    %4251 = vmatprep.subr.mxu0 0.0
    %4252 = vmatpush1.msra.mxu0 %v4156
    %4253 = vmatprep.subr.mxu0 0.0
    %4254 = vmatpush1.msra.mxu0 0.0
    %4255 = vmatprep.subr.mxu0 0.0
    %4256 = vmatpush1.msra.mxu0 0.0
    %4257 = vmatprep.subr.mxu0 0.0
    %4258 = vmatpush1.msra.mxu0 0.0
    %4259 = vmatprep.subr.mxu0 0.0
    %4260 = vmatpush1.msra.mxu0 0.0
    %4261 = vmatprep.subr.mxu0 0.0
    %4262 = vmatpush1.msra.mxu0 0.0
    %4263 = vmatprep.subr.mxu0 0.0
    %4264 = vmatpush1.msra.mxu0 0.0
    %4265 = vmatprep.subr.mxu0 0.0
    %4266 = vmatpush1.msra.mxu0 0.0
    %4267 = vmatprep.subr.mxu0 0.0
    %4268 = vmatpush1.msra.mxu0 0.0
    %4269 = vmatprep.subr.mxu0 0.0
    %4270 = vmatpush1.msra.mxu0 0.0
    %4271 = vmatprep.subr.mxu0 0.0
    %4272 = vmatpush1.msra.mxu0 0.0
    %4273 = vmatprep.subr.mxu0 0.0
    %4274 = vmatpush1.msra.mxu0 0.0
    %4275 = vmatprep.subr.mxu0 0.0
    %4276 = vmatpush1.msra.mxu0 0.0
    %4277 = vmatprep.subr.mxu0 0.0
    %4278 = vmatpush1.msra.mxu0 0.0
    %4279 = vmatprep.subr.mxu0 0.0
    %4280 = vmatpush1.msra.mxu0 0.0
    %4281 = vmatprep.subr.mxu0 0.0
    %4282 = vmatpush1.msra.mxu0 0.0
    %4283 = vmatprep.subr.mxu0 0.0
    %4284 = vmatpush1.msra.mxu0 0.0
    %4285 = vmatprep.subr.mxu0 0.0
    %4286 = vmatpush1.msra.mxu0 0.0
    %4287 = vmatprep.subr.mxu0 0.0
    %4288 = vmatpush1.msra.mxu0 0.0
    %4289 = vmatprep.subr.mxu0 0.0
    %4290 = vmatpush1.msra.mxu0 0.0
    %4291 = vmatprep.subr.mxu0 0.0
    %4292 = vmatpush1.msra.mxu0 0.0
    %4293 = vmatprep.subr.mxu0 0.0
    %4294 = vmatpush1.msra.mxu0 0.0
    %4295 = vmatprep.subr.mxu0 0.0
    %4296 = vmatpush1.msra.mxu0 0.0
    %4297 = vmatprep.subr.mxu0 0.0
    %4298 = vmatpush1.msra.mxu0 0.0
    %4299 = vmatprep.subr.mxu0 0.0
    %4300 = vmatpush1.msra.mxu0 0.0
    %4301 = vmatprep.subr.mxu0 0.0
    %4302 = vmatpush1.msra.mxu0 0.0
    %4303 = vmatprep.subr.mxu0 0.0
    %4304 = vmatpush1.msra.mxu0 0.0
    %4305 = vmatprep.subr.mxu0 0.0
    %4306 = vmatpush1.msra.mxu0 0.0
    %4307 = vmatprep.subr.mxu0 0.0
    %4308 = vmatpush1.msra.mxu0 0.0
    %4309 = vmatprep.mubr.f32.mxu0 0.0
    %4310 = vmatmul.mubr.f32.gmra.mrb[0].mxu0 %v4243
    %v4311 = vpop.f32.mrb[0].mxu0
    %v4312 = vadd.f32 %v4205, %v4311
    %v4313 = vpop.f32.mrb[0].mxu0
    %4314 = vdwg.mxu0
    %v4316 = vsel %vm132, %v4149, 0
    %4318 = vmatprep.subr.mxu0 0.0
    %4319 = vmatpush1.msra.mxu0 %v4157
    %4320 = vmatprep.subr.mxu0 0.0
    %4321 = vmatpush1.msra.mxu0 %v4158
    %4322 = vmatprep.subr.mxu0 0.0
    %4323 = vmatpush1.msra.mxu0 %v4159
    %4324 = vmatprep.subr.mxu0 0.0
    %4325 = vmatpush1.msra.mxu0 %v4160
    %4326 = vmatprep.subr.mxu0 0.0
    %4327 = vmatpush1.msra.mxu0 0.0
    %4328 = vmatprep.subr.mxu0 0.0
    %4329 = vmatpush1.msra.mxu0 0.0
    %4330 = vmatprep.subr.mxu0 0.0
    %4331 = vmatpush1.msra.mxu0 0.0
    %4332 = vmatprep.subr.mxu0 0.0
    %4333 = vmatpush1.msra.mxu0 0.0
    %4334 = vmatprep.subr.mxu0 0.0
    %4335 = vmatpush1.msra.mxu0 0.0
    %4336 = vmatprep.subr.mxu0 0.0
    %4337 = vmatpush1.msra.mxu0 0.0
    %4338 = vmatprep.subr.mxu0 0.0
    %4339 = vmatpush1.msra.mxu0 0.0
    %4340 = vmatprep.subr.mxu0 0.0
    %4341 = vmatpush1.msra.mxu0 0.0
    %4342 = vmatprep.subr.mxu0 0.0
    %4343 = vmatpush1.msra.mxu0 0.0
    %4344 = vmatprep.subr.mxu0 0.0
    %4345 = vmatpush1.msra.mxu0 0.0
    %4346 = vmatprep.subr.mxu0 0.0
    %4347 = vmatpush1.msra.mxu0 0.0
    %4348 = vmatprep.subr.mxu0 0.0
    %4349 = vmatpush1.msra.mxu0 0.0
    %4350 = vmatprep.subr.mxu0 0.0
    %4351 = vmatpush1.msra.mxu0 0.0
    %4352 = vmatprep.subr.mxu0 0.0
    %4353 = vmatpush1.msra.mxu0 0.0
    %4354 = vmatprep.subr.mxu0 0.0
    %4355 = vmatpush1.msra.mxu0 0.0
    %4356 = vmatprep.subr.mxu0 0.0
    %4357 = vmatpush1.msra.mxu0 0.0
    %4358 = vmatprep.subr.mxu0 0.0
    %4359 = vmatpush1.msra.mxu0 0.0
    %4360 = vmatprep.subr.mxu0 0.0
    %4361 = vmatpush1.msra.mxu0 0.0
    %4362 = vmatprep.subr.mxu0 0.0
    %4363 = vmatpush1.msra.mxu0 0.0
    %4364 = vmatprep.subr.mxu0 0.0
    %4365 = vmatpush1.msra.mxu0 0.0
    %4366 = vmatprep.subr.mxu0 0.0
    %4367 = vmatpush1.msra.mxu0 0.0
    %4368 = vmatprep.subr.mxu0 0.0
    %4369 = vmatpush1.msra.mxu0 0.0
    %4370 = vmatprep.subr.mxu0 0.0
    %4371 = vmatpush1.msra.mxu0 0.0
    %4372 = vmatprep.subr.mxu0 0.0
    %4373 = vmatpush1.msra.mxu0 0.0
    %4374 = vmatprep.subr.mxu0 0.0
    %4375 = vmatpush1.msra.mxu0 0.0
    %4376 = vmatprep.subr.mxu0 0.0
    %4377 = vmatpush1.msra.mxu0 0.0
    %4378 = vmatprep.subr.mxu0 0.0
    %4379 = vmatpush1.msra.mxu0 0.0
    %4380 = vmatprep.subr.mxu0 0.0
    %4381 = vmatpush1.msra.mxu0 0.0
    %4382 = vmatprep.mubr.f32.mxu0 0.0
    %4383 = vmatmul.mubr.f32.gmra.mrb[0].mxu0 %v4316
    %v4384 = vpop.f32.mrb[0].mxu0
    %v4385 = vadd.f32 %v4209, %v4384
    %v4386 = vpop.f32.mrb[0].mxu0
    %4387 = vdwg.mxu0
    %4388 = vmatprep.subr.mxu0 0.0
    %4389 = vmatpush1.msra.mxu0 %v4161
    %4390 = vmatprep.subr.mxu0 0.0
    %4391 = vmatpush1.msra.mxu0 %v4162
    %4392 = vmatprep.subr.mxu0 0.0
    %4393 = vmatpush1.msra.mxu0 %v4163
    %4394 = vmatprep.subr.mxu0 0.0
    %4395 = vmatpush1.msra.mxu0 %v4164
    %4396 = vmatprep.subr.mxu0 0.0
    %4397 = vmatpush1.msra.mxu0 0.0
    %4398 = vmatprep.subr.mxu0 0.0
    %4399 = vmatpush1.msra.mxu0 0.0
    %4400 = vmatprep.subr.mxu0 0.0
    %4401 = vmatpush1.msra.mxu0 0.0
    %4402 = vmatprep.subr.mxu0 0.0
    %4403 = vmatpush1.msra.mxu0 0.0
    %4404 = vmatprep.subr.mxu0 0.0
    %4405 = vmatpush1.msra.mxu0 0.0
    %4406 = vmatprep.subr.mxu0 0.0
    %4407 = vmatpush1.msra.mxu0 0.0
    %4408 = vmatprep.subr.mxu0 0.0
    %4409 = vmatpush1.msra.mxu0 0.0
    %4410 = vmatprep.subr.mxu0 0.0
    %4411 = vmatpush1.msra.mxu0 0.0
    %4412 = vmatprep.subr.mxu0 0.0
    %4413 = vmatpush1.msra.mxu0 0.0
    %4414 = vmatprep.subr.mxu0 0.0
    %4415 = vmatpush1.msra.mxu0 0.0
    %4416 = vmatprep.subr.mxu0 0.0
    %4417 = vmatpush1.msra.mxu0 0.0
    %4418 = vmatprep.subr.mxu0 0.0
    %4419 = vmatpush1.msra.mxu0 0.0
    %4420 = vmatprep.subr.mxu0 0.0
    %4421 = vmatpush1.msra.mxu0 0.0
    %4422 = vmatprep.subr.mxu0 0.0
    %4423 = vmatpush1.msra.mxu0 0.0
    %4424 = vmatprep.subr.mxu0 0.0
    %4425 = vmatpush1.msra.mxu0 0.0
    %4426 = vmatprep.subr.mxu0 0.0
    %4427 = vmatpush1.msra.mxu0 0.0
    %4428 = vmatprep.subr.mxu0 0.0
    %4429 = vmatpush1.msra.mxu0 0.0
    %4430 = vmatprep.subr.mxu0 0.0
    %4431 = vmatpush1.msra.mxu0 0.0
    %4432 = vmatprep.subr.mxu0 0.0
    %4433 = vmatpush1.msra.mxu0 0.0
    %4434 = vmatprep.subr.mxu0 0.0
    %4435 = vmatpush1.msra.mxu0 0.0
    %4436 = vmatprep.subr.mxu0 0.0
    %4437 = vmatpush1.msra.mxu0 0.0
    %4438 = vmatprep.subr.mxu0 0.0
    %4439 = vmatpush1.msra.mxu0 0.0
    %4440 = vmatprep.subr.mxu0 0.0
    %4441 = vmatpush1.msra.mxu0 0.0
    %4442 = vmatprep.subr.mxu0 0.0
    %4443 = vmatpush1.msra.mxu0 0.0
    %4444 = vmatprep.subr.mxu0 0.0
    %4445 = vmatpush1.msra.mxu0 0.0
    %4446 = vmatprep.subr.mxu0 0.0
    %4447 = vmatpush1.msra.mxu0 0.0
    %4448 = vmatprep.subr.mxu0 0.0
    %4449 = vmatpush1.msra.mxu0 0.0
    %4450 = vmatprep.subr.mxu0 0.0
    %4451 = vmatpush1.msra.mxu0 0.0
    %4452 = vmatprep.mubr.f32.mxu0 0.0
    %4453 = vmatmul.mubr.f32.gmra.mrb[0].mxu0 %v4243
    %v4454 = vpop.f32.mrb[0].mxu0
    %v4455 = vadd.f32 %v4213, %v4454
    %v4456 = vpop.f32.mrb[0].mxu0
    %4457 = vdwg.mxu0
    %4458 = vmatprep.subr.mxu0 0.0
    %4459 = vmatpush1.msra.mxu0 %v4165
    %4460 = vmatprep.subr.mxu0 0.0
    %4461 = vmatpush1.msra.mxu0 %v4166
    %4462 = vmatprep.subr.mxu0 0.0
    %4463 = vmatpush1.msra.mxu0 %v4167
    %4464 = vmatprep.subr.mxu0 0.0
    %4465 = vmatpush1.msra.mxu0 %v4168
    %4466 = vmatprep.subr.mxu0 0.0
    %4467 = vmatpush1.msra.mxu0 0.0
    %4468 = vmatprep.subr.mxu0 0.0
    %4469 = vmatpush1.msra.mxu0 0.0
    %4470 = vmatprep.subr.mxu0 0.0
    %4471 = vmatpush1.msra.mxu0 0.0
    %4472 = vmatprep.subr.mxu0 0.0
    %4473 = vmatpush1.msra.mxu0 0.0
    %4474 = vmatprep.subr.mxu0 0.0
    %4475 = vmatpush1.msra.mxu0 0.0
    %4476 = vmatprep.subr.mxu0 0.0
    %4477 = vmatpush1.msra.mxu0 0.0
    %4478 = vmatprep.subr.mxu0 0.0
    %4479 = vmatpush1.msra.mxu0 0.0
    %4480 = vmatprep.subr.mxu0 0.0
    %4481 = vmatpush1.msra.mxu0 0.0
    %4482 = vmatprep.subr.mxu0 0.0
    %4483 = vmatpush1.msra.mxu0 0.0
    %4484 = vmatprep.subr.mxu0 0.0
    %4485 = vmatpush1.msra.mxu0 0.0
    %4486 = vmatprep.subr.mxu0 0.0
    %4487 = vmatpush1.msra.mxu0 0.0
    %4488 = vmatprep.subr.mxu0 0.0
    %4489 = vmatpush1.msra.mxu0 0.0
    %4490 = vmatprep.subr.mxu0 0.0
    %4491 = vmatpush1.msra.mxu0 0.0
    %4492 = vmatprep.subr.mxu0 0.0
    %4493 = vmatpush1.msra.mxu0 0.0
    %4494 = vmatprep.subr.mxu0 0.0
    %4495 = vmatpush1.msra.mxu0 0.0
    %4496 = vmatprep.subr.mxu0 0.0
    %4497 = vmatpush1.msra.mxu0 0.0
    %4498 = vmatprep.subr.mxu0 0.0
    %4499 = vmatpush1.msra.mxu0 0.0
    %4500 = vmatprep.subr.mxu0 0.0
    %4501 = vmatpush1.msra.mxu0 0.0
    %4502 = vmatprep.subr.mxu0 0.0
    %4503 = vmatpush1.msra.mxu0 0.0
    %4504 = vmatprep.subr.mxu0 0.0
    %4505 = vmatpush1.msra.mxu0 0.0
    %4506 = vmatprep.subr.mxu0 0.0
    %4507 = vmatpush1.msra.mxu0 0.0
    %4508 = vmatprep.subr.mxu0 0.0
    %4509 = vmatpush1.msra.mxu0 0.0
    %4510 = vmatprep.subr.mxu0 0.0
    %4511 = vmatpush1.msra.mxu0 0.0
    %4512 = vmatprep.subr.mxu0 0.0
    %4513 = vmatpush1.msra.mxu0 0.0
    %4514 = vmatprep.subr.mxu0 0.0
    %4515 = vmatpush1.msra.mxu0 0.0
    %4516 = vmatprep.subr.mxu0 0.0
    %4517 = vmatpush1.msra.mxu0 0.0
    %4518 = vmatprep.subr.mxu0 0.0
    %4519 = vmatpush1.msra.mxu0 0.0
    %4520 = vmatprep.subr.mxu0 0.0
    %4521 = vmatpush1.msra.mxu0 0.0
    %4522 = vmatprep.mubr.f32.mxu0 0.0
    %4523 = vmatmul.mubr.f32.gmra.mrb[0].mxu0 %v4316
    %v4524 = vpop.f32.mrb[0].mxu0
    %v4525 = vadd.f32 %v4217, %v4524
    %v4526 = vpop.f32.mrb[0].mxu0
    %4527 = vdwg.mxu0
    %4528 = vmatprep.subr.mxu0 0.0
    %4529 = vmatpush1.msra.mxu0 %v4169
    %4530 = vmatprep.subr.mxu0 0.0
    %4531 = vmatpush1.msra.mxu0 %v4170
    %4532 = vmatprep.subr.mxu0 0.0
    %4533 = vmatpush1.msra.mxu0 %v4171
    %4534 = vmatprep.subr.mxu0 0.0
    %4535 = vmatpush1.msra.mxu0 %v4172
    %4536 = vmatprep.subr.mxu0 0.0
    %4537 = vmatpush1.msra.mxu0 0.0
    %4538 = vmatprep.subr.mxu0 0.0
    %4539 = vmatpush1.msra.mxu0 0.0
    %4540 = vmatprep.subr.mxu0 0.0
    %4541 = vmatpush1.msra.mxu0 0.0
    %4542 = vmatprep.subr.mxu0 0.0
    %4543 = vmatpush1.msra.mxu0 0.0
    %4544 = vmatprep.subr.mxu0 0.0
    %4545 = vmatpush1.msra.mxu0 0.0
    %4546 = vmatprep.subr.mxu0 0.0
    %4547 = vmatpush1.msra.mxu0 0.0
    %4548 = vmatprep.subr.mxu0 0.0
    %4549 = vmatpush1.msra.mxu0 0.0
    %4550 = vmatprep.subr.mxu0 0.0
    %4551 = vmatpush1.msra.mxu0 0.0
    %4552 = vmatprep.subr.mxu0 0.0
    %4553 = vmatpush1.msra.mxu0 0.0
    %4554 = vmatprep.subr.mxu0 0.0
    %4555 = vmatpush1.msra.mxu0 0.0
    %4556 = vmatprep.subr.mxu0 0.0
    %4557 = vmatpush1.msra.mxu0 0.0
    %4558 = vmatprep.subr.mxu0 0.0
    %4559 = vmatpush1.msra.mxu0 0.0
    %4560 = vmatprep.subr.mxu0 0.0
    %4561 = vmatpush1.msra.mxu0 0.0
    %4562 = vmatprep.subr.mxu0 0.0
    %4563 = vmatpush1.msra.mxu0 0.0
    %4564 = vmatprep.subr.mxu0 0.0
    %4565 = vmatpush1.msra.mxu0 0.0
    %4566 = vmatprep.subr.mxu0 0.0
    %4567 = vmatpush1.msra.mxu0 0.0
    %4568 = vmatprep.subr.mxu0 0.0
    %4569 = vmatpush1.msra.mxu0 0.0
    %4570 = vmatprep.subr.mxu0 0.0
    %4571 = vmatpush1.msra.mxu0 0.0
    %4572 = vmatprep.subr.mxu0 0.0
    %4573 = vmatpush1.msra.mxu0 0.0
    %4574 = vmatprep.subr.mxu0 0.0
    %4575 = vmatpush1.msra.mxu0 0.0
    %4576 = vmatprep.subr.mxu0 0.0
    %4577 = vmatpush1.msra.mxu0 0.0
    %4578 = vmatprep.subr.mxu0 0.0
    %4579 = vmatpush1.msra.mxu0 0.0
    %4580 = vmatprep.subr.mxu0 0.0
    %4581 = vmatpush1.msra.mxu0 0.0
    %4582 = vmatprep.subr.mxu0 0.0
    %4583 = vmatpush1.msra.mxu0 0.0
    %4584 = vmatprep.subr.mxu0 0.0
    %4585 = vmatpush1.msra.mxu0 0.0
    %4586 = vmatprep.subr.mxu0 0.0
    %4587 = vmatpush1.msra.mxu0 0.0
    %4588 = vmatprep.subr.mxu0 0.0
    %4589 = vmatpush1.msra.mxu0 0.0
    %4590 = vmatprep.subr.mxu0 0.0
    %4591 = vmatpush1.msra.mxu0 0.0
    %4592 = vmatprep.mubr.f32.mxu0 0.0
    %4593 = vmatmul.mubr.f32.gmra.mrb[0].mxu0 %v4243
    %v4594 = vpop.f32.mrb[0].mxu0
    %v4595 = vadd.f32 %v4221, %v4594
    %v4596 = vpop.f32.mrb[0].mxu0
    %4597 = vdwg.mxu0
    %4598 = vmatprep.subr.mxu0 0.0
    %4599 = vmatpush1.msra.mxu0 %v4173
    %4600 = vmatprep.subr.mxu0 0.0
    %4601 = vmatpush1.msra.mxu0 %v4174
    %4602 = vmatprep.subr.mxu0 0.0
    %4603 = vmatpush1.msra.mxu0 %v4175
    %4604 = vmatprep.subr.mxu0 0.0
    %4605 = vmatpush1.msra.mxu0 %v4176
    %4606 = vmatprep.subr.mxu0 0.0
    %4607 = vmatpush1.msra.mxu0 0.0
    %4608 = vmatprep.subr.mxu0 0.0
    %4609 = vmatpush1.msra.mxu0 0.0
    %4610 = vmatprep.subr.mxu0 0.0
    %4611 = vmatpush1.msra.mxu0 0.0
    %4612 = vmatprep.subr.mxu0 0.0
    %4613 = vmatpush1.msra.mxu0 0.0
    %4614 = vmatprep.subr.mxu0 0.0
    %4615 = vmatpush1.msra.mxu0 0.0
    %4616 = vmatprep.subr.mxu0 0.0
    %4617 = vmatpush1.msra.mxu0 0.0
    %4618 = vmatprep.subr.mxu0 0.0
    %4619 = vmatpush1.msra.mxu0 0.0
    %4620 = vmatprep.subr.mxu0 0.0
    %4621 = vmatpush1.msra.mxu0 0.0
    %4622 = vmatprep.subr.mxu0 0.0
    %4623 = vmatpush1.msra.mxu0 0.0
    %4624 = vmatprep.subr.mxu0 0.0
    %4625 = vmatpush1.msra.mxu0 0.0
    %4626 = vmatprep.subr.mxu0 0.0
    %4627 = vmatpush1.msra.mxu0 0.0
    %4628 = vmatprep.subr.mxu0 0.0
    %4629 = vmatpush1.msra.mxu0 0.0
    %4630 = vmatprep.subr.mxu0 0.0
    %4631 = vmatpush1.msra.mxu0 0.0
    %4632 = vmatprep.subr.mxu0 0.0
    %4633 = vmatpush1.msra.mxu0 0.0
    %4634 = vmatprep.subr.mxu0 0.0
    %4635 = vmatpush1.msra.mxu0 0.0
    %4636 = vmatprep.subr.mxu0 0.0
    %4637 = vmatpush1.msra.mxu0 0.0
    %4638 = vmatprep.subr.mxu0 0.0
    %4639 = vmatpush1.msra.mxu0 0.0
    %4640 = vmatprep.subr.mxu0 0.0
    %4641 = vmatpush1.msra.mxu0 0.0
    %4642 = vmatprep.subr.mxu0 0.0
    %4643 = vmatpush1.msra.mxu0 0.0
    %4644 = vmatprep.subr.mxu0 0.0
    %4645 = vmatpush1.msra.mxu0 0.0
    %4646 = vmatprep.subr.mxu0 0.0
    %4647 = vmatpush1.msra.mxu0 0.0
    %4648 = vmatprep.subr.mxu0 0.0
    %4649 = vmatpush1.msra.mxu0 0.0
    %4650 = vmatprep.subr.mxu0 0.0
    %4651 = vmatpush1.msra.mxu0 0.0
    %4652 = vmatprep.subr.mxu0 0.0
    %4653 = vmatpush1.msra.mxu0 0.0
    %4654 = vmatprep.subr.mxu0 0.0
    %4655 = vmatpush1.msra.mxu0 0.0
    %4656 = vmatprep.subr.mxu0 0.0
    %4657 = vmatpush1.msra.mxu0 0.0
    %4658 = vmatprep.subr.mxu0 0.0
    %4659 = vmatpush1.msra.mxu0 0.0
    %4660 = vmatprep.subr.mxu0 0.0
    %4661 = vmatpush1.msra.mxu0 0.0
    %4662 = vmatprep.mubr.f32.mxu0 0.0
    %4663 = vmatmul.mubr.f32.gmra.mrb[0].mxu0 %v4316
    %v4664 = vpop.f32.mrb[0].mxu0
    %v4665 = vadd.f32 %v4225, %v4664
    %v4666 = vpop.f32.mrb[0].mxu0
    %4667 = vdwg.mxu0
    %4668 = vmatprep.subr.mxu0 0.0
    %4669 = vmatpush1.msra.mxu0 %v4177
    %4670 = vmatprep.subr.mxu0 0.0
    %4671 = vmatpush1.msra.mxu0 %v4178
    %4672 = vmatprep.subr.mxu0 0.0
    %4673 = vmatpush1.msra.mxu0 %v4179
    %4674 = vmatprep.subr.mxu0 0.0
    %4675 = vmatpush1.msra.mxu0 %v4180
    %4676 = vmatprep.subr.mxu0 0.0
    %4677 = vmatpush1.msra.mxu0 0.0
    %4678 = vmatprep.subr.mxu0 0.0
    %4679 = vmatpush1.msra.mxu0 0.0
    %4680 = vmatprep.subr.mxu0 0.0
    %4681 = vmatpush1.msra.mxu0 0.0
    %4682 = vmatprep.subr.mxu0 0.0
    %4683 = vmatpush1.msra.mxu0 0.0
    %4684 = vmatprep.subr.mxu0 0.0
    %4685 = vmatpush1.msra.mxu0 0.0
    %4686 = vmatprep.subr.mxu0 0.0
    %4687 = vmatpush1.msra.mxu0 0.0
    %4688 = vmatprep.subr.mxu0 0.0
    %4689 = vmatpush1.msra.mxu0 0.0
    %4690 = vmatprep.subr.mxu0 0.0
    %4691 = vmatpush1.msra.mxu0 0.0
    %4692 = vmatprep.subr.mxu0 0.0
    %4693 = vmatpush1.msra.mxu0 0.0
    %4694 = vmatprep.subr.mxu0 0.0
    %4695 = vmatpush1.msra.mxu0 0.0
    %4696 = vmatprep.subr.mxu0 0.0
    %4697 = vmatpush1.msra.mxu0 0.0
    %4698 = vmatprep.subr.mxu0 0.0
    %4699 = vmatpush1.msra.mxu0 0.0
    %4700 = vmatprep.subr.mxu0 0.0
    %4701 = vmatpush1.msra.mxu0 0.0
    %4702 = vmatprep.subr.mxu0 0.0
    %4703 = vmatpush1.msra.mxu0 0.0
    %4704 = vmatprep.subr.mxu0 0.0
    %4705 = vmatpush1.msra.mxu0 0.0
    %4706 = vmatprep.subr.mxu0 0.0
    %4707 = vmatpush1.msra.mxu0 0.0
    %4708 = vmatprep.subr.mxu0 0.0
    %4709 = vmatpush1.msra.mxu0 0.0
    %4710 = vmatprep.subr.mxu0 0.0
    %4711 = vmatpush1.msra.mxu0 0.0
    %4712 = vmatprep.subr.mxu0 0.0
    %4713 = vmatpush1.msra.mxu0 0.0
    %4714 = vmatprep.subr.mxu0 0.0
    %4715 = vmatpush1.msra.mxu0 0.0
    %4716 = vmatprep.subr.mxu0 0.0
    %4717 = vmatpush1.msra.mxu0 0.0
    %4718 = vmatprep.subr.mxu0 0.0
    %4719 = vmatpush1.msra.mxu0 0.0
    %4720 = vmatprep.subr.mxu0 0.0
    %4721 = vmatpush1.msra.mxu0 0.0
    %4722 = vmatprep.subr.mxu0 0.0
    %4723 = vmatpush1.msra.mxu0 0.0
    %4724 = vmatprep.subr.mxu0 0.0
    %4725 = vmatpush1.msra.mxu0 0.0
    %4726 = vmatprep.subr.mxu0 0.0
    %4727 = vmatpush1.msra.mxu0 0.0
    %4728 = vmatprep.subr.mxu0 0.0
    %4729 = vmatpush1.msra.mxu0 0.0
    %4730 = vmatprep.subr.mxu0 0.0
    %4731 = vmatpush1.msra.mxu0 0.0
    %4732 = vmatprep.mubr.f32.mxu0 0.0
    %4733 = vmatmul.mubr.f32.gmra.mrb[0].mxu0 %v4243
    %v4734 = vpop.f32.mrb[0].mxu0
    %v4735 = vadd.f32 %v4229, %v4734
    %v4736 = vpop.f32.mrb[0].mxu0
    %4737 = vdwg.mxu0
    %4738 = vmatprep.subr.mxu0 0.0
    %4739 = vmatpush1.msra.mxu0 %v4181
    %4740 = vmatprep.subr.mxu0 0.0
    %4741 = vmatpush1.msra.mxu0 %v4182
    %4742 = vmatprep.subr.mxu0 0.0
    %4743 = vmatpush1.msra.mxu0 %v4183
    %4744 = vmatprep.subr.mxu0 0.0
    %4745 = vmatpush1.msra.mxu0 %v4184
    %4746 = vmatprep.subr.mxu0 0.0
    %4747 = vmatpush1.msra.mxu0 0.0
    %4748 = vmatprep.subr.mxu0 0.0
    %4749 = vmatpush1.msra.mxu0 0.0
    %4750 = vmatprep.subr.mxu0 0.0
    %4751 = vmatpush1.msra.mxu0 0.0
    %4752 = vmatprep.subr.mxu0 0.0
    %4753 = vmatpush1.msra.mxu0 0.0
    %4754 = vmatprep.subr.mxu0 0.0
    %4755 = vmatpush1.msra.mxu0 0.0
    %4756 = vmatprep.subr.mxu0 0.0
    %4757 = vmatpush1.msra.mxu0 0.0
    %4758 = vmatprep.subr.mxu0 0.0
    %4759 = vmatpush1.msra.mxu0 0.0
    %4760 = vmatprep.subr.mxu0 0.0
    %4761 = vmatpush1.msra.mxu0 0.0
    %4762 = vmatprep.subr.mxu0 0.0
    %4763 = vmatpush1.msra.mxu0 0.0
    %4764 = vmatprep.subr.mxu0 0.0
    %4765 = vmatpush1.msra.mxu0 0.0
    %4766 = vmatprep.subr.mxu0 0.0
    %4767 = vmatpush1.msra.mxu0 0.0
    %4768 = vmatprep.subr.mxu0 0.0
    %4769 = vmatpush1.msra.mxu0 0.0
    %4770 = vmatprep.subr.mxu0 0.0
    %4771 = vmatpush1.msra.mxu0 0.0
    %4772 = vmatprep.subr.mxu0 0.0
    %4773 = vmatpush1.msra.mxu0 0.0
    %4774 = vmatprep.subr.mxu0 0.0
    %4775 = vmatpush1.msra.mxu0 0.0
    %4776 = vmatprep.subr.mxu0 0.0
    %4777 = vmatpush1.msra.mxu0 0.0
    %4778 = vmatprep.subr.mxu0 0.0
    %4779 = vmatpush1.msra.mxu0 0.0
    %4780 = vmatprep.subr.mxu0 0.0
    %4781 = vmatpush1.msra.mxu0 0.0
    %4782 = vmatprep.subr.mxu0 0.0
    %4783 = vmatpush1.msra.mxu0 0.0
    %4784 = vmatprep.subr.mxu0 0.0
    %4785 = vmatpush1.msra.mxu0 0.0
    %4786 = vmatprep.subr.mxu0 0.0
    %4787 = vmatpush1.msra.mxu0 0.0
    %4788 = vmatprep.subr.mxu0 0.0
    %4789 = vmatpush1.msra.mxu0 0.0
    %4790 = vmatprep.subr.mxu0 0.0
    %4791 = vmatpush1.msra.mxu0 0.0
    %4792 = vmatprep.subr.mxu0 0.0
    %4793 = vmatpush1.msra.mxu0 0.0
    %4794 = vmatprep.subr.mxu0 0.0
    %4795 = vmatpush1.msra.mxu0 0.0
    %4796 = vmatprep.subr.mxu0 0.0
    %4797 = vmatpush1.msra.mxu0 0.0
    %4798 = vmatprep.subr.mxu0 0.0
    %4799 = vmatpush1.msra.mxu0 0.0
    %4800 = vmatprep.subr.mxu0 0.0
    %4801 = vmatpush1.msra.mxu0 0.0
    %4802 = vmatprep.mubr.f32.mxu0 0.0
    %4803 = vmatmul.mubr.f32.gmra.mrb[0].mxu0 %v4316
    %v4804 = vpop.f32.mrb[0].mxu0
    %v4805 = vadd.f32 %v4233, %v4804
    %v4806 = vpop.f32.mrb[0].mxu0
    %4807 = vdwg.mxu0
    %s4808 = scalar_lea.vmem %s2, 256
    %v4809 = vld [vmem:[%s4808] sm:$0xff]
    %v4810 = vld [vmem:[%s4808 + $0x8] sm:$0xff]
    %v4811 = vld [vmem:[%s4808 + $0x10] sm:$0xff]
    %v4812 = vld [vmem:[%s4808 + $0x18] sm:$0xff]
    %v4813 = vld [vmem:[%s4808 + $0x20] sm:$0xff]
    %v4814 = vld [vmem:[%s4808 + $0x28] sm:$0xff]
    %v4815 = vld [vmem:[%s4808 + $0x30] sm:$0xff]
    %v4816 = vld [vmem:[%s4808 + $0x38] sm:$0xff]
    %v4817 = vld [vmem:[%s4808 + $0x40] sm:$0xff]
    %v4818 = vld [vmem:[%s4808 + $0x48] sm:$0xff]
    %v4819 = vld [vmem:[%s4808 + $0x50] sm:$0xff]
    %v4820 = vld [vmem:[%s4808 + $0x58] sm:$0xff]
    %v4821 = vld [vmem:[%s4808 + $0x60] sm:$0xff]
    %v4822 = vld [vmem:[%s4808 + $0x68] sm:$0xff]
    %v4823 = vld [vmem:[%s4808 + $0x70] sm:$0xff]
    %v4824 = vld [vmem:[%s4808 + $0x78] sm:$0xff]
    %v4825 = vld [vmem:[%s4808 + $0x80] sm:$0xff]
    %v4826 = vld [vmem:[%s4808 + $0x88] sm:$0xff]
    %v4827 = vld [vmem:[%s4808 + $0x90] sm:$0xff]
    %v4828 = vld [vmem:[%s4808 + $0x98] sm:$0xff]
    %v4829 = vld [vmem:[%s4808 + $0xa0] sm:$0xff]
    %v4830 = vld [vmem:[%s4808 + $0xa8] sm:$0xff]
    %v4831 = vld [vmem:[%s4808 + $0xb0] sm:$0xff]
    %v4832 = vld [vmem:[%s4808 + $0xb8] sm:$0xff]
    %v4833 = vld [vmem:[%s4808 + $0xc0] sm:$0xff]
    %v4834 = vld [vmem:[%s4808 + $0xc8] sm:$0xff]
    %v4835 = vld [vmem:[%s4808 + $0xd0] sm:$0xff]
    %v4836 = vld [vmem:[%s4808 + $0xd8] sm:$0xff]
    %v4837 = vld [vmem:[%s4808 + $0xe0] sm:$0xff]
    %v4838 = vld [vmem:[%s4808 + $0xe8] sm:$0xff]
    %v4839 = vld [vmem:[%s4808 + $0xf0] sm:$0xff]
    %v4840 = vld [vmem:[%s4808 + $0xf8] sm:$0xff]
    %s4841 = scalar_lea.vmem %s5, 8
    %v4842 = vld [vmem:[%s4841] sm:$0x1]
    %v4843 = vld [vmem:[%s4841 + $0x1] sm:$0x1]
    %v4844 = vld [vmem:[%s4841 + $0x2] sm:$0x1]
    %v4845 = vld [vmem:[%s4841 + $0x3] sm:$0x1]
    %v4846 = vld [vmem:[%s4841 + $0x4] sm:$0x1]
    %v4847 = vld [vmem:[%s4841 + $0x5] sm:$0x1]
    %v4848 = vld [vmem:[%s4841 + $0x6] sm:$0x1]
    %v4849 = vld [vmem:[%s4841 + $0x7] sm:$0x1]
    %v4858 = vlaneseq
    %v4859 = vshrl.u32 %v4858, 7
    %v4860 = vsub.s32 0, %v4859
    %v4861 = vrot.slane %v4842, %v4860
    %v4862 = vlaneseq
    %v4863 = vshrl.u32 %v4862, 7
    %v4864 = vsub.s32 0, %v4863
    %v4865 = vrot.slane %v4843, %v4864
    %v4866 = vlaneseq
    %v4867 = vshrl.u32 %v4866, 7
    %v4868 = vsub.s32 0, %v4867
    %v4869 = vrot.slane %v4844, %v4868
    %v4870 = vlaneseq
    %v4871 = vshrl.u32 %v4870, 7
    %v4872 = vsub.s32 0, %v4871
    %v4873 = vrot.slane %v4845, %v4872
    %v4874 = vlaneseq
    %v4875 = vshrl.u32 %v4874, 7
    %v4876 = vsub.s32 0, %v4875
    %v4877 = vrot.slane %v4846, %v4876
    %v4878 = vlaneseq
    %v4879 = vshrl.u32 %v4878, 7
    %v4880 = vsub.s32 0, %v4879
    %v4881 = vrot.slane %v4847, %v4880
    %v4882 = vlaneseq
    %v4883 = vshrl.u32 %v4882, 7
    %v4884 = vsub.s32 0, %v4883
    %v4885 = vrot.slane %v4848, %v4884
    %v4886 = vlaneseq
    %v4887 = vshrl.u32 %v4886, 7
    %v4888 = vsub.s32 0, %v4887
    %v4889 = vrot.slane %v4849, %v4888
    %4898 = vmatprep.subr.mxu0 0.0
    %4899 = vmatpush1.msra.mxu0 %v4809
    %4900 = vmatprep.subr.mxu0 0.0
    %4901 = vmatpush1.msra.mxu0 %v4810
    %4902 = vmatprep.subr.mxu0 0.0
    %4903 = vmatpush1.msra.mxu0 %v4811
    %4904 = vmatprep.subr.mxu0 0.0
    %4905 = vmatpush1.msra.mxu0 %v4812
    %4906 = vmatprep.subr.mxu0 0.0
    %4907 = vmatpush1.msra.mxu0 0.0
    %4908 = vmatprep.subr.mxu0 0.0
    %4909 = vmatpush1.msra.mxu0 0.0
    %4910 = vmatprep.subr.mxu0 0.0
    %4911 = vmatpush1.msra.mxu0 0.0
    %4912 = vmatprep.subr.mxu0 0.0
    %4913 = vmatpush1.msra.mxu0 0.0
    %4914 = vmatprep.subr.mxu0 0.0
    %4915 = vmatpush1.msra.mxu0 0.0
    %4916 = vmatprep.subr.mxu0 0.0
    %4917 = vmatpush1.msra.mxu0 0.0
    %4918 = vmatprep.subr.mxu0 0.0
    %4919 = vmatpush1.msra.mxu0 0.0
    %4920 = vmatprep.subr.mxu0 0.0
    %4921 = vmatpush1.msra.mxu0 0.0
    %4922 = vmatprep.subr.mxu0 0.0
    %4923 = vmatpush1.msra.mxu0 0.0
    %4924 = vmatprep.subr.mxu0 0.0
    %4925 = vmatpush1.msra.mxu0 0.0
    %4926 = vmatprep.subr.mxu0 0.0
    %4927 = vmatpush1.msra.mxu0 0.0
    %4928 = vmatprep.subr.mxu0 0.0
    %4929 = vmatpush1.msra.mxu0 0.0
    %4930 = vmatprep.subr.mxu0 0.0
    %4931 = vmatpush1.msra.mxu0 0.0
    %4932 = vmatprep.subr.mxu0 0.0
    %4933 = vmatpush1.msra.mxu0 0.0
    %4934 = vmatprep.subr.mxu0 0.0
    %4935 = vmatpush1.msra.mxu0 0.0
    %4936 = vmatprep.subr.mxu0 0.0
    %4937 = vmatpush1.msra.mxu0 0.0
    %4938 = vmatprep.subr.mxu0 0.0
    %4939 = vmatpush1.msra.mxu0 0.0
    %4940 = vmatprep.subr.mxu0 0.0
    %4941 = vmatpush1.msra.mxu0 0.0
    %4942 = vmatprep.subr.mxu0 0.0
    %4943 = vmatpush1.msra.mxu0 0.0
    %4944 = vmatprep.subr.mxu0 0.0
    %4945 = vmatpush1.msra.mxu0 0.0
    %4946 = vmatprep.subr.mxu0 0.0
    %4947 = vmatpush1.msra.mxu0 0.0
    %4948 = vmatprep.subr.mxu0 0.0
    %4949 = vmatpush1.msra.mxu0 0.0
    %4950 = vmatprep.subr.mxu0 0.0
    %4951 = vmatpush1.msra.mxu0 0.0
    %4952 = vmatprep.subr.mxu0 0.0
    %4953 = vmatpush1.msra.mxu0 0.0
    %4954 = vmatprep.subr.mxu0 0.0
    %4955 = vmatpush1.msra.mxu0 0.0
    %4956 = vmatprep.subr.mxu0 0.0
    %4957 = vmatpush1.msra.mxu0 0.0
    %4958 = vmatprep.subr.mxu0 0.0
    %4959 = vmatpush1.msra.mxu0 0.0
    %4960 = vmatprep.subr.mxu0 0.0
    %4961 = vmatpush1.msra.mxu0 0.0
    %4962 = vmatprep.mubr.f32.mxu0 0.0
    %4963 = vmatmul.mubr.f32.gmra.mrb[0].mxu0 %v4243
    %v4964 = vpop.f32.mrb[0].mxu0
    %v4965 = vadd.f32 %v4861, %v4964
    %v4966 = vpop.f32.mrb[0].mxu0
    %4967 = vdwg.mxu0
    %4968 = vmatprep.subr.mxu0 0.0
    %4969 = vmatpush1.msra.mxu0 %v4813
    %4970 = vmatprep.subr.mxu0 0.0
    %4971 = vmatpush1.msra.mxu0 %v4814
    %4972 = vmatprep.subr.mxu0 0.0
    %4973 = vmatpush1.msra.mxu0 %v4815
    %4974 = vmatprep.subr.mxu0 0.0
    %4975 = vmatpush1.msra.mxu0 %v4816
    %4976 = vmatprep.subr.mxu0 0.0
    %4977 = vmatpush1.msra.mxu0 0.0
    %4978 = vmatprep.subr.mxu0 0.0
    %4979 = vmatpush1.msra.mxu0 0.0
    %4980 = vmatprep.subr.mxu0 0.0
    %4981 = vmatpush1.msra.mxu0 0.0
    %4982 = vmatprep.subr.mxu0 0.0
    %4983 = vmatpush1.msra.mxu0 0.0
    %4984 = vmatprep.subr.mxu0 0.0
    %4985 = vmatpush1.msra.mxu0 0.0
    %4986 = vmatprep.subr.mxu0 0.0
    %4987 = vmatpush1.msra.mxu0 0.0
    %4988 = vmatprep.subr.mxu0 0.0
    %4989 = vmatpush1.msra.mxu0 0.0
    %4990 = vmatprep.subr.mxu0 0.0
    %4991 = vmatpush1.msra.mxu0 0.0
    %4992 = vmatprep.subr.mxu0 0.0
    %4993 = vmatpush1.msra.mxu0 0.0
    %4994 = vmatprep.subr.mxu0 0.0
    %4995 = vmatpush1.msra.mxu0 0.0
    %4996 = vmatprep.subr.mxu0 0.0
    %4997 = vmatpush1.msra.mxu0 0.0
    %4998 = vmatprep.subr.mxu0 0.0
    %4999 = vmatpush1.msra.mxu0 0.0
    %5000 = vmatprep.subr.mxu0 0.0
    %5001 = vmatpush1.msra.mxu0 0.0
    %5002 = vmatprep.subr.mxu0 0.0
    %5003 = vmatpush1.msra.mxu0 0.0
    %5004 = vmatprep.subr.mxu0 0.0
    %5005 = vmatpush1.msra.mxu0 0.0
    %5006 = vmatprep.subr.mxu0 0.0
    %5007 = vmatpush1.msra.mxu0 0.0
    %5008 = vmatprep.subr.mxu0 0.0
    %5009 = vmatpush1.msra.mxu0 0.0
    %5010 = vmatprep.subr.mxu0 0.0
    %5011 = vmatpush1.msra.mxu0 0.0
    %5012 = vmatprep.subr.mxu0 0.0
    %5013 = vmatpush1.msra.mxu0 0.0
    %5014 = vmatprep.subr.mxu0 0.0
    %5015 = vmatpush1.msra.mxu0 0.0
    %5016 = vmatprep.subr.mxu0 0.0
    %5017 = vmatpush1.msra.mxu0 0.0
    %5018 = vmatprep.subr.mxu0 0.0
    %5019 = vmatpush1.msra.mxu0 0.0
    %5020 = vmatprep.subr.mxu0 0.0
    %5021 = vmatpush1.msra.mxu0 0.0
    %5022 = vmatprep.subr.mxu0 0.0
    %5023 = vmatpush1.msra.mxu0 0.0
    %5024 = vmatprep.subr.mxu0 0.0
    %5025 = vmatpush1.msra.mxu0 0.0
    %5026 = vmatprep.subr.mxu0 0.0
    %5027 = vmatpush1.msra.mxu0 0.0
    %5028 = vmatprep.subr.mxu0 0.0
    %5029 = vmatpush1.msra.mxu0 0.0
    %5030 = vmatprep.subr.mxu0 0.0
    %5031 = vmatpush1.msra.mxu0 0.0
    %5032 = vmatprep.mubr.f32.mxu0 0.0
    %5033 = vmatmul.mubr.f32.gmra.mrb[0].mxu0 %v4316
    %v5034 = vpop.f32.mrb[0].mxu0
    %v5035 = vadd.f32 %v4865, %v5034
    %v5036 = vpop.f32.mrb[0].mxu0
    %5037 = vdwg.mxu0
    %5038 = vmatprep.subr.mxu0 0.0
    %5039 = vmatpush1.msra.mxu0 %v4817
    %5040 = vmatprep.subr.mxu0 0.0
    %5041 = vmatpush1.msra.mxu0 %v4818
    %5042 = vmatprep.subr.mxu0 0.0
    %5043 = vmatpush1.msra.mxu0 %v4819
    %5044 = vmatprep.subr.mxu0 0.0
    %5045 = vmatpush1.msra.mxu0 %v4820
    %5046 = vmatprep.subr.mxu0 0.0
    %5047 = vmatpush1.msra.mxu0 0.0
    %5048 = vmatprep.subr.mxu0 0.0
    %5049 = vmatpush1.msra.mxu0 0.0
    %5050 = vmatprep.subr.mxu0 0.0
    %5051 = vmatpush1.msra.mxu0 0.0
    %5052 = vmatprep.subr.mxu0 0.0
    %5053 = vmatpush1.msra.mxu0 0.0
    %5054 = vmatprep.subr.mxu0 0.0
    %5055 = vmatpush1.msra.mxu0 0.0
    %5056 = vmatprep.subr.mxu0 0.0
    %5057 = vmatpush1.msra.mxu0 0.0
    %5058 = vmatprep.subr.mxu0 0.0
    %5059 = vmatpush1.msra.mxu0 0.0
    %5060 = vmatprep.subr.mxu0 0.0
    %5061 = vmatpush1.msra.mxu0 0.0
    %5062 = vmatprep.subr.mxu0 0.0
    %5063 = vmatpush1.msra.mxu0 0.0
    %5064 = vmatprep.subr.mxu0 0.0
    %5065 = vmatpush1.msra.mxu0 0.0
    %5066 = vmatprep.subr.mxu0 0.0
    %5067 = vmatpush1.msra.mxu0 0.0
    %5068 = vmatprep.subr.mxu0 0.0
    %5069 = vmatpush1.msra.mxu0 0.0
    %5070 = vmatprep.subr.mxu0 0.0
    %5071 = vmatpush1.msra.mxu0 0.0
    %5072 = vmatprep.subr.mxu0 0.0
    %5073 = vmatpush1.msra.mxu0 0.0
    %5074 = vmatprep.subr.mxu0 0.0
    %5075 = vmatpush1.msra.mxu0 0.0
    %5076 = vmatprep.subr.mxu0 0.0
    %5077 = vmatpush1.msra.mxu0 0.0
    %5078 = vmatprep.subr.mxu0 0.0
    %5079 = vmatpush1.msra.mxu0 0.0
    %5080 = vmatprep.subr.mxu0 0.0
    %5081 = vmatpush1.msra.mxu0 0.0
    %5082 = vmatprep.subr.mxu0 0.0
    %5083 = vmatpush1.msra.mxu0 0.0
    %5084 = vmatprep.subr.mxu0 0.0
    %5085 = vmatpush1.msra.mxu0 0.0
    %5086 = vmatprep.subr.mxu0 0.0
    %5087 = vmatpush1.msra.mxu0 0.0
    %5088 = vmatprep.subr.mxu0 0.0
    %5089 = vmatpush1.msra.mxu0 0.0
    %5090 = vmatprep.subr.mxu0 0.0
    %5091 = vmatpush1.msra.mxu0 0.0
    %5092 = vmatprep.subr.mxu0 0.0
    %5093 = vmatpush1.msra.mxu0 0.0
    %5094 = vmatprep.subr.mxu0 0.0
    %5095 = vmatpush1.msra.mxu0 0.0
    %5096 = vmatprep.subr.mxu0 0.0
    %5097 = vmatpush1.msra.mxu0 0.0
    %5098 = vmatprep.subr.mxu0 0.0
    %5099 = vmatpush1.msra.mxu0 0.0
    %5100 = vmatprep.subr.mxu0 0.0
    %5101 = vmatpush1.msra.mxu0 0.0
    %5102 = vmatprep.mubr.f32.mxu0 0.0
    %5103 = vmatmul.mubr.f32.gmra.mrb[0].mxu0 %v4243
    %v5104 = vpop.f32.mrb[0].mxu0
    %v5105 = vadd.f32 %v4869, %v5104
    %v5106 = vpop.f32.mrb[0].mxu0
    %5107 = vdwg.mxu0
    %5108 = vmatprep.subr.mxu0 0.0
    %5109 = vmatpush1.msra.mxu0 %v4821
    %5110 = vmatprep.subr.mxu0 0.0
    %5111 = vmatpush1.msra.mxu0 %v4822
    %5112 = vmatprep.subr.mxu0 0.0
    %5113 = vmatpush1.msra.mxu0 %v4823
    %5114 = vmatprep.subr.mxu0 0.0
    %5115 = vmatpush1.msra.mxu0 %v4824
    %5116 = vmatprep.subr.mxu0 0.0
    %5117 = vmatpush1.msra.mxu0 0.0
    %5118 = vmatprep.subr.mxu0 0.0
    %5119 = vmatpush1.msra.mxu0 0.0
    %5120 = vmatprep.subr.mxu0 0.0
    %5121 = vmatpush1.msra.mxu0 0.0
    %5122 = vmatprep.subr.mxu0 0.0
    %5123 = vmatpush1.msra.mxu0 0.0
    %5124 = vmatprep.subr.mxu0 0.0
    %5125 = vmatpush1.msra.mxu0 0.0
    %5126 = vmatprep.subr.mxu0 0.0
    %5127 = vmatpush1.msra.mxu0 0.0
    %5128 = vmatprep.subr.mxu0 0.0
    %5129 = vmatpush1.msra.mxu0 0.0
    %5130 = vmatprep.subr.mxu0 0.0
    %5131 = vmatpush1.msra.mxu0 0.0
    %5132 = vmatprep.subr.mxu0 0.0
    %5133 = vmatpush1.msra.mxu0 0.0
    %5134 = vmatprep.subr.mxu0 0.0
    %5135 = vmatpush1.msra.mxu0 0.0
    %5136 = vmatprep.subr.mxu0 0.0
    %5137 = vmatpush1.msra.mxu0 0.0
    %5138 = vmatprep.subr.mxu0 0.0
    %5139 = vmatpush1.msra.mxu0 0.0
    %5140 = vmatprep.subr.mxu0 0.0
    %5141 = vmatpush1.msra.mxu0 0.0
    %5142 = vmatprep.subr.mxu0 0.0
    %5143 = vmatpush1.msra.mxu0 0.0
    %5144 = vmatprep.subr.mxu0 0.0
    %5145 = vmatpush1.msra.mxu0 0.0
    %5146 = vmatprep.subr.mxu0 0.0
    %5147 = vmatpush1.msra.mxu0 0.0
    %5148 = vmatprep.subr.mxu0 0.0
    %5149 = vmatpush1.msra.mxu0 0.0
    %5150 = vmatprep.subr.mxu0 0.0
    %5151 = vmatpush1.msra.mxu0 0.0
    %5152 = vmatprep.subr.mxu0 0.0
    %5153 = vmatpush1.msra.mxu0 0.0
    %5154 = vmatprep.subr.mxu0 0.0
    %5155 = vmatpush1.msra.mxu0 0.0
    %5156 = vmatprep.subr.mxu0 0.0
    %5157 = vmatpush1.msra.mxu0 0.0
    %5158 = vmatprep.subr.mxu0 0.0
    %5159 = vmatpush1.msra.mxu0 0.0
    %5160 = vmatprep.subr.mxu0 0.0
    %5161 = vmatpush1.msra.mxu0 0.0
    %5162 = vmatprep.subr.mxu0 0.0
    %5163 = vmatpush1.msra.mxu0 0.0
    %5164 = vmatprep.subr.mxu0 0.0
    %5165 = vmatpush1.msra.mxu0 0.0
    %5166 = vmatprep.subr.mxu0 0.0
    %5167 = vmatpush1.msra.mxu0 0.0
    %5168 = vmatprep.subr.mxu0 0.0
    %5169 = vmatpush1.msra.mxu0 0.0
    %5170 = vmatprep.subr.mxu0 0.0
    %5171 = vmatpush1.msra.mxu0 0.0
    %5172 = vmatprep.mubr.f32.mxu0 0.0
    %5173 = vmatmul.mubr.f32.gmra.mrb[0].mxu0 %v4316
    %v5174 = vpop.f32.mrb[0].mxu0
    %v5175 = vadd.f32 %v4873, %v5174
    %v5176 = vpop.f32.mrb[0].mxu0
    %5177 = vdwg.mxu0
    %5178 = vmatprep.subr.mxu0 0.0
    %5179 = vmatpush1.msra.mxu0 %v4825
    %5180 = vmatprep.subr.mxu0 0.0
    %5181 = vmatpush1.msra.mxu0 %v4826
    %5182 = vmatprep.subr.mxu0 0.0
    %5183 = vmatpush1.msra.mxu0 %v4827
    %5184 = vmatprep.subr.mxu0 0.0
    %5185 = vmatpush1.msra.mxu0 %v4828
    %5186 = vmatprep.subr.mxu0 0.0
    %5187 = vmatpush1.msra.mxu0 0.0
    %5188 = vmatprep.subr.mxu0 0.0
    %5189 = vmatpush1.msra.mxu0 0.0
    %5190 = vmatprep.subr.mxu0 0.0
    %5191 = vmatpush1.msra.mxu0 0.0
    %5192 = vmatprep.subr.mxu0 0.0
    %5193 = vmatpush1.msra.mxu0 0.0
    %5194 = vmatprep.subr.mxu0 0.0
    %5195 = vmatpush1.msra.mxu0 0.0
    %5196 = vmatprep.subr.mxu0 0.0
    %5197 = vmatpush1.msra.mxu0 0.0
    %5198 = vmatprep.subr.mxu0 0.0
    %5199 = vmatpush1.msra.mxu0 0.0
    %5200 = vmatprep.subr.mxu0 0.0
    %5201 = vmatpush1.msra.mxu0 0.0
    %5202 = vmatprep.subr.mxu0 0.0
    %5203 = vmatpush1.msra.mxu0 0.0
    %5204 = vmatprep.subr.mxu0 0.0
    %5205 = vmatpush1.msra.mxu0 0.0
    %5206 = vmatprep.subr.mxu0 0.0
    %5207 = vmatpush1.msra.mxu0 0.0
    %5208 = vmatprep.subr.mxu0 0.0
    %5209 = vmatpush1.msra.mxu0 0.0
    %5210 = vmatprep.subr.mxu0 0.0
    %5211 = vmatpush1.msra.mxu0 0.0
    %5212 = vmatprep.subr.mxu0 0.0
    %5213 = vmatpush1.msra.mxu0 0.0
    %5214 = vmatprep.subr.mxu0 0.0
    %5215 = vmatpush1.msra.mxu0 0.0
    %5216 = vmatprep.subr.mxu0 0.0
    %5217 = vmatpush1.msra.mxu0 0.0
    %5218 = vmatprep.subr.mxu0 0.0
    %5219 = vmatpush1.msra.mxu0 0.0
    %5220 = vmatprep.subr.mxu0 0.0
    %5221 = vmatpush1.msra.mxu0 0.0
    %5222 = vmatprep.subr.mxu0 0.0
    %5223 = vmatpush1.msra.mxu0 0.0
    %5224 = vmatprep.subr.mxu0 0.0
    %5225 = vmatpush1.msra.mxu0 0.0
    %5226 = vmatprep.subr.mxu0 0.0
    %5227 = vmatpush1.msra.mxu0 0.0
    %5228 = vmatprep.subr.mxu0 0.0
    %5229 = vmatpush1.msra.mxu0 0.0
    %5230 = vmatprep.subr.mxu0 0.0
    %5231 = vmatpush1.msra.mxu0 0.0
    %5232 = vmatprep.subr.mxu0 0.0
    %5233 = vmatpush1.msra.mxu0 0.0
    %5234 = vmatprep.subr.mxu0 0.0
    %5235 = vmatpush1.msra.mxu0 0.0
    %5236 = vmatprep.subr.mxu0 0.0
    %5237 = vmatpush1.msra.mxu0 0.0
    %5238 = vmatprep.subr.mxu0 0.0
    %5239 = vmatpush1.msra.mxu0 0.0
    %5240 = vmatprep.subr.mxu0 0.0
    %5241 = vmatpush1.msra.mxu0 0.0
    %5242 = vmatprep.mubr.f32.mxu0 0.0
    %5243 = vmatmul.mubr.f32.gmra.mrb[0].mxu0 %v4243
    %v5244 = vpop.f32.mrb[0].mxu0
    %v5245 = vadd.f32 %v4877, %v5244
    %v5246 = vpop.f32.mrb[0].mxu0
    %5247 = vdwg.mxu0
    %5248 = vmatprep.subr.mxu0 0.0
    %5249 = vmatpush1.msra.mxu0 %v4829
    %5250 = vmatprep.subr.mxu0 0.0
    %5251 = vmatpush1.msra.mxu0 %v4830
    %5252 = vmatprep.subr.mxu0 0.0
    %5253 = vmatpush1.msra.mxu0 %v4831
    %5254 = vmatprep.subr.mxu0 0.0
    %5255 = vmatpush1.msra.mxu0 %v4832
    %5256 = vmatprep.subr.mxu0 0.0
    %5257 = vmatpush1.msra.mxu0 0.0
    %5258 = vmatprep.subr.mxu0 0.0
    %5259 = vmatpush1.msra.mxu0 0.0
    %5260 = vmatprep.subr.mxu0 0.0
    %5261 = vmatpush1.msra.mxu0 0.0
    %5262 = vmatprep.subr.mxu0 0.0
    %5263 = vmatpush1.msra.mxu0 0.0
    %5264 = vmatprep.subr.mxu0 0.0
    %5265 = vmatpush1.msra.mxu0 0.0
    %5266 = vmatprep.subr.mxu0 0.0
    %5267 = vmatpush1.msra.mxu0 0.0
    %5268 = vmatprep.subr.mxu0 0.0
    %5269 = vmatpush1.msra.mxu0 0.0
    %5270 = vmatprep.subr.mxu0 0.0
    %5271 = vmatpush1.msra.mxu0 0.0
    %5272 = vmatprep.subr.mxu0 0.0
    %5273 = vmatpush1.msra.mxu0 0.0
    %5274 = vmatprep.subr.mxu0 0.0
    %5275 = vmatpush1.msra.mxu0 0.0
    %5276 = vmatprep.subr.mxu0 0.0
    %5277 = vmatpush1.msra.mxu0 0.0
    %5278 = vmatprep.subr.mxu0 0.0
    %5279 = vmatpush1.msra.mxu0 0.0
    %5280 = vmatprep.subr.mxu0 0.0
    %5281 = vmatpush1.msra.mxu0 0.0
    %5282 = vmatprep.subr.mxu0 0.0
    %5283 = vmatpush1.msra.mxu0 0.0
    %5284 = vmatprep.subr.mxu0 0.0
    %5285 = vmatpush1.msra.mxu0 0.0
    %5286 = vmatprep.subr.mxu0 0.0
    %5287 = vmatpush1.msra.mxu0 0.0
    %5288 = vmatprep.subr.mxu0 0.0
    %5289 = vmatpush1.msra.mxu0 0.0
    %5290 = vmatprep.subr.mxu0 0.0
    %5291 = vmatpush1.msra.mxu0 0.0
    %5292 = vmatprep.subr.mxu0 0.0
    %5293 = vmatpush1.msra.mxu0 0.0
    %5294 = vmatprep.subr.mxu0 0.0
    %5295 = vmatpush1.msra.mxu0 0.0
    %5296 = vmatprep.subr.mxu0 0.0
    %5297 = vmatpush1.msra.mxu0 0.0
    %5298 = vmatprep.subr.mxu0 0.0
    %5299 = vmatpush1.msra.mxu0 0.0
    %5300 = vmatprep.subr.mxu0 0.0
    %5301 = vmatpush1.msra.mxu0 0.0
    %5302 = vmatprep.subr.mxu0 0.0
    %5303 = vmatpush1.msra.mxu0 0.0
    %5304 = vmatprep.subr.mxu0 0.0
    %5305 = vmatpush1.msra.mxu0 0.0
    %5306 = vmatprep.subr.mxu0 0.0
    %5307 = vmatpush1.msra.mxu0 0.0
    %5308 = vmatprep.subr.mxu0 0.0
    %5309 = vmatpush1.msra.mxu0 0.0
    %5310 = vmatprep.subr.mxu0 0.0
    %5311 = vmatpush1.msra.mxu0 0.0
    %5312 = vmatprep.mubr.f32.mxu0 0.0
    %5313 = vmatmul.mubr.f32.gmra.mrb[0].mxu0 %v4316
    %v5314 = vpop.f32.mrb[0].mxu0
    %v5315 = vadd.f32 %v4881, %v5314
    %v5316 = vpop.f32.mrb[0].mxu0
    %5317 = vdwg.mxu0
    %5318 = vmatprep.subr.mxu0 0.0
    %5319 = vmatpush1.msra.mxu0 %v4833
    %5320 = vmatprep.subr.mxu0 0.0
    %5321 = vmatpush1.msra.mxu0 %v4834
    %5322 = vmatprep.subr.mxu0 0.0
    %5323 = vmatpush1.msra.mxu0 %v4835
    %5324 = vmatprep.subr.mxu0 0.0
    %5325 = vmatpush1.msra.mxu0 %v4836
    %5326 = vmatprep.subr.mxu0 0.0
    %5327 = vmatpush1.msra.mxu0 0.0
    %5328 = vmatprep.subr.mxu0 0.0
    %5329 = vmatpush1.msra.mxu0 0.0
    %5330 = vmatprep.subr.mxu0 0.0
    %5331 = vmatpush1.msra.mxu0 0.0
    %5332 = vmatprep.subr.mxu0 0.0
    %5333 = vmatpush1.msra.mxu0 0.0
    %5334 = vmatprep.subr.mxu0 0.0
    %5335 = vmatpush1.msra.mxu0 0.0
    %5336 = vmatprep.subr.mxu0 0.0
    %5337 = vmatpush1.msra.mxu0 0.0
    %5338 = vmatprep.subr.mxu0 0.0
    %5339 = vmatpush1.msra.mxu0 0.0
    %5340 = vmatprep.subr.mxu0 0.0
    %5341 = vmatpush1.msra.mxu0 0.0
    %5342 = vmatprep.subr.mxu0 0.0
    %5343 = vmatpush1.msra.mxu0 0.0
    %5344 = vmatprep.subr.mxu0 0.0
    %5345 = vmatpush1.msra.mxu0 0.0
    %5346 = vmatprep.subr.mxu0 0.0
    %5347 = vmatpush1.msra.mxu0 0.0
    %5348 = vmatprep.subr.mxu0 0.0
    %5349 = vmatpush1.msra.mxu0 0.0
    %5350 = vmatprep.subr.mxu0 0.0
    %5351 = vmatpush1.msra.mxu0 0.0
    %5352 = vmatprep.subr.mxu0 0.0
    %5353 = vmatpush1.msra.mxu0 0.0
    %5354 = vmatprep.subr.mxu0 0.0
    %5355 = vmatpush1.msra.mxu0 0.0
    %5356 = vmatprep.subr.mxu0 0.0
    %5357 = vmatpush1.msra.mxu0 0.0
    %5358 = vmatprep.subr.mxu0 0.0
    %5359 = vmatpush1.msra.mxu0 0.0
    %5360 = vmatprep.subr.mxu0 0.0
    %5361 = vmatpush1.msra.mxu0 0.0
    %5362 = vmatprep.subr.mxu0 0.0
    %5363 = vmatpush1.msra.mxu0 0.0
    %5364 = vmatprep.subr.mxu0 0.0
    %5365 = vmatpush1.msra.mxu0 0.0
    %5366 = vmatprep.subr.mxu0 0.0
    %5367 = vmatpush1.msra.mxu0 0.0
    %5368 = vmatprep.subr.mxu0 0.0
    %5369 = vmatpush1.msra.mxu0 0.0
    %5370 = vmatprep.subr.mxu0 0.0
    %5371 = vmatpush1.msra.mxu0 0.0
    %5372 = vmatprep.subr.mxu0 0.0
    %5373 = vmatpush1.msra.mxu0 0.0
    %5374 = vmatprep.subr.mxu0 0.0
    %5375 = vmatpush1.msra.mxu0 0.0
    %5376 = vmatprep.subr.mxu0 0.0
    %5377 = vmatpush1.msra.mxu0 0.0
    %5378 = vmatprep.subr.mxu0 0.0
    %5379 = vmatpush1.msra.mxu0 0.0
    %5380 = vmatprep.subr.mxu0 0.0
    %5381 = vmatpush1.msra.mxu0 0.0
    %5382 = vmatprep.mubr.f32.mxu0 0.0
    %5383 = vmatmul.mubr.f32.gmra.mrb[0].mxu0 %v4243
    %v5384 = vpop.f32.mrb[0].mxu0
    %v5385 = vadd.f32 %v4885, %v5384
    %v5386 = vpop.f32.mrb[0].mxu0
    %5387 = vdwg.mxu0
    %5388 = vmatprep.subr.mxu0 0.0
    %5389 = vmatpush1.msra.mxu0 %v4837
    %5390 = vmatprep.subr.mxu0 0.0
    %5391 = vmatpush1.msra.mxu0 %v4838
    %5392 = vmatprep.subr.mxu0 0.0
    %5393 = vmatpush1.msra.mxu0 %v4839
    %5394 = vmatprep.subr.mxu0 0.0
    %5395 = vmatpush1.msra.mxu0 %v4840
    %5396 = vmatprep.subr.mxu0 0.0
    %5397 = vmatpush1.msra.mxu0 0.0
    %5398 = vmatprep.subr.mxu0 0.0
    %5399 = vmatpush1.msra.mxu0 0.0
    %5400 = vmatprep.subr.mxu0 0.0
    %5401 = vmatpush1.msra.mxu0 0.0
    %5402 = vmatprep.subr.mxu0 0.0
    %5403 = vmatpush1.msra.mxu0 0.0
    %5404 = vmatprep.subr.mxu0 0.0
    %5405 = vmatpush1.msra.mxu0 0.0
    %5406 = vmatprep.subr.mxu0 0.0
    %5407 = vmatpush1.msra.mxu0 0.0
    %5408 = vmatprep.subr.mxu0 0.0
    %5409 = vmatpush1.msra.mxu0 0.0
    %5410 = vmatprep.subr.mxu0 0.0
    %5411 = vmatpush1.msra.mxu0 0.0
    %5412 = vmatprep.subr.mxu0 0.0
    %5413 = vmatpush1.msra.mxu0 0.0
    %5414 = vmatprep.subr.mxu0 0.0
    %5415 = vmatpush1.msra.mxu0 0.0
    %5416 = vmatprep.subr.mxu0 0.0
    %5417 = vmatpush1.msra.mxu0 0.0
    %5418 = vmatprep.subr.mxu0 0.0
    %5419 = vmatpush1.msra.mxu0 0.0
    %5420 = vmatprep.subr.mxu0 0.0
    %5421 = vmatpush1.msra.mxu0 0.0
    %5422 = vmatprep.subr.mxu0 0.0
    %5423 = vmatpush1.msra.mxu0 0.0
    %5424 = vmatprep.subr.mxu0 0.0
    %5425 = vmatpush1.msra.mxu0 0.0
    %5426 = vmatprep.subr.mxu0 0.0
    %5427 = vmatpush1.msra.mxu0 0.0
    %5428 = vmatprep.subr.mxu0 0.0
    %5429 = vmatpush1.msra.mxu0 0.0
    %5430 = vmatprep.subr.mxu0 0.0
    %5431 = vmatpush1.msra.mxu0 0.0
    %5432 = vmatprep.subr.mxu0 0.0
    %5433 = vmatpush1.msra.mxu0 0.0
    %5434 = vmatprep.subr.mxu0 0.0
    %5435 = vmatpush1.msra.mxu0 0.0
    %5436 = vmatprep.subr.mxu0 0.0
    %5437 = vmatpush1.msra.mxu0 0.0
    %5438 = vmatprep.subr.mxu0 0.0
    %5439 = vmatpush1.msra.mxu0 0.0
    %5440 = vmatprep.subr.mxu0 0.0
    %5441 = vmatpush1.msra.mxu0 0.0
    %5442 = vmatprep.subr.mxu0 0.0
    %5443 = vmatpush1.msra.mxu0 0.0
    %5444 = vmatprep.subr.mxu0 0.0
    %5445 = vmatpush1.msra.mxu0 0.0
    %5446 = vmatprep.subr.mxu0 0.0
    %5447 = vmatpush1.msra.mxu0 0.0
    %5448 = vmatprep.subr.mxu0 0.0
    %5449 = vmatpush1.msra.mxu0 0.0
    %5450 = vmatprep.subr.mxu0 0.0
    %5451 = vmatpush1.msra.mxu0 0.0
    %5452 = vmatprep.mubr.f32.mxu0 0.0
    %5453 = vmatmul.mubr.f32.gmra.mrb[0].mxu0 %v4316
    %v5454 = vpop.f32.mrb[0].mxu0
    %v5455 = vadd.f32 %v4889, %v5454
    %v5456 = vpop.f32.mrb[0].mxu0
    %5457 = vdwg.mxu0
    %s5458 = scalar_lea.vmem %s3, 256
    %v5459 = vld [vmem:[%s5458] sm:$0xff]
    %v5460 = vld [vmem:[%s5458 + $0x8] sm:$0xff]
    %v5461 = vld [vmem:[%s5458 + $0x10] sm:$0xff]
    %v5462 = vld [vmem:[%s5458 + $0x18] sm:$0xff]
    %v5463 = vld [vmem:[%s5458 + $0x20] sm:$0xff]
    %v5464 = vld [vmem:[%s5458 + $0x28] sm:$0xff]
    %v5465 = vld [vmem:[%s5458 + $0x30] sm:$0xff]
    %v5466 = vld [vmem:[%s5458 + $0x38] sm:$0xff]
    %v5467 = vld [vmem:[%s5458 + $0x40] sm:$0xff]
    %v5468 = vld [vmem:[%s5458 + $0x48] sm:$0xff]
    %v5469 = vld [vmem:[%s5458 + $0x50] sm:$0xff]
    %v5470 = vld [vmem:[%s5458 + $0x58] sm:$0xff]
    %v5471 = vld [vmem:[%s5458 + $0x60] sm:$0xff]
    %v5472 = vld [vmem:[%s5458 + $0x68] sm:$0xff]
    %v5473 = vld [vmem:[%s5458 + $0x70] sm:$0xff]
    %v5474 = vld [vmem:[%s5458 + $0x78] sm:$0xff]
    %v5475 = vld [vmem:[%s5458 + $0x80] sm:$0xff]
    %v5476 = vld [vmem:[%s5458 + $0x88] sm:$0xff]
    %v5477 = vld [vmem:[%s5458 + $0x90] sm:$0xff]
    %v5478 = vld [vmem:[%s5458 + $0x98] sm:$0xff]
    %v5479 = vld [vmem:[%s5458 + $0xa0] sm:$0xff]
    %v5480 = vld [vmem:[%s5458 + $0xa8] sm:$0xff]
    %v5481 = vld [vmem:[%s5458 + $0xb0] sm:$0xff]
    %v5482 = vld [vmem:[%s5458 + $0xb8] sm:$0xff]
    %v5483 = vld [vmem:[%s5458 + $0xc0] sm:$0xff]
    %v5484 = vld [vmem:[%s5458 + $0xc8] sm:$0xff]
    %v5485 = vld [vmem:[%s5458 + $0xd0] sm:$0xff]
    %v5486 = vld [vmem:[%s5458 + $0xd8] sm:$0xff]
    %v5487 = vld [vmem:[%s5458 + $0xe0] sm:$0xff]
    %v5488 = vld [vmem:[%s5458 + $0xe8] sm:$0xff]
    %v5489 = vld [vmem:[%s5458 + $0xf0] sm:$0xff]
    %v5490 = vld [vmem:[%s5458 + $0xf8] sm:$0xff]
    %s5491 = scalar_lea.vmem %s6, 8
    %v5492 = vld [vmem:[%s5491] sm:$0x1]
    %v5493 = vld [vmem:[%s5491 + $0x1] sm:$0x1]
    %v5494 = vld [vmem:[%s5491 + $0x2] sm:$0x1]
    %v5495 = vld [vmem:[%s5491 + $0x3] sm:$0x1]
    %v5496 = vld [vmem:[%s5491 + $0x4] sm:$0x1]
    %v5497 = vld [vmem:[%s5491 + $0x5] sm:$0x1]
    %v5498 = vld [vmem:[%s5491 + $0x6] sm:$0x1]
    %v5499 = vld [vmem:[%s5491 + $0x7] sm:$0x1]
    %v5508 = vlaneseq
    %v5509 = vshrl.u32 %v5508, 7
    %v5510 = vsub.s32 0, %v5509
    %v5511 = vrot.slane %v5492, %v5510
    %v5512 = vlaneseq
    %v5513 = vshrl.u32 %v5512, 7
    %v5514 = vsub.s32 0, %v5513
    %v5515 = vrot.slane %v5493, %v5514
    %v5516 = vlaneseq
    %v5517 = vshrl.u32 %v5516, 7
    %v5518 = vsub.s32 0, %v5517
    %v5519 = vrot.slane %v5494, %v5518
    %v5520 = vlaneseq
    %v5521 = vshrl.u32 %v5520, 7
    %v5522 = vsub.s32 0, %v5521
    %v5523 = vrot.slane %v5495, %v5522
    %v5524 = vlaneseq
    %v5525 = vshrl.u32 %v5524, 7
    %v5526 = vsub.s32 0, %v5525
    %v5527 = vrot.slane %v5496, %v5526
    %v5528 = vlaneseq
    %v5529 = vshrl.u32 %v5528, 7
    %v5530 = vsub.s32 0, %v5529
    %v5531 = vrot.slane %v5497, %v5530
    %v5532 = vlaneseq
    %v5533 = vshrl.u32 %v5532, 7
    %v5534 = vsub.s32 0, %v5533
    %v5535 = vrot.slane %v5498, %v5534
    %v5536 = vlaneseq
    %v5537 = vshrl.u32 %v5536, 7
    %v5538 = vsub.s32 0, %v5537
    %v5539 = vrot.slane %v5499, %v5538
    %5548 = vmatprep.subr.mxu0 0.0
    %5549 = vmatpush1.msra.mxu0 %v5459
    %5550 = vmatprep.subr.mxu0 0.0
    %5551 = vmatpush1.msra.mxu0 %v5460
    %5552 = vmatprep.subr.mxu0 0.0
    %5553 = vmatpush1.msra.mxu0 %v5461
    %5554 = vmatprep.subr.mxu0 0.0
    %5555 = vmatpush1.msra.mxu0 %v5462
    %5556 = vmatprep.subr.mxu0 0.0
    %5557 = vmatpush1.msra.mxu0 0.0
    %5558 = vmatprep.subr.mxu0 0.0
    %5559 = vmatpush1.msra.mxu0 0.0
    %5560 = vmatprep.subr.mxu0 0.0
    %5561 = vmatpush1.msra.mxu0 0.0
    %5562 = vmatprep.subr.mxu0 0.0
    %5563 = vmatpush1.msra.mxu0 0.0
    %5564 = vmatprep.subr.mxu0 0.0
    %5565 = vmatpush1.msra.mxu0 0.0
    %5566 = vmatprep.subr.mxu0 0.0
    %5567 = vmatpush1.msra.mxu0 0.0
    %5568 = vmatprep.subr.mxu0 0.0
    %5569 = vmatpush1.msra.mxu0 0.0
    %5570 = vmatprep.subr.mxu0 0.0
    %5571 = vmatpush1.msra.mxu0 0.0
    %5572 = vmatprep.subr.mxu0 0.0
    %5573 = vmatpush1.msra.mxu0 0.0
    %5574 = vmatprep.subr.mxu0 0.0
    %5575 = vmatpush1.msra.mxu0 0.0
    %5576 = vmatprep.subr.mxu0 0.0
    %5577 = vmatpush1.msra.mxu0 0.0
    %5578 = vmatprep.subr.mxu0 0.0
    %5579 = vmatpush1.msra.mxu0 0.0
    %5580 = vmatprep.subr.mxu0 0.0
    %5581 = vmatpush1.msra.mxu0 0.0
    %5582 = vmatprep.subr.mxu0 0.0
    %5583 = vmatpush1.msra.mxu0 0.0
    %5584 = vmatprep.subr.mxu0 0.0
    %5585 = vmatpush1.msra.mxu0 0.0
    %5586 = vmatprep.subr.mxu0 0.0
    %5587 = vmatpush1.msra.mxu0 0.0
    %5588 = vmatprep.subr.mxu0 0.0
    %5589 = vmatpush1.msra.mxu0 0.0
    %5590 = vmatprep.subr.mxu0 0.0
    %5591 = vmatpush1.msra.mxu0 0.0
    %5592 = vmatprep.subr.mxu0 0.0
    %5593 = vmatpush1.msra.mxu0 0.0
    %5594 = vmatprep.subr.mxu0 0.0
    %5595 = vmatpush1.msra.mxu0 0.0
    %5596 = vmatprep.subr.mxu0 0.0
    %5597 = vmatpush1.msra.mxu0 0.0
    %5598 = vmatprep.subr.mxu0 0.0
    %5599 = vmatpush1.msra.mxu0 0.0
    %5600 = vmatprep.subr.mxu0 0.0
    %5601 = vmatpush1.msra.mxu0 0.0
    %5602 = vmatprep.subr.mxu0 0.0
    %5603 = vmatpush1.msra.mxu0 0.0
    %5604 = vmatprep.subr.mxu0 0.0
    %5605 = vmatpush1.msra.mxu0 0.0
    %5606 = vmatprep.subr.mxu0 0.0
    %5607 = vmatpush1.msra.mxu0 0.0
    %5608 = vmatprep.subr.mxu0 0.0
    %5609 = vmatpush1.msra.mxu0 0.0
    %5610 = vmatprep.subr.mxu0 0.0
    %5611 = vmatpush1.msra.mxu0 0.0
    %5612 = vmatprep.mubr.f32.mxu0 0.0
    %5613 = vmatmul.mubr.f32.gmra.mrb[0].mxu0 %v4243
    %v5614 = vpop.f32.mrb[0].mxu0
    %v5615 = vadd.f32 %v5511, %v5614
    %v5616 = vpop.f32.mrb[0].mxu0
    %5617 = vdwg.mxu0
    %5618 = vmatprep.subr.mxu0 0.0
    %5619 = vmatpush1.msra.mxu0 %v5463
    %5620 = vmatprep.subr.mxu0 0.0
    %5621 = vmatpush1.msra.mxu0 %v5464
    %5622 = vmatprep.subr.mxu0 0.0
    %5623 = vmatpush1.msra.mxu0 %v5465
    %5624 = vmatprep.subr.mxu0 0.0
    %5625 = vmatpush1.msra.mxu0 %v5466
    %5626 = vmatprep.subr.mxu0 0.0
    %5627 = vmatpush1.msra.mxu0 0.0
    %5628 = vmatprep.subr.mxu0 0.0
    %5629 = vmatpush1.msra.mxu0 0.0
    %5630 = vmatprep.subr.mxu0 0.0
    %5631 = vmatpush1.msra.mxu0 0.0
    %5632 = vmatprep.subr.mxu0 0.0
    %5633 = vmatpush1.msra.mxu0 0.0
    %5634 = vmatprep.subr.mxu0 0.0
    %5635 = vmatpush1.msra.mxu0 0.0
    %5636 = vmatprep.subr.mxu0 0.0
    %5637 = vmatpush1.msra.mxu0 0.0
    %5638 = vmatprep.subr.mxu0 0.0
    %5639 = vmatpush1.msra.mxu0 0.0
    %5640 = vmatprep.subr.mxu0 0.0
    %5641 = vmatpush1.msra.mxu0 0.0
    %5642 = vmatprep.subr.mxu0 0.0
    %5643 = vmatpush1.msra.mxu0 0.0
    %5644 = vmatprep.subr.mxu0 0.0
    %5645 = vmatpush1.msra.mxu0 0.0
    %5646 = vmatprep.subr.mxu0 0.0
    %5647 = vmatpush1.msra.mxu0 0.0
    %5648 = vmatprep.subr.mxu0 0.0
    %5649 = vmatpush1.msra.mxu0 0.0
    %5650 = vmatprep.subr.mxu0 0.0
    %5651 = vmatpush1.msra.mxu0 0.0
    %5652 = vmatprep.subr.mxu0 0.0
    %5653 = vmatpush1.msra.mxu0 0.0
    %5654 = vmatprep.subr.mxu0 0.0
    %5655 = vmatpush1.msra.mxu0 0.0
    %5656 = vmatprep.subr.mxu0 0.0
    %5657 = vmatpush1.msra.mxu0 0.0
    %5658 = vmatprep.subr.mxu0 0.0
    %5659 = vmatpush1.msra.mxu0 0.0
    %5660 = vmatprep.subr.mxu0 0.0
    %5661 = vmatpush1.msra.mxu0 0.0
    %5662 = vmatprep.subr.mxu0 0.0
    %5663 = vmatpush1.msra.mxu0 0.0
    %5664 = vmatprep.subr.mxu0 0.0
    %5665 = vmatpush1.msra.mxu0 0.0
    %5666 = vmatprep.subr.mxu0 0.0
    %5667 = vmatpush1.msra.mxu0 0.0
    %5668 = vmatprep.subr.mxu0 0.0
    %5669 = vmatpush1.msra.mxu0 0.0
    %5670 = vmatprep.subr.mxu0 0.0
    %5671 = vmatpush1.msra.mxu0 0.0
    %5672 = vmatprep.subr.mxu0 0.0
    %5673 = vmatpush1.msra.mxu0 0.0
    %5674 = vmatprep.subr.mxu0 0.0
    %5675 = vmatpush1.msra.mxu0 0.0
    %5676 = vmatprep.subr.mxu0 0.0
    %5677 = vmatpush1.msra.mxu0 0.0
    %5678 = vmatprep.subr.mxu0 0.0
    %5679 = vmatpush1.msra.mxu0 0.0
    %5680 = vmatprep.subr.mxu0 0.0
    %5681 = vmatpush1.msra.mxu0 0.0
    %5682 = vmatprep.mubr.f32.mxu0 0.0
    %5683 = vmatmul.mubr.f32.gmra.mrb[0].mxu0 %v4316
    %v5684 = vpop.f32.mrb[0].mxu0
    %v5685 = vadd.f32 %v5515, %v5684
    %v5686 = vpop.f32.mrb[0].mxu0
    %5687 = vdwg.mxu0
    %5688 = vmatprep.subr.mxu0 0.0
    %5689 = vmatpush1.msra.mxu0 %v5467
    %5690 = vmatprep.subr.mxu0 0.0
    %5691 = vmatpush1.msra.mxu0 %v5468
    %5692 = vmatprep.subr.mxu0 0.0
    %5693 = vmatpush1.msra.mxu0 %v5469
    %5694 = vmatprep.subr.mxu0 0.0
    %5695 = vmatpush1.msra.mxu0 %v5470
    %5696 = vmatprep.subr.mxu0 0.0
    %5697 = vmatpush1.msra.mxu0 0.0
    %5698 = vmatprep.subr.mxu0 0.0
    %5699 = vmatpush1.msra.mxu0 0.0
    %5700 = vmatprep.subr.mxu0 0.0
    %5701 = vmatpush1.msra.mxu0 0.0
    %5702 = vmatprep.subr.mxu0 0.0
    %5703 = vmatpush1.msra.mxu0 0.0
    %5704 = vmatprep.subr.mxu0 0.0
    %5705 = vmatpush1.msra.mxu0 0.0
    %5706 = vmatprep.subr.mxu0 0.0
    %5707 = vmatpush1.msra.mxu0 0.0
    %5708 = vmatprep.subr.mxu0 0.0
    %5709 = vmatpush1.msra.mxu0 0.0
    %5710 = vmatprep.subr.mxu0 0.0
    %5711 = vmatpush1.msra.mxu0 0.0
    %5712 = vmatprep.subr.mxu0 0.0
    %5713 = vmatpush1.msra.mxu0 0.0
    %5714 = vmatprep.subr.mxu0 0.0
    %5715 = vmatpush1.msra.mxu0 0.0
    %5716 = vmatprep.subr.mxu0 0.0
    %5717 = vmatpush1.msra.mxu0 0.0
    %5718 = vmatprep.subr.mxu0 0.0
    %5719 = vmatpush1.msra.mxu0 0.0
    %5720 = vmatprep.subr.mxu0 0.0
    %5721 = vmatpush1.msra.mxu0 0.0
    %5722 = vmatprep.subr.mxu0 0.0
    %5723 = vmatpush1.msra.mxu0 0.0
    %5724 = vmatprep.subr.mxu0 0.0
    %5725 = vmatpush1.msra.mxu0 0.0
    %5726 = vmatprep.subr.mxu0 0.0
    %5727 = vmatpush1.msra.mxu0 0.0
    %5728 = vmatprep.subr.mxu0 0.0
    %5729 = vmatpush1.msra.mxu0 0.0
    %5730 = vmatprep.subr.mxu0 0.0
    %5731 = vmatpush1.msra.mxu0 0.0
    %5732 = vmatprep.subr.mxu0 0.0
    %5733 = vmatpush1.msra.mxu0 0.0
    %5734 = vmatprep.subr.mxu0 0.0
    %5735 = vmatpush1.msra.mxu0 0.0
    %5736 = vmatprep.subr.mxu0 0.0
    %5737 = vmatpush1.msra.mxu0 0.0
    %5738 = vmatprep.subr.mxu0 0.0
    %5739 = vmatpush1.msra.mxu0 0.0
    %5740 = vmatprep.subr.mxu0 0.0
    %5741 = vmatpush1.msra.mxu0 0.0
    %5742 = vmatprep.subr.mxu0 0.0
    %5743 = vmatpush1.msra.mxu0 0.0
    %5744 = vmatprep.subr.mxu0 0.0
    %5745 = vmatpush1.msra.mxu0 0.0
    %5746 = vmatprep.subr.mxu0 0.0
    %5747 = vmatpush1.msra.mxu0 0.0
    %5748 = vmatprep.subr.mxu0 0.0
    %5749 = vmatpush1.msra.mxu0 0.0
    %5750 = vmatprep.subr.mxu0 0.0
    %5751 = vmatpush1.msra.mxu0 0.0
    %5752 = vmatprep.mubr.f32.mxu0 0.0
    %5753 = vmatmul.mubr.f32.gmra.mrb[0].mxu0 %v4243
    %v5754 = vpop.f32.mrb[0].mxu0
    %v5755 = vadd.f32 %v5519, %v5754
    %v5756 = vpop.f32.mrb[0].mxu0
    %5757 = vdwg.mxu0
    %5758 = vmatprep.subr.mxu0 0.0
    %5759 = vmatpush1.msra.mxu0 %v5471
    %5760 = vmatprep.subr.mxu0 0.0
    %5761 = vmatpush1.msra.mxu0 %v5472
    %5762 = vmatprep.subr.mxu0 0.0
    %5763 = vmatpush1.msra.mxu0 %v5473
    %5764 = vmatprep.subr.mxu0 0.0
    %5765 = vmatpush1.msra.mxu0 %v5474
    %5766 = vmatprep.subr.mxu0 0.0
    %5767 = vmatpush1.msra.mxu0 0.0
    %5768 = vmatprep.subr.mxu0 0.0
    %5769 = vmatpush1.msra.mxu0 0.0
    %5770 = vmatprep.subr.mxu0 0.0
    %5771 = vmatpush1.msra.mxu0 0.0
    %5772 = vmatprep.subr.mxu0 0.0
    %5773 = vmatpush1.msra.mxu0 0.0
    %5774 = vmatprep.subr.mxu0 0.0
    %5775 = vmatpush1.msra.mxu0 0.0
    %5776 = vmatprep.subr.mxu0 0.0
    %5777 = vmatpush1.msra.mxu0 0.0
    %5778 = vmatprep.subr.mxu0 0.0
    %5779 = vmatpush1.msra.mxu0 0.0
    %5780 = vmatprep.subr.mxu0 0.0
    %5781 = vmatpush1.msra.mxu0 0.0
    %5782 = vmatprep.subr.mxu0 0.0
    %5783 = vmatpush1.msra.mxu0 0.0
    %5784 = vmatprep.subr.mxu0 0.0
    %5785 = vmatpush1.msra.mxu0 0.0
    %5786 = vmatprep.subr.mxu0 0.0
    %5787 = vmatpush1.msra.mxu0 0.0
    %5788 = vmatprep.subr.mxu0 0.0
    %5789 = vmatpush1.msra.mxu0 0.0
    %5790 = vmatprep.subr.mxu0 0.0
    %5791 = vmatpush1.msra.mxu0 0.0
    %5792 = vmatprep.subr.mxu0 0.0
    %5793 = vmatpush1.msra.mxu0 0.0
    %5794 = vmatprep.subr.mxu0 0.0
    %5795 = vmatpush1.msra.mxu0 0.0
    %5796 = vmatprep.subr.mxu0 0.0
    %5797 = vmatpush1.msra.mxu0 0.0
    %5798 = vmatprep.subr.mxu0 0.0
    %5799 = vmatpush1.msra.mxu0 0.0
    %5800 = vmatprep.subr.mxu0 0.0
    %5801 = vmatpush1.msra.mxu0 0.0
    %5802 = vmatprep.subr.mxu0 0.0
    %5803 = vmatpush1.msra.mxu0 0.0
    %5804 = vmatprep.subr.mxu0 0.0
    %5805 = vmatpush1.msra.mxu0 0.0
    %5806 = vmatprep.subr.mxu0 0.0
    %5807 = vmatpush1.msra.mxu0 0.0
    %5808 = vmatprep.subr.mxu0 0.0
    %5809 = vmatpush1.msra.mxu0 0.0
    %5810 = vmatprep.subr.mxu0 0.0
    %5811 = vmatpush1.msra.mxu0 0.0
    %5812 = vmatprep.subr.mxu0 0.0
    %5813 = vmatpush1.msra.mxu0 0.0
    %5814 = vmatprep.subr.mxu0 0.0
    %5815 = vmatpush1.msra.mxu0 0.0
    %5816 = vmatprep.subr.mxu0 0.0
    %5817 = vmatpush1.msra.mxu0 0.0
    %5818 = vmatprep.subr.mxu0 0.0
    %5819 = vmatpush1.msra.mxu0 0.0
    %5820 = vmatprep.subr.mxu0 0.0
    %5821 = vmatpush1.msra.mxu0 0.0
    %5822 = vmatprep.mubr.f32.mxu0 0.0
    %5823 = vmatmul.mubr.f32.gmra.mrb[0].mxu0 %v4316
    %v5824 = vpop.f32.mrb[0].mxu0
    %v5825 = vadd.f32 %v5523, %v5824
    %v5826 = vpop.f32.mrb[0].mxu0
    %5827 = vdwg.mxu0
    %5828 = vmatprep.subr.mxu0 0.0
    %5829 = vmatpush1.msra.mxu0 %v5475
    %5830 = vmatprep.subr.mxu0 0.0
    %5831 = vmatpush1.msra.mxu0 %v5476
    %5832 = vmatprep.subr.mxu0 0.0
    %5833 = vmatpush1.msra.mxu0 %v5477
    %5834 = vmatprep.subr.mxu0 0.0
    %5835 = vmatpush1.msra.mxu0 %v5478
    %5836 = vmatprep.subr.mxu0 0.0
    %5837 = vmatpush1.msra.mxu0 0.0
    %5838 = vmatprep.subr.mxu0 0.0
    %5839 = vmatpush1.msra.mxu0 0.0
    %5840 = vmatprep.subr.mxu0 0.0
    %5841 = vmatpush1.msra.mxu0 0.0
    %5842 = vmatprep.subr.mxu0 0.0
    %5843 = vmatpush1.msra.mxu0 0.0
    %5844 = vmatprep.subr.mxu0 0.0
    %5845 = vmatpush1.msra.mxu0 0.0
    %5846 = vmatprep.subr.mxu0 0.0
    %5847 = vmatpush1.msra.mxu0 0.0
    %5848 = vmatprep.subr.mxu0 0.0
    %5849 = vmatpush1.msra.mxu0 0.0
    %5850 = vmatprep.subr.mxu0 0.0
    %5851 = vmatpush1.msra.mxu0 0.0
    %5852 = vmatprep.subr.mxu0 0.0
    %5853 = vmatpush1.msra.mxu0 0.0
    %5854 = vmatprep.subr.mxu0 0.0
    %5855 = vmatpush1.msra.mxu0 0.0
    %5856 = vmatprep.subr.mxu0 0.0
    %5857 = vmatpush1.msra.mxu0 0.0
    %5858 = vmatprep.subr.mxu0 0.0
    %5859 = vmatpush1.msra.mxu0 0.0
    %5860 = vmatprep.subr.mxu0 0.0
    %5861 = vmatpush1.msra.mxu0 0.0
    %5862 = vmatprep.subr.mxu0 0.0
    %5863 = vmatpush1.msra.mxu0 0.0
    %5864 = vmatprep.subr.mxu0 0.0
    %5865 = vmatpush1.msra.mxu0 0.0
    %5866 = vmatprep.subr.mxu0 0.0
    %5867 = vmatpush1.msra.mxu0 0.0
    %5868 = vmatprep.subr.mxu0 0.0
    %5869 = vmatpush1.msra.mxu0 0.0
    %5870 = vmatprep.subr.mxu0 0.0
    %5871 = vmatpush1.msra.mxu0 0.0
    %5872 = vmatprep.subr.mxu0 0.0
    %5873 = vmatpush1.msra.mxu0 0.0
    %5874 = vmatprep.subr.mxu0 0.0
    %5875 = vmatpush1.msra.mxu0 0.0
    %5876 = vmatprep.subr.mxu0 0.0
    %5877 = vmatpush1.msra.mxu0 0.0
    %5878 = vmatprep.subr.mxu0 0.0
    %5879 = vmatpush1.msra.mxu0 0.0
    %5880 = vmatprep.subr.mxu0 0.0
    %5881 = vmatpush1.msra.mxu0 0.0
    %5882 = vmatprep.subr.mxu0 0.0
    %5883 = vmatpush1.msra.mxu0 0.0
    %5884 = vmatprep.subr.mxu0 0.0
    %5885 = vmatpush1.msra.mxu0 0.0
    %5886 = vmatprep.subr.mxu0 0.0
    %5887 = vmatpush1.msra.mxu0 0.0
    %5888 = vmatprep.subr.mxu0 0.0
    %5889 = vmatpush1.msra.mxu0 0.0
    %5890 = vmatprep.subr.mxu0 0.0
    %5891 = vmatpush1.msra.mxu0 0.0
    %5892 = vmatprep.mubr.f32.mxu0 0.0
    %5893 = vmatmul.mubr.f32.gmra.mrb[0].mxu0 %v4243
    %v5894 = vpop.f32.mrb[0].mxu0
    %v5895 = vadd.f32 %v5527, %v5894
    %v5896 = vpop.f32.mrb[0].mxu0
    %5897 = vdwg.mxu0
    %5898 = vmatprep.subr.mxu0 0.0
    %5899 = vmatpush1.msra.mxu0 %v5479
    %5900 = vmatprep.subr.mxu0 0.0
    %5901 = vmatpush1.msra.mxu0 %v5480
    %5902 = vmatprep.subr.mxu0 0.0
    %5903 = vmatpush1.msra.mxu0 %v5481
    %5904 = vmatprep.subr.mxu0 0.0
    %5905 = vmatpush1.msra.mxu0 %v5482
    %5906 = vmatprep.subr.mxu0 0.0
    %5907 = vmatpush1.msra.mxu0 0.0
    %5908 = vmatprep.subr.mxu0 0.0
    %5909 = vmatpush1.msra.mxu0 0.0
    %5910 = vmatprep.subr.mxu0 0.0
    %5911 = vmatpush1.msra.mxu0 0.0
    %5912 = vmatprep.subr.mxu0 0.0
    %5913 = vmatpush1.msra.mxu0 0.0
    %5914 = vmatprep.subr.mxu0 0.0
    %5915 = vmatpush1.msra.mxu0 0.0
    %5916 = vmatprep.subr.mxu0 0.0
    %5917 = vmatpush1.msra.mxu0 0.0
    %5918 = vmatprep.subr.mxu0 0.0
    %5919 = vmatpush1.msra.mxu0 0.0
    %5920 = vmatprep.subr.mxu0 0.0
    %5921 = vmatpush1.msra.mxu0 0.0
    %5922 = vmatprep.subr.mxu0 0.0
    %5923 = vmatpush1.msra.mxu0 0.0
    %5924 = vmatprep.subr.mxu0 0.0
    %5925 = vmatpush1.msra.mxu0 0.0
    %5926 = vmatprep.subr.mxu0 0.0
    %5927 = vmatpush1.msra.mxu0 0.0
    %5928 = vmatprep.subr.mxu0 0.0
    %5929 = vmatpush1.msra.mxu0 0.0
    %5930 = vmatprep.subr.mxu0 0.0
    %5931 = vmatpush1.msra.mxu0 0.0
    %5932 = vmatprep.subr.mxu0 0.0
    %5933 = vmatpush1.msra.mxu0 0.0
    %5934 = vmatprep.subr.mxu0 0.0
    %5935 = vmatpush1.msra.mxu0 0.0
    %5936 = vmatprep.subr.mxu0 0.0
    %5937 = vmatpush1.msra.mxu0 0.0
    %5938 = vmatprep.subr.mxu0 0.0
    %5939 = vmatpush1.msra.mxu0 0.0
    %5940 = vmatprep.subr.mxu0 0.0
    %5941 = vmatpush1.msra.mxu0 0.0
    %5942 = vmatprep.subr.mxu0 0.0
    %5943 = vmatpush1.msra.mxu0 0.0
    %5944 = vmatprep.subr.mxu0 0.0
    %5945 = vmatpush1.msra.mxu0 0.0
    %5946 = vmatprep.subr.mxu0 0.0
    %5947 = vmatpush1.msra.mxu0 0.0
    %5948 = vmatprep.subr.mxu0 0.0
    %5949 = vmatpush1.msra.mxu0 0.0
    %5950 = vmatprep.subr.mxu0 0.0
    %5951 = vmatpush1.msra.mxu0 0.0
    %5952 = vmatprep.subr.mxu0 0.0
    %5953 = vmatpush1.msra.mxu0 0.0
    %5954 = vmatprep.subr.mxu0 0.0
    %5955 = vmatpush1.msra.mxu0 0.0
    %5956 = vmatprep.subr.mxu0 0.0
    %5957 = vmatpush1.msra.mxu0 0.0
    %5958 = vmatprep.subr.mxu0 0.0
    %5959 = vmatpush1.msra.mxu0 0.0
    %5960 = vmatprep.subr.mxu0 0.0
    %5961 = vmatpush1.msra.mxu0 0.0
    %5962 = vmatprep.mubr.f32.mxu0 0.0
    %5963 = vmatmul.mubr.f32.gmra.mrb[0].mxu0 %v4316
    %v5964 = vpop.f32.mrb[0].mxu0
    %v5965 = vadd.f32 %v5531, %v5964
    %v5966 = vpop.f32.mrb[0].mxu0
    %5967 = vdwg.mxu0
    %5968 = vmatprep.subr.mxu0 0.0
    %5969 = vmatpush1.msra.mxu0 %v5483
    %5970 = vmatprep.subr.mxu0 0.0
    %5971 = vmatpush1.msra.mxu0 %v5484
    %5972 = vmatprep.subr.mxu0 0.0
    %5973 = vmatpush1.msra.mxu0 %v5485
    %5974 = vmatprep.subr.mxu0 0.0
    %5975 = vmatpush1.msra.mxu0 %v5486
    %5976 = vmatprep.subr.mxu0 0.0
    %5977 = vmatpush1.msra.mxu0 0.0
    %5978 = vmatprep.subr.mxu0 0.0
    %5979 = vmatpush1.msra.mxu0 0.0
    %5980 = vmatprep.subr.mxu0 0.0
    %5981 = vmatpush1.msra.mxu0 0.0
    %5982 = vmatprep.subr.mxu0 0.0
    %5983 = vmatpush1.msra.mxu0 0.0
    %5984 = vmatprep.subr.mxu0 0.0
    %5985 = vmatpush1.msra.mxu0 0.0
    %5986 = vmatprep.subr.mxu0 0.0
    %5987 = vmatpush1.msra.mxu0 0.0
    %5988 = vmatprep.subr.mxu0 0.0
    %5989 = vmatpush1.msra.mxu0 0.0
    %5990 = vmatprep.subr.mxu0 0.0
    %5991 = vmatpush1.msra.mxu0 0.0
    %5992 = vmatprep.subr.mxu0 0.0
    %5993 = vmatpush1.msra.mxu0 0.0
    %5994 = vmatprep.subr.mxu0 0.0
    %5995 = vmatpush1.msra.mxu0 0.0
    %5996 = vmatprep.subr.mxu0 0.0
    %5997 = vmatpush1.msra.mxu0 0.0
    %5998 = vmatprep.subr.mxu0 0.0
    %5999 = vmatpush1.msra.mxu0 0.0
    %6000 = vmatprep.subr.mxu0 0.0
    %6001 = vmatpush1.msra.mxu0 0.0
    %6002 = vmatprep.subr.mxu0 0.0
    %6003 = vmatpush1.msra.mxu0 0.0
    %6004 = vmatprep.subr.mxu0 0.0
    %6005 = vmatpush1.msra.mxu0 0.0
    %6006 = vmatprep.subr.mxu0 0.0
    %6007 = vmatpush1.msra.mxu0 0.0
    %6008 = vmatprep.subr.mxu0 0.0
    %6009 = vmatpush1.msra.mxu0 0.0
    %6010 = vmatprep.subr.mxu0 0.0
    %6011 = vmatpush1.msra.mxu0 0.0
    %6012 = vmatprep.subr.mxu0 0.0
    %6013 = vmatpush1.msra.mxu0 0.0
    %6014 = vmatprep.subr.mxu0 0.0
    %6015 = vmatpush1.msra.mxu0 0.0
    %6016 = vmatprep.subr.mxu0 0.0
    %6017 = vmatpush1.msra.mxu0 0.0
    %6018 = vmatprep.subr.mxu0 0.0
    %6019 = vmatpush1.msra.mxu0 0.0
    %6020 = vmatprep.subr.mxu0 0.0
    %6021 = vmatpush1.msra.mxu0 0.0
    %6022 = vmatprep.subr.mxu0 0.0
    %6023 = vmatpush1.msra.mxu0 0.0
    %6024 = vmatprep.subr.mxu0 0.0
    %6025 = vmatpush1.msra.mxu0 0.0
    %6026 = vmatprep.subr.mxu0 0.0
    %6027 = vmatpush1.msra.mxu0 0.0
    %6028 = vmatprep.subr.mxu0 0.0
    %6029 = vmatpush1.msra.mxu0 0.0
    %6030 = vmatprep.subr.mxu0 0.0
    %6031 = vmatpush1.msra.mxu0 0.0
    %6032 = vmatprep.mubr.f32.mxu0 0.0
    %6033 = vmatmul.mubr.f32.gmra.mrb[0].mxu0 %v4243
    %v6034 = vpop.f32.mrb[0].mxu0
    %v6035 = vadd.f32 %v5535, %v6034
    %v6036 = vpop.f32.mrb[0].mxu0
    %6037 = vdwg.mxu0
    %6038 = vmatprep.subr.mxu0 0.0
    %6039 = vmatpush1.msra.mxu0 %v5487
    %6040 = vmatprep.subr.mxu0 0.0
    %6041 = vmatpush1.msra.mxu0 %v5488
    %6042 = vmatprep.subr.mxu0 0.0
    %6043 = vmatpush1.msra.mxu0 %v5489
    %6044 = vmatprep.subr.mxu0 0.0
    %6045 = vmatpush1.msra.mxu0 %v5490
    %6046 = vmatprep.subr.mxu0 0.0
    %6047 = vmatpush1.msra.mxu0 0.0
    %6048 = vmatprep.subr.mxu0 0.0
    %6049 = vmatpush1.msra.mxu0 0.0
    %6050 = vmatprep.subr.mxu0 0.0
    %6051 = vmatpush1.msra.mxu0 0.0
    %6052 = vmatprep.subr.mxu0 0.0
    %6053 = vmatpush1.msra.mxu0 0.0
    %6054 = vmatprep.subr.mxu0 0.0
    %6055 = vmatpush1.msra.mxu0 0.0
    %6056 = vmatprep.subr.mxu0 0.0
    %6057 = vmatpush1.msra.mxu0 0.0
    %6058 = vmatprep.subr.mxu0 0.0
    %6059 = vmatpush1.msra.mxu0 0.0
    %6060 = vmatprep.subr.mxu0 0.0
    %6061 = vmatpush1.msra.mxu0 0.0
    %6062 = vmatprep.subr.mxu0 0.0
    %6063 = vmatpush1.msra.mxu0 0.0
    %6064 = vmatprep.subr.mxu0 0.0
    %6065 = vmatpush1.msra.mxu0 0.0
    %6066 = vmatprep.subr.mxu0 0.0
    %6067 = vmatpush1.msra.mxu0 0.0
    %6068 = vmatprep.subr.mxu0 0.0
    %6069 = vmatpush1.msra.mxu0 0.0
    %6070 = vmatprep.subr.mxu0 0.0
    %6071 = vmatpush1.msra.mxu0 0.0
    %6072 = vmatprep.subr.mxu0 0.0
    %6073 = vmatpush1.msra.mxu0 0.0
    %6074 = vmatprep.subr.mxu0 0.0
    %6075 = vmatpush1.msra.mxu0 0.0
    %6076 = vmatprep.subr.mxu0 0.0
    %6077 = vmatpush1.msra.mxu0 0.0
    %6078 = vmatprep.subr.mxu0 0.0
    %6079 = vmatpush1.msra.mxu0 0.0
    %6080 = vmatprep.subr.mxu0 0.0
    %6081 = vmatpush1.msra.mxu0 0.0
    %6082 = vmatprep.subr.mxu0 0.0
    %6083 = vmatpush1.msra.mxu0 0.0
    %6084 = vmatprep.subr.mxu0 0.0
    %6085 = vmatpush1.msra.mxu0 0.0
    %6086 = vmatprep.subr.mxu0 0.0
    %6087 = vmatpush1.msra.mxu0 0.0
    %6088 = vmatprep.subr.mxu0 0.0
    %6089 = vmatpush1.msra.mxu0 0.0
    %6090 = vmatprep.subr.mxu0 0.0
    %6091 = vmatpush1.msra.mxu0 0.0
    %6092 = vmatprep.subr.mxu0 0.0
    %6093 = vmatpush1.msra.mxu0 0.0
    %6094 = vmatprep.subr.mxu0 0.0
    %6095 = vmatpush1.msra.mxu0 0.0
    %6096 = vmatprep.subr.mxu0 0.0
    %6097 = vmatpush1.msra.mxu0 0.0
    %6098 = vmatprep.subr.mxu0 0.0
    %6099 = vmatpush1.msra.mxu0 0.0
    %6100 = vmatprep.subr.mxu0 0.0
    %6101 = vmatpush1.msra.mxu0 0.0
    %6102 = vmatprep.mubr.f32.mxu0 0.0
    %6103 = vmatmul.mubr.f32.gmra.mrb[0].mxu0 %v4316
    %v6104 = vpop.f32.mrb[0].mxu0
    %v6105 = vadd.f32 %v5539, %v6104
    %v6106 = vpop.f32.mrb[0].mxu0
    %6107 = vdwg.mxu0
    %v6109 = vsel %vm1995, %v4312, 0
    %v6112 = vsel %vm1995, %v4965, 0
    %6114 = vmatprep.subr.mxu0 0.0
    %6115 = vmatpush1.xpose.msra.mxu0 %v6112
    %6116 = vmatprep.subr.mxu0 0.0
    %6117 = vmatpush1.xpose.msra.mxu0 0.0
    %6118 = vmatprep.subr.mxu0 0.0
    %6119 = vmatpush1.xpose.msra.mxu0 0.0
    %6120 = vmatprep.subr.mxu0 0.0
    %6121 = vmatpush1.xpose.msra.mxu0 0.0
    %6122 = vmatprep.subr.mxu0 0.0
    %6123 = vmatpush1.xpose.msra.mxu0 0.0
    %6124 = vmatprep.subr.mxu0 0.0
    %6125 = vmatpush1.xpose.msra.mxu0 0.0
    %6126 = vmatprep.subr.mxu0 0.0
    %6127 = vmatpush1.xpose.msra.mxu0 0.0
    %6128 = vmatprep.subr.mxu0 0.0
    %6129 = vmatpush1.xpose.msra.mxu0 0.0
    %6130 = vmatprep.subr.mxu0 0.0
    %6131 = vmatpush1.xpose.msra.mxu0 0.0
    %6132 = vmatprep.subr.mxu0 0.0
    %6133 = vmatpush1.xpose.msra.mxu0 0.0
    %6134 = vmatprep.subr.mxu0 0.0
    %6135 = vmatpush1.xpose.msra.mxu0 0.0
    %6136 = vmatprep.subr.mxu0 0.0
    %6137 = vmatpush1.xpose.msra.mxu0 0.0
    %6138 = vmatprep.subr.mxu0 0.0
    %6139 = vmatpush1.xpose.msra.mxu0 0.0
    %6140 = vmatprep.subr.mxu0 0.0
    %6141 = vmatpush1.xpose.msra.mxu0 0.0
    %6142 = vmatprep.subr.mxu0 0.0
    %6143 = vmatpush1.xpose.msra.mxu0 0.0
    %6144 = vmatprep.subr.mxu0 0.0
    %6145 = vmatpush1.xpose.msra.mxu0 0.0
    %6146 = vmatprep.subr.mxu0 0.0
    %6147 = vmatpush1.xpose.msra.mxu0 0.0
    %6148 = vmatprep.subr.mxu0 0.0
    %6149 = vmatpush1.xpose.msra.mxu0 0.0
    %6150 = vmatprep.subr.mxu0 0.0
    %6151 = vmatpush1.xpose.msra.mxu0 0.0
    %6152 = vmatprep.subr.mxu0 0.0
    %6153 = vmatpush1.xpose.msra.mxu0 0.0
    %6154 = vmatprep.subr.mxu0 0.0
    %6155 = vmatpush1.xpose.msra.mxu0 0.0
    %6156 = vmatprep.subr.mxu0 0.0
    %6157 = vmatpush1.xpose.msra.mxu0 0.0
    %6158 = vmatprep.subr.mxu0 0.0
    %6159 = vmatpush1.xpose.msra.mxu0 0.0
    %6160 = vmatprep.subr.mxu0 0.0
    %6161 = vmatpush1.xpose.msra.mxu0 0.0
    %6162 = vmatprep.subr.mxu0 0.0
    %6163 = vmatpush1.xpose.msra.mxu0 0.0
    %6164 = vmatprep.subr.mxu0 0.0
    %6165 = vmatpush1.xpose.msra.mxu0 0.0
    %6166 = vmatprep.subr.mxu0 0.0
    %6167 = vmatpush1.xpose.msra.mxu0 0.0
    %6168 = vmatprep.subr.mxu0 0.0
    %6169 = vmatpush1.xpose.msra.mxu0 0.0
    %6170 = vmatprep.subr.mxu0 0.0
    %6171 = vmatpush1.xpose.msra.mxu0 0.0
    %6172 = vmatprep.subr.mxu0 0.0
    %6173 = vmatpush1.xpose.msra.mxu0 0.0
    %6174 = vmatprep.subr.mxu0 0.0
    %6175 = vmatpush1.xpose.msra.mxu0 0.0
    %6176 = vmatprep.subr.mxu0 0.0
    %6177 = vmatpush1.xpose.msra.mxu0 0.0
    %6178 = vmatprep.mubr.f32.mxu0 0.0
    %6179 = vmatmul.mubr.f32.gmra.mrb[0].mxu0 %v6109
    %v6180 = vpop.f32.mrb[0].mxu0
    %v6181 = vadd.f32 0.0, %v6180
    %v6182 = vpop.f32.mrb[0].mxu0
    %6183 = vdwg.mxu0
    %v6185 = vsel %vm1995, %v4385, 0
    %v6188 = vsel %vm1995, %v5035, 0
    %6190 = vmatprep.subr.mxu0 0.0
    %6191 = vmatpush1.xpose.msra.mxu0 %v6188
    %6192 = vmatprep.subr.mxu0 0.0
    %6193 = vmatpush1.xpose.msra.mxu0 0.0
    %6194 = vmatprep.subr.mxu0 0.0
    %6195 = vmatpush1.xpose.msra.mxu0 0.0
    %6196 = vmatprep.subr.mxu0 0.0
    %6197 = vmatpush1.xpose.msra.mxu0 0.0
    %6198 = vmatprep.subr.mxu0 0.0
    %6199 = vmatpush1.xpose.msra.mxu0 0.0
    %6200 = vmatprep.subr.mxu0 0.0
    %6201 = vmatpush1.xpose.msra.mxu0 0.0
    %6202 = vmatprep.subr.mxu0 0.0
    %6203 = vmatpush1.xpose.msra.mxu0 0.0
    %6204 = vmatprep.subr.mxu0 0.0
    %6205 = vmatpush1.xpose.msra.mxu0 0.0
    %6206 = vmatprep.subr.mxu0 0.0
    %6207 = vmatpush1.xpose.msra.mxu0 0.0
    %6208 = vmatprep.subr.mxu0 0.0
    %6209 = vmatpush1.xpose.msra.mxu0 0.0
    %6210 = vmatprep.subr.mxu0 0.0
    %6211 = vmatpush1.xpose.msra.mxu0 0.0
    %6212 = vmatprep.subr.mxu0 0.0
    %6213 = vmatpush1.xpose.msra.mxu0 0.0
    %6214 = vmatprep.subr.mxu0 0.0
    %6215 = vmatpush1.xpose.msra.mxu0 0.0
    %6216 = vmatprep.subr.mxu0 0.0
    %6217 = vmatpush1.xpose.msra.mxu0 0.0
    %6218 = vmatprep.subr.mxu0 0.0
    %6219 = vmatpush1.xpose.msra.mxu0 0.0
    %6220 = vmatprep.subr.mxu0 0.0
    %6221 = vmatpush1.xpose.msra.mxu0 0.0
    %6222 = vmatprep.subr.mxu0 0.0
    %6223 = vmatpush1.xpose.msra.mxu0 0.0
    %6224 = vmatprep.subr.mxu0 0.0
    %6225 = vmatpush1.xpose.msra.mxu0 0.0
    %6226 = vmatprep.subr.mxu0 0.0
    %6227 = vmatpush1.xpose.msra.mxu0 0.0
    %6228 = vmatprep.subr.mxu0 0.0
    %6229 = vmatpush1.xpose.msra.mxu0 0.0
    %6230 = vmatprep.subr.mxu0 0.0
    %6231 = vmatpush1.xpose.msra.mxu0 0.0
    %6232 = vmatprep.subr.mxu0 0.0
    %6233 = vmatpush1.xpose.msra.mxu0 0.0
    %6234 = vmatprep.subr.mxu0 0.0
    %6235 = vmatpush1.xpose.msra.mxu0 0.0
    %6236 = vmatprep.subr.mxu0 0.0
    %6237 = vmatpush1.xpose.msra.mxu0 0.0
    %6238 = vmatprep.subr.mxu0 0.0
    %6239 = vmatpush1.xpose.msra.mxu0 0.0
    %6240 = vmatprep.subr.mxu0 0.0
    %6241 = vmatpush1.xpose.msra.mxu0 0.0
    %6242 = vmatprep.subr.mxu0 0.0
    %6243 = vmatpush1.xpose.msra.mxu0 0.0
    %6244 = vmatprep.subr.mxu0 0.0
    %6245 = vmatpush1.xpose.msra.mxu0 0.0
    %6246 = vmatprep.subr.mxu0 0.0
    %6247 = vmatpush1.xpose.msra.mxu0 0.0
    %6248 = vmatprep.subr.mxu0 0.0
    %6249 = vmatpush1.xpose.msra.mxu0 0.0
    %6250 = vmatprep.subr.mxu0 0.0
    %6251 = vmatpush1.xpose.msra.mxu0 0.0
    %6252 = vmatprep.subr.mxu0 0.0
    %6253 = vmatpush1.xpose.msra.mxu0 0.0
    %6254 = vmatprep.mubr.f32.mxu0 0.0
    %6255 = vmatmul.mubr.f32.gmra.mrb[0].mxu0 %v6185
    %v6256 = vpop.f32.mrb[0].mxu0
    %v6257 = vadd.f32 0.0, %v6256
    %v6258 = vpop.f32.mrb[0].mxu0
    %6259 = vdwg.mxu0
    %v6261 = vsel %vm1995, %v4455, 0
    %v6264 = vsel %vm1995, %v5105, 0
    %6266 = vmatprep.subr.mxu0 0.0
    %6267 = vmatpush1.xpose.msra.mxu0 %v6264
    %6268 = vmatprep.subr.mxu0 0.0
    %6269 = vmatpush1.xpose.msra.mxu0 0.0
    %6270 = vmatprep.subr.mxu0 0.0
    %6271 = vmatpush1.xpose.msra.mxu0 0.0
    %6272 = vmatprep.subr.mxu0 0.0
    %6273 = vmatpush1.xpose.msra.mxu0 0.0
    %6274 = vmatprep.subr.mxu0 0.0
    %6275 = vmatpush1.xpose.msra.mxu0 0.0
    %6276 = vmatprep.subr.mxu0 0.0
    %6277 = vmatpush1.xpose.msra.mxu0 0.0
    %6278 = vmatprep.subr.mxu0 0.0
    %6279 = vmatpush1.xpose.msra.mxu0 0.0
    %6280 = vmatprep.subr.mxu0 0.0
    %6281 = vmatpush1.xpose.msra.mxu0 0.0
    %6282 = vmatprep.subr.mxu0 0.0
    %6283 = vmatpush1.xpose.msra.mxu0 0.0
    %6284 = vmatprep.subr.mxu0 0.0
    %6285 = vmatpush1.xpose.msra.mxu0 0.0
    %6286 = vmatprep.subr.mxu0 0.0
    %6287 = vmatpush1.xpose.msra.mxu0 0.0
    %6288 = vmatprep.subr.mxu0 0.0
    %6289 = vmatpush1.xpose.msra.mxu0 0.0
    %6290 = vmatprep.subr.mxu0 0.0
    %6291 = vmatpush1.xpose.msra.mxu0 0.0
    %6292 = vmatprep.subr.mxu0 0.0
    %6293 = vmatpush1.xpose.msra.mxu0 0.0
    %6294 = vmatprep.subr.mxu0 0.0
    %6295 = vmatpush1.xpose.msra.mxu0 0.0
    %6296 = vmatprep.subr.mxu0 0.0
    %6297 = vmatpush1.xpose.msra.mxu0 0.0
    %6298 = vmatprep.subr.mxu0 0.0
    %6299 = vmatpush1.xpose.msra.mxu0 0.0
    %6300 = vmatprep.subr.mxu0 0.0
    %6301 = vmatpush1.xpose.msra.mxu0 0.0
    %6302 = vmatprep.subr.mxu0 0.0
    %6303 = vmatpush1.xpose.msra.mxu0 0.0
    %6304 = vmatprep.subr.mxu0 0.0
    %6305 = vmatpush1.xpose.msra.mxu0 0.0
    %6306 = vmatprep.subr.mxu0 0.0
    %6307 = vmatpush1.xpose.msra.mxu0 0.0
    %6308 = vmatprep.subr.mxu0 0.0
    %6309 = vmatpush1.xpose.msra.mxu0 0.0
    %6310 = vmatprep.subr.mxu0 0.0
    %6311 = vmatpush1.xpose.msra.mxu0 0.0
    %6312 = vmatprep.subr.mxu0 0.0
    %6313 = vmatpush1.xpose.msra.mxu0 0.0
    %6314 = vmatprep.subr.mxu0 0.0
    %6315 = vmatpush1.xpose.msra.mxu0 0.0
    %6316 = vmatprep.subr.mxu0 0.0
    %6317 = vmatpush1.xpose.msra.mxu0 0.0
    %6318 = vmatprep.subr.mxu0 0.0
    %6319 = vmatpush1.xpose.msra.mxu0 0.0
    %6320 = vmatprep.subr.mxu0 0.0
    %6321 = vmatpush1.xpose.msra.mxu0 0.0
    %6322 = vmatprep.subr.mxu0 0.0
    %6323 = vmatpush1.xpose.msra.mxu0 0.0
    %6324 = vmatprep.subr.mxu0 0.0
    %6325 = vmatpush1.xpose.msra.mxu0 0.0
    %6326 = vmatprep.subr.mxu0 0.0
    %6327 = vmatpush1.xpose.msra.mxu0 0.0
    %6328 = vmatprep.subr.mxu0 0.0
    %6329 = vmatpush1.xpose.msra.mxu0 0.0
    %6330 = vmatprep.mubr.f32.mxu0 0.0
    %6331 = vmatmul.mubr.f32.gmra.mrb[0].mxu0 %v6261
    %v6332 = vpop.f32.mrb[0].mxu0
    %v6333 = vadd.f32 0.0, %v6332
    %v6334 = vpop.f32.mrb[0].mxu0
    %6335 = vdwg.mxu0
    %v6337 = vsel %vm1995, %v4525, 0
    %v6340 = vsel %vm1995, %v5175, 0
    %6342 = vmatprep.subr.mxu0 0.0
    %6343 = vmatpush1.xpose.msra.mxu0 %v6340
    %6344 = vmatprep.subr.mxu0 0.0
    %6345 = vmatpush1.xpose.msra.mxu0 0.0
    %6346 = vmatprep.subr.mxu0 0.0
    %6347 = vmatpush1.xpose.msra.mxu0 0.0
    %6348 = vmatprep.subr.mxu0 0.0
    %6349 = vmatpush1.xpose.msra.mxu0 0.0
    %6350 = vmatprep.subr.mxu0 0.0
    %6351 = vmatpush1.xpose.msra.mxu0 0.0
    %6352 = vmatprep.subr.mxu0 0.0
    %6353 = vmatpush1.xpose.msra.mxu0 0.0
    %6354 = vmatprep.subr.mxu0 0.0
    %6355 = vmatpush1.xpose.msra.mxu0 0.0
    %6356 = vmatprep.subr.mxu0 0.0
    %6357 = vmatpush1.xpose.msra.mxu0 0.0
    %6358 = vmatprep.subr.mxu0 0.0
    %6359 = vmatpush1.xpose.msra.mxu0 0.0
    %6360 = vmatprep.subr.mxu0 0.0
    %6361 = vmatpush1.xpose.msra.mxu0 0.0
    %6362 = vmatprep.subr.mxu0 0.0
    %6363 = vmatpush1.xpose.msra.mxu0 0.0
    %6364 = vmatprep.subr.mxu0 0.0
    %6365 = vmatpush1.xpose.msra.mxu0 0.0
    %6366 = vmatprep.subr.mxu0 0.0
    %6367 = vmatpush1.xpose.msra.mxu0 0.0
    %6368 = vmatprep.subr.mxu0 0.0
    %6369 = vmatpush1.xpose.msra.mxu0 0.0
    %6370 = vmatprep.subr.mxu0 0.0
    %6371 = vmatpush1.xpose.msra.mxu0 0.0
    %6372 = vmatprep.subr.mxu0 0.0
    %6373 = vmatpush1.xpose.msra.mxu0 0.0
    %6374 = vmatprep.subr.mxu0 0.0
    %6375 = vmatpush1.xpose.msra.mxu0 0.0
    %6376 = vmatprep.subr.mxu0 0.0
    %6377 = vmatpush1.xpose.msra.mxu0 0.0
    %6378 = vmatprep.subr.mxu0 0.0
    %6379 = vmatpush1.xpose.msra.mxu0 0.0
    %6380 = vmatprep.subr.mxu0 0.0
    %6381 = vmatpush1.xpose.msra.mxu0 0.0
    %6382 = vmatprep.subr.mxu0 0.0
    %6383 = vmatpush1.xpose.msra.mxu0 0.0
    %6384 = vmatprep.subr.mxu0 0.0
    %6385 = vmatpush1.xpose.msra.mxu0 0.0
    %6386 = vmatprep.subr.mxu0 0.0
    %6387 = vmatpush1.xpose.msra.mxu0 0.0
    %6388 = vmatprep.subr.mxu0 0.0
    %6389 = vmatpush1.xpose.msra.mxu0 0.0
    %6390 = vmatprep.subr.mxu0 0.0
    %6391 = vmatpush1.xpose.msra.mxu0 0.0
    %6392 = vmatprep.subr.mxu0 0.0
    %6393 = vmatpush1.xpose.msra.mxu0 0.0
    %6394 = vmatprep.subr.mxu0 0.0
    %6395 = vmatpush1.xpose.msra.mxu0 0.0
    %6396 = vmatprep.subr.mxu0 0.0
    %6397 = vmatpush1.xpose.msra.mxu0 0.0
    %6398 = vmatprep.subr.mxu0 0.0
    %6399 = vmatpush1.xpose.msra.mxu0 0.0
    %6400 = vmatprep.subr.mxu0 0.0
    %6401 = vmatpush1.xpose.msra.mxu0 0.0
    %6402 = vmatprep.subr.mxu0 0.0
    %6403 = vmatpush1.xpose.msra.mxu0 0.0
    %6404 = vmatprep.subr.mxu0 0.0
    %6405 = vmatpush1.xpose.msra.mxu0 0.0
    %6406 = vmatprep.mubr.f32.mxu0 0.0
    %6407 = vmatmul.mubr.f32.gmra.mrb[0].mxu0 %v6337
    %v6408 = vpop.f32.mrb[0].mxu0
    %v6409 = vadd.f32 0.0, %v6408
    %v6410 = vpop.f32.mrb[0].mxu0
    %6411 = vdwg.mxu0
    %v6413 = vsel %vm1995, %v4595, 0
    %v6416 = vsel %vm1995, %v5245, 0
    %6418 = vmatprep.subr.mxu0 0.0
    %6419 = vmatpush1.xpose.msra.mxu0 %v6416
    %6420 = vmatprep.subr.mxu0 0.0
    %6421 = vmatpush1.xpose.msra.mxu0 0.0
    %6422 = vmatprep.subr.mxu0 0.0
    %6423 = vmatpush1.xpose.msra.mxu0 0.0
    %6424 = vmatprep.subr.mxu0 0.0
    %6425 = vmatpush1.xpose.msra.mxu0 0.0
    %6426 = vmatprep.subr.mxu0 0.0
    %6427 = vmatpush1.xpose.msra.mxu0 0.0
    %6428 = vmatprep.subr.mxu0 0.0
    %6429 = vmatpush1.xpose.msra.mxu0 0.0
    %6430 = vmatprep.subr.mxu0 0.0
    %6431 = vmatpush1.xpose.msra.mxu0 0.0
    %6432 = vmatprep.subr.mxu0 0.0
    %6433 = vmatpush1.xpose.msra.mxu0 0.0
    %6434 = vmatprep.subr.mxu0 0.0
    %6435 = vmatpush1.xpose.msra.mxu0 0.0
    %6436 = vmatprep.subr.mxu0 0.0
    %6437 = vmatpush1.xpose.msra.mxu0 0.0
    %6438 = vmatprep.subr.mxu0 0.0
    %6439 = vmatpush1.xpose.msra.mxu0 0.0
    %6440 = vmatprep.subr.mxu0 0.0
    %6441 = vmatpush1.xpose.msra.mxu0 0.0
    %6442 = vmatprep.subr.mxu0 0.0
    %6443 = vmatpush1.xpose.msra.mxu0 0.0
    %6444 = vmatprep.subr.mxu0 0.0
    %6445 = vmatpush1.xpose.msra.mxu0 0.0
    %6446 = vmatprep.subr.mxu0 0.0
    %6447 = vmatpush1.xpose.msra.mxu0 0.0
    %6448 = vmatprep.subr.mxu0 0.0
    %6449 = vmatpush1.xpose.msra.mxu0 0.0
    %6450 = vmatprep.subr.mxu0 0.0
    %6451 = vmatpush1.xpose.msra.mxu0 0.0
    %6452 = vmatprep.subr.mxu0 0.0
    %6453 = vmatpush1.xpose.msra.mxu0 0.0
    %6454 = vmatprep.subr.mxu0 0.0
    %6455 = vmatpush1.xpose.msra.mxu0 0.0
    %6456 = vmatprep.subr.mxu0 0.0
    %6457 = vmatpush1.xpose.msra.mxu0 0.0
    %6458 = vmatprep.subr.mxu0 0.0
    %6459 = vmatpush1.xpose.msra.mxu0 0.0
    %6460 = vmatprep.subr.mxu0 0.0
    %6461 = vmatpush1.xpose.msra.mxu0 0.0
    %6462 = vmatprep.subr.mxu0 0.0
    %6463 = vmatpush1.xpose.msra.mxu0 0.0
    %6464 = vmatprep.subr.mxu0 0.0
    %6465 = vmatpush1.xpose.msra.mxu0 0.0
    %6466 = vmatprep.subr.mxu0 0.0
    %6467 = vmatpush1.xpose.msra.mxu0 0.0
    %6468 = vmatprep.subr.mxu0 0.0
    %6469 = vmatpush1.xpose.msra.mxu0 0.0
    %6470 = vmatprep.subr.mxu0 0.0
    %6471 = vmatpush1.xpose.msra.mxu0 0.0
    %6472 = vmatprep.subr.mxu0 0.0
    %6473 = vmatpush1.xpose.msra.mxu0 0.0
    %6474 = vmatprep.subr.mxu0 0.0
    %6475 = vmatpush1.xpose.msra.mxu0 0.0
    %6476 = vmatprep.subr.mxu0 0.0
    %6477 = vmatpush1.xpose.msra.mxu0 0.0
    %6478 = vmatprep.subr.mxu0 0.0
    %6479 = vmatpush1.xpose.msra.mxu0 0.0
    %6480 = vmatprep.subr.mxu0 0.0
    %6481 = vmatpush1.xpose.msra.mxu0 0.0
    %6482 = vmatprep.mubr.f32.mxu0 0.0
    %6483 = vmatmul.mubr.f32.gmra.mrb[0].mxu0 %v6413
    %v6484 = vpop.f32.mrb[0].mxu0
    %v6485 = vadd.f32 0.0, %v6484
    %v6486 = vpop.f32.mrb[0].mxu0
    %6487 = vdwg.mxu0
    %v6489 = vsel %vm1995, %v4665, 0
    %v6492 = vsel %vm1995, %v5315, 0
    %6494 = vmatprep.subr.mxu0 0.0
    %6495 = vmatpush1.xpose.msra.mxu0 %v6492
    %6496 = vmatprep.subr.mxu0 0.0
    %6497 = vmatpush1.xpose.msra.mxu0 0.0
    %6498 = vmatprep.subr.mxu0 0.0
    %6499 = vmatpush1.xpose.msra.mxu0 0.0
    %6500 = vmatprep.subr.mxu0 0.0
    %6501 = vmatpush1.xpose.msra.mxu0 0.0
    %6502 = vmatprep.subr.mxu0 0.0
    %6503 = vmatpush1.xpose.msra.mxu0 0.0
    %6504 = vmatprep.subr.mxu0 0.0
    %6505 = vmatpush1.xpose.msra.mxu0 0.0
    %6506 = vmatprep.subr.mxu0 0.0
    %6507 = vmatpush1.xpose.msra.mxu0 0.0
    %6508 = vmatprep.subr.mxu0 0.0
    %6509 = vmatpush1.xpose.msra.mxu0 0.0
    %6510 = vmatprep.subr.mxu0 0.0
    %6511 = vmatpush1.xpose.msra.mxu0 0.0
    %6512 = vmatprep.subr.mxu0 0.0
    %6513 = vmatpush1.xpose.msra.mxu0 0.0
    %6514 = vmatprep.subr.mxu0 0.0
    %6515 = vmatpush1.xpose.msra.mxu0 0.0
    %6516 = vmatprep.subr.mxu0 0.0
    %6517 = vmatpush1.xpose.msra.mxu0 0.0
    %6518 = vmatprep.subr.mxu0 0.0
    %6519 = vmatpush1.xpose.msra.mxu0 0.0
    %6520 = vmatprep.subr.mxu0 0.0
    %6521 = vmatpush1.xpose.msra.mxu0 0.0
    %6522 = vmatprep.subr.mxu0 0.0
    %6523 = vmatpush1.xpose.msra.mxu0 0.0
    %6524 = vmatprep.subr.mxu0 0.0
    %6525 = vmatpush1.xpose.msra.mxu0 0.0
    %6526 = vmatprep.subr.mxu0 0.0
    %6527 = vmatpush1.xpose.msra.mxu0 0.0
    %6528 = vmatprep.subr.mxu0 0.0
    %6529 = vmatpush1.xpose.msra.mxu0 0.0
    %6530 = vmatprep.subr.mxu0 0.0
    %6531 = vmatpush1.xpose.msra.mxu0 0.0
    %6532 = vmatprep.subr.mxu0 0.0
    %6533 = vmatpush1.xpose.msra.mxu0 0.0
    %6534 = vmatprep.subr.mxu0 0.0
    %6535 = vmatpush1.xpose.msra.mxu0 0.0
    %6536 = vmatprep.subr.mxu0 0.0
    %6537 = vmatpush1.xpose.msra.mxu0 0.0
    %6538 = vmatprep.subr.mxu0 0.0
    %6539 = vmatpush1.xpose.msra.mxu0 0.0
    %6540 = vmatprep.subr.mxu0 0.0
    %6541 = vmatpush1.xpose.msra.mxu0 0.0
    %6542 = vmatprep.subr.mxu0 0.0
    %6543 = vmatpush1.xpose.msra.mxu0 0.0
    %6544 = vmatprep.subr.mxu0 0.0
    %6545 = vmatpush1.xpose.msra.mxu0 0.0
    %6546 = vmatprep.subr.mxu0 0.0
    %6547 = vmatpush1.xpose.msra.mxu0 0.0
    %6548 = vmatprep.subr.mxu0 0.0
    %6549 = vmatpush1.xpose.msra.mxu0 0.0
    %6550 = vmatprep.subr.mxu0 0.0
    %6551 = vmatpush1.xpose.msra.mxu0 0.0
    %6552 = vmatprep.subr.mxu0 0.0
    %6553 = vmatpush1.xpose.msra.mxu0 0.0
    %6554 = vmatprep.subr.mxu0 0.0
    %6555 = vmatpush1.xpose.msra.mxu0 0.0
    %6556 = vmatprep.subr.mxu0 0.0
    %6557 = vmatpush1.xpose.msra.mxu0 0.0
    %6558 = vmatprep.mubr.f32.mxu0 0.0
    %6559 = vmatmul.mubr.f32.gmra.mrb[0].mxu0 %v6489
    %v6560 = vpop.f32.mrb[0].mxu0
    %v6561 = vadd.f32 0.0, %v6560
    %v6562 = vpop.f32.mrb[0].mxu0
    %6563 = vdwg.mxu0
    %v6565 = vsel %vm1995, %v4735, 0
    %v6568 = vsel %vm1995, %v5385, 0
    %6570 = vmatprep.subr.mxu0 0.0
    %6571 = vmatpush1.xpose.msra.mxu0 %v6568
    %6572 = vmatprep.subr.mxu0 0.0
    %6573 = vmatpush1.xpose.msra.mxu0 0.0
    %6574 = vmatprep.subr.mxu0 0.0
    %6575 = vmatpush1.xpose.msra.mxu0 0.0
    %6576 = vmatprep.subr.mxu0 0.0
    %6577 = vmatpush1.xpose.msra.mxu0 0.0
    %6578 = vmatprep.subr.mxu0 0.0
    %6579 = vmatpush1.xpose.msra.mxu0 0.0
    %6580 = vmatprep.subr.mxu0 0.0
    %6581 = vmatpush1.xpose.msra.mxu0 0.0
    %6582 = vmatprep.subr.mxu0 0.0
    %6583 = vmatpush1.xpose.msra.mxu0 0.0
    %6584 = vmatprep.subr.mxu0 0.0
    %6585 = vmatpush1.xpose.msra.mxu0 0.0
    %6586 = vmatprep.subr.mxu0 0.0
    %6587 = vmatpush1.xpose.msra.mxu0 0.0
    %6588 = vmatprep.subr.mxu0 0.0
    %6589 = vmatpush1.xpose.msra.mxu0 0.0
    %6590 = vmatprep.subr.mxu0 0.0
    %6591 = vmatpush1.xpose.msra.mxu0 0.0
    %6592 = vmatprep.subr.mxu0 0.0
    %6593 = vmatpush1.xpose.msra.mxu0 0.0
    %6594 = vmatprep.subr.mxu0 0.0
    %6595 = vmatpush1.xpose.msra.mxu0 0.0
    %6596 = vmatprep.subr.mxu0 0.0
    %6597 = vmatpush1.xpose.msra.mxu0 0.0
    %6598 = vmatprep.subr.mxu0 0.0
    %6599 = vmatpush1.xpose.msra.mxu0 0.0
    %6600 = vmatprep.subr.mxu0 0.0
    %6601 = vmatpush1.xpose.msra.mxu0 0.0
    %6602 = vmatprep.subr.mxu0 0.0
    %6603 = vmatpush1.xpose.msra.mxu0 0.0
    %6604 = vmatprep.subr.mxu0 0.0
    %6605 = vmatpush1.xpose.msra.mxu0 0.0
    %6606 = vmatprep.subr.mxu0 0.0
    %6607 = vmatpush1.xpose.msra.mxu0 0.0
    %6608 = vmatprep.subr.mxu0 0.0
    %6609 = vmatpush1.xpose.msra.mxu0 0.0
    %6610 = vmatprep.subr.mxu0 0.0
    %6611 = vmatpush1.xpose.msra.mxu0 0.0
    %6612 = vmatprep.subr.mxu0 0.0
    %6613 = vmatpush1.xpose.msra.mxu0 0.0
    %6614 = vmatprep.subr.mxu0 0.0
    %6615 = vmatpush1.xpose.msra.mxu0 0.0
    %6616 = vmatprep.subr.mxu0 0.0
    %6617 = vmatpush1.xpose.msra.mxu0 0.0
    %6618 = vmatprep.subr.mxu0 0.0
    %6619 = vmatpush1.xpose.msra.mxu0 0.0
    %6620 = vmatprep.subr.mxu0 0.0
    %6621 = vmatpush1.xpose.msra.mxu0 0.0
    %6622 = vmatprep.subr.mxu0 0.0
    %6623 = vmatpush1.xpose.msra.mxu0 0.0
    %6624 = vmatprep.subr.mxu0 0.0
    %6625 = vmatpush1.xpose.msra.mxu0 0.0
    %6626 = vmatprep.subr.mxu0 0.0
    %6627 = vmatpush1.xpose.msra.mxu0 0.0
    %6628 = vmatprep.subr.mxu0 0.0
    %6629 = vmatpush1.xpose.msra.mxu0 0.0
    %6630 = vmatprep.subr.mxu0 0.0
    %6631 = vmatpush1.xpose.msra.mxu0 0.0
    %6632 = vmatprep.subr.mxu0 0.0
    %6633 = vmatpush1.xpose.msra.mxu0 0.0
    %6634 = vmatprep.mubr.f32.mxu0 0.0
    %6635 = vmatmul.mubr.f32.gmra.mrb[0].mxu0 %v6565
    %v6636 = vpop.f32.mrb[0].mxu0
    %v6637 = vadd.f32 0.0, %v6636
    %v6638 = vpop.f32.mrb[0].mxu0
    %6639 = vdwg.mxu0
    %v6641 = vsel %vm1995, %v4805, 0
    %v6644 = vsel %vm1995, %v5455, 0
    %6646 = vmatprep.subr.mxu0 0.0
    %6647 = vmatpush1.xpose.msra.mxu0 %v6644
    %6648 = vmatprep.subr.mxu0 0.0
    %6649 = vmatpush1.xpose.msra.mxu0 0.0
    %6650 = vmatprep.subr.mxu0 0.0
    %6651 = vmatpush1.xpose.msra.mxu0 0.0
    %6652 = vmatprep.subr.mxu0 0.0
    %6653 = vmatpush1.xpose.msra.mxu0 0.0
    %6654 = vmatprep.subr.mxu0 0.0
    %6655 = vmatpush1.xpose.msra.mxu0 0.0
    %6656 = vmatprep.subr.mxu0 0.0
    %6657 = vmatpush1.xpose.msra.mxu0 0.0
    %6658 = vmatprep.subr.mxu0 0.0
    %6659 = vmatpush1.xpose.msra.mxu0 0.0
    %6660 = vmatprep.subr.mxu0 0.0
    %6661 = vmatpush1.xpose.msra.mxu0 0.0
    %6662 = vmatprep.subr.mxu0 0.0
    %6663 = vmatpush1.xpose.msra.mxu0 0.0
    %6664 = vmatprep.subr.mxu0 0.0
    %6665 = vmatpush1.xpose.msra.mxu0 0.0
    %6666 = vmatprep.subr.mxu0 0.0
    %6667 = vmatpush1.xpose.msra.mxu0 0.0
    %6668 = vmatprep.subr.mxu0 0.0
    %6669 = vmatpush1.xpose.msra.mxu0 0.0
    %6670 = vmatprep.subr.mxu0 0.0
    %6671 = vmatpush1.xpose.msra.mxu0 0.0
    %6672 = vmatprep.subr.mxu0 0.0
    %6673 = vmatpush1.xpose.msra.mxu0 0.0
    %6674 = vmatprep.subr.mxu0 0.0
    %6675 = vmatpush1.xpose.msra.mxu0 0.0
    %6676 = vmatprep.subr.mxu0 0.0
    %6677 = vmatpush1.xpose.msra.mxu0 0.0
    %6678 = vmatprep.subr.mxu0 0.0
    %6679 = vmatpush1.xpose.msra.mxu0 0.0
    %6680 = vmatprep.subr.mxu0 0.0
    %6681 = vmatpush1.xpose.msra.mxu0 0.0
    %6682 = vmatprep.subr.mxu0 0.0
    %6683 = vmatpush1.xpose.msra.mxu0 0.0
    %6684 = vmatprep.subr.mxu0 0.0
    %6685 = vmatpush1.xpose.msra.mxu0 0.0
    %6686 = vmatprep.subr.mxu0 0.0
    %6687 = vmatpush1.xpose.msra.mxu0 0.0
    %6688 = vmatprep.subr.mxu0 0.0
    %6689 = vmatpush1.xpose.msra.mxu0 0.0
    %6690 = vmatprep.subr.mxu0 0.0
    %6691 = vmatpush1.xpose.msra.mxu0 0.0
    %6692 = vmatprep.subr.mxu0 0.0
    %6693 = vmatpush1.xpose.msra.mxu0 0.0
    %6694 = vmatprep.subr.mxu0 0.0
    %6695 = vmatpush1.xpose.msra.mxu0 0.0
    %6696 = vmatprep.subr.mxu0 0.0
    %6697 = vmatpush1.xpose.msra.mxu0 0.0
    %6698 = vmatprep.subr.mxu0 0.0
    %6699 = vmatpush1.xpose.msra.mxu0 0.0
    %6700 = vmatprep.subr.mxu0 0.0
    %6701 = vmatpush1.xpose.msra.mxu0 0.0
    %6702 = vmatprep.subr.mxu0 0.0
    %6703 = vmatpush1.xpose.msra.mxu0 0.0
    %6704 = vmatprep.subr.mxu0 0.0
    %6705 = vmatpush1.xpose.msra.mxu0 0.0
    %6706 = vmatprep.subr.mxu0 0.0
    %6707 = vmatpush1.xpose.msra.mxu0 0.0
    %6708 = vmatprep.subr.mxu0 0.0
    %6709 = vmatpush1.xpose.msra.mxu0 0.0
    %6710 = vmatprep.mubr.f32.mxu0 0.0
    %6711 = vmatmul.mubr.f32.gmra.mrb[0].mxu0 %v6641
    %v6712 = vpop.f32.mrb[0].mxu0
    %v6713 = vadd.f32 0.0, %v6712
    %v6714 = vpop.f32.mrb[0].mxu0
    %6715 = vdwg.mxu0
    %v6716 = vsel %vm1995, %v6181, -inf
    %6717 = vmax.xlane.f32.xlu0 %v6716
    %v6718 = vpop.xlane.xlu0 %6717
    %v6719 = vsel %vm1995, %v6257, -inf
    %6720 = vmax.xlane.f32.xlu0 %v6719
    %v6721 = vpop.xlane.xlu0 %6720
    %v6722 = vsel %vm1995, %v6333, -inf
    %6723 = vmax.xlane.f32.xlu0 %v6722
    %v6724 = vpop.xlane.xlu0 %6723
    %v6725 = vsel %vm1995, %v6409, -inf
    %6726 = vmax.xlane.f32.xlu0 %v6725
    %v6727 = vpop.xlane.xlu0 %6726
    %v6728 = vsel %vm1995, %v6485, -inf
    %6729 = vmax.xlane.f32.xlu0 %v6728
    %v6730 = vpop.xlane.xlu0 %6729
    %v6731 = vsel %vm1995, %v6561, -inf
    %6732 = vmax.xlane.f32.xlu0 %v6731
    %v6733 = vpop.xlane.xlu0 %6732
    %v6734 = vsel %vm1995, %v6637, -inf
    %6735 = vmax.xlane.f32.xlu0 %v6734
    %v6736 = vpop.xlane.xlu0 %6735
    %v6737 = vsel %vm1995, %v6713, -inf
    %6738 = vmax.xlane.f32.xlu0 %v6737
    %v6739 = vpop.xlane.xlu0 %6738
    %v6740 = vsub.f32 %v6181, %v6718
    %v6741 = vsub.f32 %v6257, %v6721
    %v6742 = vsub.f32 %v6333, %v6724
    %v6743 = vsub.f32 %v6409, %v6727
    %v6744 = vsub.f32 %v6485, %v6730
    %v6745 = vsub.f32 %v6561, %v6733
    %v6746 = vsub.f32 %v6637, %v6736
    %v6747 = vsub.f32 %v6713, %v6739
    %v6748 = vmul.f32 %v6740, 1.442695
    %v6749 = vpow.pop %v6748
    %v6750 = vmul.f32 %v6741, 1.442695
    %v6751 = vpow.pop %v6750
    %v6752 = vmul.f32 %v6742, 1.442695
    %v6753 = vpow.pop %v6752
    %v6754 = vmul.f32 %v6743, 1.442695
    %v6755 = vpow.pop %v6754
    %v6756 = vmul.f32 %v6744, 1.442695
    %v6757 = vpow.pop %v6756
    %v6758 = vmul.f32 %v6745, 1.442695
    %v6759 = vpow.pop %v6758
    %v6760 = vmul.f32 %v6746, 1.442695
    %v6761 = vpow.pop %v6760
    %v6762 = vmul.f32 %v6747, 1.442695
    %v6763 = vpow.pop %v6762
    %v6764 = vsel %vm1995, %v6749, 0.0
    %6765 = vadd.xlane.f32.xlu0 %v6764
    %v6766 = vpop.xlane.xlu0 %6765
    %v6767 = vsel %vm1995, %v6751, 0.0
    %6768 = vadd.xlane.f32.xlu0 %v6767
    %v6769 = vpop.xlane.xlu0 %6768
    %v6770 = vsel %vm1995, %v6753, 0.0
    %6771 = vadd.xlane.f32.xlu0 %v6770
    %v6772 = vpop.xlane.xlu0 %6771
    %v6773 = vsel %vm1995, %v6755, 0.0
    %6774 = vadd.xlane.f32.xlu0 %v6773
    %v6775 = vpop.xlane.xlu0 %6774
    %v6776 = vsel %vm1995, %v6757, 0.0
    %6777 = vadd.xlane.f32.xlu0 %v6776
    %v6778 = vpop.xlane.xlu0 %6777
    %v6779 = vsel %vm1995, %v6759, 0.0
    %6780 = vadd.xlane.f32.xlu0 %v6779
    %v6781 = vpop.xlane.xlu0 %6780
    %v6782 = vsel %vm1995, %v6761, 0.0
    %6783 = vadd.xlane.f32.xlu0 %v6782
    %v6784 = vpop.xlane.xlu0 %6783
    %v6785 = vsel %vm1995, %v6763, 0.0
    %6786 = vadd.xlane.f32.xlu0 %v6785
    %v6787 = vpop.xlane.xlu0 %6786
    %v6788 = vrcp.pop %v6766
    %v6789 = vrcp.pop %v6769
    %v6790 = vrcp.pop %v6772
    %v6791 = vrcp.pop %v6775
    %v6792 = vrcp.pop %v6778
    %v6793 = vrcp.pop %v6781
    %v6794 = vrcp.pop %v6784
    %v6795 = vrcp.pop %v6787
    %v6796 = vmul.f32 %v6749, %v6788
    %v6797 = vmul.f32 %v6751, %v6789
    %v6798 = vmul.f32 %v6753, %v6790
    %v6799 = vmul.f32 %v6755, %v6791
    %v6800 = vmul.f32 %v6757, %v6792
    %v6801 = vmul.f32 %v6759, %v6793
    %v6802 = vmul.f32 %v6761, %v6794
    %v6803 = vmul.f32 %v6763, %v6795
    %v6805 = vsel %vm1995, %v6796, 0
    %6807 = vmatprep.subr.mxu0 0.0
    %6808 = vmatpush1.msra.mxu0 %v5615
    %6809 = vmatprep.subr.mxu0 0.0
    %6810 = vmatpush1.msra.mxu0 0.0
    %6811 = vmatprep.subr.mxu0 0.0
    %6812 = vmatpush1.msra.mxu0 0.0
    %6813 = vmatprep.subr.mxu0 0.0
    %6814 = vmatpush1.msra.mxu0 0.0
    %6815 = vmatprep.subr.mxu0 0.0
    %6816 = vmatpush1.msra.mxu0 0.0
    %6817 = vmatprep.subr.mxu0 0.0
    %6818 = vmatpush1.msra.mxu0 0.0
    %6819 = vmatprep.subr.mxu0 0.0
    %6820 = vmatpush1.msra.mxu0 0.0
    %6821 = vmatprep.subr.mxu0 0.0
    %6822 = vmatpush1.msra.mxu0 0.0
    %6823 = vmatprep.subr.mxu0 0.0
    %6824 = vmatpush1.msra.mxu0 0.0
    %6825 = vmatprep.subr.mxu0 0.0
    %6826 = vmatpush1.msra.mxu0 0.0
    %6827 = vmatprep.subr.mxu0 0.0
    %6828 = vmatpush1.msra.mxu0 0.0
    %6829 = vmatprep.subr.mxu0 0.0
    %6830 = vmatpush1.msra.mxu0 0.0
    %6831 = vmatprep.subr.mxu0 0.0
    %6832 = vmatpush1.msra.mxu0 0.0
    %6833 = vmatprep.subr.mxu0 0.0
    %6834 = vmatpush1.msra.mxu0 0.0
    %6835 = vmatprep.subr.mxu0 0.0
    %6836 = vmatpush1.msra.mxu0 0.0
    %6837 = vmatprep.subr.mxu0 0.0
    %6838 = vmatpush1.msra.mxu0 0.0
    %6839 = vmatprep.subr.mxu0 0.0
    %6840 = vmatpush1.msra.mxu0 0.0
    %6841 = vmatprep.subr.mxu0 0.0
    %6842 = vmatpush1.msra.mxu0 0.0
    %6843 = vmatprep.subr.mxu0 0.0
    %6844 = vmatpush1.msra.mxu0 0.0
    %6845 = vmatprep.subr.mxu0 0.0
    %6846 = vmatpush1.msra.mxu0 0.0
    %6847 = vmatprep.subr.mxu0 0.0
    %6848 = vmatpush1.msra.mxu0 0.0
    %6849 = vmatprep.subr.mxu0 0.0
    %6850 = vmatpush1.msra.mxu0 0.0
    %6851 = vmatprep.subr.mxu0 0.0
    %6852 = vmatpush1.msra.mxu0 0.0
    %6853 = vmatprep.subr.mxu0 0.0
    %6854 = vmatpush1.msra.mxu0 0.0
    %6855 = vmatprep.subr.mxu0 0.0
    %6856 = vmatpush1.msra.mxu0 0.0
    %6857 = vmatprep.subr.mxu0 0.0
    %6858 = vmatpush1.msra.mxu0 0.0
    %6859 = vmatprep.subr.mxu0 0.0
    %6860 = vmatpush1.msra.mxu0 0.0
    %6861 = vmatprep.subr.mxu0 0.0
    %6862 = vmatpush1.msra.mxu0 0.0
    %6863 = vmatprep.subr.mxu0 0.0
    %6864 = vmatpush1.msra.mxu0 0.0
    %6865 = vmatprep.subr.mxu0 0.0
    %6866 = vmatpush1.msra.mxu0 0.0
    %6867 = vmatprep.subr.mxu0 0.0
    %6868 = vmatpush1.msra.mxu0 0.0
    %6869 = vmatprep.subr.mxu0 0.0
    %6870 = vmatpush1.msra.mxu0 0.0
    %6871 = vmatprep.mubr.f32.mxu0 0.0
    %6872 = vmatmul.mubr.f32.gmra.mrb[0].mxu0 %v6805
    %v6873 = vpop.f32.mrb[0].mxu0
    %v6874 = vadd.f32 0.0, %v6873
    %v6875 = vpop.f32.mrb[0].mxu0
    %6876 = vdwg.mxu0
    %v6878 = vsel %vm1995, %v6797, 0
    %6880 = vmatprep.subr.mxu0 0.0
    %6881 = vmatpush1.msra.mxu0 %v5685
    %6882 = vmatprep.subr.mxu0 0.0
    %6883 = vmatpush1.msra.mxu0 0.0
    %6884 = vmatprep.subr.mxu0 0.0
    %6885 = vmatpush1.msra.mxu0 0.0
    %6886 = vmatprep.subr.mxu0 0.0
    %6887 = vmatpush1.msra.mxu0 0.0
    %6888 = vmatprep.subr.mxu0 0.0
    %6889 = vmatpush1.msra.mxu0 0.0
    %6890 = vmatprep.subr.mxu0 0.0
    %6891 = vmatpush1.msra.mxu0 0.0
    %6892 = vmatprep.subr.mxu0 0.0
    %6893 = vmatpush1.msra.mxu0 0.0
    %6894 = vmatprep.subr.mxu0 0.0
    %6895 = vmatpush1.msra.mxu0 0.0
    %6896 = vmatprep.subr.mxu0 0.0
    %6897 = vmatpush1.msra.mxu0 0.0
    %6898 = vmatprep.subr.mxu0 0.0
    %6899 = vmatpush1.msra.mxu0 0.0
    %6900 = vmatprep.subr.mxu0 0.0
    %6901 = vmatpush1.msra.mxu0 0.0
    %6902 = vmatprep.subr.mxu0 0.0
    %6903 = vmatpush1.msra.mxu0 0.0
    %6904 = vmatprep.subr.mxu0 0.0
    %6905 = vmatpush1.msra.mxu0 0.0
    %6906 = vmatprep.subr.mxu0 0.0
    %6907 = vmatpush1.msra.mxu0 0.0
    %6908 = vmatprep.subr.mxu0 0.0
    %6909 = vmatpush1.msra.mxu0 0.0
    %6910 = vmatprep.subr.mxu0 0.0
    %6911 = vmatpush1.msra.mxu0 0.0
    %6912 = vmatprep.subr.mxu0 0.0
    %6913 = vmatpush1.msra.mxu0 0.0
    %6914 = vmatprep.subr.mxu0 0.0
    %6915 = vmatpush1.msra.mxu0 0.0
    %6916 = vmatprep.subr.mxu0 0.0
    %6917 = vmatpush1.msra.mxu0 0.0
    %6918 = vmatprep.subr.mxu0 0.0
    %6919 = vmatpush1.msra.mxu0 0.0
    %6920 = vmatprep.subr.mxu0 0.0
    %6921 = vmatpush1.msra.mxu0 0.0
    %6922 = vmatprep.subr.mxu0 0.0
    %6923 = vmatpush1.msra.mxu0 0.0
    %6924 = vmatprep.subr.mxu0 0.0
    %6925 = vmatpush1.msra.mxu0 0.0
    %6926 = vmatprep.subr.mxu0 0.0
    %6927 = vmatpush1.msra.mxu0 0.0
    %6928 = vmatprep.subr.mxu0 0.0
    %6929 = vmatpush1.msra.mxu0 0.0
    %6930 = vmatprep.subr.mxu0 0.0
    %6931 = vmatpush1.msra.mxu0 0.0
    %6932 = vmatprep.subr.mxu0 0.0
    %6933 = vmatpush1.msra.mxu0 0.0
    %6934 = vmatprep.subr.mxu0 0.0
    %6935 = vmatpush1.msra.mxu0 0.0
    %6936 = vmatprep.subr.mxu0 0.0
    %6937 = vmatpush1.msra.mxu0 0.0
    %6938 = vmatprep.subr.mxu0 0.0
    %6939 = vmatpush1.msra.mxu0 0.0
    %6940 = vmatprep.subr.mxu0 0.0
    %6941 = vmatpush1.msra.mxu0 0.0
    %6942 = vmatprep.subr.mxu0 0.0
    %6943 = vmatpush1.msra.mxu0 0.0
    %6944 = vmatprep.mubr.f32.mxu0 0.0
    %6945 = vmatmul.mubr.f32.gmra.mrb[0].mxu0 %v6878
    %v6946 = vpop.f32.mrb[0].mxu0
    %v6947 = vadd.f32 0.0, %v6946
    %v6948 = vpop.f32.mrb[0].mxu0
    %6949 = vdwg.mxu0
    %v6951 = vsel %vm1995, %v6798, 0
    %6953 = vmatprep.subr.mxu0 0.0
    %6954 = vmatpush1.msra.mxu0 %v5755
    %6955 = vmatprep.subr.mxu0 0.0
    %6956 = vmatpush1.msra.mxu0 0.0
    %6957 = vmatprep.subr.mxu0 0.0
    %6958 = vmatpush1.msra.mxu0 0.0
    %6959 = vmatprep.subr.mxu0 0.0
    %6960 = vmatpush1.msra.mxu0 0.0
    %6961 = vmatprep.subr.mxu0 0.0
    %6962 = vmatpush1.msra.mxu0 0.0
    %6963 = vmatprep.subr.mxu0 0.0
    %6964 = vmatpush1.msra.mxu0 0.0
    %6965 = vmatprep.subr.mxu0 0.0
    %6966 = vmatpush1.msra.mxu0 0.0
    %6967 = vmatprep.subr.mxu0 0.0
    %6968 = vmatpush1.msra.mxu0 0.0
    %6969 = vmatprep.subr.mxu0 0.0
    %6970 = vmatpush1.msra.mxu0 0.0
    %6971 = vmatprep.subr.mxu0 0.0
    %6972 = vmatpush1.msra.mxu0 0.0
    %6973 = vmatprep.subr.mxu0 0.0
    %6974 = vmatpush1.msra.mxu0 0.0
    %6975 = vmatprep.subr.mxu0 0.0
    %6976 = vmatpush1.msra.mxu0 0.0
    %6977 = vmatprep.subr.mxu0 0.0
    %6978 = vmatpush1.msra.mxu0 0.0
    %6979 = vmatprep.subr.mxu0 0.0
    %6980 = vmatpush1.msra.mxu0 0.0
    %6981 = vmatprep.subr.mxu0 0.0
    %6982 = vmatpush1.msra.mxu0 0.0
    %6983 = vmatprep.subr.mxu0 0.0
    %6984 = vmatpush1.msra.mxu0 0.0
    %6985 = vmatprep.subr.mxu0 0.0
    %6986 = vmatpush1.msra.mxu0 0.0
    %6987 = vmatprep.subr.mxu0 0.0
    %6988 = vmatpush1.msra.mxu0 0.0
    %6989 = vmatprep.subr.mxu0 0.0
    %6990 = vmatpush1.msra.mxu0 0.0
    %6991 = vmatprep.subr.mxu0 0.0
    %6992 = vmatpush1.msra.mxu0 0.0
    %6993 = vmatprep.subr.mxu0 0.0
    %6994 = vmatpush1.msra.mxu0 0.0
    %6995 = vmatprep.subr.mxu0 0.0
    %6996 = vmatpush1.msra.mxu0 0.0
    %6997 = vmatprep.subr.mxu0 0.0
    %6998 = vmatpush1.msra.mxu0 0.0
    %6999 = vmatprep.subr.mxu0 0.0
    %7000 = vmatpush1.msra.mxu0 0.0
    %7001 = vmatprep.subr.mxu0 0.0
    %7002 = vmatpush1.msra.mxu0 0.0
    %7003 = vmatprep.subr.mxu0 0.0
    %7004 = vmatpush1.msra.mxu0 0.0
    %7005 = vmatprep.subr.mxu0 0.0
    %7006 = vmatpush1.msra.mxu0 0.0
    %7007 = vmatprep.subr.mxu0 0.0
    %7008 = vmatpush1.msra.mxu0 0.0
    %7009 = vmatprep.subr.mxu0 0.0
    %7010 = vmatpush1.msra.mxu0 0.0
    %7011 = vmatprep.subr.mxu0 0.0
    %7012 = vmatpush1.msra.mxu0 0.0
    %7013 = vmatprep.subr.mxu0 0.0
    %7014 = vmatpush1.msra.mxu0 0.0
    %7015 = vmatprep.subr.mxu0 0.0
    %7016 = vmatpush1.msra.mxu0 0.0
    %7017 = vmatprep.mubr.f32.mxu0 0.0
    %7018 = vmatmul.mubr.f32.gmra.mrb[0].mxu0 %v6951
    %v7019 = vpop.f32.mrb[0].mxu0
    %v7020 = vadd.f32 0.0, %v7019
    %v7021 = vpop.f32.mrb[0].mxu0
    %7022 = vdwg.mxu0
    %v7024 = vsel %vm1995, %v6799, 0
    %7026 = vmatprep.subr.mxu0 0.0
    %7027 = vmatpush1.msra.mxu0 %v5825
    %7028 = vmatprep.subr.mxu0 0.0
    %7029 = vmatpush1.msra.mxu0 0.0
    %7030 = vmatprep.subr.mxu0 0.0
    %7031 = vmatpush1.msra.mxu0 0.0
    %7032 = vmatprep.subr.mxu0 0.0
    %7033 = vmatpush1.msra.mxu0 0.0
    %7034 = vmatprep.subr.mxu0 0.0
    %7035 = vmatpush1.msra.mxu0 0.0
    %7036 = vmatprep.subr.mxu0 0.0
    %7037 = vmatpush1.msra.mxu0 0.0
    %7038 = vmatprep.subr.mxu0 0.0
    %7039 = vmatpush1.msra.mxu0 0.0
    %7040 = vmatprep.subr.mxu0 0.0
    %7041 = vmatpush1.msra.mxu0 0.0
    %7042 = vmatprep.subr.mxu0 0.0
    %7043 = vmatpush1.msra.mxu0 0.0
    %7044 = vmatprep.subr.mxu0 0.0
    %7045 = vmatpush1.msra.mxu0 0.0
    %7046 = vmatprep.subr.mxu0 0.0
    %7047 = vmatpush1.msra.mxu0 0.0
    %7048 = vmatprep.subr.mxu0 0.0
    %7049 = vmatpush1.msra.mxu0 0.0
    %7050 = vmatprep.subr.mxu0 0.0
    %7051 = vmatpush1.msra.mxu0 0.0
    %7052 = vmatprep.subr.mxu0 0.0
    %7053 = vmatpush1.msra.mxu0 0.0
    %7054 = vmatprep.subr.mxu0 0.0
    %7055 = vmatpush1.msra.mxu0 0.0
    %7056 = vmatprep.subr.mxu0 0.0
    %7057 = vmatpush1.msra.mxu0 0.0
    %7058 = vmatprep.subr.mxu0 0.0
    %7059 = vmatpush1.msra.mxu0 0.0
    %7060 = vmatprep.subr.mxu0 0.0
    %7061 = vmatpush1.msra.mxu0 0.0
    %7062 = vmatprep.subr.mxu0 0.0
    %7063 = vmatpush1.msra.mxu0 0.0
    %7064 = vmatprep.subr.mxu0 0.0
    %7065 = vmatpush1.msra.mxu0 0.0
    %7066 = vmatprep.subr.mxu0 0.0
    %7067 = vmatpush1.msra.mxu0 0.0
    %7068 = vmatprep.subr.mxu0 0.0
    %7069 = vmatpush1.msra.mxu0 0.0
    %7070 = vmatprep.subr.mxu0 0.0
    %7071 = vmatpush1.msra.mxu0 0.0
    %7072 = vmatprep.subr.mxu0 0.0
    %7073 = vmatpush1.msra.mxu0 0.0
    %7074 = vmatprep.subr.mxu0 0.0
    %7075 = vmatpush1.msra.mxu0 0.0
    %7076 = vmatprep.subr.mxu0 0.0
    %7077 = vmatpush1.msra.mxu0 0.0
    %7078 = vmatprep.subr.mxu0 0.0
    %7079 = vmatpush1.msra.mxu0 0.0
    %7080 = vmatprep.subr.mxu0 0.0
    %7081 = vmatpush1.msra.mxu0 0.0
    %7082 = vmatprep.subr.mxu0 0.0
    %7083 = vmatpush1.msra.mxu0 0.0
    %7084 = vmatprep.subr.mxu0 0.0
    %7085 = vmatpush1.msra.mxu0 0.0
    %7086 = vmatprep.subr.mxu0 0.0
    %7087 = vmatpush1.msra.mxu0 0.0
    %7088 = vmatprep.subr.mxu0 0.0
    %7089 = vmatpush1.msra.mxu0 0.0
    %7090 = vmatprep.mubr.f32.mxu0 0.0
    %7091 = vmatmul.mubr.f32.gmra.mrb[0].mxu0 %v7024
    %v7092 = vpop.f32.mrb[0].mxu0
    %v7093 = vadd.f32 0.0, %v7092
    %v7094 = vpop.f32.mrb[0].mxu0
    %7095 = vdwg.mxu0
    %v7097 = vsel %vm1995, %v6800, 0
    %7099 = vmatprep.subr.mxu0 0.0
    %7100 = vmatpush1.msra.mxu0 %v5895
    %7101 = vmatprep.subr.mxu0 0.0
    %7102 = vmatpush1.msra.mxu0 0.0
    %7103 = vmatprep.subr.mxu0 0.0
    %7104 = vmatpush1.msra.mxu0 0.0
    %7105 = vmatprep.subr.mxu0 0.0
    %7106 = vmatpush1.msra.mxu0 0.0
    %7107 = vmatprep.subr.mxu0 0.0
    %7108 = vmatpush1.msra.mxu0 0.0
    %7109 = vmatprep.subr.mxu0 0.0
    %7110 = vmatpush1.msra.mxu0 0.0
    %7111 = vmatprep.subr.mxu0 0.0
    %7112 = vmatpush1.msra.mxu0 0.0
    %7113 = vmatprep.subr.mxu0 0.0
    %7114 = vmatpush1.msra.mxu0 0.0
    %7115 = vmatprep.subr.mxu0 0.0
    %7116 = vmatpush1.msra.mxu0 0.0
    %7117 = vmatprep.subr.mxu0 0.0
    %7118 = vmatpush1.msra.mxu0 0.0
    %7119 = vmatprep.subr.mxu0 0.0
    %7120 = vmatpush1.msra.mxu0 0.0
    %7121 = vmatprep.subr.mxu0 0.0
    %7122 = vmatpush1.msra.mxu0 0.0
    %7123 = vmatprep.subr.mxu0 0.0
    %7124 = vmatpush1.msra.mxu0 0.0
    %7125 = vmatprep.subr.mxu0 0.0
    %7126 = vmatpush1.msra.mxu0 0.0
    %7127 = vmatprep.subr.mxu0 0.0
    %7128 = vmatpush1.msra.mxu0 0.0
    %7129 = vmatprep.subr.mxu0 0.0
    %7130 = vmatpush1.msra.mxu0 0.0
    %7131 = vmatprep.subr.mxu0 0.0
    %7132 = vmatpush1.msra.mxu0 0.0
    %7133 = vmatprep.subr.mxu0 0.0
    %7134 = vmatpush1.msra.mxu0 0.0
    %7135 = vmatprep.subr.mxu0 0.0
    %7136 = vmatpush1.msra.mxu0 0.0
    %7137 = vmatprep.subr.mxu0 0.0
    %7138 = vmatpush1.msra.mxu0 0.0
    %7139 = vmatprep.subr.mxu0 0.0
    %7140 = vmatpush1.msra.mxu0 0.0
    %7141 = vmatprep.subr.mxu0 0.0
    %7142 = vmatpush1.msra.mxu0 0.0
    %7143 = vmatprep.subr.mxu0 0.0
    %7144 = vmatpush1.msra.mxu0 0.0
    %7145 = vmatprep.subr.mxu0 0.0
    %7146 = vmatpush1.msra.mxu0 0.0
    %7147 = vmatprep.subr.mxu0 0.0
    %7148 = vmatpush1.msra.mxu0 0.0
    %7149 = vmatprep.subr.mxu0 0.0
    %7150 = vmatpush1.msra.mxu0 0.0
    %7151 = vmatprep.subr.mxu0 0.0
    %7152 = vmatpush1.msra.mxu0 0.0
    %7153 = vmatprep.subr.mxu0 0.0
    %7154 = vmatpush1.msra.mxu0 0.0
    %7155 = vmatprep.subr.mxu0 0.0
    %7156 = vmatpush1.msra.mxu0 0.0
    %7157 = vmatprep.subr.mxu0 0.0
    %7158 = vmatpush1.msra.mxu0 0.0
    %7159 = vmatprep.subr.mxu0 0.0
    %7160 = vmatpush1.msra.mxu0 0.0
    %7161 = vmatprep.subr.mxu0 0.0
    %7162 = vmatpush1.msra.mxu0 0.0
    %7163 = vmatprep.mubr.f32.mxu0 0.0
    %7164 = vmatmul.mubr.f32.gmra.mrb[0].mxu0 %v7097
    %v7165 = vpop.f32.mrb[0].mxu0
    %v7166 = vadd.f32 0.0, %v7165
    %v7167 = vpop.f32.mrb[0].mxu0
    %7168 = vdwg.mxu0
    %v7170 = vsel %vm1995, %v6801, 0
    %7172 = vmatprep.subr.mxu0 0.0
    %7173 = vmatpush1.msra.mxu0 %v5965
    %7174 = vmatprep.subr.mxu0 0.0
    %7175 = vmatpush1.msra.mxu0 0.0
    %7176 = vmatprep.subr.mxu0 0.0
    %7177 = vmatpush1.msra.mxu0 0.0
    %7178 = vmatprep.subr.mxu0 0.0
    %7179 = vmatpush1.msra.mxu0 0.0
    %7180 = vmatprep.subr.mxu0 0.0
    %7181 = vmatpush1.msra.mxu0 0.0
    %7182 = vmatprep.subr.mxu0 0.0
    %7183 = vmatpush1.msra.mxu0 0.0
    %7184 = vmatprep.subr.mxu0 0.0
    %7185 = vmatpush1.msra.mxu0 0.0
    %7186 = vmatprep.subr.mxu0 0.0
    %7187 = vmatpush1.msra.mxu0 0.0
    %7188 = vmatprep.subr.mxu0 0.0
    %7189 = vmatpush1.msra.mxu0 0.0
    %7190 = vmatprep.subr.mxu0 0.0
    %7191 = vmatpush1.msra.mxu0 0.0
    %7192 = vmatprep.subr.mxu0 0.0
    %7193 = vmatpush1.msra.mxu0 0.0
    %7194 = vmatprep.subr.mxu0 0.0
    %7195 = vmatpush1.msra.mxu0 0.0
    %7196 = vmatprep.subr.mxu0 0.0
    %7197 = vmatpush1.msra.mxu0 0.0
    %7198 = vmatprep.subr.mxu0 0.0
    %7199 = vmatpush1.msra.mxu0 0.0
    %7200 = vmatprep.subr.mxu0 0.0
    %7201 = vmatpush1.msra.mxu0 0.0
    %7202 = vmatprep.subr.mxu0 0.0
    %7203 = vmatpush1.msra.mxu0 0.0
    %7204 = vmatprep.subr.mxu0 0.0
    %7205 = vmatpush1.msra.mxu0 0.0
    %7206 = vmatprep.subr.mxu0 0.0
    %7207 = vmatpush1.msra.mxu0 0.0
    %7208 = vmatprep.subr.mxu0 0.0
    %7209 = vmatpush1.msra.mxu0 0.0
    %7210 = vmatprep.subr.mxu0 0.0
    %7211 = vmatpush1.msra.mxu0 0.0
    %7212 = vmatprep.subr.mxu0 0.0
    %7213 = vmatpush1.msra.mxu0 0.0
    %7214 = vmatprep.subr.mxu0 0.0
    %7215 = vmatpush1.msra.mxu0 0.0
    %7216 = vmatprep.subr.mxu0 0.0
    %7217 = vmatpush1.msra.mxu0 0.0
    %7218 = vmatprep.subr.mxu0 0.0
    %7219 = vmatpush1.msra.mxu0 0.0
    %7220 = vmatprep.subr.mxu0 0.0
    %7221 = vmatpush1.msra.mxu0 0.0
    %7222 = vmatprep.subr.mxu0 0.0
    %7223 = vmatpush1.msra.mxu0 0.0
    %7224 = vmatprep.subr.mxu0 0.0
    %7225 = vmatpush1.msra.mxu0 0.0
    %7226 = vmatprep.subr.mxu0 0.0
    %7227 = vmatpush1.msra.mxu0 0.0
    %7228 = vmatprep.subr.mxu0 0.0
    %7229 = vmatpush1.msra.mxu0 0.0
    %7230 = vmatprep.subr.mxu0 0.0
    %7231 = vmatpush1.msra.mxu0 0.0
    %7232 = vmatprep.subr.mxu0 0.0
    %7233 = vmatpush1.msra.mxu0 0.0
    %7234 = vmatprep.subr.mxu0 0.0
    %7235 = vmatpush1.msra.mxu0 0.0
    %7236 = vmatprep.mubr.f32.mxu0 0.0
    %7237 = vmatmul.mubr.f32.gmra.mrb[0].mxu0 %v7170
    %v7238 = vpop.f32.mrb[0].mxu0
    %v7239 = vadd.f32 0.0, %v7238
    %v7240 = vpop.f32.mrb[0].mxu0
    %7241 = vdwg.mxu0
    %v7243 = vsel %vm1995, %v6802, 0
    %7245 = vmatprep.subr.mxu0 0.0
    %7246 = vmatpush1.msra.mxu0 %v6035
    %7247 = vmatprep.subr.mxu0 0.0
    %7248 = vmatpush1.msra.mxu0 0.0
    %7249 = vmatprep.subr.mxu0 0.0
    %7250 = vmatpush1.msra.mxu0 0.0
    %7251 = vmatprep.subr.mxu0 0.0
    %7252 = vmatpush1.msra.mxu0 0.0
    %7253 = vmatprep.subr.mxu0 0.0
    %7254 = vmatpush1.msra.mxu0 0.0
    %7255 = vmatprep.subr.mxu0 0.0
    %7256 = vmatpush1.msra.mxu0 0.0
    %7257 = vmatprep.subr.mxu0 0.0
    %7258 = vmatpush1.msra.mxu0 0.0
    %7259 = vmatprep.subr.mxu0 0.0
    %7260 = vmatpush1.msra.mxu0 0.0
    %7261 = vmatprep.subr.mxu0 0.0
    %7262 = vmatpush1.msra.mxu0 0.0
    %7263 = vmatprep.subr.mxu0 0.0
    %7264 = vmatpush1.msra.mxu0 0.0
    %7265 = vmatprep.subr.mxu0 0.0
    %7266 = vmatpush1.msra.mxu0 0.0
    %7267 = vmatprep.subr.mxu0 0.0
    %7268 = vmatpush1.msra.mxu0 0.0
    %7269 = vmatprep.subr.mxu0 0.0
    %7270 = vmatpush1.msra.mxu0 0.0
    %7271 = vmatprep.subr.mxu0 0.0
    %7272 = vmatpush1.msra.mxu0 0.0
    %7273 = vmatprep.subr.mxu0 0.0
    %7274 = vmatpush1.msra.mxu0 0.0
    %7275 = vmatprep.subr.mxu0 0.0
    %7276 = vmatpush1.msra.mxu0 0.0
    %7277 = vmatprep.subr.mxu0 0.0
    %7278 = vmatpush1.msra.mxu0 0.0
    %7279 = vmatprep.subr.mxu0 0.0
    %7280 = vmatpush1.msra.mxu0 0.0
    %7281 = vmatprep.subr.mxu0 0.0
    %7282 = vmatpush1.msra.mxu0 0.0
    %7283 = vmatprep.subr.mxu0 0.0
    %7284 = vmatpush1.msra.mxu0 0.0
    %7285 = vmatprep.subr.mxu0 0.0
    %7286 = vmatpush1.msra.mxu0 0.0
    %7287 = vmatprep.subr.mxu0 0.0
    %7288 = vmatpush1.msra.mxu0 0.0
    %7289 = vmatprep.subr.mxu0 0.0
    %7290 = vmatpush1.msra.mxu0 0.0
    %7291 = vmatprep.subr.mxu0 0.0
    %7292 = vmatpush1.msra.mxu0 0.0
    %7293 = vmatprep.subr.mxu0 0.0
    %7294 = vmatpush1.msra.mxu0 0.0
    %7295 = vmatprep.subr.mxu0 0.0
    %7296 = vmatpush1.msra.mxu0 0.0
    %7297 = vmatprep.subr.mxu0 0.0
    %7298 = vmatpush1.msra.mxu0 0.0
    %7299 = vmatprep.subr.mxu0 0.0
    %7300 = vmatpush1.msra.mxu0 0.0
    %7301 = vmatprep.subr.mxu0 0.0
    %7302 = vmatpush1.msra.mxu0 0.0
    %7303 = vmatprep.subr.mxu0 0.0
    %7304 = vmatpush1.msra.mxu0 0.0
    %7305 = vmatprep.subr.mxu0 0.0
    %7306 = vmatpush1.msra.mxu0 0.0
    %7307 = vmatprep.subr.mxu0 0.0
    %7308 = vmatpush1.msra.mxu0 0.0
    %7309 = vmatprep.mubr.f32.mxu0 0.0
    %7310 = vmatmul.mubr.f32.gmra.mrb[0].mxu0 %v7243
    %v7311 = vpop.f32.mrb[0].mxu0
    %v7312 = vadd.f32 0.0, %v7311
    %v7313 = vpop.f32.mrb[0].mxu0
    %7314 = vdwg.mxu0
    %v7316 = vsel %vm1995, %v6803, 0
    %7318 = vmatprep.subr.mxu0 0.0
    %7319 = vmatpush1.msra.mxu0 %v6105
    %7320 = vmatprep.subr.mxu0 0.0
    %7321 = vmatpush1.msra.mxu0 0.0
    %7322 = vmatprep.subr.mxu0 0.0
    %7323 = vmatpush1.msra.mxu0 0.0
    %7324 = vmatprep.subr.mxu0 0.0
    %7325 = vmatpush1.msra.mxu0 0.0
    %7326 = vmatprep.subr.mxu0 0.0
    %7327 = vmatpush1.msra.mxu0 0.0
    %7328 = vmatprep.subr.mxu0 0.0
    %7329 = vmatpush1.msra.mxu0 0.0
    %7330 = vmatprep.subr.mxu0 0.0
    %7331 = vmatpush1.msra.mxu0 0.0
    %7332 = vmatprep.subr.mxu0 0.0
    %7333 = vmatpush1.msra.mxu0 0.0
    %7334 = vmatprep.subr.mxu0 0.0
    %7335 = vmatpush1.msra.mxu0 0.0
    %7336 = vmatprep.subr.mxu0 0.0
    %7337 = vmatpush1.msra.mxu0 0.0
    %7338 = vmatprep.subr.mxu0 0.0
    %7339 = vmatpush1.msra.mxu0 0.0
    %7340 = vmatprep.subr.mxu0 0.0
    %7341 = vmatpush1.msra.mxu0 0.0
    %7342 = vmatprep.subr.mxu0 0.0
    %7343 = vmatpush1.msra.mxu0 0.0
    %7344 = vmatprep.subr.mxu0 0.0
    %7345 = vmatpush1.msra.mxu0 0.0
    %7346 = vmatprep.subr.mxu0 0.0
    %7347 = vmatpush1.msra.mxu0 0.0
    %7348 = vmatprep.subr.mxu0 0.0
    %7349 = vmatpush1.msra.mxu0 0.0
    %7350 = vmatprep.subr.mxu0 0.0
    %7351 = vmatpush1.msra.mxu0 0.0
    %7352 = vmatprep.subr.mxu0 0.0
    %7353 = vmatpush1.msra.mxu0 0.0
    %7354 = vmatprep.subr.mxu0 0.0
    %7355 = vmatpush1.msra.mxu0 0.0
    %7356 = vmatprep.subr.mxu0 0.0
    %7357 = vmatpush1.msra.mxu0 0.0
    %7358 = vmatprep.subr.mxu0 0.0
    %7359 = vmatpush1.msra.mxu0 0.0
    %7360 = vmatprep.subr.mxu0 0.0
    %7361 = vmatpush1.msra.mxu0 0.0
    %7362 = vmatprep.subr.mxu0 0.0
    %7363 = vmatpush1.msra.mxu0 0.0
    %7364 = vmatprep.subr.mxu0 0.0
    %7365 = vmatpush1.msra.mxu0 0.0
    %7366 = vmatprep.subr.mxu0 0.0
    %7367 = vmatpush1.msra.mxu0 0.0
    %7368 = vmatprep.subr.mxu0 0.0
    %7369 = vmatpush1.msra.mxu0 0.0
    %7370 = vmatprep.subr.mxu0 0.0
    %7371 = vmatpush1.msra.mxu0 0.0
    %7372 = vmatprep.subr.mxu0 0.0
    %7373 = vmatpush1.msra.mxu0 0.0
    %7374 = vmatprep.subr.mxu0 0.0
    %7375 = vmatpush1.msra.mxu0 0.0
    %7376 = vmatprep.subr.mxu0 0.0
    %7377 = vmatpush1.msra.mxu0 0.0
    %7378 = vmatprep.subr.mxu0 0.0
    %7379 = vmatpush1.msra.mxu0 0.0
    %7380 = vmatprep.subr.mxu0 0.0
    %7381 = vmatpush1.msra.mxu0 0.0
    %7382 = vmatprep.mubr.f32.mxu0 0.0
    %7383 = vmatmul.mubr.f32.gmra.mrb[0].mxu0 %v7316
    %v7384 = vpop.f32.mrb[0].mxu0
    %v7385 = vadd.f32 0.0, %v7384
    %v7386 = vpop.f32.mrb[0].mxu0
    %7387 = vdwg.mxu0
    %s7388 = scalar_lea.vmem %s7, 64
    %v7389 = vld [vmem:[%s7388] sm:$0xff]
    %v7390 = vld [vmem:[%s7388 + $0x8] sm:$0xff]
    %v7391 = vld [vmem:[%s7388 + $0x10] sm:$0xff]
    %v7392 = vld [vmem:[%s7388 + $0x18] sm:$0xff]
    %v7393 = vld [vmem:[%s7388 + $0x20] sm:$0xff]
    %v7394 = vld [vmem:[%s7388 + $0x28] sm:$0xff]
    %v7395 = vld [vmem:[%s7388 + $0x30] sm:$0xff]
    %v7396 = vld [vmem:[%s7388 + $0x38] sm:$0xff]
    %v7398 = vsel %vm1995, %v6874, 0
    %7400 = vmatprep.subr.mxu0 0.0
    %7401 = vmatpush1.msra.mxu0 %v7389
    %7402 = vmatprep.subr.mxu0 0.0
    %7403 = vmatpush1.msra.mxu0 0.0
    %7404 = vmatprep.subr.mxu0 0.0
    %7405 = vmatpush1.msra.mxu0 0.0
    %7406 = vmatprep.subr.mxu0 0.0
    %7407 = vmatpush1.msra.mxu0 0.0
    %7408 = vmatprep.subr.mxu0 0.0
    %7409 = vmatpush1.msra.mxu0 0.0
    %7410 = vmatprep.subr.mxu0 0.0
    %7411 = vmatpush1.msra.mxu0 0.0
    %7412 = vmatprep.subr.mxu0 0.0
    %7413 = vmatpush1.msra.mxu0 0.0
    %7414 = vmatprep.subr.mxu0 0.0
    %7415 = vmatpush1.msra.mxu0 0.0
    %7416 = vmatprep.subr.mxu0 0.0
    %7417 = vmatpush1.msra.mxu0 0.0
    %7418 = vmatprep.subr.mxu0 0.0
    %7419 = vmatpush1.msra.mxu0 0.0
    %7420 = vmatprep.subr.mxu0 0.0
    %7421 = vmatpush1.msra.mxu0 0.0
    %7422 = vmatprep.subr.mxu0 0.0
    %7423 = vmatpush1.msra.mxu0 0.0
    %7424 = vmatprep.subr.mxu0 0.0
    %7425 = vmatpush1.msra.mxu0 0.0
    %7426 = vmatprep.subr.mxu0 0.0
    %7427 = vmatpush1.msra.mxu0 0.0
    %7428 = vmatprep.subr.mxu0 0.0
    %7429 = vmatpush1.msra.mxu0 0.0
    %7430 = vmatprep.subr.mxu0 0.0
    %7431 = vmatpush1.msra.mxu0 0.0
    %7432 = vmatprep.subr.mxu0 0.0
    %7433 = vmatpush1.msra.mxu0 0.0
    %7434 = vmatprep.subr.mxu0 0.0
    %7435 = vmatpush1.msra.mxu0 0.0
    %7436 = vmatprep.subr.mxu0 0.0
    %7437 = vmatpush1.msra.mxu0 0.0
    %7438 = vmatprep.subr.mxu0 0.0
    %7439 = vmatpush1.msra.mxu0 0.0
    %7440 = vmatprep.subr.mxu0 0.0
    %7441 = vmatpush1.msra.mxu0 0.0
    %7442 = vmatprep.subr.mxu0 0.0
    %7443 = vmatpush1.msra.mxu0 0.0
    %7444 = vmatprep.subr.mxu0 0.0
    %7445 = vmatpush1.msra.mxu0 0.0
    %7446 = vmatprep.subr.mxu0 0.0
    %7447 = vmatpush1.msra.mxu0 0.0
    %7448 = vmatprep.subr.mxu0 0.0
    %7449 = vmatpush1.msra.mxu0 0.0
    %7450 = vmatprep.subr.mxu0 0.0
    %7451 = vmatpush1.msra.mxu0 0.0
    %7452 = vmatprep.subr.mxu0 0.0
    %7453 = vmatpush1.msra.mxu0 0.0
    %7454 = vmatprep.subr.mxu0 0.0
    %7455 = vmatpush1.msra.mxu0 0.0
    %7456 = vmatprep.subr.mxu0 0.0
    %7457 = vmatpush1.msra.mxu0 0.0
    %7458 = vmatprep.subr.mxu0 0.0
    %7459 = vmatpush1.msra.mxu0 0.0
    %7460 = vmatprep.subr.mxu0 0.0
    %7461 = vmatpush1.msra.mxu0 0.0
    %7462 = vmatprep.subr.mxu0 0.0
    %7463 = vmatpush1.msra.mxu0 0.0
    %7464 = vmatprep.mubr.f32.mxu0 0.0
    %7465 = vmatmul.mubr.f32.gmra.mrb[0].mxu0 %v7398
    %v7466 = vpop.f32.mrb[0].mxu0
    %v7467 = vadd.f32 0.0, %v7466
    %v7468 = vpop.f32.mrb[0].mxu0
    %7469 = vdwg.mxu0
    %v7471 = vsel %vm1995, %v6947, 0
    %7473 = vmatprep.subr.mxu0 0.0
    %7474 = vmatpush1.msra.mxu0 %v7390
    %7475 = vmatprep.subr.mxu0 0.0
    %7476 = vmatpush1.msra.mxu0 0.0
    %7477 = vmatprep.subr.mxu0 0.0
    %7478 = vmatpush1.msra.mxu0 0.0
    %7479 = vmatprep.subr.mxu0 0.0
    %7480 = vmatpush1.msra.mxu0 0.0
    %7481 = vmatprep.subr.mxu0 0.0
    %7482 = vmatpush1.msra.mxu0 0.0
    %7483 = vmatprep.subr.mxu0 0.0
    %7484 = vmatpush1.msra.mxu0 0.0
    %7485 = vmatprep.subr.mxu0 0.0
    %7486 = vmatpush1.msra.mxu0 0.0
    %7487 = vmatprep.subr.mxu0 0.0
    %7488 = vmatpush1.msra.mxu0 0.0
    %7489 = vmatprep.subr.mxu0 0.0
    %7490 = vmatpush1.msra.mxu0 0.0
    %7491 = vmatprep.subr.mxu0 0.0
    %7492 = vmatpush1.msra.mxu0 0.0
    %7493 = vmatprep.subr.mxu0 0.0
    %7494 = vmatpush1.msra.mxu0 0.0
    %7495 = vmatprep.subr.mxu0 0.0
    %7496 = vmatpush1.msra.mxu0 0.0
    %7497 = vmatprep.subr.mxu0 0.0
    %7498 = vmatpush1.msra.mxu0 0.0
    %7499 = vmatprep.subr.mxu0 0.0
    %7500 = vmatpush1.msra.mxu0 0.0
    %7501 = vmatprep.subr.mxu0 0.0
    %7502 = vmatpush1.msra.mxu0 0.0
    %7503 = vmatprep.subr.mxu0 0.0
    %7504 = vmatpush1.msra.mxu0 0.0
    %7505 = vmatprep.subr.mxu0 0.0
    %7506 = vmatpush1.msra.mxu0 0.0
    %7507 = vmatprep.subr.mxu0 0.0
    %7508 = vmatpush1.msra.mxu0 0.0
    %7509 = vmatprep.subr.mxu0 0.0
    %7510 = vmatpush1.msra.mxu0 0.0
    %7511 = vmatprep.subr.mxu0 0.0
    %7512 = vmatpush1.msra.mxu0 0.0
    %7513 = vmatprep.subr.mxu0 0.0
    %7514 = vmatpush1.msra.mxu0 0.0
    %7515 = vmatprep.subr.mxu0 0.0
    %7516 = vmatpush1.msra.mxu0 0.0
    %7517 = vmatprep.subr.mxu0 0.0
    %7518 = vmatpush1.msra.mxu0 0.0
    %7519 = vmatprep.subr.mxu0 0.0
    %7520 = vmatpush1.msra.mxu0 0.0
    %7521 = vmatprep.subr.mxu0 0.0
    %7522 = vmatpush1.msra.mxu0 0.0
    %7523 = vmatprep.subr.mxu0 0.0
    %7524 = vmatpush1.msra.mxu0 0.0
    %7525 = vmatprep.subr.mxu0 0.0
    %7526 = vmatpush1.msra.mxu0 0.0
    %7527 = vmatprep.subr.mxu0 0.0
    %7528 = vmatpush1.msra.mxu0 0.0
    %7529 = vmatprep.subr.mxu0 0.0
    %7530 = vmatpush1.msra.mxu0 0.0
    %7531 = vmatprep.subr.mxu0 0.0
    %7532 = vmatpush1.msra.mxu0 0.0
    %7533 = vmatprep.subr.mxu0 0.0
    %7534 = vmatpush1.msra.mxu0 0.0
    %7535 = vmatprep.subr.mxu0 0.0
    %7536 = vmatpush1.msra.mxu0 0.0
    %7537 = vmatprep.mubr.f32.mxu0 0.0
    %7538 = vmatmul.mubr.f32.gmra.mrb[0].mxu0 %v7471
    %v7539 = vpop.f32.mrb[0].mxu0
    %v7540 = vadd.f32 0.0, %v7539
    %v7541 = vpop.f32.mrb[0].mxu0
    %7542 = vdwg.mxu0
    %v7544 = vsel %vm1995, %v7020, 0
    %7546 = vmatprep.subr.mxu0 0.0
    %7547 = vmatpush1.msra.mxu0 %v7391
    %7548 = vmatprep.subr.mxu0 0.0
    %7549 = vmatpush1.msra.mxu0 0.0
    %7550 = vmatprep.subr.mxu0 0.0
    %7551 = vmatpush1.msra.mxu0 0.0
    %7552 = vmatprep.subr.mxu0 0.0
    %7553 = vmatpush1.msra.mxu0 0.0
    %7554 = vmatprep.subr.mxu0 0.0
    %7555 = vmatpush1.msra.mxu0 0.0
    %7556 = vmatprep.subr.mxu0 0.0
    %7557 = vmatpush1.msra.mxu0 0.0
    %7558 = vmatprep.subr.mxu0 0.0
    %7559 = vmatpush1.msra.mxu0 0.0
    %7560 = vmatprep.subr.mxu0 0.0
    %7561 = vmatpush1.msra.mxu0 0.0
    %7562 = vmatprep.subr.mxu0 0.0
    %7563 = vmatpush1.msra.mxu0 0.0
    %7564 = vmatprep.subr.mxu0 0.0
    %7565 = vmatpush1.msra.mxu0 0.0
    %7566 = vmatprep.subr.mxu0 0.0
    %7567 = vmatpush1.msra.mxu0 0.0
    %7568 = vmatprep.subr.mxu0 0.0
    %7569 = vmatpush1.msra.mxu0 0.0
    %7570 = vmatprep.subr.mxu0 0.0
    %7571 = vmatpush1.msra.mxu0 0.0
    %7572 = vmatprep.subr.mxu0 0.0
    %7573 = vmatpush1.msra.mxu0 0.0
    %7574 = vmatprep.subr.mxu0 0.0
    %7575 = vmatpush1.msra.mxu0 0.0
    %7576 = vmatprep.subr.mxu0 0.0
    %7577 = vmatpush1.msra.mxu0 0.0
    %7578 = vmatprep.subr.mxu0 0.0
    %7579 = vmatpush1.msra.mxu0 0.0
    %7580 = vmatprep.subr.mxu0 0.0
    %7581 = vmatpush1.msra.mxu0 0.0
    %7582 = vmatprep.subr.mxu0 0.0
    %7583 = vmatpush1.msra.mxu0 0.0
    %7584 = vmatprep.subr.mxu0 0.0
    %7585 = vmatpush1.msra.mxu0 0.0
    %7586 = vmatprep.subr.mxu0 0.0
    %7587 = vmatpush1.msra.mxu0 0.0
    %7588 = vmatprep.subr.mxu0 0.0
    %7589 = vmatpush1.msra.mxu0 0.0
    %7590 = vmatprep.subr.mxu0 0.0
    %7591 = vmatpush1.msra.mxu0 0.0
    %7592 = vmatprep.subr.mxu0 0.0
    %7593 = vmatpush1.msra.mxu0 0.0
    %7594 = vmatprep.subr.mxu0 0.0
    %7595 = vmatpush1.msra.mxu0 0.0
    %7596 = vmatprep.subr.mxu0 0.0
    %7597 = vmatpush1.msra.mxu0 0.0
    %7598 = vmatprep.subr.mxu0 0.0
    %7599 = vmatpush1.msra.mxu0 0.0
    %7600 = vmatprep.subr.mxu0 0.0
    %7601 = vmatpush1.msra.mxu0 0.0
    %7602 = vmatprep.subr.mxu0 0.0
    %7603 = vmatpush1.msra.mxu0 0.0
    %7604 = vmatprep.subr.mxu0 0.0
    %7605 = vmatpush1.msra.mxu0 0.0
    %7606 = vmatprep.subr.mxu0 0.0
    %7607 = vmatpush1.msra.mxu0 0.0
    %7608 = vmatprep.subr.mxu0 0.0
    %7609 = vmatpush1.msra.mxu0 0.0
    %7610 = vmatprep.mubr.f32.mxu0 0.0
    %7611 = vmatmul.mubr.f32.gmra.mrb[0].mxu0 %v7544
    %v7612 = vpop.f32.mrb[0].mxu0
    %v7613 = vadd.f32 0.0, %v7612
    %v7614 = vpop.f32.mrb[0].mxu0
    %7615 = vdwg.mxu0
    %v7617 = vsel %vm1995, %v7093, 0
    %7619 = vmatprep.subr.mxu0 0.0
    %7620 = vmatpush1.msra.mxu0 %v7392
    %7621 = vmatprep.subr.mxu0 0.0
    %7622 = vmatpush1.msra.mxu0 0.0
    %7623 = vmatprep.subr.mxu0 0.0
    %7624 = vmatpush1.msra.mxu0 0.0
    %7625 = vmatprep.subr.mxu0 0.0
    %7626 = vmatpush1.msra.mxu0 0.0
    %7627 = vmatprep.subr.mxu0 0.0
    %7628 = vmatpush1.msra.mxu0 0.0
    %7629 = vmatprep.subr.mxu0 0.0
    %7630 = vmatpush1.msra.mxu0 0.0
    %7631 = vmatprep.subr.mxu0 0.0
    %7632 = vmatpush1.msra.mxu0 0.0
    %7633 = vmatprep.subr.mxu0 0.0
    %7634 = vmatpush1.msra.mxu0 0.0
    %7635 = vmatprep.subr.mxu0 0.0
    %7636 = vmatpush1.msra.mxu0 0.0
    %7637 = vmatprep.subr.mxu0 0.0
    %7638 = vmatpush1.msra.mxu0 0.0
    %7639 = vmatprep.subr.mxu0 0.0
    %7640 = vmatpush1.msra.mxu0 0.0
    %7641 = vmatprep.subr.mxu0 0.0
    %7642 = vmatpush1.msra.mxu0 0.0
    %7643 = vmatprep.subr.mxu0 0.0
    %7644 = vmatpush1.msra.mxu0 0.0
    %7645 = vmatprep.subr.mxu0 0.0
    %7646 = vmatpush1.msra.mxu0 0.0
    %7647 = vmatprep.subr.mxu0 0.0
    %7648 = vmatpush1.msra.mxu0 0.0
    %7649 = vmatprep.subr.mxu0 0.0
    %7650 = vmatpush1.msra.mxu0 0.0
    %7651 = vmatprep.subr.mxu0 0.0
    %7652 = vmatpush1.msra.mxu0 0.0
    %7653 = vmatprep.subr.mxu0 0.0
    %7654 = vmatpush1.msra.mxu0 0.0
    %7655 = vmatprep.subr.mxu0 0.0
    %7656 = vmatpush1.msra.mxu0 0.0
    %7657 = vmatprep.subr.mxu0 0.0
    %7658 = vmatpush1.msra.mxu0 0.0
    %7659 = vmatprep.subr.mxu0 0.0
    %7660 = vmatpush1.msra.mxu0 0.0
    %7661 = vmatprep.subr.mxu0 0.0
    %7662 = vmatpush1.msra.mxu0 0.0
    %7663 = vmatprep.subr.mxu0 0.0
    %7664 = vmatpush1.msra.mxu0 0.0
    %7665 = vmatprep.subr.mxu0 0.0
    %7666 = vmatpush1.msra.mxu0 0.0
    %7667 = vmatprep.subr.mxu0 0.0
    %7668 = vmatpush1.msra.mxu0 0.0
    %7669 = vmatprep.subr.mxu0 0.0
    %7670 = vmatpush1.msra.mxu0 0.0
    %7671 = vmatprep.subr.mxu0 0.0
    %7672 = vmatpush1.msra.mxu0 0.0
    %7673 = vmatprep.subr.mxu0 0.0
    %7674 = vmatpush1.msra.mxu0 0.0
    %7675 = vmatprep.subr.mxu0 0.0
    %7676 = vmatpush1.msra.mxu0 0.0
    %7677 = vmatprep.subr.mxu0 0.0
    %7678 = vmatpush1.msra.mxu0 0.0
    %7679 = vmatprep.subr.mxu0 0.0
    %7680 = vmatpush1.msra.mxu0 0.0
    %7681 = vmatprep.subr.mxu0 0.0
    %7682 = vmatpush1.msra.mxu0 0.0
    %7683 = vmatprep.mubr.f32.mxu0 0.0
    %7684 = vmatmul.mubr.f32.gmra.mrb[0].mxu0 %v7617
    %v7685 = vpop.f32.mrb[0].mxu0
    %v7686 = vadd.f32 0.0, %v7685
    %v7687 = vpop.f32.mrb[0].mxu0
    %7688 = vdwg.mxu0
    %v7690 = vsel %vm1995, %v7166, 0
    %7692 = vmatprep.subr.mxu0 0.0
    %7693 = vmatpush1.msra.mxu0 %v7393
    %7694 = vmatprep.subr.mxu0 0.0
    %7695 = vmatpush1.msra.mxu0 0.0
    %7696 = vmatprep.subr.mxu0 0.0
    %7697 = vmatpush1.msra.mxu0 0.0
    %7698 = vmatprep.subr.mxu0 0.0
    %7699 = vmatpush1.msra.mxu0 0.0
    %7700 = vmatprep.subr.mxu0 0.0
    %7701 = vmatpush1.msra.mxu0 0.0
    %7702 = vmatprep.subr.mxu0 0.0
    %7703 = vmatpush1.msra.mxu0 0.0
    %7704 = vmatprep.subr.mxu0 0.0
    %7705 = vmatpush1.msra.mxu0 0.0
    %7706 = vmatprep.subr.mxu0 0.0
    %7707 = vmatpush1.msra.mxu0 0.0
    %7708 = vmatprep.subr.mxu0 0.0
    %7709 = vmatpush1.msra.mxu0 0.0
    %7710 = vmatprep.subr.mxu0 0.0
    %7711 = vmatpush1.msra.mxu0 0.0
    %7712 = vmatprep.subr.mxu0 0.0
    %7713 = vmatpush1.msra.mxu0 0.0
    %7714 = vmatprep.subr.mxu0 0.0
    %7715 = vmatpush1.msra.mxu0 0.0
    %7716 = vmatprep.subr.mxu0 0.0
    %7717 = vmatpush1.msra.mxu0 0.0
    %7718 = vmatprep.subr.mxu0 0.0
    %7719 = vmatpush1.msra.mxu0 0.0
    %7720 = vmatprep.subr.mxu0 0.0
    %7721 = vmatpush1.msra.mxu0 0.0
    %7722 = vmatprep.subr.mxu0 0.0
    %7723 = vmatpush1.msra.mxu0 0.0
    %7724 = vmatprep.subr.mxu0 0.0
    %7725 = vmatpush1.msra.mxu0 0.0
    %7726 = vmatprep.subr.mxu0 0.0
    %7727 = vmatpush1.msra.mxu0 0.0
    %7728 = vmatprep.subr.mxu0 0.0
    %7729 = vmatpush1.msra.mxu0 0.0
    %7730 = vmatprep.subr.mxu0 0.0
    %7731 = vmatpush1.msra.mxu0 0.0
    %7732 = vmatprep.subr.mxu0 0.0
    %7733 = vmatpush1.msra.mxu0 0.0
    %7734 = vmatprep.subr.mxu0 0.0
    %7735 = vmatpush1.msra.mxu0 0.0
    %7736 = vmatprep.subr.mxu0 0.0
    %7737 = vmatpush1.msra.mxu0 0.0
    %7738 = vmatprep.subr.mxu0 0.0
    %7739 = vmatpush1.msra.mxu0 0.0
    %7740 = vmatprep.subr.mxu0 0.0
    %7741 = vmatpush1.msra.mxu0 0.0
    %7742 = vmatprep.subr.mxu0 0.0
    %7743 = vmatpush1.msra.mxu0 0.0
    %7744 = vmatprep.subr.mxu0 0.0
    %7745 = vmatpush1.msra.mxu0 0.0
    %7746 = vmatprep.subr.mxu0 0.0
    %7747 = vmatpush1.msra.mxu0 0.0
    %7748 = vmatprep.subr.mxu0 0.0
    %7749 = vmatpush1.msra.mxu0 0.0
    %7750 = vmatprep.subr.mxu0 0.0
    %7751 = vmatpush1.msra.mxu0 0.0
    %7752 = vmatprep.subr.mxu0 0.0
    %7753 = vmatpush1.msra.mxu0 0.0
    %7754 = vmatprep.subr.mxu0 0.0
    %7755 = vmatpush1.msra.mxu0 0.0
    %7756 = vmatprep.mubr.f32.mxu0 0.0
    %7757 = vmatmul.mubr.f32.gmra.mrb[0].mxu0 %v7690
    %v7758 = vpop.f32.mrb[0].mxu0
    %v7759 = vadd.f32 0.0, %v7758
    %v7760 = vpop.f32.mrb[0].mxu0
    %7761 = vdwg.mxu0
    %v7763 = vsel %vm1995, %v7239, 0
    %7765 = vmatprep.subr.mxu0 0.0
    %7766 = vmatpush1.msra.mxu0 %v7394
    %7767 = vmatprep.subr.mxu0 0.0
    %7768 = vmatpush1.msra.mxu0 0.0
    %7769 = vmatprep.subr.mxu0 0.0
    %7770 = vmatpush1.msra.mxu0 0.0
    %7771 = vmatprep.subr.mxu0 0.0
    %7772 = vmatpush1.msra.mxu0 0.0
    %7773 = vmatprep.subr.mxu0 0.0
    %7774 = vmatpush1.msra.mxu0 0.0
    %7775 = vmatprep.subr.mxu0 0.0
    %7776 = vmatpush1.msra.mxu0 0.0
    %7777 = vmatprep.subr.mxu0 0.0
    %7778 = vmatpush1.msra.mxu0 0.0
    %7779 = vmatprep.subr.mxu0 0.0
    %7780 = vmatpush1.msra.mxu0 0.0
    %7781 = vmatprep.subr.mxu0 0.0
    %7782 = vmatpush1.msra.mxu0 0.0
    %7783 = vmatprep.subr.mxu0 0.0
    %7784 = vmatpush1.msra.mxu0 0.0
    %7785 = vmatprep.subr.mxu0 0.0
    %7786 = vmatpush1.msra.mxu0 0.0
    %7787 = vmatprep.subr.mxu0 0.0
    %7788 = vmatpush1.msra.mxu0 0.0
    %7789 = vmatprep.subr.mxu0 0.0
    %7790 = vmatpush1.msra.mxu0 0.0
    %7791 = vmatprep.subr.mxu0 0.0
    %7792 = vmatpush1.msra.mxu0 0.0
    %7793 = vmatprep.subr.mxu0 0.0
    %7794 = vmatpush1.msra.mxu0 0.0
    %7795 = vmatprep.subr.mxu0 0.0
    %7796 = vmatpush1.msra.mxu0 0.0
    %7797 = vmatprep.subr.mxu0 0.0
    %7798 = vmatpush1.msra.mxu0 0.0
    %7799 = vmatprep.subr.mxu0 0.0
    %7800 = vmatpush1.msra.mxu0 0.0
    %7801 = vmatprep.subr.mxu0 0.0
    %7802 = vmatpush1.msra.mxu0 0.0
    %7803 = vmatprep.subr.mxu0 0.0
    %7804 = vmatpush1.msra.mxu0 0.0
    %7805 = vmatprep.subr.mxu0 0.0
    %7806 = vmatpush1.msra.mxu0 0.0
    %7807 = vmatprep.subr.mxu0 0.0
    %7808 = vmatpush1.msra.mxu0 0.0
    %7809 = vmatprep.subr.mxu0 0.0
    %7810 = vmatpush1.msra.mxu0 0.0
    %7811 = vmatprep.subr.mxu0 0.0
    %7812 = vmatpush1.msra.mxu0 0.0
    %7813 = vmatprep.subr.mxu0 0.0
    %7814 = vmatpush1.msra.mxu0 0.0
    %7815 = vmatprep.subr.mxu0 0.0
    %7816 = vmatpush1.msra.mxu0 0.0
    %7817 = vmatprep.subr.mxu0 0.0
    %7818 = vmatpush1.msra.mxu0 0.0
    %7819 = vmatprep.subr.mxu0 0.0
    %7820 = vmatpush1.msra.mxu0 0.0
    %7821 = vmatprep.subr.mxu0 0.0
    %7822 = vmatpush1.msra.mxu0 0.0
    %7823 = vmatprep.subr.mxu0 0.0
    %7824 = vmatpush1.msra.mxu0 0.0
    %7825 = vmatprep.subr.mxu0 0.0
    %7826 = vmatpush1.msra.mxu0 0.0
    %7827 = vmatprep.subr.mxu0 0.0
    %7828 = vmatpush1.msra.mxu0 0.0
    %7829 = vmatprep.mubr.f32.mxu0 0.0
    %7830 = vmatmul.mubr.f32.gmra.mrb[0].mxu0 %v7763
    %v7831 = vpop.f32.mrb[0].mxu0
    %v7832 = vadd.f32 0.0, %v7831
    %v7833 = vpop.f32.mrb[0].mxu0
    %7834 = vdwg.mxu0
    %v7836 = vsel %vm1995, %v7312, 0
    %7838 = vmatprep.subr.mxu0 0.0
    %7839 = vmatpush1.msra.mxu0 %v7395
    %7840 = vmatprep.subr.mxu0 0.0
    %7841 = vmatpush1.msra.mxu0 0.0
    %7842 = vmatprep.subr.mxu0 0.0
    %7843 = vmatpush1.msra.mxu0 0.0
    %7844 = vmatprep.subr.mxu0 0.0
    %7845 = vmatpush1.msra.mxu0 0.0
    %7846 = vmatprep.subr.mxu0 0.0
    %7847 = vmatpush1.msra.mxu0 0.0
    %7848 = vmatprep.subr.mxu0 0.0
    %7849 = vmatpush1.msra.mxu0 0.0
    %7850 = vmatprep.subr.mxu0 0.0
    %7851 = vmatpush1.msra.mxu0 0.0
    %7852 = vmatprep.subr.mxu0 0.0
    %7853 = vmatpush1.msra.mxu0 0.0
    %7854 = vmatprep.subr.mxu0 0.0
    %7855 = vmatpush1.msra.mxu0 0.0
    %7856 = vmatprep.subr.mxu0 0.0
    %7857 = vmatpush1.msra.mxu0 0.0
    %7858 = vmatprep.subr.mxu0 0.0
    %7859 = vmatpush1.msra.mxu0 0.0
    %7860 = vmatprep.subr.mxu0 0.0
    %7861 = vmatpush1.msra.mxu0 0.0
    %7862 = vmatprep.subr.mxu0 0.0
    %7863 = vmatpush1.msra.mxu0 0.0
    %7864 = vmatprep.subr.mxu0 0.0
    %7865 = vmatpush1.msra.mxu0 0.0
    %7866 = vmatprep.subr.mxu0 0.0
    %7867 = vmatpush1.msra.mxu0 0.0
    %7868 = vmatprep.subr.mxu0 0.0
    %7869 = vmatpush1.msra.mxu0 0.0
    %7870 = vmatprep.subr.mxu0 0.0
    %7871 = vmatpush1.msra.mxu0 0.0
    %7872 = vmatprep.subr.mxu0 0.0
    %7873 = vmatpush1.msra.mxu0 0.0
    %7874 = vmatprep.subr.mxu0 0.0
    %7875 = vmatpush1.msra.mxu0 0.0
    %7876 = vmatprep.subr.mxu0 0.0
    %7877 = vmatpush1.msra.mxu0 0.0
    %7878 = vmatprep.subr.mxu0 0.0
    %7879 = vmatpush1.msra.mxu0 0.0
    %7880 = vmatprep.subr.mxu0 0.0
    %7881 = vmatpush1.msra.mxu0 0.0
    %7882 = vmatprep.subr.mxu0 0.0
    %7883 = vmatpush1.msra.mxu0 0.0
    %7884 = vmatprep.subr.mxu0 0.0
    %7885 = vmatpush1.msra.mxu0 0.0
    %7886 = vmatprep.subr.mxu0 0.0
    %7887 = vmatpush1.msra.mxu0 0.0
    %7888 = vmatprep.subr.mxu0 0.0
    %7889 = vmatpush1.msra.mxu0 0.0
    %7890 = vmatprep.subr.mxu0 0.0
    %7891 = vmatpush1.msra.mxu0 0.0
    %7892 = vmatprep.subr.mxu0 0.0
    %7893 = vmatpush1.msra.mxu0 0.0
    %7894 = vmatprep.subr.mxu0 0.0
    %7895 = vmatpush1.msra.mxu0 0.0
    %7896 = vmatprep.subr.mxu0 0.0
    %7897 = vmatpush1.msra.mxu0 0.0
    %7898 = vmatprep.subr.mxu0 0.0
    %7899 = vmatpush1.msra.mxu0 0.0
    %7900 = vmatprep.subr.mxu0 0.0
    %7901 = vmatpush1.msra.mxu0 0.0
    %7902 = vmatprep.mubr.f32.mxu0 0.0
    %7903 = vmatmul.mubr.f32.gmra.mrb[0].mxu0 %v7836
    %v7904 = vpop.f32.mrb[0].mxu0
    %v7905 = vadd.f32 0.0, %v7904
    %v7906 = vpop.f32.mrb[0].mxu0
    %7907 = vdwg.mxu0
    %v7909 = vsel %vm1995, %v7385, 0
    %7911 = vmatprep.subr.mxu0 0.0
    %7912 = vmatpush1.msra.mxu0 %v7396
    %7913 = vmatprep.subr.mxu0 0.0
    %7914 = vmatpush1.msra.mxu0 0.0
    %7915 = vmatprep.subr.mxu0 0.0
    %7916 = vmatpush1.msra.mxu0 0.0
    %7917 = vmatprep.subr.mxu0 0.0
    %7918 = vmatpush1.msra.mxu0 0.0
    %7919 = vmatprep.subr.mxu0 0.0
    %7920 = vmatpush1.msra.mxu0 0.0
    %7921 = vmatprep.subr.mxu0 0.0
    %7922 = vmatpush1.msra.mxu0 0.0
    %7923 = vmatprep.subr.mxu0 0.0
    %7924 = vmatpush1.msra.mxu0 0.0
    %7925 = vmatprep.subr.mxu0 0.0
    %7926 = vmatpush1.msra.mxu0 0.0
    %7927 = vmatprep.subr.mxu0 0.0
    %7928 = vmatpush1.msra.mxu0 0.0
    %7929 = vmatprep.subr.mxu0 0.0
    %7930 = vmatpush1.msra.mxu0 0.0
    %7931 = vmatprep.subr.mxu0 0.0
    %7932 = vmatpush1.msra.mxu0 0.0
    %7933 = vmatprep.subr.mxu0 0.0
    %7934 = vmatpush1.msra.mxu0 0.0
    %7935 = vmatprep.subr.mxu0 0.0
    %7936 = vmatpush1.msra.mxu0 0.0
    %7937 = vmatprep.subr.mxu0 0.0
    %7938 = vmatpush1.msra.mxu0 0.0
    %7939 = vmatprep.subr.mxu0 0.0
    %7940 = vmatpush1.msra.mxu0 0.0
    %7941 = vmatprep.subr.mxu0 0.0
    %7942 = vmatpush1.msra.mxu0 0.0
    %7943 = vmatprep.subr.mxu0 0.0
    %7944 = vmatpush1.msra.mxu0 0.0
    %7945 = vmatprep.subr.mxu0 0.0
    %7946 = vmatpush1.msra.mxu0 0.0
    %7947 = vmatprep.subr.mxu0 0.0
    %7948 = vmatpush1.msra.mxu0 0.0
    %7949 = vmatprep.subr.mxu0 0.0
    %7950 = vmatpush1.msra.mxu0 0.0
    %7951 = vmatprep.subr.mxu0 0.0
    %7952 = vmatpush1.msra.mxu0 0.0
    %7953 = vmatprep.subr.mxu0 0.0
    %7954 = vmatpush1.msra.mxu0 0.0
    %7955 = vmatprep.subr.mxu0 0.0
    %7956 = vmatpush1.msra.mxu0 0.0
    %7957 = vmatprep.subr.mxu0 0.0
    %7958 = vmatpush1.msra.mxu0 0.0
    %7959 = vmatprep.subr.mxu0 0.0
    %7960 = vmatpush1.msra.mxu0 0.0
    %7961 = vmatprep.subr.mxu0 0.0
    %7962 = vmatpush1.msra.mxu0 0.0
    %7963 = vmatprep.subr.mxu0 0.0
    %7964 = vmatpush1.msra.mxu0 0.0
    %7965 = vmatprep.subr.mxu0 0.0
    %7966 = vmatpush1.msra.mxu0 0.0
    %7967 = vmatprep.subr.mxu0 0.0
    %7968 = vmatpush1.msra.mxu0 0.0
    %7969 = vmatprep.subr.mxu0 0.0
    %7970 = vmatpush1.msra.mxu0 0.0
    %7971 = vmatprep.subr.mxu0 0.0
    %7972 = vmatpush1.msra.mxu0 0.0
    %7973 = vmatprep.subr.mxu0 0.0
    %7974 = vmatpush1.msra.mxu0 0.0
    %7975 = vmatprep.mubr.f32.mxu0 0.0
    %7976 = vmatmul.mubr.f32.gmra.mrb[0].mxu0 %v7909
    %v7977 = vpop.f32.mrb[0].mxu0
    %v7978 = vadd.f32 0.0, %v7977
    %v7979 = vpop.f32.mrb[0].mxu0
    %7980 = vdwg.mxu0
    %v7981 = vadd.f32 %v7467, %v7613
    %v7982 = vadd.f32 %v7540, %v7686
    %v7983 = vadd.f32 %v7981, %v7759
    %v7984 = vadd.f32 %v7982, %v7832
    %v7985 = vadd.f32 %v7983, %v7905
    %v7986 = vadd.f32 %v7984, %v7978
    %s7987 = scalar_lea.vmem %s11, 8
    %v7988 = vld [vmem:[%s7987] sm:$0xff]
    %v7989 = vadd.f32 %v4148, %v7985
    %v7990 = vadd.f32 %v4149, %v7986
    %v7991 = vlaneseq
    %v7992 = vshrl.u32 %v7991, 7
    %v7993 = vsub.s32 0, %v7992
    %v7994 = vrot.slane %v7988, %v7993
    %v7995 = vadd.f32 %v7989, %v7994
    %v7996 = vadd.f32 %v7990, %v7994
    %v7997 = vsel %vm132, %v7995, 0.0
    %7998 = vadd.xlane.f32.xlu0 %v7997
    %v7999 = vpop.xlane.xlu0 %7998
    %v8000 = vsel %vm132, %v7996, 0.0
    %8001 = vadd.xlane.f32.xlu0 %v8000
    %v8002 = vpop.xlane.xlu0 %8001
    %v8003 = vmul.f32 %v7999, %v3889
    %v8004 = vmul.f32 %v8002, %v3889
    %v8005 = vsub.f32 %v7995, %v8003
    %v8006 = vsub.f32 %v7996, %v8004
    %v8007 = vmul.f32 %v8005, %v8005
    %v8008 = vmul.f32 %v8006, %v8006
    %v8009 = vsel %vm132, %v8007, 0.0
    %8010 = vadd.xlane.f32.xlu0 %v8009
    %v8011 = vpop.xlane.xlu0 %8010
    %v8012 = vsel %vm132, %v8008, 0.0
    %8013 = vadd.xlane.f32.xlu0 %v8012
    %v8014 = vpop.xlane.xlu0 %8013
    %v8015 = vmul.f32 %v8011, 0.032258064
    %v8016 = vmul.f32 %v8014, 0.032258064
    %v8017 = vrsqrt.pop %v8015
    %v8018 = vrsqrt.pop %v8016
    %v8019 = vmul.f32 %v8005, %v8017
    %v8020 = vmul.f32 %v8006, %v8018
    %v8021 = vadd.f32 %v8019, 1e-05
    %v8022 = vadd.f32 %v8020, 1e-05
    %v8023 = vlaneseq
    %v8024 = vshrl.u32 %v8023, 7
    %v8025 = vsub.s32 2, %v8024
    %v8026 = vrot.slane %v7988, %v8025
    %v8027 = vmul.f32 %v8021, %v8026
    %v8028 = vmul.f32 %v8022, %v8026
    %v8029 = vlaneseq
    %v8030 = vshrl.u32 %v8029, 7
    %v8031 = vsub.s32 3, %v8030
    %v8032 = vrot.slane %v7988, %v8031
    %v8033 = vadd.f32 %v8027, %v8032
    %v8034 = vadd.f32 %v8028, %v8032
    %s8035 = scalar_lea.vmem %s8, 32
    %v8036 = vld [vmem:[%s8035] sm:$0xff]
    %v8037 = vld [vmem:[%s8035 + $0x8] sm:$0xff]
    %v8038 = vld [vmem:[%s8035 + $0x10] sm:$0xff]
    %v8039 = vld [vmem:[%s8035 + $0x18] sm:$0xff]
    %s8040 = scalar_lea.vmem %s9, 1
    %v8041 = vld [vmem:[%s8040] sm:$0x1]
    %v8043 = vlaneseq
    %v8044 = vshrl.u32 %v8043, 7
    %v8045 = vsub.s32 0, %v8044
    %v8046 = vrot.slane %v8041, %v8045
    %v8049 = vsel %vm132, %v8033, 0
    %v8052 = vsel %vm132, %v8034, 0
    %8054 = vmatprep.subr.mxu0 0.0
    %8055 = vmatpush1.msra.mxu0 %v8036
    %8056 = vmatprep.subr.mxu0 0.0
    %8057 = vmatpush1.msra.mxu0 %v8037
    %8058 = vmatprep.subr.mxu0 0.0
    %8059 = vmatpush1.msra.mxu0 %v8038
    %8060 = vmatprep.subr.mxu0 0.0
    %8061 = vmatpush1.msra.mxu0 %v8039
    %8062 = vmatprep.subr.mxu0 0.0
    %8063 = vmatpush1.msra.mxu0 0.0
    %8064 = vmatprep.subr.mxu0 0.0
    %8065 = vmatpush1.msra.mxu0 0.0
    %8066 = vmatprep.subr.mxu0 0.0
    %8067 = vmatpush1.msra.mxu0 0.0
    %8068 = vmatprep.subr.mxu0 0.0
    %8069 = vmatpush1.msra.mxu0 0.0
    %8070 = vmatprep.subr.mxu0 0.0
    %8071 = vmatpush1.msra.mxu0 0.0
    %8072 = vmatprep.subr.mxu0 0.0
    %8073 = vmatpush1.msra.mxu0 0.0
    %8074 = vmatprep.subr.mxu0 0.0
    %8075 = vmatpush1.msra.mxu0 0.0
    %8076 = vmatprep.subr.mxu0 0.0
    %8077 = vmatpush1.msra.mxu0 0.0
    %8078 = vmatprep.subr.mxu0 0.0
    %8079 = vmatpush1.msra.mxu0 0.0
    %8080 = vmatprep.subr.mxu0 0.0
    %8081 = vmatpush1.msra.mxu0 0.0
    %8082 = vmatprep.subr.mxu0 0.0
    %8083 = vmatpush1.msra.mxu0 0.0
    %8084 = vmatprep.subr.mxu0 0.0
    %8085 = vmatpush1.msra.mxu0 0.0
    %8086 = vmatprep.subr.mxu0 0.0
    %8087 = vmatpush1.msra.mxu0 0.0
    %8088 = vmatprep.subr.mxu0 0.0
    %8089 = vmatpush1.msra.mxu0 0.0
    %8090 = vmatprep.subr.mxu0 0.0
    %8091 = vmatpush1.msra.mxu0 0.0
    %8092 = vmatprep.subr.mxu0 0.0
    %8093 = vmatpush1.msra.mxu0 0.0
    %8094 = vmatprep.subr.mxu0 0.0
    %8095 = vmatpush1.msra.mxu0 0.0
    %8096 = vmatprep.subr.mxu0 0.0
    %8097 = vmatpush1.msra.mxu0 0.0
    %8098 = vmatprep.subr.mxu0 0.0
    %8099 = vmatpush1.msra.mxu0 0.0
    %8100 = vmatprep.subr.mxu0 0.0
    %8101 = vmatpush1.msra.mxu0 0.0
    %8102 = vmatprep.subr.mxu0 0.0
    %8103 = vmatpush1.msra.mxu0 0.0
    %8104 = vmatprep.subr.mxu0 0.0
    %8105 = vmatpush1.msra.mxu0 0.0
    %8106 = vmatprep.subr.mxu0 0.0
    %8107 = vmatpush1.msra.mxu0 0.0
    %8108 = vmatprep.subr.mxu0 0.0
    %8109 = vmatpush1.msra.mxu0 0.0
    %8110 = vmatprep.subr.mxu0 0.0
    %8111 = vmatpush1.msra.mxu0 0.0
    %8112 = vmatprep.subr.mxu0 0.0
    %8113 = vmatpush1.msra.mxu0 0.0
    %8114 = vmatprep.subr.mxu0 0.0
    %8115 = vmatpush1.msra.mxu0 0.0
    %8116 = vmatprep.subr.mxu0 0.0
    %8117 = vmatpush1.msra.mxu0 0.0
    %8118 = vmatprep.mubr.f32.mxu0 0.0
    %8119 = vmatmul.mubr.f32.gmra.mrb[0].mxu0 %v8049
    %v8120 = vpop.f32.mrb[0].mxu0
    %v8121 = vadd.f32 %v8046, %v8120
    %v8122 = vpop.f32.mrb[0].mxu0
    %8123 = vmatprep.mubr.f32.mxu0 0.0
    %8124 = vmatmul.mubr.f32.gmra.mrb[0].mxu0 %v8052
    %v8125 = vpop.f32.mrb[0].mxu0
    %v8126 = vadd.f32 %v8046, %v8125
    %v8127 = vpop.f32.mrb[0].mxu0
    %8128 = vdwg.mxu0
    %v8129 = vmax.f32 %v8121, 0.0
    %v8130 = vmax.f32 %v8126, 0.0
    %s8131 = scalar_lea.vmem %s10, 64
    %v8132 = vld [vmem:[%s8131] sm:$0xff]
    %v8133 = vld [vmem:[%s8131 + $0x8] sm:$0xff]
    %v8134 = vld [vmem:[%s8131 + $0x10] sm:$0xff]
    %v8135 = vld [vmem:[%s8131 + $0x18] sm:$0xff]
    %v8136 = vld [vmem:[%s8131 + $0x20] sm:$0xff]
    %v8137 = vld [vmem:[%s8131 + $0x28] sm:$0xff]
    %v8138 = vld [vmem:[%s8131 + $0x30] sm:$0xff]
    %v8139 = vld [vmem:[%s8131 + $0x38] sm:$0xff]
    %v8140 = vlaneseq
    %v8141 = vshrl.u32 %v8140, 7
    %v8142 = vsub.s32 1, %v8141
    %v8143 = vrot.slane %v7988, %v8142
    %v8145 = vsel %vm4028, %v8129, 0
    %v8148 = vsel %vm4028, %v8130, 0
    %8150 = vmatprep.subr.mxu0 0.0
    %8151 = vmatpush1.msra.mxu0 %v8132
    %8152 = vmatprep.subr.mxu0 0.0
    %8153 = vmatpush1.msra.mxu0 %v8133
    %8154 = vmatprep.subr.mxu0 0.0
    %8155 = vmatpush1.msra.mxu0 %v8134
    %8156 = vmatprep.subr.mxu0 0.0
    %8157 = vmatpush1.msra.mxu0 %v8135
    %8158 = vmatprep.subr.mxu0 0.0
    %8159 = vmatpush1.msra.mxu0 %v8136
    %8160 = vmatprep.subr.mxu0 0.0
    %8161 = vmatpush1.msra.mxu0 %v8137
    %8162 = vmatprep.subr.mxu0 0.0
    %8163 = vmatpush1.msra.mxu0 %v8138
    %8164 = vmatprep.subr.mxu0 0.0
    %8165 = vmatpush1.msra.mxu0 %v8139
    %8166 = vmatprep.subr.mxu0 0.0
    %8167 = vmatpush1.msra.mxu0 0.0
    %8168 = vmatprep.subr.mxu0 0.0
    %8169 = vmatpush1.msra.mxu0 0.0
    %8170 = vmatprep.subr.mxu0 0.0
    %8171 = vmatpush1.msra.mxu0 0.0
    %8172 = vmatprep.subr.mxu0 0.0
    %8173 = vmatpush1.msra.mxu0 0.0
    %8174 = vmatprep.subr.mxu0 0.0
    %8175 = vmatpush1.msra.mxu0 0.0
    %8176 = vmatprep.subr.mxu0 0.0
    %8177 = vmatpush1.msra.mxu0 0.0
    %8178 = vmatprep.subr.mxu0 0.0
    %8179 = vmatpush1.msra.mxu0 0.0
    %8180 = vmatprep.subr.mxu0 0.0
    %8181 = vmatpush1.msra.mxu0 0.0
    %8182 = vmatprep.subr.mxu0 0.0
    %8183 = vmatpush1.msra.mxu0 0.0
    %8184 = vmatprep.subr.mxu0 0.0
    %8185 = vmatpush1.msra.mxu0 0.0
    %8186 = vmatprep.subr.mxu0 0.0
    %8187 = vmatpush1.msra.mxu0 0.0
    %8188 = vmatprep.subr.mxu0 0.0
    %8189 = vmatpush1.msra.mxu0 0.0
    %8190 = vmatprep.subr.mxu0 0.0
    %8191 = vmatpush1.msra.mxu0 0.0
    %8192 = vmatprep.subr.mxu0 0.0
    %8193 = vmatpush1.msra.mxu0 0.0
    %8194 = vmatprep.subr.mxu0 0.0
    %8195 = vmatpush1.msra.mxu0 0.0
    %8196 = vmatprep.subr.mxu0 0.0
    %8197 = vmatpush1.msra.mxu0 0.0
    %8198 = vmatprep.subr.mxu0 0.0
    %8199 = vmatpush1.msra.mxu0 0.0
    %8200 = vmatprep.subr.mxu0 0.0
    %8201 = vmatpush1.msra.mxu0 0.0
    %8202 = vmatprep.subr.mxu0 0.0
    %8203 = vmatpush1.msra.mxu0 0.0
    %8204 = vmatprep.subr.mxu0 0.0
    %8205 = vmatpush1.msra.mxu0 0.0
    %8206 = vmatprep.subr.mxu0 0.0
    %8207 = vmatpush1.msra.mxu0 0.0
    %8208 = vmatprep.subr.mxu0 0.0
    %8209 = vmatpush1.msra.mxu0 0.0
    %8210 = vmatprep.subr.mxu0 0.0
    %8211 = vmatpush1.msra.mxu0 0.0
    %8212 = vmatprep.subr.mxu0 0.0
    %8213 = vmatpush1.msra.mxu0 0.0
    %8214 = vmatprep.mubr.f32.mxu0 0.0
    %8215 = vmatmul.mubr.f32.gmra.mrb[0].mxu0 %v8145
    %v8216 = vpop.f32.mrb[0].mxu0
    %v8217 = vadd.f32 %v8143, %v8216
    %v8218 = vpop.f32.mrb[0].mxu0
    %8219 = vmatprep.mubr.f32.mxu0 0.0
    %8220 = vmatmul.mubr.f32.gmra.mrb[0].mxu0 %v8148
    %v8221 = vpop.f32.mrb[0].mxu0
    %v8222 = vadd.f32 %v8143, %v8221
    %v8223 = vpop.f32.mrb[0].mxu0
    %8224 = vdwg.mxu0
    %v8225 = vadd.f32 %v8033, %v8217
    %v8226 = vadd.f32 %v8034, %v8222
    %v8227 = vsel %vm132, %v8225, 0.0
    %8228 = vadd.xlane.f32.xlu0 %v8227
    %v8229 = vpop.xlane.xlu0 %8228
    %v8230 = vsel %vm132, %v8226, 0.0
    %8231 = vadd.xlane.f32.xlu0 %v8230
    %v8232 = vpop.xlane.xlu0 %8231
    %v8233 = vmul.f32 %v8229, %v3889
    %v8234 = vmul.f32 %v8232, %v3889
    %v8235 = vsub.f32 %v8225, %v8233
    %v8236 = vsub.f32 %v8226, %v8234
    %v8237 = vmul.f32 %v8235, %v8235
    %v8238 = vmul.f32 %v8236, %v8236
    %v8239 = vsel %vm132, %v8237, 0.0
    %8240 = vadd.xlane.f32.xlu0 %v8239
    %v8241 = vpop.xlane.xlu0 %8240
    %v8242 = vsel %vm132, %v8238, 0.0
    %8243 = vadd.xlane.f32.xlu0 %v8242
    %v8244 = vpop.xlane.xlu0 %8243
    %v8245 = vmul.f32 %v8241, 0.032258064
    %v8246 = vmul.f32 %v8244, 0.032258064
    %v8247 = vrsqrt.pop %v8245
    %v8248 = vrsqrt.pop %v8246
    %v8249 = vmul.f32 %v8235, %v8247
    %v8250 = vmul.f32 %v8236, %v8248
    %v8251 = vadd.f32 %v8249, 1e-05
    %v8252 = vadd.f32 %v8250, 1e-05
    %v8253 = vlaneseq
    %v8254 = vshrl.u32 %v8253, 7
    %v8255 = vsub.s32 4, %v8254
    %v8256 = vrot.slane %v7988, %v8255
    %v8257 = vmul.f32 %v8251, %v8256
    %v8258 = vmul.f32 %v8252, %v8256
    %v8259 = vlaneseq
    %v8260 = vshrl.u32 %v8259, 7
    %v8261 = vsub.s32 5, %v8260
    %v8262 = vrot.slane %v7988, %v8261
    %v8263 = vadd.f32 %v8257, %v8262
    %v8264 = vadd.f32 %v8258, %v8262
    %s8265 = scalar_lea.vmem [#allocation2], 16
    %8266 = vst.msk [vmem:[%s8265] sm:$0xff] %vm132, %v8263
    %8267 = vst.msk [vmem:[%s8265 + $0x8] sm:$0xff] %vm132, %v8264
    // Predicated region
    $region50: #{tpu_custom_call.1} parent=1 // pred_check
      _
    $region51: #{tpu_custom_call.1} parent=1 // pred_check_branch
      %8269 = sbr.rel (0) target = $region53
    $region52: #{tpu_custom_call.1} parent=1 // pred_region
      %s8271 = ssub.s32 512, 512
      %8272 = vsyncadd [#allocation3], %s8271
      %s8273 = sshll.u32 [#allocation2], 4
      %s8274 = int_to_ptr.vmem [resolvable:$true] %s8273
      %8279 = dma.vmem_to_hbm [thread:$0]  %s8274, 512, %s12, [#allocation3], 128, 128, 8
    $region53: #{tpu_custom_call.1} parent=1 // pred_fallthru
      _
    // Predicated region
    $region54: #{tpu_custom_call.1} parent=1 // pred_check
      _
    $region55: #{tpu_custom_call.1} parent=1 // pred_check_branch
      %8281 = sbr.rel (0) target = $region57
    $region56: #{tpu_custom_call.1} parent=1 // pred_region
      %8282 = dma.done [#allocation3], 512
    $region57: #{tpu_custom_call.1} parent=1 // pred_fallthru
      _
    %8283 = vsyncpa [#allocation3], 1

</llo_original>
